<compile_context>
chip_gen: v5e
topology: v5e:2x2
jax: 0.10.0
libtpu: 0.0.40
codegen_flags: <defaults>
</compile_context>

<pallas_src>
import functools

import jax
import jax.numpy as jnp
from jax.experimental import pallas as pl
from jax.experimental.pallas import tpu as pltpu

F_IN = 512      # feat / feat_con feature dim (cat -> 1024)
H1 = 2048
H2 = 512
# The blend uses the [B, H2] mask as an elementwise select over the [B, F_IN]
# features; the module hard-codes H2 == F_IN == 512 (review concern made explicit).
assert H2 == F_IN


def policy_kernel(feat_ref, featc_ref, w1_ref, s1_ref, b1_ref,
                  w2_ref, s2_ref, b2_ref, mask_ref, out_ref):
    feat = feat_ref[...]            # [tB, 512] f32
    featc = featc_ref[...]          # [tB, 512] f32

    # cat((feat, feat_con), dim=1): lane-axis concat of two bf16 tiles, then a
    # single MXU dot against the full resident W1 (no W1 slicing).
    x_bf = jnp.concatenate(
        [feat.astype(jnp.bfloat16), featc.astype(jnp.bfloat16)], axis=1)

    # int8 weights -> bf16 (exact for |w| <= 127), f32 MXU accumulation,
    # per-output-channel dequant scale applied once on the dot result.
    w1_bf = w1_ref[...].astype(jnp.bfloat16)                       # [1024, 2048]
    h = jnp.dot(x_bf, w1_bf, preferred_element_type=jnp.float32)   # [tB, 2048] f32
    h = h * s1_ref[...] + b1_ref[...]                              # scale + bias

    w2_bf = w2_ref[...].astype(jnp.bfloat16)                       # [2048, 512]
    y = jnp.dot(h.astype(jnp.bfloat16), w2_bf,
                preferred_element_type=jnp.float32)                # [tB, 512] f32
    y = y * s2_ref[...] + b2_ref[...]                              # pre-sigmoid logits

    # Bisign(sigmoid(y)): sigmoid(y) > 0.5  <=>  y > 0 (bit-exact) -> skip sigmoid.
    pred = y > 0.0
    mask_ref[...] = pred.astype(jnp.float32)
    out_ref[...] = jnp.where(pred, featc, feat)   # (1-mask)*feat + mask*feat_con


def policy_net_forward(feat, feat_con, params, *, tile_b=None):
    B = feat.shape[0]
    assert feat.shape == (B, F_IN) and feat_con.shape == (B, F_IN)

    out_shape = (
        jax.ShapeDtypeStruct((B, H2), jnp.float32),     # mask
        jax.ShapeDtypeStruct((B, F_IN), jnp.float32),   # blended output
    )
    args = (feat, feat_con, params["w1"], params["s1"], params["b1"],
            params["w2"], params["s2"], params["b2"])

    # Advisory cost: ~6.3*B MFLOP of matmul, ~3.2 MB of int8 weight bytes plus
    # small activation traffic, no transcendentals (sigmoid eliminated).
    weight_bytes = (2 * F_IN) * H1 + H1 * H2                  # int8
    scale_bias_bytes = 4 * 2 * (H1 + H2)                      # f32 scales + biases
    act_bytes = B * (2 * F_IN + H2 + F_IN) * 4                # f32 in/out
    cost = pl.CostEstimate(
        flops=2 * B * ((2 * F_IN) * H1 + H1 * H2),
        transcendentals=0,
        bytes_accessed=weight_bytes + scale_bias_bytes + act_bytes)

    # VMEM budget: int8 weights ~3 MiB (x2 buffers worst case) + in-kernel bf16
    # dequant temporaries ~6 MiB + activation tiles ~2-4 MiB  => <~18 MiB;
    # 32 MiB cap leaves headroom and fits every generation (v7x has 64 MiB).
    cparams = dict(vmem_limit_bytes=32 * 1024 * 1024)

    if tile_b is None or B <= tile_b or B % tile_b != 0:
        # Single-shot, grid-less: at small B the call is floored by the one-pass
        # weight read; grid steps would add ~0.35 us each of pure overhead.
        vmem = pl.BlockSpec(memory_space=pltpu.MemorySpace.VMEM)
        return pl.pallas_call(
            policy_kernel,
            out_shape=out_shape,
            in_specs=[vmem] * 8,
            out_specs=(vmem, vmem),
            cost_estimate=cost,
            compiler_params=pltpu.CompilerParams(**cparams),
        )(*args)

    # Batched path: parallel grid over B; weights full-block, constant index_map
    # (DMA'd once, resident); activations/outputs blocked (tile_b, feature).
    grid = (B // tile_b,)
    in_specs = [
        pl.BlockSpec((tile_b, F_IN), lambda i: (i, 0)),     # feat tile
        pl.BlockSpec((tile_b, F_IN), lambda i: (i, 0)),     # feat_con tile
        pl.BlockSpec((2 * F_IN, H1), lambda i: (0, 0)),     # W1 (resident)
        pl.BlockSpec((1, H1), lambda i: (0, 0)),            # s1
        pl.BlockSpec((1, H1), lambda i: (0, 0)),            # b1
        pl.BlockSpec((H1, H2), lambda i: (0, 0)),           # W2 (resident)
        pl.BlockSpec((1, H2), lambda i: (0, 0)),            # s2
        pl.BlockSpec((1, H2), lambda i: (0, 0)),            # b2
    ]
    out_specs = (
        pl.BlockSpec((tile_b, H2), lambda i: (i, 0)),
        pl.BlockSpec((tile_b, F_IN), lambda i: (i, 0)),
    )
    return pl.pallas_call(
        policy_kernel,
        out_shape=out_shape,
        grid=grid,
        in_specs=in_specs,
        out_specs=out_specs,
        cost_estimate=cost,
        compiler_params=pltpu.CompilerParams(
            dimension_semantics=("parallel",), **cparams),
    )(*args)


def _quantize_per_out_channel(w):
    """Symmetric int8 quantization with one f32 scale per output column."""
    amax = jnp.max(jnp.abs(w), axis=0)
    scale = jnp.where(amax > 0, amax / 127.0, 1.0)
    q = jnp.clip(jnp.round(w / scale), -127, 127).astype(jnp.int8)
    return q, scale.reshape(1, -1).astype(jnp.float32)


def init_params(key):
    k1, k2, k3, k4 = jax.random.split(key, 4)
    # Deterministic synthetic init (PyTorch default uniform(-1/sqrt(fan_in), ...)).
    w1 = jax.random.uniform(k1, (2 * F_IN, H1), jnp.float32, -0.03125, 0.03125)
    b1 = jax.random.uniform(k2, (H1,), jnp.float32, -0.03125, 0.03125)
    w2 = jax.random.uniform(k3, (H1, H2), jnp.float32, -0.0221, 0.0221)
    b2 = jax.random.uniform(k4, (H2,), jnp.float32, -0.0221, 0.0221)
    q1, s1 = _quantize_per_out_channel(w1)
    q2, s2 = _quantize_per_out_channel(w2)
    # Accepted numerics: the model's effective weights are the int8-dequantized
    # ones (the reference below uses the same), biases stay f32.
    return {"w1": q1, "s1": s1, "b1": b1.reshape(1, H1),
            "w2": q2, "s2": s2, "b2": b2.reshape(1, H2)}


def reference_forward(feat, feat_con, params):
    """Plain-XLA replica of the kernel math (only accumulation order differs)."""
    x_bf = jnp.concatenate([feat, feat_con], axis=1).astype(jnp.bfloat16)
    h = jnp.dot(x_bf, params["w1"].astype(jnp.bfloat16),
                preferred_element_type=jnp.float32) * params["s1"] + params["b1"]
    y = jnp.dot(h.astype(jnp.bfloat16), params["w2"].astype(jnp.bfloat16),
                preferred_element_type=jnp.float32) * params["s2"] + params["b2"]
    mask = (jax.nn.sigmoid(y) > 0.5).astype(jnp.float32)
    out = (1.0 - mask) * feat + mask * feat_con
    return mask, out, y


if __name__ == "__main__":
    key = jax.random.PRNGKey(0)
    kp, kdata = jax.random.split(key)
    params = init_params(kp)

    def check(B, tile_b):
        kf, kc = jax.random.split(jax.random.fold_in(kdata, B))
        feat = jax.random.normal(kf, (B, F_IN), jnp.float32)
        feat_con = jax.random.normal(kc, (B, F_IN), jnp.float32)

        fwd = jax.jit(functools.partial(policy_net_forward, tile_b=tile_b))
        mask, out = fwd(feat, feat_con, params)
        jax.block_until_ready((mask, out))
        assert mask.shape == (B, H2) and out.shape == (B, F_IN)

        ref_mask, ref_out, y_ref = reference_forward(feat, feat_con, params)
        # The mask is a hard threshold: only compare where the reference logit
        # is clearly away from the decision boundary (kernel vs XLA dot
        # accumulation-order differences are ~1e-5).
        safe = jnp.abs(y_ref) > 1e-3
        assert bool(jnp.all(jnp.where(safe, mask == ref_mask, True)))
        # The blend must be an exact select driven by the kernel's own mask...
        assert bool(jnp.allclose(out, (1.0 - mask) * feat + mask * feat_con))
        # ...and match the reference blend wherever the mask is unambiguous.
        assert bool(jnp.all(jnp.where(safe,
                                      jnp.isclose(out, ref_out, atol=1e-6),
                                      True)))

    check(8, None)      # single-shot latency path (B=8)
    check(256, 128)     # batched path: parallel B grid, resident weights

    print("KERNEL_OK")
</pallas_src>

<mosaic_0001>
module attributes {stable_mosaic.version = 11 : i64} {
  func.func @policy_kernel(%arg0: memref<8x512xf32, #tpu.memory_space<vmem>>, %arg1: memref<8x512xf32, #tpu.memory_space<vmem>>, %arg2: memref<1024x2048xi8, #tpu.memory_space<vmem>>, %arg3: memref<1x2048xf32, #tpu.memory_space<vmem>>, %arg4: memref<1x2048xf32, #tpu.memory_space<vmem>>, %arg5: memref<2048x512xi8, #tpu.memory_space<vmem>>, %arg6: memref<1x512xf32, #tpu.memory_space<vmem>>, %arg7: memref<1x512xf32, #tpu.memory_space<vmem>>, %arg8: memref<8x512xf32, #tpu.memory_space<vmem>>, %arg9: memref<8x512xf32, #tpu.memory_space<vmem>>) attributes {dimension_semantics = [], scalar_prefetch = 0 : i64, scratch_operands = 0 : i64, tpu.core_type = #tpu.core_type<tc>} {
    %c0 = arith.constant 0 : index
    %c0_0 = arith.constant 0 : index
    %0 = vector.load %arg0[%c0, %c0_0] : memref<8x512xf32, #tpu.memory_space<vmem>>, vector<8x512xf32>
    %c0_1 = arith.constant 0 : index
    %c0_2 = arith.constant 0 : index
    %1 = vector.load %arg1[%c0_1, %c0_2] : memref<8x512xf32, #tpu.memory_space<vmem>>, vector<8x512xf32>
    %2 = arith.truncf %0 : vector<8x512xf32> to vector<8x512xbf16>
    %3 = arith.truncf %1 : vector<8x512xf32> to vector<8x512xbf16>
    %4 = tpu.concatenate %2, %3 in 1 : vector<8x512xbf16>, vector<8x512xbf16> -> vector<8x1024xbf16>
    %c0_3 = arith.constant 0 : index
    %c0_4 = arith.constant 0 : index
    %5 = vector.load %arg2[%c0_3, %c0_4] : memref<1024x2048xi8, #tpu.memory_space<vmem>>, vector<1024x2048xi8>
    %6 = arith.sitofp %5 : vector<1024x2048xi8> to vector<1024x2048xbf16>
    %cst = arith.constant dense<0.000000e+00> : vector<8x2048xf32>
    %7 = tpu.matmul %4, %6, %cst {dimension_numbers = #tpu.dot_dimension_numbers<[1], [0], [0], [1], [0, 0, 1, 1], [], []>} : vector<8x1024xbf16>, vector<1024x2048xbf16>, vector<8x2048xf32> -> vector<8x2048xf32>
    %c0_5 = arith.constant 0 : index
    %c0_6 = arith.constant 0 : index
    %8 = vector.load %arg3[%c0_5, %c0_6] : memref<1x2048xf32, #tpu.memory_space<vmem>>, vector<1x2048xf32>
    %9 = vector.broadcast %8 : vector<1x2048xf32> to vector<8x2048xf32>
    %10 = arith.mulf %7, %9 : vector<8x2048xf32>
    %c0_7 = arith.constant 0 : index
    %c0_8 = arith.constant 0 : index
    %11 = vector.load %arg4[%c0_7, %c0_8] : memref<1x2048xf32, #tpu.memory_space<vmem>>, vector<1x2048xf32>
    %12 = vector.broadcast %11 : vector<1x2048xf32> to vector<8x2048xf32>
    %13 = arith.addf %10, %12 : vector<8x2048xf32>
    %c0_9 = arith.constant 0 : index
    %c0_10 = arith.constant 0 : index
    %14 = vector.load %arg5[%c0_9, %c0_10] : memref<2048x512xi8, #tpu.memory_space<vmem>>, vector<2048x512xi8>
    %15 = arith.sitofp %14 : vector<2048x512xi8> to vector<2048x512xbf16>
    %16 = arith.truncf %13 : vector<8x2048xf32> to vector<8x2048xbf16>
    %cst_11 = arith.constant dense<0.000000e+00> : vector<8x512xf32>
    %17 = tpu.matmul %16, %15, %cst_11 {dimension_numbers = #tpu.dot_dimension_numbers<[1], [0], [0], [1], [0, 0, 1, 1], [], []>} : vector<8x2048xbf16>, vector<2048x512xbf16>, vector<8x512xf32> -> vector<8x512xf32>
    %c0_12 = arith.constant 0 : index
    %c0_13 = arith.constant 0 : index
    %18 = vector.load %arg6[%c0_12, %c0_13] : memref<1x512xf32, #tpu.memory_space<vmem>>, vector<1x512xf32>
    %19 = vector.broadcast %18 : vector<1x512xf32> to vector<8x512xf32>
    %20 = arith.mulf %17, %19 : vector<8x512xf32>
    %c0_14 = arith.constant 0 : index
    %c0_15 = arith.constant 0 : index
    %21 = vector.load %arg7[%c0_14, %c0_15] : memref<1x512xf32, #tpu.memory_space<vmem>>, vector<1x512xf32>
    %22 = vector.broadcast %21 : vector<1x512xf32> to vector<8x512xf32>
    %23 = arith.addf %20, %22 : vector<8x512xf32>
    %cst_16 = arith.constant 0.000000e+00 : f32
    %24 = vector.broadcast %cst_16 : f32 to vector<8x512xf32>
    %25 = arith.cmpf ogt, %23, %24 : vector<8x512xf32>
    %26 = arith.extui %25 : vector<8x512xi1> to vector<8x512xi32>
    %27 = arith.sitofp %26 : vector<8x512xi32> to vector<8x512xf32>
    %c0_17 = arith.constant 0 : index
    %c0_18 = arith.constant 0 : index
    %28 = vector.load %arg8[%c0_17, %c0_18] : memref<8x512xf32, #tpu.memory_space<vmem>>, vector<8x512xf32>
    tpu.vector_store %arg8[%c0_17, %c0_18], %27 {strides = array<i32>} : memref<8x512xf32, #tpu.memory_space<vmem>>, vector<8x512xf32>,
    %29 = arith.select %25, %1, %0 : vector<8x512xi1>, vector<8x512xf32>
    %c0_19 = arith.constant 0 : index
    %c0_20 = arith.constant 0 : index
    %30 = vector.load %arg9[%c0_19, %c0_20] : memref<8x512xf32, #tpu.memory_space<vmem>>, vector<8x512xf32>
    tpu.vector_store %arg9[%c0_19, %c0_20], %29 {strides = array<i32>} : memref<8x512xf32, #tpu.memory_space<vmem>>, vector<8x512xf32>,
    return
  }
}

</mosaic_0001>

<llo_original>
// kernel: policy_net_forward.1
$region0: #{policy_net_forward.1}
  #allocation0 [shape = 'u32[]', space=smem, size = 0x4, offset = 0x4, fixed_abs, tag = 'smem constant byte address 0x4 - core index']
  #allocation1 [shape = 'u32[72,128]{1,0:T(1,128)}', space=vmem, size = 0x9000, scoped, tag = 'internal scratch']
  %s0 = inlined_call_operand.hbm [shape: f32[8,512], index: 0, kind: input, shape index: {}]
  %s1 = inlined_call_operand.hbm [shape: f32[8,512], index: 1, kind: input, shape index: {}]
  %s2 = inlined_call_operand.hbm [shape: s8[1024,2048], index: 2, kind: input, shape index: {}]
  %s3 = inlined_call_operand.hbm [shape: f32[1,2048], index: 3, kind: input, shape index: {}]
  %s4 = inlined_call_operand.hbm [shape: f32[1,2048], index: 4, kind: input, shape index: {}]
  %s5 = inlined_call_operand.hbm [shape: s8[2048,512], index: 5, kind: input, shape index: {}]
  %s6 = inlined_call_operand.hbm [shape: f32[1,512], index: 6, kind: input, shape index: {}]
  %s7 = inlined_call_operand.hbm [shape: f32[1,512], index: 7, kind: input, shape index: {}]
  %s8 = inlined_call_operand.hbm [shape: f32[8,512], index: 8, kind: output, shape index: {0}]
  %s9 = inlined_call_operand.hbm [shape: f32[8,512], index: 9, kind: output, shape index: {1}]
  %10 = xla_tuple %s8, %s9
  %s11 = sld [smem:[#allocation0]]
  $region82: #{policy_net_forward.1} parent=0
    _
  %s13 = ssub.s32 1, %s11
  %s14 = scalar_select 0, %s13, %s11
  $region1: #{policy_net_forward.1} parent=0
    #allocation2 [shape = 'u8[16384]{0}', space=vmem, size = 0x4000, scoped, tag = 'input window, operand 0, single buffered']
    #allocation3 [shape = 's32[1]{0}', space=sflag, size = 0x4, scoped, tag = 'scoped memory for policy_net_forward.1']
    #allocation4 [shape = 's32[1]{0}', space=sflag, size = 0x4, scoped, tag = 'scoped memory for policy_net_forward.1']
    #allocation5 [shape = 'u8[16384]{0}', space=vmem, size = 0x4000, scoped, tag = 'input window, operand 1, single buffered']
    #allocation6 [shape = 's32[1]{0}', space=sflag, size = 0x4, scoped, tag = 'scoped memory for policy_net_forward.1']
    #allocation7 [shape = 'u8[2097152]{0}', space=vmem, size = 0x200000, scoped, tag = 'input window, operand 2, single buffered']
    #allocation8 [shape = 'u8[8192]{0}', space=vmem, size = 0x2000, scoped, tag = 'input window, operand 3, single buffered']
    #allocation9 [shape = 's32[1]{0}', space=sflag, size = 0x4, scoped, tag = 'scoped memory for policy_net_forward.1']
    #allocation10 [shape = 'u8[8192]{0}', space=vmem, size = 0x2000, scoped, tag = 'input window, operand 4, single buffered']
    #allocation11 [shape = 'u8[1048576]{0}', space=vmem, size = 0x100000, scoped, tag = 'input window, operand 5, single buffered']
    #allocation12 [shape = 's32[1]{0}', space=sflag, size = 0x4, scoped, tag = 'scoped memory for policy_net_forward.1']
    #allocation13 [shape = 'u8[2048]{0}', space=vmem, size = 0x800, scoped, tag = 'input window, operand 6, single buffered']
    #allocation14 [shape = 'u8[2048]{0}', space=vmem, size = 0x800, scoped, tag = 'input window, operand 7, single buffered']
    #allocation15 [shape = 's32[1]{0}', space=sflag, size = 0x4, scoped, tag = 'scoped memory for policy_net_forward.1']
    #allocation16 [shape = 'u8[16384]{0}', space=vmem, size = 0x4000, scoped, tag = 'output window, operand 0, single buffered']
    #allocation17 [shape = 'u8[16384]{0}', space=vmem, size = 0x4000, scoped, tag = 'output window, operand 1, single buffered']
    #allocation18 [shape = 's32[1]{0}', space=sflag, size = 0x4, scoped, tag = 'scoped memory for policy_net_forward.1']
    %15 = vsyncpa [#allocation3], 0
    %16 = vsyncpa [#allocation6], 0
    %17 = vsyncpa [#allocation9], 0
    %18 = vsyncpa [#allocation12], 0
    %19 = vsyncpa [#allocation15], 0
    %20 = vsyncpa [#allocation4], 0
    %21 = vsyncpa [#allocation18], 0
    // Predicated region
    $region2: #{policy_net_forward.1} parent=1 // pred_check
      _
    $region3: #{policy_net_forward.1} parent=1 // pred_check_branch
      %23 = sbr.rel (0) target = $region5
    $region4: #{policy_net_forward.1} parent=1 // pred_region
      %25 = vsyncadd [#allocation3], 0
      %s27 = sshll.u32 %s0, 4
      %s28 = int_to_ptr.hbm [resolvable:$true] %s27
      %s29 = sshll.u32 [#allocation2], 4
      %s30 = int_to_ptr.vmem [resolvable:$true] %s29
      %32 = dma.hbm_to_vmem [thread:$0]  %s28, 512, %s30, [#allocation3]
    $region5: #{policy_net_forward.1} parent=1 // pred_fallthru
      _
    // Predicated region
    $region6: #{policy_net_forward.1} parent=1 // pred_check
      _
    $region7: #{policy_net_forward.1} parent=1 // pred_check_branch
      %34 = sbr.rel (0) target = $region9
    $region8: #{policy_net_forward.1} parent=1 // pred_region
      %36 = vsyncadd [#allocation6], 0
      %s38 = sshll.u32 %s1, 4
      %s39 = int_to_ptr.hbm [resolvable:$true] %s38
      %s40 = sshll.u32 [#allocation5], 4
      %s41 = int_to_ptr.vmem [resolvable:$true] %s40
      %43 = dma.hbm_to_vmem [thread:$0]  %s39, 512, %s41, [#allocation6]
    $region9: #{policy_net_forward.1} parent=1 // pred_fallthru
      _
    // Predicated region
    $region10: #{policy_net_forward.1} parent=1 // pred_check
      _
    $region11: #{policy_net_forward.1} parent=1 // pred_check_branch
      %45 = sbr.rel (0) target = $region13
    $region12: #{policy_net_forward.1} parent=1 // pred_region
      %47 = vsyncadd [#allocation6], 0
      %s48 = sshll.u32 %s2, 4
      %s49 = int_to_ptr.hbm [resolvable:$true] %s48
      %s50 = sshll.u32 [#allocation7], 4
      %s51 = int_to_ptr.vmem [resolvable:$true] %s50
      %56 = dma.hbm_to_vmem [thread:$0]  %s49, 65536, %s51, [#allocation6], 2048, 2048, 128
    $region13: #{policy_net_forward.1} parent=1 // pred_fallthru
      _
    // Predicated region
    $region14: #{policy_net_forward.1} parent=1 // pred_check
      _
    $region15: #{policy_net_forward.1} parent=1 // pred_check_branch
      %58 = sbr.rel (0) target = $region17
    $region16: #{policy_net_forward.1} parent=1 // pred_region
      %60 = vsyncadd [#allocation9], 0
      %s62 = sshll.u32 %s3, 4
      %s63 = int_to_ptr.hbm [resolvable:$true] %s62
      %s64 = sshll.u32 [#allocation8], 4
      %s65 = int_to_ptr.vmem [resolvable:$true] %s64
      %67 = dma.hbm_to_vmem [thread:$0]  %s63, 256, %s65, [#allocation9]
    $region17: #{policy_net_forward.1} parent=1 // pred_fallthru
      _
    // Predicated region
    $region18: #{policy_net_forward.1} parent=1 // pred_check
      _
    $region19: #{policy_net_forward.1} parent=1 // pred_check_branch
      %69 = sbr.rel (0) target = $region21
    $region20: #{policy_net_forward.1} parent=1 // pred_region
      %71 = vsyncadd [#allocation9], 0
      %s73 = sshll.u32 %s4, 4
      %s74 = int_to_ptr.hbm [resolvable:$true] %s73
      %s75 = sshll.u32 [#allocation10], 4
      %s76 = int_to_ptr.vmem [resolvable:$true] %s75
      %78 = dma.hbm_to_vmem [thread:$0]  %s74, 256, %s76, [#allocation9]
    $region21: #{policy_net_forward.1} parent=1 // pred_fallthru
      _
    // Predicated region
    $region22: #{policy_net_forward.1} parent=1 // pred_check
      _
    $region23: #{policy_net_forward.1} parent=1 // pred_check_branch
      %80 = sbr.rel (0) target = $region25
    $region24: #{policy_net_forward.1} parent=1 // pred_region
      %82 = vsyncadd [#allocation12], 0
      %s83 = sshll.u32 %s5, 4
      %s84 = int_to_ptr.hbm [resolvable:$true] %s83
      %s85 = sshll.u32 [#allocation11], 4
      %s86 = int_to_ptr.vmem [resolvable:$true] %s85
      %91 = dma.hbm_to_vmem [thread:$0]  %s84, 32768, %s86, [#allocation12], 512, 512, 32
    $region25: #{policy_net_forward.1} parent=1 // pred_fallthru
      _
    // Predicated region
    $region26: #{policy_net_forward.1} parent=1 // pred_check
      _
    $region27: #{policy_net_forward.1} parent=1 // pred_check_branch
      %93 = sbr.rel (0) target = $region29
    $region28: #{policy_net_forward.1} parent=1 // pred_region
      %95 = vsyncadd [#allocation12], 0
      %s97 = sshll.u32 %s6, 4
      %s98 = int_to_ptr.hbm [resolvable:$true] %s97
      %s99 = sshll.u32 [#allocation13], 4
      %s100 = int_to_ptr.vmem [resolvable:$true] %s99
      %102 = dma.hbm_to_vmem [thread:$0]  %s98, 64, %s100, [#allocation12]
    $region29: #{policy_net_forward.1} parent=1 // pred_fallthru
      _
    // Predicated region
    $region30: #{policy_net_forward.1} parent=1 // pred_check
      _
    $region31: #{policy_net_forward.1} parent=1 // pred_check_branch
      %104 = sbr.rel (0) target = $region33
    $region32: #{policy_net_forward.1} parent=1 // pred_region
      %106 = vsyncadd [#allocation15], 0
      %s108 = sshll.u32 %s7, 4
      %s109 = int_to_ptr.hbm [resolvable:$true] %s108
      %s110 = sshll.u32 [#allocation14], 4
      %s111 = int_to_ptr.vmem [resolvable:$true] %s110
      %113 = dma.hbm_to_vmem [thread:$0]  %s109, 64, %s111, [#allocation15]
    $region33: #{policy_net_forward.1} parent=1 // pred_fallthru
      _
    // Predicated region
    $region34: #{policy_net_forward.1} parent=1 // pred_check
      _
    $region35: #{policy_net_forward.1} parent=1 // pred_check_branch
      %115 = sbr.rel (0) target = $region37
    $region36: #{policy_net_forward.1} parent=1 // pred_region
      %117 = dma.done [#allocation3], 512
    $region37: #{policy_net_forward.1} parent=1 // pred_fallthru
      _
    // Predicated region
    $region38: #{policy_net_forward.1} parent=1 // pred_check
      _
    $region39: #{policy_net_forward.1} parent=1 // pred_check_branch
      %119 = sbr.rel (0) target = $region41
    $region40: #{policy_net_forward.1} parent=1 // pred_region
      %121 = dma.done [#allocation6], 512
    $region41: #{policy_net_forward.1} parent=1 // pred_fallthru
      _
    // Predicated region
    $region42: #{policy_net_forward.1} parent=1 // pred_check
      _
    $region43: #{policy_net_forward.1} parent=1 // pred_check_branch
      %123 = sbr.rel (0) target = $region45
    $region44: #{policy_net_forward.1} parent=1 // pred_region
      %125 = dma.done [#allocation6], 65536
    $region45: #{policy_net_forward.1} parent=1 // pred_fallthru
      _
    // Predicated region
    $region46: #{policy_net_forward.1} parent=1 // pred_check
      _
    $region47: #{policy_net_forward.1} parent=1 // pred_check_branch
      %127 = sbr.rel (0) target = $region49
    $region48: #{policy_net_forward.1} parent=1 // pred_region
      %129 = dma.done [#allocation9], 256
    $region49: #{policy_net_forward.1} parent=1 // pred_fallthru
      _
    // Predicated region
    $region50: #{policy_net_forward.1} parent=1 // pred_check
      _
    $region51: #{policy_net_forward.1} parent=1 // pred_check_branch
      %131 = sbr.rel (0) target = $region53
    $region52: #{policy_net_forward.1} parent=1 // pred_region
      %133 = dma.done [#allocation9], 256
    $region53: #{policy_net_forward.1} parent=1 // pred_fallthru
      _
    // Predicated region
    $region54: #{policy_net_forward.1} parent=1 // pred_check
      _
    $region55: #{policy_net_forward.1} parent=1 // pred_check_branch
      %135 = sbr.rel (0) target = $region57
    $region56: #{policy_net_forward.1} parent=1 // pred_region
      %137 = dma.done [#allocation12], 32768
    $region57: #{policy_net_forward.1} parent=1 // pred_fallthru
      _
    // Predicated region
    $region58: #{policy_net_forward.1} parent=1 // pred_check
      _
    $region59: #{policy_net_forward.1} parent=1 // pred_check_branch
      %139 = sbr.rel (0) target = $region61
    $region60: #{policy_net_forward.1} parent=1 // pred_region
      %141 = dma.done [#allocation12], 64
    $region61: #{policy_net_forward.1} parent=1 // pred_fallthru
      _
    // Predicated region
    $region62: #{policy_net_forward.1} parent=1 // pred_check
      _
    $region63: #{policy_net_forward.1} parent=1 // pred_check_branch
      %143 = sbr.rel (0) target = $region65
    $region64: #{policy_net_forward.1} parent=1 // pred_region
      %145 = dma.done [#allocation15], 64
    $region65: #{policy_net_forward.1} parent=1 // pred_fallthru
      _
    %v146 = vld [vmem:[#allocation2] sm:$0xff]
    %v147 = vld [vmem:[#allocation2 + $0x8] sm:$0xff]
    %v148 = vld [vmem:[#allocation2 + $0x10] sm:$0xff]
    %v149 = vld [vmem:[#allocation2 + $0x18] sm:$0xff]
    %v150 = vld [vmem:[#allocation5] sm:$0xff]
    %v151 = vld [vmem:[#allocation5 + $0x8] sm:$0xff]
    %v152 = vld [vmem:[#allocation5 + $0x10] sm:$0xff]
    %v153 = vld [vmem:[#allocation5 + $0x18] sm:$0xff]
    %v154 = vpack.c.bf16 %v147, %v146
    %v155 = vpack.c.bf16 %v149, %v148
    %v156 = vpack.c.bf16 %v151, %v150
    %v157 = vpack.c.bf16 %v153, %v152
    %v160 = vunpack.c.l.b16 %v154
    %v161 = vunpack.c.h.b16 %v154
    %v162 = vunpack.c.l.b16 %v155
    %v163 = vunpack.c.h.b16 %v155
    %v164 = vpack.c.b16 %v160, %v160
    %v165 = vpack.c.b16 %v161, %v161
    %v166 = vpack.c.b16 %v162, %v162
    %v167 = vpack.c.b16 %v163, %v163
    %v174 = vunpack.c.l.b16 %v156
    %v175 = vunpack.c.h.b16 %v156
    %v176 = vunpack.c.l.b16 %v157
    %v177 = vunpack.c.h.b16 %v157
    %v178 = vpack.c.b16 %v174, %v174
    %v179 = vpack.c.b16 %v175, %v175
    %v180 = vpack.c.b16 %v176, %v176
    %v181 = vpack.c.b16 %v177, %v177
    %v186 = vld [vmem:[#allocation7] sm:$0xff]
    %v187 = vld [vmem:[#allocation7 + $0x8] sm:$0xff]
    %v188 = vld [vmem:[#allocation7 + $0x10] sm:$0xff]
    %v189 = vld [vmem:[#allocation7 + $0x18] sm:$0xff]
    %v190 = vld [vmem:[#allocation7 + $0x20] sm:$0xff]
    %v191 = vld [vmem:[#allocation7 + $0x28] sm:$0xff]
    %v192 = vld [vmem:[#allocation7 + $0x30] sm:$0xff]
    %v193 = vld [vmem:[#allocation7 + $0x38] sm:$0xff]
    %v194 = vld [vmem:[#allocation7 + $0x40] sm:$0xff]
    %v195 = vld [vmem:[#allocation7 + $0x48] sm:$0xff]
    %v196 = vld [vmem:[#allocation7 + $0x50] sm:$0xff]
    %v197 = vld [vmem:[#allocation7 + $0x58] sm:$0xff]
    %v198 = vld [vmem:[#allocation7 + $0x60] sm:$0xff]
    %v199 = vld [vmem:[#allocation7 + $0x68] sm:$0xff]
    %v200 = vld [vmem:[#allocation7 + $0x70] sm:$0xff]
    %v201 = vld [vmem:[#allocation7 + $0x78] sm:$0xff]
    %v202 = vld [vmem:[#allocation7 + $0x80] sm:$0xff]
    %v203 = vld [vmem:[#allocation7 + $0x88] sm:$0xff]
    %v204 = vld [vmem:[#allocation7 + $0x90] sm:$0xff]
    %v205 = vld [vmem:[#allocation7 + $0x98] sm:$0xff]
    %v206 = vld [vmem:[#allocation7 + $0xa0] sm:$0xff]
    %v207 = vld [vmem:[#allocation7 + $0xa8] sm:$0xff]
    %v208 = vld [vmem:[#allocation7 + $0xb0] sm:$0xff]
    %v209 = vld [vmem:[#allocation7 + $0xb8] sm:$0xff]
    %v210 = vld [vmem:[#allocation7 + $0xc0] sm:$0xff]
    %v211 = vld [vmem:[#allocation7 + $0xc8] sm:$0xff]
    %v212 = vld [vmem:[#allocation7 + $0xd0] sm:$0xff]
    %v213 = vld [vmem:[#allocation7 + $0xd8] sm:$0xff]
    %v214 = vld [vmem:[#allocation7 + $0xe0] sm:$0xff]
    %v215 = vld [vmem:[#allocation7 + $0xe8] sm:$0xff]
    %v216 = vld [vmem:[#allocation7 + $0xf0] sm:$0xff]
    %v217 = vld [vmem:[#allocation7 + $0xf8] sm:$0xff]
    %v218 = vld [vmem:[#allocation7 + $0x100] sm:$0xff]
    %v219 = vld [vmem:[#allocation7 + $0x108] sm:$0xff]
    %v220 = vld [vmem:[#allocation7 + $0x110] sm:$0xff]
    %v221 = vld [vmem:[#allocation7 + $0x118] sm:$0xff]
    %v222 = vld [vmem:[#allocation7 + $0x120] sm:$0xff]
    %v223 = vld [vmem:[#allocation7 + $0x128] sm:$0xff]
    %v224 = vld [vmem:[#allocation7 + $0x130] sm:$0xff]
    %v225 = vld [vmem:[#allocation7 + $0x138] sm:$0xff]
    %v226 = vld [vmem:[#allocation7 + $0x140] sm:$0xff]
    %v227 = vld [vmem:[#allocation7 + $0x148] sm:$0xff]
    %v228 = vld [vmem:[#allocation7 + $0x150] sm:$0xff]
    %v229 = vld [vmem:[#allocation7 + $0x158] sm:$0xff]
    %v230 = vld [vmem:[#allocation7 + $0x160] sm:$0xff]
    %v231 = vld [vmem:[#allocation7 + $0x168] sm:$0xff]
    %v232 = vld [vmem:[#allocation7 + $0x170] sm:$0xff]
    %v233 = vld [vmem:[#allocation7 + $0x178] sm:$0xff]
    %v234 = vld [vmem:[#allocation7 + $0x180] sm:$0xff]
    %v235 = vld [vmem:[#allocation7 + $0x188] sm:$0xff]
    %v236 = vld [vmem:[#allocation7 + $0x190] sm:$0xff]
    %v237 = vld [vmem:[#allocation7 + $0x198] sm:$0xff]
    %v238 = vld [vmem:[#allocation7 + $0x1a0] sm:$0xff]
    %v239 = vld [vmem:[#allocation7 + $0x1a8] sm:$0xff]
    %v240 = vld [vmem:[#allocation7 + $0x1b0] sm:$0xff]
    %v241 = vld [vmem:[#allocation7 + $0x1b8] sm:$0xff]
    %v242 = vld [vmem:[#allocation7 + $0x1c0] sm:$0xff]
    %v243 = vld [vmem:[#allocation7 + $0x1c8] sm:$0xff]
    %v244 = vld [vmem:[#allocation7 + $0x1d0] sm:$0xff]
    %v245 = vld [vmem:[#allocation7 + $0x1d8] sm:$0xff]
    %v246 = vld [vmem:[#allocation7 + $0x1e0] sm:$0xff]
    %v247 = vld [vmem:[#allocation7 + $0x1e8] sm:$0xff]
    %v248 = vld [vmem:[#allocation7 + $0x1f0] sm:$0xff]
    %v249 = vld [vmem:[#allocation7 + $0x1f8] sm:$0xff]
    %v250 = vld [vmem:[#allocation7 + $0x200] sm:$0xff]
    %v251 = vld [vmem:[#allocation7 + $0x208] sm:$0xff]
    %v252 = vld [vmem:[#allocation7 + $0x210] sm:$0xff]
    %v253 = vld [vmem:[#allocation7 + $0x218] sm:$0xff]
    %v254 = vld [vmem:[#allocation7 + $0x220] sm:$0xff]
    %v255 = vld [vmem:[#allocation7 + $0x228] sm:$0xff]
    %v256 = vld [vmem:[#allocation7 + $0x230] sm:$0xff]
    %v257 = vld [vmem:[#allocation7 + $0x238] sm:$0xff]
    %v258 = vld [vmem:[#allocation7 + $0x240] sm:$0xff]
    %v259 = vld [vmem:[#allocation7 + $0x248] sm:$0xff]
    %v260 = vld [vmem:[#allocation7 + $0x250] sm:$0xff]
    %v261 = vld [vmem:[#allocation7 + $0x258] sm:$0xff]
    %v262 = vld [vmem:[#allocation7 + $0x260] sm:$0xff]
    %v263 = vld [vmem:[#allocation7 + $0x268] sm:$0xff]
    %v264 = vld [vmem:[#allocation7 + $0x270] sm:$0xff]
    %v265 = vld [vmem:[#allocation7 + $0x278] sm:$0xff]
    %v266 = vld [vmem:[#allocation7 + $0x280] sm:$0xff]
    %v267 = vld [vmem:[#allocation7 + $0x288] sm:$0xff]
    %v268 = vld [vmem:[#allocation7 + $0x290] sm:$0xff]
    %v269 = vld [vmem:[#allocation7 + $0x298] sm:$0xff]
    %v270 = vld [vmem:[#allocation7 + $0x2a0] sm:$0xff]
    %v271 = vld [vmem:[#allocation7 + $0x2a8] sm:$0xff]
    %v272 = vld [vmem:[#allocation7 + $0x2b0] sm:$0xff]
    %v273 = vld [vmem:[#allocation7 + $0x2b8] sm:$0xff]
    %v274 = vld [vmem:[#allocation7 + $0x2c0] sm:$0xff]
    %v275 = vld [vmem:[#allocation7 + $0x2c8] sm:$0xff]
    %v276 = vld [vmem:[#allocation7 + $0x2d0] sm:$0xff]
    %v277 = vld [vmem:[#allocation7 + $0x2d8] sm:$0xff]
    %v278 = vld [vmem:[#allocation7 + $0x2e0] sm:$0xff]
    %v279 = vld [vmem:[#allocation7 + $0x2e8] sm:$0xff]
    %v280 = vld [vmem:[#allocation7 + $0x2f0] sm:$0xff]
    %v281 = vld [vmem:[#allocation7 + $0x2f8] sm:$0xff]
    %v282 = vld [vmem:[#allocation7 + $0x300] sm:$0xff]
    %v283 = vld [vmem:[#allocation7 + $0x308] sm:$0xff]
    %v284 = vld [vmem:[#allocation7 + $0x310] sm:$0xff]
    %v285 = vld [vmem:[#allocation7 + $0x318] sm:$0xff]
    %v286 = vld [vmem:[#allocation7 + $0x320] sm:$0xff]
    %v287 = vld [vmem:[#allocation7 + $0x328] sm:$0xff]
    %v288 = vld [vmem:[#allocation7 + $0x330] sm:$0xff]
    %v289 = vld [vmem:[#allocation7 + $0x338] sm:$0xff]
    %v290 = vld [vmem:[#allocation7 + $0x340] sm:$0xff]
    %v291 = vld [vmem:[#allocation7 + $0x348] sm:$0xff]
    %v292 = vld [vmem:[#allocation7 + $0x350] sm:$0xff]
    %v293 = vld [vmem:[#allocation7 + $0x358] sm:$0xff]
    %v294 = vld [vmem:[#allocation7 + $0x360] sm:$0xff]
    %v295 = vld [vmem:[#allocation7 + $0x368] sm:$0xff]
    %v296 = vld [vmem:[#allocation7 + $0x370] sm:$0xff]
    %v297 = vld [vmem:[#allocation7 + $0x378] sm:$0xff]
    %v298 = vld [vmem:[#allocation7 + $0x380] sm:$0xff]
    %v299 = vld [vmem:[#allocation7 + $0x388] sm:$0xff]
    %v300 = vld [vmem:[#allocation7 + $0x390] sm:$0xff]
    %v301 = vld [vmem:[#allocation7 + $0x398] sm:$0xff]
    %v302 = vld [vmem:[#allocation7 + $0x3a0] sm:$0xff]
    %v303 = vld [vmem:[#allocation7 + $0x3a8] sm:$0xff]
    %v304 = vld [vmem:[#allocation7 + $0x3b0] sm:$0xff]
    %v305 = vld [vmem:[#allocation7 + $0x3b8] sm:$0xff]
    %v306 = vld [vmem:[#allocation7 + $0x3c0] sm:$0xff]
    %v307 = vld [vmem:[#allocation7 + $0x3c8] sm:$0xff]
    %v308 = vld [vmem:[#allocation7 + $0x3d0] sm:$0xff]
    %v309 = vld [vmem:[#allocation7 + $0x3d8] sm:$0xff]
    %v310 = vld [vmem:[#allocation7 + $0x3e0] sm:$0xff]
    %v311 = vld [vmem:[#allocation7 + $0x3e8] sm:$0xff]
    %v312 = vld [vmem:[#allocation7 + $0x3f0] sm:$0xff]
    %v313 = vld [vmem:[#allocation7 + $0x3f8] sm:$0xff]
    %v314 = vld [vmem:[#allocation7 + $0x400] sm:$0xff]
    %v315 = vld [vmem:[#allocation7 + $0x408] sm:$0xff]
    %v316 = vld [vmem:[#allocation7 + $0x410] sm:$0xff]
    %v317 = vld [vmem:[#allocation7 + $0x418] sm:$0xff]
    %v318 = vld [vmem:[#allocation7 + $0x420] sm:$0xff]
    %v319 = vld [vmem:[#allocation7 + $0x428] sm:$0xff]
    %v320 = vld [vmem:[#allocation7 + $0x430] sm:$0xff]
    %v321 = vld [vmem:[#allocation7 + $0x438] sm:$0xff]
    %v322 = vld [vmem:[#allocation7 + $0x440] sm:$0xff]
    %v323 = vld [vmem:[#allocation7 + $0x448] sm:$0xff]
    %v324 = vld [vmem:[#allocation7 + $0x450] sm:$0xff]
    %v325 = vld [vmem:[#allocation7 + $0x458] sm:$0xff]
    %v326 = vld [vmem:[#allocation7 + $0x460] sm:$0xff]
    %v327 = vld [vmem:[#allocation7 + $0x468] sm:$0xff]
    %v328 = vld [vmem:[#allocation7 + $0x470] sm:$0xff]
    %v329 = vld [vmem:[#allocation7 + $0x478] sm:$0xff]
    %v330 = vld [vmem:[#allocation7 + $0x480] sm:$0xff]
    %v331 = vld [vmem:[#allocation7 + $0x488] sm:$0xff]
    %v332 = vld [vmem:[#allocation7 + $0x490] sm:$0xff]
    %v333 = vld [vmem:[#allocation7 + $0x498] sm:$0xff]
    %v334 = vld [vmem:[#allocation7 + $0x4a0] sm:$0xff]
    %v335 = vld [vmem:[#allocation7 + $0x4a8] sm:$0xff]
    %v336 = vld [vmem:[#allocation7 + $0x4b0] sm:$0xff]
    %v337 = vld [vmem:[#allocation7 + $0x4b8] sm:$0xff]
    %v338 = vld [vmem:[#allocation7 + $0x4c0] sm:$0xff]
    %v339 = vld [vmem:[#allocation7 + $0x4c8] sm:$0xff]
    %v340 = vld [vmem:[#allocation7 + $0x4d0] sm:$0xff]
    %v341 = vld [vmem:[#allocation7 + $0x4d8] sm:$0xff]
    %v342 = vld [vmem:[#allocation7 + $0x4e0] sm:$0xff]
    %v343 = vld [vmem:[#allocation7 + $0x4e8] sm:$0xff]
    %v344 = vld [vmem:[#allocation7 + $0x4f0] sm:$0xff]
    %v345 = vld [vmem:[#allocation7 + $0x4f8] sm:$0xff]
    %v346 = vld [vmem:[#allocation7 + $0x500] sm:$0xff]
    %v347 = vld [vmem:[#allocation7 + $0x508] sm:$0xff]
    %v348 = vld [vmem:[#allocation7 + $0x510] sm:$0xff]
    %v349 = vld [vmem:[#allocation7 + $0x518] sm:$0xff]
    %v350 = vld [vmem:[#allocation7 + $0x520] sm:$0xff]
    %v351 = vld [vmem:[#allocation7 + $0x528] sm:$0xff]
    %v352 = vld [vmem:[#allocation7 + $0x530] sm:$0xff]
    %v353 = vld [vmem:[#allocation7 + $0x538] sm:$0xff]
    %v354 = vld [vmem:[#allocation7 + $0x540] sm:$0xff]
    %v355 = vld [vmem:[#allocation7 + $0x548] sm:$0xff]
    %v356 = vld [vmem:[#allocation7 + $0x550] sm:$0xff]
    %v357 = vld [vmem:[#allocation7 + $0x558] sm:$0xff]
    %v358 = vld [vmem:[#allocation7 + $0x560] sm:$0xff]
    %v359 = vld [vmem:[#allocation7 + $0x568] sm:$0xff]
    %v360 = vld [vmem:[#allocation7 + $0x570] sm:$0xff]
    %v361 = vld [vmem:[#allocation7 + $0x578] sm:$0xff]
    %v362 = vld [vmem:[#allocation7 + $0x580] sm:$0xff]
    %v363 = vld [vmem:[#allocation7 + $0x588] sm:$0xff]
    %v364 = vld [vmem:[#allocation7 + $0x590] sm:$0xff]
    %v365 = vld [vmem:[#allocation7 + $0x598] sm:$0xff]
    %v366 = vld [vmem:[#allocation7 + $0x5a0] sm:$0xff]
    %v367 = vld [vmem:[#allocation7 + $0x5a8] sm:$0xff]
    %v368 = vld [vmem:[#allocation7 + $0x5b0] sm:$0xff]
    %v369 = vld [vmem:[#allocation7 + $0x5b8] sm:$0xff]
    %v370 = vld [vmem:[#allocation7 + $0x5c0] sm:$0xff]
    %v371 = vld [vmem:[#allocation7 + $0x5c8] sm:$0xff]
    %v372 = vld [vmem:[#allocation7 + $0x5d0] sm:$0xff]
    %v373 = vld [vmem:[#allocation7 + $0x5d8] sm:$0xff]
    %v374 = vld [vmem:[#allocation7 + $0x5e0] sm:$0xff]
    %v375 = vld [vmem:[#allocation7 + $0x5e8] sm:$0xff]
    %v376 = vld [vmem:[#allocation7 + $0x5f0] sm:$0xff]
    %v377 = vld [vmem:[#allocation7 + $0x5f8] sm:$0xff]
    %v378 = vld [vmem:[#allocation7 + $0x600] sm:$0xff]
    %v379 = vld [vmem:[#allocation7 + $0x608] sm:$0xff]
    %v380 = vld [vmem:[#allocation7 + $0x610] sm:$0xff]
    %v381 = vld [vmem:[#allocation7 + $0x618] sm:$0xff]
    %v382 = vld [vmem:[#allocation7 + $0x620] sm:$0xff]
    %v383 = vld [vmem:[#allocation7 + $0x628] sm:$0xff]
    %v384 = vld [vmem:[#allocation7 + $0x630] sm:$0xff]
    %v385 = vld [vmem:[#allocation7 + $0x638] sm:$0xff]
    %v386 = vld [vmem:[#allocation7 + $0x640] sm:$0xff]
    %v387 = vld [vmem:[#allocation7 + $0x648] sm:$0xff]
    %v388 = vld [vmem:[#allocation7 + $0x650] sm:$0xff]
    %v389 = vld [vmem:[#allocation7 + $0x658] sm:$0xff]
    %v390 = vld [vmem:[#allocation7 + $0x660] sm:$0xff]
    %v391 = vld [vmem:[#allocation7 + $0x668] sm:$0xff]
    %v392 = vld [vmem:[#allocation7 + $0x670] sm:$0xff]
    %v393 = vld [vmem:[#allocation7 + $0x678] sm:$0xff]
    %v394 = vld [vmem:[#allocation7 + $0x680] sm:$0xff]
    %v395 = vld [vmem:[#allocation7 + $0x688] sm:$0xff]
    %v396 = vld [vmem:[#allocation7 + $0x690] sm:$0xff]
    %v397 = vld [vmem:[#allocation7 + $0x698] sm:$0xff]
    %v398 = vld [vmem:[#allocation7 + $0x6a0] sm:$0xff]
    %v399 = vld [vmem:[#allocation7 + $0x6a8] sm:$0xff]
    %v400 = vld [vmem:[#allocation7 + $0x6b0] sm:$0xff]
    %v401 = vld [vmem:[#allocation7 + $0x6b8] sm:$0xff]
    %v402 = vld [vmem:[#allocation7 + $0x6c0] sm:$0xff]
    %v403 = vld [vmem:[#allocation7 + $0x6c8] sm:$0xff]
    %v404 = vld [vmem:[#allocation7 + $0x6d0] sm:$0xff]
    %v405 = vld [vmem:[#allocation7 + $0x6d8] sm:$0xff]
    %v406 = vld [vmem:[#allocation7 + $0x6e0] sm:$0xff]
    %v407 = vld [vmem:[#allocation7 + $0x6e8] sm:$0xff]
    %v408 = vld [vmem:[#allocation7 + $0x6f0] sm:$0xff]
    %v409 = vld [vmem:[#allocation7 + $0x6f8] sm:$0xff]
    %v410 = vld [vmem:[#allocation7 + $0x700] sm:$0xff]
    %v411 = vld [vmem:[#allocation7 + $0x708] sm:$0xff]
    %v412 = vld [vmem:[#allocation7 + $0x710] sm:$0xff]
    %v413 = vld [vmem:[#allocation7 + $0x718] sm:$0xff]
    %v414 = vld [vmem:[#allocation7 + $0x720] sm:$0xff]
    %v415 = vld [vmem:[#allocation7 + $0x728] sm:$0xff]
    %v416 = vld [vmem:[#allocation7 + $0x730] sm:$0xff]
    %v417 = vld [vmem:[#allocation7 + $0x738] sm:$0xff]
    %v418 = vld [vmem:[#allocation7 + $0x740] sm:$0xff]
    %v419 = vld [vmem:[#allocation7 + $0x748] sm:$0xff]
    %v420 = vld [vmem:[#allocation7 + $0x750] sm:$0xff]
    %v421 = vld [vmem:[#allocation7 + $0x758] sm:$0xff]
    %v422 = vld [vmem:[#allocation7 + $0x760] sm:$0xff]
    %v423 = vld [vmem:[#allocation7 + $0x768] sm:$0xff]
    %v424 = vld [vmem:[#allocation7 + $0x770] sm:$0xff]
    %v425 = vld [vmem:[#allocation7 + $0x778] sm:$0xff]
    %v426 = vld [vmem:[#allocation7 + $0x780] sm:$0xff]
    %v427 = vld [vmem:[#allocation7 + $0x788] sm:$0xff]
    %v428 = vld [vmem:[#allocation7 + $0x790] sm:$0xff]
    %v429 = vld [vmem:[#allocation7 + $0x798] sm:$0xff]
    %v430 = vld [vmem:[#allocation7 + $0x7a0] sm:$0xff]
    %v431 = vld [vmem:[#allocation7 + $0x7a8] sm:$0xff]
    %v432 = vld [vmem:[#allocation7 + $0x7b0] sm:$0xff]
    %v433 = vld [vmem:[#allocation7 + $0x7b8] sm:$0xff]
    %v434 = vld [vmem:[#allocation7 + $0x7c0] sm:$0xff]
    %v435 = vld [vmem:[#allocation7 + $0x7c8] sm:$0xff]
    %v436 = vld [vmem:[#allocation7 + $0x7d0] sm:$0xff]
    %v437 = vld [vmem:[#allocation7 + $0x7d8] sm:$0xff]
    %v438 = vld [vmem:[#allocation7 + $0x7e0] sm:$0xff]
    %v439 = vld [vmem:[#allocation7 + $0x7e8] sm:$0xff]
    %v440 = vld [vmem:[#allocation7 + $0x7f0] sm:$0xff]
    %v441 = vld [vmem:[#allocation7 + $0x7f8] sm:$0xff]
    %v442 = vld [vmem:[#allocation7 + $0x800] sm:$0xff]
    %v443 = vld [vmem:[#allocation7 + $0x808] sm:$0xff]
    %v444 = vld [vmem:[#allocation7 + $0x810] sm:$0xff]
    %v445 = vld [vmem:[#allocation7 + $0x818] sm:$0xff]
    %v446 = vld [vmem:[#allocation7 + $0x820] sm:$0xff]
    %v447 = vld [vmem:[#allocation7 + $0x828] sm:$0xff]
    %v448 = vld [vmem:[#allocation7 + $0x830] sm:$0xff]
    %v449 = vld [vmem:[#allocation7 + $0x838] sm:$0xff]
    %v450 = vld [vmem:[#allocation7 + $0x840] sm:$0xff]
    %v451 = vld [vmem:[#allocation7 + $0x848] sm:$0xff]
    %v452 = vld [vmem:[#allocation7 + $0x850] sm:$0xff]
    %v453 = vld [vmem:[#allocation7 + $0x858] sm:$0xff]
    %v454 = vld [vmem:[#allocation7 + $0x860] sm:$0xff]
    %v455 = vld [vmem:[#allocation7 + $0x868] sm:$0xff]
    %v456 = vld [vmem:[#allocation7 + $0x870] sm:$0xff]
    %v457 = vld [vmem:[#allocation7 + $0x878] sm:$0xff]
    %v458 = vld [vmem:[#allocation7 + $0x880] sm:$0xff]
    %v459 = vld [vmem:[#allocation7 + $0x888] sm:$0xff]
    %v460 = vld [vmem:[#allocation7 + $0x890] sm:$0xff]
    %v461 = vld [vmem:[#allocation7 + $0x898] sm:$0xff]
    %v462 = vld [vmem:[#allocation7 + $0x8a0] sm:$0xff]
    %v463 = vld [vmem:[#allocation7 + $0x8a8] sm:$0xff]
    %v464 = vld [vmem:[#allocation7 + $0x8b0] sm:$0xff]
    %v465 = vld [vmem:[#allocation7 + $0x8b8] sm:$0xff]
    %v466 = vld [vmem:[#allocation7 + $0x8c0] sm:$0xff]
    %v467 = vld [vmem:[#allocation7 + $0x8c8] sm:$0xff]
    %v468 = vld [vmem:[#allocation7 + $0x8d0] sm:$0xff]
    %v469 = vld [vmem:[#allocation7 + $0x8d8] sm:$0xff]
    %v470 = vld [vmem:[#allocation7 + $0x8e0] sm:$0xff]
    %v471 = vld [vmem:[#allocation7 + $0x8e8] sm:$0xff]
    %v472 = vld [vmem:[#allocation7 + $0x8f0] sm:$0xff]
    %v473 = vld [vmem:[#allocation7 + $0x8f8] sm:$0xff]
    %v474 = vld [vmem:[#allocation7 + $0x900] sm:$0xff]
    %v475 = vld [vmem:[#allocation7 + $0x908] sm:$0xff]
    %v476 = vld [vmem:[#allocation7 + $0x910] sm:$0xff]
    %v477 = vld [vmem:[#allocation7 + $0x918] sm:$0xff]
    %v478 = vld [vmem:[#allocation7 + $0x920] sm:$0xff]
    %v479 = vld [vmem:[#allocation7 + $0x928] sm:$0xff]
    %v480 = vld [vmem:[#allocation7 + $0x930] sm:$0xff]
    %v481 = vld [vmem:[#allocation7 + $0x938] sm:$0xff]
    %v482 = vld [vmem:[#allocation7 + $0x940] sm:$0xff]
    %v483 = vld [vmem:[#allocation7 + $0x948] sm:$0xff]
    %v484 = vld [vmem:[#allocation7 + $0x950] sm:$0xff]
    %v485 = vld [vmem:[#allocation7 + $0x958] sm:$0xff]
    %v486 = vld [vmem:[#allocation7 + $0x960] sm:$0xff]
    %v487 = vld [vmem:[#allocation7 + $0x968] sm:$0xff]
    %v488 = vld [vmem:[#allocation7 + $0x970] sm:$0xff]
    %v489 = vld [vmem:[#allocation7 + $0x978] sm:$0xff]
    %v490 = vld [vmem:[#allocation7 + $0x980] sm:$0xff]
    %v491 = vld [vmem:[#allocation7 + $0x988] sm:$0xff]
    %v492 = vld [vmem:[#allocation7 + $0x990] sm:$0xff]
    %v493 = vld [vmem:[#allocation7 + $0x998] sm:$0xff]
    %v494 = vld [vmem:[#allocation7 + $0x9a0] sm:$0xff]
    %v495 = vld [vmem:[#allocation7 + $0x9a8] sm:$0xff]
    %v496 = vld [vmem:[#allocation7 + $0x9b0] sm:$0xff]
    %v497 = vld [vmem:[#allocation7 + $0x9b8] sm:$0xff]
    %v498 = vld [vmem:[#allocation7 + $0x9c0] sm:$0xff]
    %v499 = vld [vmem:[#allocation7 + $0x9c8] sm:$0xff]
    %v500 = vld [vmem:[#allocation7 + $0x9d0] sm:$0xff]
    %v501 = vld [vmem:[#allocation7 + $0x9d8] sm:$0xff]
    %v502 = vld [vmem:[#allocation7 + $0x9e0] sm:$0xff]
    %v503 = vld [vmem:[#allocation7 + $0x9e8] sm:$0xff]
    %v504 = vld [vmem:[#allocation7 + $0x9f0] sm:$0xff]
    %v505 = vld [vmem:[#allocation7 + $0x9f8] sm:$0xff]
    %v506 = vld [vmem:[#allocation7 + $0xa00] sm:$0xff]
    %v507 = vld [vmem:[#allocation7 + $0xa08] sm:$0xff]
    %v508 = vld [vmem:[#allocation7 + $0xa10] sm:$0xff]
    %v509 = vld [vmem:[#allocation7 + $0xa18] sm:$0xff]
    %v510 = vld [vmem:[#allocation7 + $0xa20] sm:$0xff]
    %v511 = vld [vmem:[#allocation7 + $0xa28] sm:$0xff]
    %v512 = vld [vmem:[#allocation7 + $0xa30] sm:$0xff]
    %v513 = vld [vmem:[#allocation7 + $0xa38] sm:$0xff]
    %v514 = vld [vmem:[#allocation7 + $0xa40] sm:$0xff]
    %v515 = vld [vmem:[#allocation7 + $0xa48] sm:$0xff]
    %v516 = vld [vmem:[#allocation7 + $0xa50] sm:$0xff]
    %v517 = vld [vmem:[#allocation7 + $0xa58] sm:$0xff]
    %v518 = vld [vmem:[#allocation7 + $0xa60] sm:$0xff]
    %v519 = vld [vmem:[#allocation7 + $0xa68] sm:$0xff]
    %v520 = vld [vmem:[#allocation7 + $0xa70] sm:$0xff]
    %v521 = vld [vmem:[#allocation7 + $0xa78] sm:$0xff]
    %v522 = vld [vmem:[#allocation7 + $0xa80] sm:$0xff]
    %v523 = vld [vmem:[#allocation7 + $0xa88] sm:$0xff]
    %v524 = vld [vmem:[#allocation7 + $0xa90] sm:$0xff]
    %v525 = vld [vmem:[#allocation7 + $0xa98] sm:$0xff]
    %v526 = vld [vmem:[#allocation7 + $0xaa0] sm:$0xff]
    %v527 = vld [vmem:[#allocation7 + $0xaa8] sm:$0xff]
    %v528 = vld [vmem:[#allocation7 + $0xab0] sm:$0xff]
    %v529 = vld [vmem:[#allocation7 + $0xab8] sm:$0xff]
    %v530 = vld [vmem:[#allocation7 + $0xac0] sm:$0xff]
    %v531 = vld [vmem:[#allocation7 + $0xac8] sm:$0xff]
    %v532 = vld [vmem:[#allocation7 + $0xad0] sm:$0xff]
    %v533 = vld [vmem:[#allocation7 + $0xad8] sm:$0xff]
    %v534 = vld [vmem:[#allocation7 + $0xae0] sm:$0xff]
    %v535 = vld [vmem:[#allocation7 + $0xae8] sm:$0xff]
    %v536 = vld [vmem:[#allocation7 + $0xaf0] sm:$0xff]
    %v537 = vld [vmem:[#allocation7 + $0xaf8] sm:$0xff]
    %v538 = vld [vmem:[#allocation7 + $0xb00] sm:$0xff]
    %v539 = vld [vmem:[#allocation7 + $0xb08] sm:$0xff]
    %v540 = vld [vmem:[#allocation7 + $0xb10] sm:$0xff]
    %v541 = vld [vmem:[#allocation7 + $0xb18] sm:$0xff]
    %v542 = vld [vmem:[#allocation7 + $0xb20] sm:$0xff]
    %v543 = vld [vmem:[#allocation7 + $0xb28] sm:$0xff]
    %v544 = vld [vmem:[#allocation7 + $0xb30] sm:$0xff]
    %v545 = vld [vmem:[#allocation7 + $0xb38] sm:$0xff]
    %v546 = vld [vmem:[#allocation7 + $0xb40] sm:$0xff]
    %v547 = vld [vmem:[#allocation7 + $0xb48] sm:$0xff]
    %v548 = vld [vmem:[#allocation7 + $0xb50] sm:$0xff]
    %v549 = vld [vmem:[#allocation7 + $0xb58] sm:$0xff]
    %v550 = vld [vmem:[#allocation7 + $0xb60] sm:$0xff]
    %v551 = vld [vmem:[#allocation7 + $0xb68] sm:$0xff]
    %v552 = vld [vmem:[#allocation7 + $0xb70] sm:$0xff]
    %v553 = vld [vmem:[#allocation7 + $0xb78] sm:$0xff]
    %v554 = vld [vmem:[#allocation7 + $0xb80] sm:$0xff]
    %v555 = vld [vmem:[#allocation7 + $0xb88] sm:$0xff]
    %v556 = vld [vmem:[#allocation7 + $0xb90] sm:$0xff]
    %v557 = vld [vmem:[#allocation7 + $0xb98] sm:$0xff]
    %v558 = vld [vmem:[#allocation7 + $0xba0] sm:$0xff]
    %v559 = vld [vmem:[#allocation7 + $0xba8] sm:$0xff]
    %v560 = vld [vmem:[#allocation7 + $0xbb0] sm:$0xff]
    %v561 = vld [vmem:[#allocation7 + $0xbb8] sm:$0xff]
    %v562 = vld [vmem:[#allocation7 + $0xbc0] sm:$0xff]
    %v563 = vld [vmem:[#allocation7 + $0xbc8] sm:$0xff]
    %v564 = vld [vmem:[#allocation7 + $0xbd0] sm:$0xff]
    %v565 = vld [vmem:[#allocation7 + $0xbd8] sm:$0xff]
    %v566 = vld [vmem:[#allocation7 + $0xbe0] sm:$0xff]
    %v567 = vld [vmem:[#allocation7 + $0xbe8] sm:$0xff]
    %v568 = vld [vmem:[#allocation7 + $0xbf0] sm:$0xff]
    %v569 = vld [vmem:[#allocation7 + $0xbf8] sm:$0xff]
    %v570 = vld [vmem:[#allocation7 + $0xc00] sm:$0xff]
    %v571 = vld [vmem:[#allocation7 + $0xc08] sm:$0xff]
    %v572 = vld [vmem:[#allocation7 + $0xc10] sm:$0xff]
    %v573 = vld [vmem:[#allocation7 + $0xc18] sm:$0xff]
    %v574 = vld [vmem:[#allocation7 + $0xc20] sm:$0xff]
    %v575 = vld [vmem:[#allocation7 + $0xc28] sm:$0xff]
    %v576 = vld [vmem:[#allocation7 + $0xc30] sm:$0xff]
    %v577 = vld [vmem:[#allocation7 + $0xc38] sm:$0xff]
    %v578 = vld [vmem:[#allocation7 + $0xc40] sm:$0xff]
    %v579 = vld [vmem:[#allocation7 + $0xc48] sm:$0xff]
    %v580 = vld [vmem:[#allocation7 + $0xc50] sm:$0xff]
    %v581 = vld [vmem:[#allocation7 + $0xc58] sm:$0xff]
    %v582 = vld [vmem:[#allocation7 + $0xc60] sm:$0xff]
    %v583 = vld [vmem:[#allocation7 + $0xc68] sm:$0xff]
    %v584 = vld [vmem:[#allocation7 + $0xc70] sm:$0xff]
    %v585 = vld [vmem:[#allocation7 + $0xc78] sm:$0xff]
    %v586 = vld [vmem:[#allocation7 + $0xc80] sm:$0xff]
    %v587 = vld [vmem:[#allocation7 + $0xc88] sm:$0xff]
    %v588 = vld [vmem:[#allocation7 + $0xc90] sm:$0xff]
    %v589 = vld [vmem:[#allocation7 + $0xc98] sm:$0xff]
    %v590 = vld [vmem:[#allocation7 + $0xca0] sm:$0xff]
    %v591 = vld [vmem:[#allocation7 + $0xca8] sm:$0xff]
    %v592 = vld [vmem:[#allocation7 + $0xcb0] sm:$0xff]
    %v593 = vld [vmem:[#allocation7 + $0xcb8] sm:$0xff]
    %v594 = vld [vmem:[#allocation7 + $0xcc0] sm:$0xff]
    %v595 = vld [vmem:[#allocation7 + $0xcc8] sm:$0xff]
    %v596 = vld [vmem:[#allocation7 + $0xcd0] sm:$0xff]
    %v597 = vld [vmem:[#allocation7 + $0xcd8] sm:$0xff]
    %v598 = vld [vmem:[#allocation7 + $0xce0] sm:$0xff]
    %v599 = vld [vmem:[#allocation7 + $0xce8] sm:$0xff]
    %v600 = vld [vmem:[#allocation7 + $0xcf0] sm:$0xff]
    %v601 = vld [vmem:[#allocation7 + $0xcf8] sm:$0xff]
    %v602 = vld [vmem:[#allocation7 + $0xd00] sm:$0xff]
    %v603 = vld [vmem:[#allocation7 + $0xd08] sm:$0xff]
    %v604 = vld [vmem:[#allocation7 + $0xd10] sm:$0xff]
    %v605 = vld [vmem:[#allocation7 + $0xd18] sm:$0xff]
    %v606 = vld [vmem:[#allocation7 + $0xd20] sm:$0xff]
    %v607 = vld [vmem:[#allocation7 + $0xd28] sm:$0xff]
    %v608 = vld [vmem:[#allocation7 + $0xd30] sm:$0xff]
    %v609 = vld [vmem:[#allocation7 + $0xd38] sm:$0xff]
    %v610 = vld [vmem:[#allocation7 + $0xd40] sm:$0xff]
    %v611 = vld [vmem:[#allocation7 + $0xd48] sm:$0xff]
    %v612 = vld [vmem:[#allocation7 + $0xd50] sm:$0xff]
    %v613 = vld [vmem:[#allocation7 + $0xd58] sm:$0xff]
    %v614 = vld [vmem:[#allocation7 + $0xd60] sm:$0xff]
    %v615 = vld [vmem:[#allocation7 + $0xd68] sm:$0xff]
    %v616 = vld [vmem:[#allocation7 + $0xd70] sm:$0xff]
    %v617 = vld [vmem:[#allocation7 + $0xd78] sm:$0xff]
    %v618 = vld [vmem:[#allocation7 + $0xd80] sm:$0xff]
    %v619 = vld [vmem:[#allocation7 + $0xd88] sm:$0xff]
    %v620 = vld [vmem:[#allocation7 + $0xd90] sm:$0xff]
    %v621 = vld [vmem:[#allocation7 + $0xd98] sm:$0xff]
    %v622 = vld [vmem:[#allocation7 + $0xda0] sm:$0xff]
    %v623 = vld [vmem:[#allocation7 + $0xda8] sm:$0xff]
    %v624 = vld [vmem:[#allocation7 + $0xdb0] sm:$0xff]
    %v625 = vld [vmem:[#allocation7 + $0xdb8] sm:$0xff]
    %v626 = vld [vmem:[#allocation7 + $0xdc0] sm:$0xff]
    %v627 = vld [vmem:[#allocation7 + $0xdc8] sm:$0xff]
    %v628 = vld [vmem:[#allocation7 + $0xdd0] sm:$0xff]
    %v629 = vld [vmem:[#allocation7 + $0xdd8] sm:$0xff]
    %v630 = vld [vmem:[#allocation7 + $0xde0] sm:$0xff]
    %v631 = vld [vmem:[#allocation7 + $0xde8] sm:$0xff]
    %v632 = vld [vmem:[#allocation7 + $0xdf0] sm:$0xff]
    %v633 = vld [vmem:[#allocation7 + $0xdf8] sm:$0xff]
    %v634 = vld [vmem:[#allocation7 + $0xe00] sm:$0xff]
    %v635 = vld [vmem:[#allocation7 + $0xe08] sm:$0xff]
    %v636 = vld [vmem:[#allocation7 + $0xe10] sm:$0xff]
    %v637 = vld [vmem:[#allocation7 + $0xe18] sm:$0xff]
    %v638 = vld [vmem:[#allocation7 + $0xe20] sm:$0xff]
    %v639 = vld [vmem:[#allocation7 + $0xe28] sm:$0xff]
    %v640 = vld [vmem:[#allocation7 + $0xe30] sm:$0xff]
    %v641 = vld [vmem:[#allocation7 + $0xe38] sm:$0xff]
    %v642 = vld [vmem:[#allocation7 + $0xe40] sm:$0xff]
    %v643 = vld [vmem:[#allocation7 + $0xe48] sm:$0xff]
    %v644 = vld [vmem:[#allocation7 + $0xe50] sm:$0xff]
    %v645 = vld [vmem:[#allocation7 + $0xe58] sm:$0xff]
    %v646 = vld [vmem:[#allocation7 + $0xe60] sm:$0xff]
    %v647 = vld [vmem:[#allocation7 + $0xe68] sm:$0xff]
    %v648 = vld [vmem:[#allocation7 + $0xe70] sm:$0xff]
    %v649 = vld [vmem:[#allocation7 + $0xe78] sm:$0xff]
    %v650 = vld [vmem:[#allocation7 + $0xe80] sm:$0xff]
    %v651 = vld [vmem:[#allocation7 + $0xe88] sm:$0xff]
    %v652 = vld [vmem:[#allocation7 + $0xe90] sm:$0xff]
    %v653 = vld [vmem:[#allocation7 + $0xe98] sm:$0xff]
    %v654 = vld [vmem:[#allocation7 + $0xea0] sm:$0xff]
    %v655 = vld [vmem:[#allocation7 + $0xea8] sm:$0xff]
    %v656 = vld [vmem:[#allocation7 + $0xeb0] sm:$0xff]
    %v657 = vld [vmem:[#allocation7 + $0xeb8] sm:$0xff]
    %v658 = vld [vmem:[#allocation7 + $0xec0] sm:$0xff]
    %v659 = vld [vmem:[#allocation7 + $0xec8] sm:$0xff]
    %v660 = vld [vmem:[#allocation7 + $0xed0] sm:$0xff]
    %v661 = vld [vmem:[#allocation7 + $0xed8] sm:$0xff]
    %v662 = vld [vmem:[#allocation7 + $0xee0] sm:$0xff]
    %v663 = vld [vmem:[#allocation7 + $0xee8] sm:$0xff]
    %v664 = vld [vmem:[#allocation7 + $0xef0] sm:$0xff]
    %v665 = vld [vmem:[#allocation7 + $0xef8] sm:$0xff]
    %v666 = vld [vmem:[#allocation7 + $0xf00] sm:$0xff]
    %v667 = vld [vmem:[#allocation7 + $0xf08] sm:$0xff]
    %v668 = vld [vmem:[#allocation7 + $0xf10] sm:$0xff]
    %v669 = vld [vmem:[#allocation7 + $0xf18] sm:$0xff]
    %v670 = vld [vmem:[#allocation7 + $0xf20] sm:$0xff]
    %v671 = vld [vmem:[#allocation7 + $0xf28] sm:$0xff]
    %v672 = vld [vmem:[#allocation7 + $0xf30] sm:$0xff]
    %v673 = vld [vmem:[#allocation7 + $0xf38] sm:$0xff]
    %v674 = vld [vmem:[#allocation7 + $0xf40] sm:$0xff]
    %v675 = vld [vmem:[#allocation7 + $0xf48] sm:$0xff]
    %v676 = vld [vmem:[#allocation7 + $0xf50] sm:$0xff]
    %v677 = vld [vmem:[#allocation7 + $0xf58] sm:$0xff]
    %v678 = vld [vmem:[#allocation7 + $0xf60] sm:$0xff]
    %v679 = vld [vmem:[#allocation7 + $0xf68] sm:$0xff]
    %v680 = vld [vmem:[#allocation7 + $0xf70] sm:$0xff]
    %v681 = vld [vmem:[#allocation7 + $0xf78] sm:$0xff]
    %v682 = vld [vmem:[#allocation7 + $0xf80] sm:$0xff]
    %v683 = vld [vmem:[#allocation7 + $0xf88] sm:$0xff]
    %v684 = vld [vmem:[#allocation7 + $0xf90] sm:$0xff]
    %v685 = vld [vmem:[#allocation7 + $0xf98] sm:$0xff]
    %v686 = vld [vmem:[#allocation7 + $0xfa0] sm:$0xff]
    %v687 = vld [vmem:[#allocation7 + $0xfa8] sm:$0xff]
    %v688 = vld [vmem:[#allocation7 + $0xfb0] sm:$0xff]
    %v689 = vld [vmem:[#allocation7 + $0xfb8] sm:$0xff]
    %v690 = vld [vmem:[#allocation7 + $0xfc0] sm:$0xff]
    %v691 = vld [vmem:[#allocation7 + $0xfc8] sm:$0xff]
    %v692 = vld [vmem:[#allocation7 + $0xfd0] sm:$0xff]
    %v693 = vld [vmem:[#allocation7 + $0xfd8] sm:$0xff]
    %v694 = vld [vmem:[#allocation7 + $0xfe0] sm:$0xff]
    %v695 = vld [vmem:[#allocation7 + $0xfe8] sm:$0xff]
    %v696 = vld [vmem:[#allocation7 + $0xff0] sm:$0xff]
    %v697 = vld [vmem:[#allocation7 + $0xff8] sm:$0xff]
    %v698 = vunpack.c.0.s8 %v186
    %v699 = vunpack.c.0.s8 %v187
    %v700 = vunpack.c.0.s8 %v188
    %v701 = vunpack.c.0.s8 %v189
    %v702 = vunpack.c.0.s8 %v190
    %v703 = vunpack.c.0.s8 %v191
    %v704 = vunpack.c.0.s8 %v192
    %v705 = vunpack.c.0.s8 %v193
    %v706 = vunpack.c.0.s8 %v194
    %v707 = vunpack.c.0.s8 %v195
    %v708 = vunpack.c.0.s8 %v196
    %v709 = vunpack.c.0.s8 %v197
    %v710 = vunpack.c.0.s8 %v198
    %v711 = vunpack.c.0.s8 %v199
    %v712 = vunpack.c.0.s8 %v200
    %v713 = vunpack.c.0.s8 %v201
    %v714 = vunpack.c.1.s8 %v186
    %v715 = vunpack.c.1.s8 %v187
    %v716 = vunpack.c.1.s8 %v188
    %v717 = vunpack.c.1.s8 %v189
    %v718 = vunpack.c.1.s8 %v190
    %v719 = vunpack.c.1.s8 %v191
    %v720 = vunpack.c.1.s8 %v192
    %v721 = vunpack.c.1.s8 %v193
    %v722 = vunpack.c.1.s8 %v194
    %v723 = vunpack.c.1.s8 %v195
    %v724 = vunpack.c.1.s8 %v196
    %v725 = vunpack.c.1.s8 %v197
    %v726 = vunpack.c.1.s8 %v198
    %v727 = vunpack.c.1.s8 %v199
    %v728 = vunpack.c.1.s8 %v200
    %v729 = vunpack.c.1.s8 %v201
    %v730 = vunpack.c.2.s8 %v186
    %v731 = vunpack.c.2.s8 %v187
    %v732 = vunpack.c.2.s8 %v188
    %v733 = vunpack.c.2.s8 %v189
    %v734 = vunpack.c.2.s8 %v190
    %v735 = vunpack.c.2.s8 %v191
    %v736 = vunpack.c.2.s8 %v192
    %v737 = vunpack.c.2.s8 %v193
    %v738 = vunpack.c.2.s8 %v194
    %v739 = vunpack.c.2.s8 %v195
    %v740 = vunpack.c.2.s8 %v196
    %v741 = vunpack.c.2.s8 %v197
    %v742 = vunpack.c.2.s8 %v198
    %v743 = vunpack.c.2.s8 %v199
    %v744 = vunpack.c.2.s8 %v200
    %v745 = vunpack.c.2.s8 %v201
    %v746 = vunpack.c.3.s8 %v186
    %v747 = vunpack.c.3.s8 %v187
    %v748 = vunpack.c.3.s8 %v188
    %v749 = vunpack.c.3.s8 %v189
    %v750 = vunpack.c.3.s8 %v190
    %v751 = vunpack.c.3.s8 %v191
    %v752 = vunpack.c.3.s8 %v192
    %v753 = vunpack.c.3.s8 %v193
    %v754 = vunpack.c.3.s8 %v194
    %v755 = vunpack.c.3.s8 %v195
    %v756 = vunpack.c.3.s8 %v196
    %v757 = vunpack.c.3.s8 %v197
    %v758 = vunpack.c.3.s8 %v198
    %v759 = vunpack.c.3.s8 %v199
    %v760 = vunpack.c.3.s8 %v200
    %v761 = vunpack.c.3.s8 %v201
    %v762 = vunpack.c.0.s8 %v202
    %v763 = vunpack.c.0.s8 %v203
    %v764 = vunpack.c.0.s8 %v204
    %v765 = vunpack.c.0.s8 %v205
    %v766 = vunpack.c.0.s8 %v206
    %v767 = vunpack.c.0.s8 %v207
    %v768 = vunpack.c.0.s8 %v208
    %v769 = vunpack.c.0.s8 %v209
    %v770 = vunpack.c.0.s8 %v210
    %v771 = vunpack.c.0.s8 %v211
    %v772 = vunpack.c.0.s8 %v212
    %v773 = vunpack.c.0.s8 %v213
    %v774 = vunpack.c.0.s8 %v214
    %v775 = vunpack.c.0.s8 %v215
    %v776 = vunpack.c.0.s8 %v216
    %v777 = vunpack.c.0.s8 %v217
    %v778 = vunpack.c.1.s8 %v202
    %v779 = vunpack.c.1.s8 %v203
    %v780 = vunpack.c.1.s8 %v204
    %v781 = vunpack.c.1.s8 %v205
    %v782 = vunpack.c.1.s8 %v206
    %v783 = vunpack.c.1.s8 %v207
    %v784 = vunpack.c.1.s8 %v208
    %v785 = vunpack.c.1.s8 %v209
    %v786 = vunpack.c.1.s8 %v210
    %v787 = vunpack.c.1.s8 %v211
    %v788 = vunpack.c.1.s8 %v212
    %v789 = vunpack.c.1.s8 %v213
    %v790 = vunpack.c.1.s8 %v214
    %v791 = vunpack.c.1.s8 %v215
    %v792 = vunpack.c.1.s8 %v216
    %v793 = vunpack.c.1.s8 %v217
    %v794 = vunpack.c.2.s8 %v202
    %v795 = vunpack.c.2.s8 %v203
    %v796 = vunpack.c.2.s8 %v204
    %v797 = vunpack.c.2.s8 %v205
    %v798 = vunpack.c.2.s8 %v206
    %v799 = vunpack.c.2.s8 %v207
    %v800 = vunpack.c.2.s8 %v208
    %v801 = vunpack.c.2.s8 %v209
    %v802 = vunpack.c.2.s8 %v210
    %v803 = vunpack.c.2.s8 %v211
    %v804 = vunpack.c.2.s8 %v212
    %v805 = vunpack.c.2.s8 %v213
    %v806 = vunpack.c.2.s8 %v214
    %v807 = vunpack.c.2.s8 %v215
    %v808 = vunpack.c.2.s8 %v216
    %v809 = vunpack.c.2.s8 %v217
    %v810 = vunpack.c.3.s8 %v202
    %v811 = vunpack.c.3.s8 %v203
    %v812 = vunpack.c.3.s8 %v204
    %v813 = vunpack.c.3.s8 %v205
    %v814 = vunpack.c.3.s8 %v206
    %v815 = vunpack.c.3.s8 %v207
    %v816 = vunpack.c.3.s8 %v208
    %v817 = vunpack.c.3.s8 %v209
    %v818 = vunpack.c.3.s8 %v210
    %v819 = vunpack.c.3.s8 %v211
    %v820 = vunpack.c.3.s8 %v212
    %v821 = vunpack.c.3.s8 %v213
    %v822 = vunpack.c.3.s8 %v214
    %v823 = vunpack.c.3.s8 %v215
    %v824 = vunpack.c.3.s8 %v216
    %v825 = vunpack.c.3.s8 %v217
    %v826 = vunpack.c.0.s8 %v218
    %v827 = vunpack.c.0.s8 %v219
    %v828 = vunpack.c.0.s8 %v220
    %v829 = vunpack.c.0.s8 %v221
    %v830 = vunpack.c.0.s8 %v222
    %v831 = vunpack.c.0.s8 %v223
    %v832 = vunpack.c.0.s8 %v224
    %v833 = vunpack.c.0.s8 %v225
    %v834 = vunpack.c.0.s8 %v226
    %v835 = vunpack.c.0.s8 %v227
    %v836 = vunpack.c.0.s8 %v228
    %v837 = vunpack.c.0.s8 %v229
    %v838 = vunpack.c.0.s8 %v230
    %v839 = vunpack.c.0.s8 %v231
    %v840 = vunpack.c.0.s8 %v232
    %v841 = vunpack.c.0.s8 %v233
    %v842 = vunpack.c.1.s8 %v218
    %v843 = vunpack.c.1.s8 %v219
    %v844 = vunpack.c.1.s8 %v220
    %v845 = vunpack.c.1.s8 %v221
    %v846 = vunpack.c.1.s8 %v222
    %v847 = vunpack.c.1.s8 %v223
    %v848 = vunpack.c.1.s8 %v224
    %v849 = vunpack.c.1.s8 %v225
    %v850 = vunpack.c.1.s8 %v226
    %v851 = vunpack.c.1.s8 %v227
    %v852 = vunpack.c.1.s8 %v228
    %v853 = vunpack.c.1.s8 %v229
    %v854 = vunpack.c.1.s8 %v230
    %v855 = vunpack.c.1.s8 %v231
    %v856 = vunpack.c.1.s8 %v232
    %v857 = vunpack.c.1.s8 %v233
    %v858 = vunpack.c.2.s8 %v218
    %v859 = vunpack.c.2.s8 %v219
    %v860 = vunpack.c.2.s8 %v220
    %v861 = vunpack.c.2.s8 %v221
    %v862 = vunpack.c.2.s8 %v222
    %v863 = vunpack.c.2.s8 %v223
    %v864 = vunpack.c.2.s8 %v224
    %v865 = vunpack.c.2.s8 %v225
    %v866 = vunpack.c.2.s8 %v226
    %v867 = vunpack.c.2.s8 %v227
    %v868 = vunpack.c.2.s8 %v228
    %v869 = vunpack.c.2.s8 %v229
    %v870 = vunpack.c.2.s8 %v230
    %v871 = vunpack.c.2.s8 %v231
    %v872 = vunpack.c.2.s8 %v232
    %v873 = vunpack.c.2.s8 %v233
    %v874 = vunpack.c.3.s8 %v218
    %v875 = vunpack.c.3.s8 %v219
    %v876 = vunpack.c.3.s8 %v220
    %v877 = vunpack.c.3.s8 %v221
    %v878 = vunpack.c.3.s8 %v222
    %v879 = vunpack.c.3.s8 %v223
    %v880 = vunpack.c.3.s8 %v224
    %v881 = vunpack.c.3.s8 %v225
    %v882 = vunpack.c.3.s8 %v226
    %v883 = vunpack.c.3.s8 %v227
    %v884 = vunpack.c.3.s8 %v228
    %v885 = vunpack.c.3.s8 %v229
    %v886 = vunpack.c.3.s8 %v230
    %v887 = vunpack.c.3.s8 %v231
    %v888 = vunpack.c.3.s8 %v232
    %v889 = vunpack.c.3.s8 %v233
    %v890 = vunpack.c.0.s8 %v234
    %v891 = vunpack.c.0.s8 %v235
    %v892 = vunpack.c.0.s8 %v236
    %v893 = vunpack.c.0.s8 %v237
    %v894 = vunpack.c.0.s8 %v238
    %v895 = vunpack.c.0.s8 %v239
    %v896 = vunpack.c.0.s8 %v240
    %v897 = vunpack.c.0.s8 %v241
    %v898 = vunpack.c.0.s8 %v242
    %v899 = vunpack.c.0.s8 %v243
    %v900 = vunpack.c.0.s8 %v244
    %v901 = vunpack.c.0.s8 %v245
    %v902 = vunpack.c.0.s8 %v246
    %v903 = vunpack.c.0.s8 %v247
    %v904 = vunpack.c.0.s8 %v248
    %v905 = vunpack.c.0.s8 %v249
    %v906 = vunpack.c.1.s8 %v234
    %v907 = vunpack.c.1.s8 %v235
    %v908 = vunpack.c.1.s8 %v236
    %v909 = vunpack.c.1.s8 %v237
    %v910 = vunpack.c.1.s8 %v238
    %v911 = vunpack.c.1.s8 %v239
    %v912 = vunpack.c.1.s8 %v240
    %v913 = vunpack.c.1.s8 %v241
    %v914 = vunpack.c.1.s8 %v242
    %v915 = vunpack.c.1.s8 %v243
    %v916 = vunpack.c.1.s8 %v244
    %v917 = vunpack.c.1.s8 %v245
    %v918 = vunpack.c.1.s8 %v246
    %v919 = vunpack.c.1.s8 %v247
    %v920 = vunpack.c.1.s8 %v248
    %v921 = vunpack.c.1.s8 %v249
    %v922 = vunpack.c.2.s8 %v234
    %v923 = vunpack.c.2.s8 %v235
    %v924 = vunpack.c.2.s8 %v236
    %v925 = vunpack.c.2.s8 %v237
    %v926 = vunpack.c.2.s8 %v238
    %v927 = vunpack.c.2.s8 %v239
    %v928 = vunpack.c.2.s8 %v240
    %v929 = vunpack.c.2.s8 %v241
    %v930 = vunpack.c.2.s8 %v242
    %v931 = vunpack.c.2.s8 %v243
    %v932 = vunpack.c.2.s8 %v244
    %v933 = vunpack.c.2.s8 %v245
    %v934 = vunpack.c.2.s8 %v246
    %v935 = vunpack.c.2.s8 %v247
    %v936 = vunpack.c.2.s8 %v248
    %v937 = vunpack.c.2.s8 %v249
    %v938 = vunpack.c.3.s8 %v234
    %v939 = vunpack.c.3.s8 %v235
    %v940 = vunpack.c.3.s8 %v236
    %v941 = vunpack.c.3.s8 %v237
    %v942 = vunpack.c.3.s8 %v238
    %v943 = vunpack.c.3.s8 %v239
    %v944 = vunpack.c.3.s8 %v240
    %v945 = vunpack.c.3.s8 %v241
    %v946 = vunpack.c.3.s8 %v242
    %v947 = vunpack.c.3.s8 %v243
    %v948 = vunpack.c.3.s8 %v244
    %v949 = vunpack.c.3.s8 %v245
    %v950 = vunpack.c.3.s8 %v246
    %v951 = vunpack.c.3.s8 %v247
    %v952 = vunpack.c.3.s8 %v248
    %v953 = vunpack.c.3.s8 %v249
    %v954 = vunpack.c.0.s8 %v250
    %v955 = vunpack.c.0.s8 %v251
    %v956 = vunpack.c.0.s8 %v252
    %v957 = vunpack.c.0.s8 %v253
    %v958 = vunpack.c.0.s8 %v254
    %v959 = vunpack.c.0.s8 %v255
    %v960 = vunpack.c.0.s8 %v256
    %v961 = vunpack.c.0.s8 %v257
    %v962 = vunpack.c.0.s8 %v258
    %v963 = vunpack.c.0.s8 %v259
    %v964 = vunpack.c.0.s8 %v260
    %v965 = vunpack.c.0.s8 %v261
    %v966 = vunpack.c.0.s8 %v262
    %v967 = vunpack.c.0.s8 %v263
    %v968 = vunpack.c.0.s8 %v264
    %v969 = vunpack.c.0.s8 %v265
    %v970 = vunpack.c.1.s8 %v250
    %v971 = vunpack.c.1.s8 %v251
    %v972 = vunpack.c.1.s8 %v252
    %v973 = vunpack.c.1.s8 %v253
    %v974 = vunpack.c.1.s8 %v254
    %v975 = vunpack.c.1.s8 %v255
    %v976 = vunpack.c.1.s8 %v256
    %v977 = vunpack.c.1.s8 %v257
    %v978 = vunpack.c.1.s8 %v258
    %v979 = vunpack.c.1.s8 %v259
    %v980 = vunpack.c.1.s8 %v260
    %v981 = vunpack.c.1.s8 %v261
    %v982 = vunpack.c.1.s8 %v262
    %v983 = vunpack.c.1.s8 %v263
    %v984 = vunpack.c.1.s8 %v264
    %v985 = vunpack.c.1.s8 %v265
    %v986 = vunpack.c.2.s8 %v250
    %v987 = vunpack.c.2.s8 %v251
    %v988 = vunpack.c.2.s8 %v252
    %v989 = vunpack.c.2.s8 %v253
    %v990 = vunpack.c.2.s8 %v254
    %v991 = vunpack.c.2.s8 %v255
    %v992 = vunpack.c.2.s8 %v256
    %v993 = vunpack.c.2.s8 %v257
    %v994 = vunpack.c.2.s8 %v258
    %v995 = vunpack.c.2.s8 %v259
    %v996 = vunpack.c.2.s8 %v260
    %v997 = vunpack.c.2.s8 %v261
    %v998 = vunpack.c.2.s8 %v262
    %v999 = vunpack.c.2.s8 %v263
    %v1000 = vunpack.c.2.s8 %v264
    %v1001 = vunpack.c.2.s8 %v265
    %v1002 = vunpack.c.3.s8 %v250
    %v1003 = vunpack.c.3.s8 %v251
    %v1004 = vunpack.c.3.s8 %v252
    %v1005 = vunpack.c.3.s8 %v253
    %v1006 = vunpack.c.3.s8 %v254
    %v1007 = vunpack.c.3.s8 %v255
    %v1008 = vunpack.c.3.s8 %v256
    %v1009 = vunpack.c.3.s8 %v257
    %v1010 = vunpack.c.3.s8 %v258
    %v1011 = vunpack.c.3.s8 %v259
    %v1012 = vunpack.c.3.s8 %v260
    %v1013 = vunpack.c.3.s8 %v261
    %v1014 = vunpack.c.3.s8 %v262
    %v1015 = vunpack.c.3.s8 %v263
    %v1016 = vunpack.c.3.s8 %v264
    %v1017 = vunpack.c.3.s8 %v265
    %v1018 = vunpack.c.0.s8 %v266
    %v1019 = vunpack.c.0.s8 %v267
    %v1020 = vunpack.c.0.s8 %v268
    %v1021 = vunpack.c.0.s8 %v269
    %v1022 = vunpack.c.0.s8 %v270
    %v1023 = vunpack.c.0.s8 %v271
    %v1024 = vunpack.c.0.s8 %v272
    %v1025 = vunpack.c.0.s8 %v273
    %v1026 = vunpack.c.0.s8 %v274
    %v1027 = vunpack.c.0.s8 %v275
    %v1028 = vunpack.c.0.s8 %v276
    %v1029 = vunpack.c.0.s8 %v277
    %v1030 = vunpack.c.0.s8 %v278
    %v1031 = vunpack.c.0.s8 %v279
    %v1032 = vunpack.c.0.s8 %v280
    %v1033 = vunpack.c.0.s8 %v281
    %v1034 = vunpack.c.1.s8 %v266
    %v1035 = vunpack.c.1.s8 %v267
    %v1036 = vunpack.c.1.s8 %v268
    %v1037 = vunpack.c.1.s8 %v269
    %v1038 = vunpack.c.1.s8 %v270
    %v1039 = vunpack.c.1.s8 %v271
    %v1040 = vunpack.c.1.s8 %v272
    %v1041 = vunpack.c.1.s8 %v273
    %v1042 = vunpack.c.1.s8 %v274
    %v1043 = vunpack.c.1.s8 %v275
    %v1044 = vunpack.c.1.s8 %v276
    %v1045 = vunpack.c.1.s8 %v277
    %v1046 = vunpack.c.1.s8 %v278
    %v1047 = vunpack.c.1.s8 %v279
    %v1048 = vunpack.c.1.s8 %v280
    %v1049 = vunpack.c.1.s8 %v281
    %v1050 = vunpack.c.2.s8 %v266
    %v1051 = vunpack.c.2.s8 %v267
    %v1052 = vunpack.c.2.s8 %v268
    %v1053 = vunpack.c.2.s8 %v269
    %v1054 = vunpack.c.2.s8 %v270
    %v1055 = vunpack.c.2.s8 %v271
    %v1056 = vunpack.c.2.s8 %v272
    %v1057 = vunpack.c.2.s8 %v273
    %v1058 = vunpack.c.2.s8 %v274
    %v1059 = vunpack.c.2.s8 %v275
    %v1060 = vunpack.c.2.s8 %v276
    %v1061 = vunpack.c.2.s8 %v277
    %v1062 = vunpack.c.2.s8 %v278
    %v1063 = vunpack.c.2.s8 %v279
    %v1064 = vunpack.c.2.s8 %v280
    %v1065 = vunpack.c.2.s8 %v281
    %v1066 = vunpack.c.3.s8 %v266
    %v1067 = vunpack.c.3.s8 %v267
    %v1068 = vunpack.c.3.s8 %v268
    %v1069 = vunpack.c.3.s8 %v269
    %v1070 = vunpack.c.3.s8 %v270
    %v1071 = vunpack.c.3.s8 %v271
    %v1072 = vunpack.c.3.s8 %v272
    %v1073 = vunpack.c.3.s8 %v273
    %v1074 = vunpack.c.3.s8 %v274
    %v1075 = vunpack.c.3.s8 %v275
    %v1076 = vunpack.c.3.s8 %v276
    %v1077 = vunpack.c.3.s8 %v277
    %v1078 = vunpack.c.3.s8 %v278
    %v1079 = vunpack.c.3.s8 %v279
    %v1080 = vunpack.c.3.s8 %v280
    %v1081 = vunpack.c.3.s8 %v281
    %v1082 = vunpack.c.0.s8 %v282
    %v1083 = vunpack.c.0.s8 %v283
    %v1084 = vunpack.c.0.s8 %v284
    %v1085 = vunpack.c.0.s8 %v285
    %v1086 = vunpack.c.0.s8 %v286
    %v1087 = vunpack.c.0.s8 %v287
    %v1088 = vunpack.c.0.s8 %v288
    %v1089 = vunpack.c.0.s8 %v289
    %v1090 = vunpack.c.0.s8 %v290
    %v1091 = vunpack.c.0.s8 %v291
    %v1092 = vunpack.c.0.s8 %v292
    %v1093 = vunpack.c.0.s8 %v293
    %v1094 = vunpack.c.0.s8 %v294
    %v1095 = vunpack.c.0.s8 %v295
    %v1096 = vunpack.c.0.s8 %v296
    %v1097 = vunpack.c.0.s8 %v297
    %v1098 = vunpack.c.1.s8 %v282
    %v1099 = vunpack.c.1.s8 %v283
    %v1100 = vunpack.c.1.s8 %v284
    %v1101 = vunpack.c.1.s8 %v285
    %v1102 = vunpack.c.1.s8 %v286
    %v1103 = vunpack.c.1.s8 %v287
    %v1104 = vunpack.c.1.s8 %v288
    %v1105 = vunpack.c.1.s8 %v289
    %v1106 = vunpack.c.1.s8 %v290
    %v1107 = vunpack.c.1.s8 %v291
    %v1108 = vunpack.c.1.s8 %v292
    %v1109 = vunpack.c.1.s8 %v293
    %v1110 = vunpack.c.1.s8 %v294
    %v1111 = vunpack.c.1.s8 %v295
    %v1112 = vunpack.c.1.s8 %v296
    %v1113 = vunpack.c.1.s8 %v297
    %v1114 = vunpack.c.2.s8 %v282
    %v1115 = vunpack.c.2.s8 %v283
    %v1116 = vunpack.c.2.s8 %v284
    %v1117 = vunpack.c.2.s8 %v285
    %v1118 = vunpack.c.2.s8 %v286
    %v1119 = vunpack.c.2.s8 %v287
    %v1120 = vunpack.c.2.s8 %v288
    %v1121 = vunpack.c.2.s8 %v289
    %v1122 = vunpack.c.2.s8 %v290
    %v1123 = vunpack.c.2.s8 %v291
    %v1124 = vunpack.c.2.s8 %v292
    %v1125 = vunpack.c.2.s8 %v293
    %v1126 = vunpack.c.2.s8 %v294
    %v1127 = vunpack.c.2.s8 %v295
    %v1128 = vunpack.c.2.s8 %v296
    %v1129 = vunpack.c.2.s8 %v297
    %v1130 = vunpack.c.3.s8 %v282
    %v1131 = vunpack.c.3.s8 %v283
    %v1132 = vunpack.c.3.s8 %v284
    %v1133 = vunpack.c.3.s8 %v285
    %v1134 = vunpack.c.3.s8 %v286
    %v1135 = vunpack.c.3.s8 %v287
    %v1136 = vunpack.c.3.s8 %v288
    %v1137 = vunpack.c.3.s8 %v289
    %v1138 = vunpack.c.3.s8 %v290
    %v1139 = vunpack.c.3.s8 %v291
    %v1140 = vunpack.c.3.s8 %v292
    %v1141 = vunpack.c.3.s8 %v293
    %v1142 = vunpack.c.3.s8 %v294
    %v1143 = vunpack.c.3.s8 %v295
    %v1144 = vunpack.c.3.s8 %v296
    %v1145 = vunpack.c.3.s8 %v297
    %v1146 = vunpack.c.0.s8 %v298
    %v1147 = vunpack.c.0.s8 %v299
    %v1148 = vunpack.c.0.s8 %v300
    %v1149 = vunpack.c.0.s8 %v301
    %v1150 = vunpack.c.0.s8 %v302
    %v1151 = vunpack.c.0.s8 %v303
    %v1152 = vunpack.c.0.s8 %v304
    %v1153 = vunpack.c.0.s8 %v305
    %v1154 = vunpack.c.0.s8 %v306
    %v1155 = vunpack.c.0.s8 %v307
    %v1156 = vunpack.c.0.s8 %v308
    %v1157 = vunpack.c.0.s8 %v309
    %v1158 = vunpack.c.0.s8 %v310
    %v1159 = vunpack.c.0.s8 %v311
    %v1160 = vunpack.c.0.s8 %v312
    %v1161 = vunpack.c.0.s8 %v313
    %v1162 = vunpack.c.1.s8 %v298
    %v1163 = vunpack.c.1.s8 %v299
    %v1164 = vunpack.c.1.s8 %v300
    %v1165 = vunpack.c.1.s8 %v301
    %v1166 = vunpack.c.1.s8 %v302
    %v1167 = vunpack.c.1.s8 %v303
    %v1168 = vunpack.c.1.s8 %v304
    %v1169 = vunpack.c.1.s8 %v305
    %v1170 = vunpack.c.1.s8 %v306
    %v1171 = vunpack.c.1.s8 %v307
    %v1172 = vunpack.c.1.s8 %v308
    %v1173 = vunpack.c.1.s8 %v309
    %v1174 = vunpack.c.1.s8 %v310
    %v1175 = vunpack.c.1.s8 %v311
    %v1176 = vunpack.c.1.s8 %v312
    %v1177 = vunpack.c.1.s8 %v313
    %v1178 = vunpack.c.2.s8 %v298
    %v1179 = vunpack.c.2.s8 %v299
    %v1180 = vunpack.c.2.s8 %v300
    %v1181 = vunpack.c.2.s8 %v301
    %v1182 = vunpack.c.2.s8 %v302
    %v1183 = vunpack.c.2.s8 %v303
    %v1184 = vunpack.c.2.s8 %v304
    %v1185 = vunpack.c.2.s8 %v305
    %v1186 = vunpack.c.2.s8 %v306
    %v1187 = vunpack.c.2.s8 %v307
    %v1188 = vunpack.c.2.s8 %v308
    %v1189 = vunpack.c.2.s8 %v309
    %v1190 = vunpack.c.2.s8 %v310
    %v1191 = vunpack.c.2.s8 %v311
    %v1192 = vunpack.c.2.s8 %v312
    %v1193 = vunpack.c.2.s8 %v313
    %v1194 = vunpack.c.3.s8 %v298
    %v1195 = vunpack.c.3.s8 %v299
    %v1196 = vunpack.c.3.s8 %v300
    %v1197 = vunpack.c.3.s8 %v301
    %v1198 = vunpack.c.3.s8 %v302
    %v1199 = vunpack.c.3.s8 %v303
    %v1200 = vunpack.c.3.s8 %v304
    %v1201 = vunpack.c.3.s8 %v305
    %v1202 = vunpack.c.3.s8 %v306
    %v1203 = vunpack.c.3.s8 %v307
    %v1204 = vunpack.c.3.s8 %v308
    %v1205 = vunpack.c.3.s8 %v309
    %v1206 = vunpack.c.3.s8 %v310
    %v1207 = vunpack.c.3.s8 %v311
    %v1208 = vunpack.c.3.s8 %v312
    %v1209 = vunpack.c.3.s8 %v313
    %v1210 = vunpack.c.0.s8 %v314
    %v1211 = vunpack.c.0.s8 %v315
    %v1212 = vunpack.c.0.s8 %v316
    %v1213 = vunpack.c.0.s8 %v317
    %v1214 = vunpack.c.0.s8 %v318
    %v1215 = vunpack.c.0.s8 %v319
    %v1216 = vunpack.c.0.s8 %v320
    %v1217 = vunpack.c.0.s8 %v321
    %v1218 = vunpack.c.0.s8 %v322
    %v1219 = vunpack.c.0.s8 %v323
    %v1220 = vunpack.c.0.s8 %v324
    %v1221 = vunpack.c.0.s8 %v325
    %v1222 = vunpack.c.0.s8 %v326
    %v1223 = vunpack.c.0.s8 %v327
    %v1224 = vunpack.c.0.s8 %v328
    %v1225 = vunpack.c.0.s8 %v329
    %v1226 = vunpack.c.1.s8 %v314
    %v1227 = vunpack.c.1.s8 %v315
    %v1228 = vunpack.c.1.s8 %v316
    %v1229 = vunpack.c.1.s8 %v317
    %v1230 = vunpack.c.1.s8 %v318
    %v1231 = vunpack.c.1.s8 %v319
    %v1232 = vunpack.c.1.s8 %v320
    %v1233 = vunpack.c.1.s8 %v321
    %v1234 = vunpack.c.1.s8 %v322
    %v1235 = vunpack.c.1.s8 %v323
    %v1236 = vunpack.c.1.s8 %v324
    %v1237 = vunpack.c.1.s8 %v325
    %v1238 = vunpack.c.1.s8 %v326
    %v1239 = vunpack.c.1.s8 %v327
    %v1240 = vunpack.c.1.s8 %v328
    %v1241 = vunpack.c.1.s8 %v329
    %v1242 = vunpack.c.2.s8 %v314
    %v1243 = vunpack.c.2.s8 %v315
    %v1244 = vunpack.c.2.s8 %v316
    %v1245 = vunpack.c.2.s8 %v317
    %v1246 = vunpack.c.2.s8 %v318
    %v1247 = vunpack.c.2.s8 %v319
    %v1248 = vunpack.c.2.s8 %v320
    %v1249 = vunpack.c.2.s8 %v321
    %v1250 = vunpack.c.2.s8 %v322
    %v1251 = vunpack.c.2.s8 %v323
    %v1252 = vunpack.c.2.s8 %v324
    %v1253 = vunpack.c.2.s8 %v325
    %v1254 = vunpack.c.2.s8 %v326
    %v1255 = vunpack.c.2.s8 %v327
    %v1256 = vunpack.c.2.s8 %v328
    %v1257 = vunpack.c.2.s8 %v329
    %v1258 = vunpack.c.3.s8 %v314
    %v1259 = vunpack.c.3.s8 %v315
    %v1260 = vunpack.c.3.s8 %v316
    %v1261 = vunpack.c.3.s8 %v317
    %v1262 = vunpack.c.3.s8 %v318
    %v1263 = vunpack.c.3.s8 %v319
    %v1264 = vunpack.c.3.s8 %v320
    %v1265 = vunpack.c.3.s8 %v321
    %v1266 = vunpack.c.3.s8 %v322
    %v1267 = vunpack.c.3.s8 %v323
    %v1268 = vunpack.c.3.s8 %v324
    %v1269 = vunpack.c.3.s8 %v325
    %v1270 = vunpack.c.3.s8 %v326
    %v1271 = vunpack.c.3.s8 %v327
    %v1272 = vunpack.c.3.s8 %v328
    %v1273 = vunpack.c.3.s8 %v329
    %v1274 = vunpack.c.0.s8 %v330
    %v1275 = vunpack.c.0.s8 %v331
    %v1276 = vunpack.c.0.s8 %v332
    %v1277 = vunpack.c.0.s8 %v333
    %v1278 = vunpack.c.0.s8 %v334
    %v1279 = vunpack.c.0.s8 %v335
    %v1280 = vunpack.c.0.s8 %v336
    %v1281 = vunpack.c.0.s8 %v337
    %v1282 = vunpack.c.0.s8 %v338
    %v1283 = vunpack.c.0.s8 %v339
    %v1284 = vunpack.c.0.s8 %v340
    %v1285 = vunpack.c.0.s8 %v341
    %v1286 = vunpack.c.0.s8 %v342
    %v1287 = vunpack.c.0.s8 %v343
    %v1288 = vunpack.c.0.s8 %v344
    %v1289 = vunpack.c.0.s8 %v345
    %v1290 = vunpack.c.1.s8 %v330
    %v1291 = vunpack.c.1.s8 %v331
    %v1292 = vunpack.c.1.s8 %v332
    %v1293 = vunpack.c.1.s8 %v333
    %v1294 = vunpack.c.1.s8 %v334
    %v1295 = vunpack.c.1.s8 %v335
    %v1296 = vunpack.c.1.s8 %v336
    %v1297 = vunpack.c.1.s8 %v337
    %v1298 = vunpack.c.1.s8 %v338
    %v1299 = vunpack.c.1.s8 %v339
    %v1300 = vunpack.c.1.s8 %v340
    %v1301 = vunpack.c.1.s8 %v341
    %v1302 = vunpack.c.1.s8 %v342
    %v1303 = vunpack.c.1.s8 %v343
    %v1304 = vunpack.c.1.s8 %v344
    %v1305 = vunpack.c.1.s8 %v345
    %v1306 = vunpack.c.2.s8 %v330
    %v1307 = vunpack.c.2.s8 %v331
    %v1308 = vunpack.c.2.s8 %v332
    %v1309 = vunpack.c.2.s8 %v333
    %v1310 = vunpack.c.2.s8 %v334
    %v1311 = vunpack.c.2.s8 %v335
    %v1312 = vunpack.c.2.s8 %v336
    %v1313 = vunpack.c.2.s8 %v337
    %v1314 = vunpack.c.2.s8 %v338
    %v1315 = vunpack.c.2.s8 %v339
    %v1316 = vunpack.c.2.s8 %v340
    %v1317 = vunpack.c.2.s8 %v341
    %v1318 = vunpack.c.2.s8 %v342
    %v1319 = vunpack.c.2.s8 %v343
    %v1320 = vunpack.c.2.s8 %v344
    %v1321 = vunpack.c.2.s8 %v345
    %v1322 = vunpack.c.3.s8 %v330
    %v1323 = vunpack.c.3.s8 %v331
    %v1324 = vunpack.c.3.s8 %v332
    %v1325 = vunpack.c.3.s8 %v333
    %v1326 = vunpack.c.3.s8 %v334
    %v1327 = vunpack.c.3.s8 %v335
    %v1328 = vunpack.c.3.s8 %v336
    %v1329 = vunpack.c.3.s8 %v337
    %v1330 = vunpack.c.3.s8 %v338
    %v1331 = vunpack.c.3.s8 %v339
    %v1332 = vunpack.c.3.s8 %v340
    %v1333 = vunpack.c.3.s8 %v341
    %v1334 = vunpack.c.3.s8 %v342
    %v1335 = vunpack.c.3.s8 %v343
    %v1336 = vunpack.c.3.s8 %v344
    %v1337 = vunpack.c.3.s8 %v345
    %v1338 = vunpack.c.0.s8 %v346
    %v1339 = vunpack.c.0.s8 %v347
    %v1340 = vunpack.c.0.s8 %v348
    %v1341 = vunpack.c.0.s8 %v349
    %v1342 = vunpack.c.0.s8 %v350
    %v1343 = vunpack.c.0.s8 %v351
    %v1344 = vunpack.c.0.s8 %v352
    %v1345 = vunpack.c.0.s8 %v353
    %v1346 = vunpack.c.0.s8 %v354
    %v1347 = vunpack.c.0.s8 %v355
    %v1348 = vunpack.c.0.s8 %v356
    %v1349 = vunpack.c.0.s8 %v357
    %v1350 = vunpack.c.0.s8 %v358
    %v1351 = vunpack.c.0.s8 %v359
    %v1352 = vunpack.c.0.s8 %v360
    %v1353 = vunpack.c.0.s8 %v361
    %v1354 = vunpack.c.1.s8 %v346
    %v1355 = vunpack.c.1.s8 %v347
    %v1356 = vunpack.c.1.s8 %v348
    %v1357 = vunpack.c.1.s8 %v349
    %v1358 = vunpack.c.1.s8 %v350
    %v1359 = vunpack.c.1.s8 %v351
    %v1360 = vunpack.c.1.s8 %v352
    %v1361 = vunpack.c.1.s8 %v353
    %v1362 = vunpack.c.1.s8 %v354
    %v1363 = vunpack.c.1.s8 %v355
    %v1364 = vunpack.c.1.s8 %v356
    %v1365 = vunpack.c.1.s8 %v357
    %v1366 = vunpack.c.1.s8 %v358
    %v1367 = vunpack.c.1.s8 %v359
    %v1368 = vunpack.c.1.s8 %v360
    %v1369 = vunpack.c.1.s8 %v361
    %v1370 = vunpack.c.2.s8 %v346
    %v1371 = vunpack.c.2.s8 %v347
    %v1372 = vunpack.c.2.s8 %v348
    %v1373 = vunpack.c.2.s8 %v349
    %v1374 = vunpack.c.2.s8 %v350
    %v1375 = vunpack.c.2.s8 %v351
    %v1376 = vunpack.c.2.s8 %v352
    %v1377 = vunpack.c.2.s8 %v353
    %v1378 = vunpack.c.2.s8 %v354
    %v1379 = vunpack.c.2.s8 %v355
    %v1380 = vunpack.c.2.s8 %v356
    %v1381 = vunpack.c.2.s8 %v357
    %v1382 = vunpack.c.2.s8 %v358
    %v1383 = vunpack.c.2.s8 %v359
    %v1384 = vunpack.c.2.s8 %v360
    %v1385 = vunpack.c.2.s8 %v361
    %v1386 = vunpack.c.3.s8 %v346
    %v1387 = vunpack.c.3.s8 %v347
    %v1388 = vunpack.c.3.s8 %v348
    %v1389 = vunpack.c.3.s8 %v349
    %v1390 = vunpack.c.3.s8 %v350
    %v1391 = vunpack.c.3.s8 %v351
    %v1392 = vunpack.c.3.s8 %v352
    %v1393 = vunpack.c.3.s8 %v353
    %v1394 = vunpack.c.3.s8 %v354
    %v1395 = vunpack.c.3.s8 %v355
    %v1396 = vunpack.c.3.s8 %v356
    %v1397 = vunpack.c.3.s8 %v357
    %v1398 = vunpack.c.3.s8 %v358
    %v1399 = vunpack.c.3.s8 %v359
    %v1400 = vunpack.c.3.s8 %v360
    %v1401 = vunpack.c.3.s8 %v361
    %v1402 = vunpack.c.0.s8 %v362
    %v1403 = vunpack.c.0.s8 %v363
    %v1404 = vunpack.c.0.s8 %v364
    %v1405 = vunpack.c.0.s8 %v365
    %v1406 = vunpack.c.0.s8 %v366
    %v1407 = vunpack.c.0.s8 %v367
    %v1408 = vunpack.c.0.s8 %v368
    %v1409 = vunpack.c.0.s8 %v369
    %v1410 = vunpack.c.0.s8 %v370
    %v1411 = vunpack.c.0.s8 %v371
    %v1412 = vunpack.c.0.s8 %v372
    %v1413 = vunpack.c.0.s8 %v373
    %v1414 = vunpack.c.0.s8 %v374
    %v1415 = vunpack.c.0.s8 %v375
    %v1416 = vunpack.c.0.s8 %v376
    %v1417 = vunpack.c.0.s8 %v377
    %v1418 = vunpack.c.1.s8 %v362
    %v1419 = vunpack.c.1.s8 %v363
    %v1420 = vunpack.c.1.s8 %v364
    %v1421 = vunpack.c.1.s8 %v365
    %v1422 = vunpack.c.1.s8 %v366
    %v1423 = vunpack.c.1.s8 %v367
    %v1424 = vunpack.c.1.s8 %v368
    %v1425 = vunpack.c.1.s8 %v369
    %v1426 = vunpack.c.1.s8 %v370
    %v1427 = vunpack.c.1.s8 %v371
    %v1428 = vunpack.c.1.s8 %v372
    %v1429 = vunpack.c.1.s8 %v373
    %v1430 = vunpack.c.1.s8 %v374
    %v1431 = vunpack.c.1.s8 %v375
    %v1432 = vunpack.c.1.s8 %v376
    %v1433 = vunpack.c.1.s8 %v377
    %v1434 = vunpack.c.2.s8 %v362
    %v1435 = vunpack.c.2.s8 %v363
    %v1436 = vunpack.c.2.s8 %v364
    %v1437 = vunpack.c.2.s8 %v365
    %v1438 = vunpack.c.2.s8 %v366
    %v1439 = vunpack.c.2.s8 %v367
    %v1440 = vunpack.c.2.s8 %v368
    %v1441 = vunpack.c.2.s8 %v369
    %v1442 = vunpack.c.2.s8 %v370
    %v1443 = vunpack.c.2.s8 %v371
    %v1444 = vunpack.c.2.s8 %v372
    %v1445 = vunpack.c.2.s8 %v373
    %v1446 = vunpack.c.2.s8 %v374
    %v1447 = vunpack.c.2.s8 %v375
    %v1448 = vunpack.c.2.s8 %v376
    %v1449 = vunpack.c.2.s8 %v377
    %v1450 = vunpack.c.3.s8 %v362
    %v1451 = vunpack.c.3.s8 %v363
    %v1452 = vunpack.c.3.s8 %v364
    %v1453 = vunpack.c.3.s8 %v365
    %v1454 = vunpack.c.3.s8 %v366
    %v1455 = vunpack.c.3.s8 %v367
    %v1456 = vunpack.c.3.s8 %v368
    %v1457 = vunpack.c.3.s8 %v369
    %v1458 = vunpack.c.3.s8 %v370
    %v1459 = vunpack.c.3.s8 %v371
    %v1460 = vunpack.c.3.s8 %v372
    %v1461 = vunpack.c.3.s8 %v373
    %v1462 = vunpack.c.3.s8 %v374
    %v1463 = vunpack.c.3.s8 %v375
    %v1464 = vunpack.c.3.s8 %v376
    %v1465 = vunpack.c.3.s8 %v377
    %v1466 = vunpack.c.0.s8 %v378
    %v1467 = vunpack.c.0.s8 %v379
    %v1468 = vunpack.c.0.s8 %v380
    %v1469 = vunpack.c.0.s8 %v381
    %v1470 = vunpack.c.0.s8 %v382
    %v1471 = vunpack.c.0.s8 %v383
    %v1472 = vunpack.c.0.s8 %v384
    %v1473 = vunpack.c.0.s8 %v385
    %v1474 = vunpack.c.0.s8 %v386
    %v1475 = vunpack.c.0.s8 %v387
    %v1476 = vunpack.c.0.s8 %v388
    %v1477 = vunpack.c.0.s8 %v389
    %v1478 = vunpack.c.0.s8 %v390
    %v1479 = vunpack.c.0.s8 %v391
    %v1480 = vunpack.c.0.s8 %v392
    %v1481 = vunpack.c.0.s8 %v393
    %v1482 = vunpack.c.1.s8 %v378
    %v1483 = vunpack.c.1.s8 %v379
    %v1484 = vunpack.c.1.s8 %v380
    %v1485 = vunpack.c.1.s8 %v381
    %v1486 = vunpack.c.1.s8 %v382
    %v1487 = vunpack.c.1.s8 %v383
    %v1488 = vunpack.c.1.s8 %v384
    %v1489 = vunpack.c.1.s8 %v385
    %v1490 = vunpack.c.1.s8 %v386
    %v1491 = vunpack.c.1.s8 %v387
    %v1492 = vunpack.c.1.s8 %v388
    %v1493 = vunpack.c.1.s8 %v389
    %v1494 = vunpack.c.1.s8 %v390
    %v1495 = vunpack.c.1.s8 %v391
    %v1496 = vunpack.c.1.s8 %v392
    %v1497 = vunpack.c.1.s8 %v393
    %v1498 = vunpack.c.2.s8 %v378
    %v1499 = vunpack.c.2.s8 %v379
    %v1500 = vunpack.c.2.s8 %v380
    %v1501 = vunpack.c.2.s8 %v381
    %v1502 = vunpack.c.2.s8 %v382
    %v1503 = vunpack.c.2.s8 %v383
    %v1504 = vunpack.c.2.s8 %v384
    %v1505 = vunpack.c.2.s8 %v385
    %v1506 = vunpack.c.2.s8 %v386
    %v1507 = vunpack.c.2.s8 %v387
    %v1508 = vunpack.c.2.s8 %v388
    %v1509 = vunpack.c.2.s8 %v389
    %v1510 = vunpack.c.2.s8 %v390
    %v1511 = vunpack.c.2.s8 %v391
    %v1512 = vunpack.c.2.s8 %v392
    %v1513 = vunpack.c.2.s8 %v393
    %v1514 = vunpack.c.3.s8 %v378
    %v1515 = vunpack.c.3.s8 %v379
    %v1516 = vunpack.c.3.s8 %v380
    %v1517 = vunpack.c.3.s8 %v381
    %v1518 = vunpack.c.3.s8 %v382
    %v1519 = vunpack.c.3.s8 %v383
    %v1520 = vunpack.c.3.s8 %v384
    %v1521 = vunpack.c.3.s8 %v385
    %v1522 = vunpack.c.3.s8 %v386
    %v1523 = vunpack.c.3.s8 %v387
    %v1524 = vunpack.c.3.s8 %v388
    %v1525 = vunpack.c.3.s8 %v389
    %v1526 = vunpack.c.3.s8 %v390
    %v1527 = vunpack.c.3.s8 %v391
    %v1528 = vunpack.c.3.s8 %v392
    %v1529 = vunpack.c.3.s8 %v393
    %v1530 = vunpack.c.0.s8 %v394
    %v1531 = vunpack.c.0.s8 %v395
    %v1532 = vunpack.c.0.s8 %v396
    %v1533 = vunpack.c.0.s8 %v397
    %v1534 = vunpack.c.0.s8 %v398
    %v1535 = vunpack.c.0.s8 %v399
    %v1536 = vunpack.c.0.s8 %v400
    %v1537 = vunpack.c.0.s8 %v401
    %v1538 = vunpack.c.0.s8 %v402
    %v1539 = vunpack.c.0.s8 %v403
    %v1540 = vunpack.c.0.s8 %v404
    %v1541 = vunpack.c.0.s8 %v405
    %v1542 = vunpack.c.0.s8 %v406
    %v1543 = vunpack.c.0.s8 %v407
    %v1544 = vunpack.c.0.s8 %v408
    %v1545 = vunpack.c.0.s8 %v409
    %v1546 = vunpack.c.1.s8 %v394
    %v1547 = vunpack.c.1.s8 %v395
    %v1548 = vunpack.c.1.s8 %v396
    %v1549 = vunpack.c.1.s8 %v397
    %v1550 = vunpack.c.1.s8 %v398
    %v1551 = vunpack.c.1.s8 %v399
    %v1552 = vunpack.c.1.s8 %v400
    %v1553 = vunpack.c.1.s8 %v401
    %v1554 = vunpack.c.1.s8 %v402
    %v1555 = vunpack.c.1.s8 %v403
    %v1556 = vunpack.c.1.s8 %v404
    %v1557 = vunpack.c.1.s8 %v405
    %v1558 = vunpack.c.1.s8 %v406
    %v1559 = vunpack.c.1.s8 %v407
    %v1560 = vunpack.c.1.s8 %v408
    %v1561 = vunpack.c.1.s8 %v409
    %v1562 = vunpack.c.2.s8 %v394
    %v1563 = vunpack.c.2.s8 %v395
    %v1564 = vunpack.c.2.s8 %v396
    %v1565 = vunpack.c.2.s8 %v397
    %v1566 = vunpack.c.2.s8 %v398
    %v1567 = vunpack.c.2.s8 %v399
    %v1568 = vunpack.c.2.s8 %v400
    %v1569 = vunpack.c.2.s8 %v401
    %v1570 = vunpack.c.2.s8 %v402
    %v1571 = vunpack.c.2.s8 %v403
    %v1572 = vunpack.c.2.s8 %v404
    %v1573 = vunpack.c.2.s8 %v405
    %v1574 = vunpack.c.2.s8 %v406
    %v1575 = vunpack.c.2.s8 %v407
    %v1576 = vunpack.c.2.s8 %v408
    %v1577 = vunpack.c.2.s8 %v409
    %v1578 = vunpack.c.3.s8 %v394
    %v1579 = vunpack.c.3.s8 %v395
    %v1580 = vunpack.c.3.s8 %v396
    %v1581 = vunpack.c.3.s8 %v397
    %v1582 = vunpack.c.3.s8 %v398
    %v1583 = vunpack.c.3.s8 %v399
    %v1584 = vunpack.c.3.s8 %v400
    %v1585 = vunpack.c.3.s8 %v401
    %v1586 = vunpack.c.3.s8 %v402
    %v1587 = vunpack.c.3.s8 %v403
    %v1588 = vunpack.c.3.s8 %v404
    %v1589 = vunpack.c.3.s8 %v405
    %v1590 = vunpack.c.3.s8 %v406
    %v1591 = vunpack.c.3.s8 %v407
    %v1592 = vunpack.c.3.s8 %v408
    %v1593 = vunpack.c.3.s8 %v409
    %v1594 = vunpack.c.0.s8 %v410
    %v1595 = vunpack.c.0.s8 %v411
    %v1596 = vunpack.c.0.s8 %v412
    %v1597 = vunpack.c.0.s8 %v413
    %v1598 = vunpack.c.0.s8 %v414
    %v1599 = vunpack.c.0.s8 %v415
    %v1600 = vunpack.c.0.s8 %v416
    %v1601 = vunpack.c.0.s8 %v417
    %v1602 = vunpack.c.0.s8 %v418
    %v1603 = vunpack.c.0.s8 %v419
    %v1604 = vunpack.c.0.s8 %v420
    %v1605 = vunpack.c.0.s8 %v421
    %v1606 = vunpack.c.0.s8 %v422
    %v1607 = vunpack.c.0.s8 %v423
    %v1608 = vunpack.c.0.s8 %v424
    %v1609 = vunpack.c.0.s8 %v425
    %v1610 = vunpack.c.1.s8 %v410
    %v1611 = vunpack.c.1.s8 %v411
    %v1612 = vunpack.c.1.s8 %v412
    %v1613 = vunpack.c.1.s8 %v413
    %v1614 = vunpack.c.1.s8 %v414
    %v1615 = vunpack.c.1.s8 %v415
    %v1616 = vunpack.c.1.s8 %v416
    %v1617 = vunpack.c.1.s8 %v417
    %v1618 = vunpack.c.1.s8 %v418
    %v1619 = vunpack.c.1.s8 %v419
    %v1620 = vunpack.c.1.s8 %v420
    %v1621 = vunpack.c.1.s8 %v421
    %v1622 = vunpack.c.1.s8 %v422
    %v1623 = vunpack.c.1.s8 %v423
    %v1624 = vunpack.c.1.s8 %v424
    %v1625 = vunpack.c.1.s8 %v425
    %v1626 = vunpack.c.2.s8 %v410
    %v1627 = vunpack.c.2.s8 %v411
    %v1628 = vunpack.c.2.s8 %v412
    %v1629 = vunpack.c.2.s8 %v413
    %v1630 = vunpack.c.2.s8 %v414
    %v1631 = vunpack.c.2.s8 %v415
    %v1632 = vunpack.c.2.s8 %v416
    %v1633 = vunpack.c.2.s8 %v417
    %v1634 = vunpack.c.2.s8 %v418
    %v1635 = vunpack.c.2.s8 %v419
    %v1636 = vunpack.c.2.s8 %v420
    %v1637 = vunpack.c.2.s8 %v421
    %v1638 = vunpack.c.2.s8 %v422
    %v1639 = vunpack.c.2.s8 %v423
    %v1640 = vunpack.c.2.s8 %v424
    %v1641 = vunpack.c.2.s8 %v425
    %v1642 = vunpack.c.3.s8 %v410
    %v1643 = vunpack.c.3.s8 %v411
    %v1644 = vunpack.c.3.s8 %v412
    %v1645 = vunpack.c.3.s8 %v413
    %v1646 = vunpack.c.3.s8 %v414
    %v1647 = vunpack.c.3.s8 %v415
    %v1648 = vunpack.c.3.s8 %v416
    %v1649 = vunpack.c.3.s8 %v417
    %v1650 = vunpack.c.3.s8 %v418
    %v1651 = vunpack.c.3.s8 %v419
    %v1652 = vunpack.c.3.s8 %v420
    %v1653 = vunpack.c.3.s8 %v421
    %v1654 = vunpack.c.3.s8 %v422
    %v1655 = vunpack.c.3.s8 %v423
    %v1656 = vunpack.c.3.s8 %v424
    %v1657 = vunpack.c.3.s8 %v425
    %v1658 = vunpack.c.0.s8 %v426
    %v1659 = vunpack.c.0.s8 %v427
    %v1660 = vunpack.c.0.s8 %v428
    %v1661 = vunpack.c.0.s8 %v429
    %v1662 = vunpack.c.0.s8 %v430
    %v1663 = vunpack.c.0.s8 %v431
    %v1664 = vunpack.c.0.s8 %v432
    %v1665 = vunpack.c.0.s8 %v433
    %v1666 = vunpack.c.0.s8 %v434
    %v1667 = vunpack.c.0.s8 %v435
    %v1668 = vunpack.c.0.s8 %v436
    %v1669 = vunpack.c.0.s8 %v437
    %v1670 = vunpack.c.0.s8 %v438
    %v1671 = vunpack.c.0.s8 %v439
    %v1672 = vunpack.c.0.s8 %v440
    %v1673 = vunpack.c.0.s8 %v441
    %v1674 = vunpack.c.1.s8 %v426
    %v1675 = vunpack.c.1.s8 %v427
    %v1676 = vunpack.c.1.s8 %v428
    %v1677 = vunpack.c.1.s8 %v429
    %v1678 = vunpack.c.1.s8 %v430
    %v1679 = vunpack.c.1.s8 %v431
    %v1680 = vunpack.c.1.s8 %v432
    %v1681 = vunpack.c.1.s8 %v433
    %v1682 = vunpack.c.1.s8 %v434
    %v1683 = vunpack.c.1.s8 %v435
    %v1684 = vunpack.c.1.s8 %v436
    %v1685 = vunpack.c.1.s8 %v437
    %v1686 = vunpack.c.1.s8 %v438
    %v1687 = vunpack.c.1.s8 %v439
    %v1688 = vunpack.c.1.s8 %v440
    %v1689 = vunpack.c.1.s8 %v441
    %v1690 = vunpack.c.2.s8 %v426
    %v1691 = vunpack.c.2.s8 %v427
    %v1692 = vunpack.c.2.s8 %v428
    %v1693 = vunpack.c.2.s8 %v429
    %v1694 = vunpack.c.2.s8 %v430
    %v1695 = vunpack.c.2.s8 %v431
    %v1696 = vunpack.c.2.s8 %v432
    %v1697 = vunpack.c.2.s8 %v433
    %v1698 = vunpack.c.2.s8 %v434
    %v1699 = vunpack.c.2.s8 %v435
    %v1700 = vunpack.c.2.s8 %v436
    %v1701 = vunpack.c.2.s8 %v437
    %v1702 = vunpack.c.2.s8 %v438
    %v1703 = vunpack.c.2.s8 %v439
    %v1704 = vunpack.c.2.s8 %v440
    %v1705 = vunpack.c.2.s8 %v441
    %v1706 = vunpack.c.3.s8 %v426
    %v1707 = vunpack.c.3.s8 %v427
    %v1708 = vunpack.c.3.s8 %v428
    %v1709 = vunpack.c.3.s8 %v429
    %v1710 = vunpack.c.3.s8 %v430
    %v1711 = vunpack.c.3.s8 %v431
    %v1712 = vunpack.c.3.s8 %v432
    %v1713 = vunpack.c.3.s8 %v433
    %v1714 = vunpack.c.3.s8 %v434
    %v1715 = vunpack.c.3.s8 %v435
    %v1716 = vunpack.c.3.s8 %v436
    %v1717 = vunpack.c.3.s8 %v437
    %v1718 = vunpack.c.3.s8 %v438
    %v1719 = vunpack.c.3.s8 %v439
    %v1720 = vunpack.c.3.s8 %v440
    %v1721 = vunpack.c.3.s8 %v441
    %v1722 = vunpack.c.0.s8 %v442
    %v1723 = vunpack.c.0.s8 %v443
    %v1724 = vunpack.c.0.s8 %v444
    %v1725 = vunpack.c.0.s8 %v445
    %v1726 = vunpack.c.0.s8 %v446
    %v1727 = vunpack.c.0.s8 %v447
    %v1728 = vunpack.c.0.s8 %v448
    %v1729 = vunpack.c.0.s8 %v449
    %v1730 = vunpack.c.0.s8 %v450
    %v1731 = vunpack.c.0.s8 %v451
    %v1732 = vunpack.c.0.s8 %v452
    %v1733 = vunpack.c.0.s8 %v453
    %v1734 = vunpack.c.0.s8 %v454
    %v1735 = vunpack.c.0.s8 %v455
    %v1736 = vunpack.c.0.s8 %v456
    %v1737 = vunpack.c.0.s8 %v457
    %v1738 = vunpack.c.1.s8 %v442
    %v1739 = vunpack.c.1.s8 %v443
    %v1740 = vunpack.c.1.s8 %v444
    %v1741 = vunpack.c.1.s8 %v445
    %v1742 = vunpack.c.1.s8 %v446
    %v1743 = vunpack.c.1.s8 %v447
    %v1744 = vunpack.c.1.s8 %v448
    %v1745 = vunpack.c.1.s8 %v449
    %v1746 = vunpack.c.1.s8 %v450
    %v1747 = vunpack.c.1.s8 %v451
    %v1748 = vunpack.c.1.s8 %v452
    %v1749 = vunpack.c.1.s8 %v453
    %v1750 = vunpack.c.1.s8 %v454
    %v1751 = vunpack.c.1.s8 %v455
    %v1752 = vunpack.c.1.s8 %v456
    %v1753 = vunpack.c.1.s8 %v457
    %v1754 = vunpack.c.2.s8 %v442
    %v1755 = vunpack.c.2.s8 %v443
    %v1756 = vunpack.c.2.s8 %v444
    %v1757 = vunpack.c.2.s8 %v445
    %v1758 = vunpack.c.2.s8 %v446
    %v1759 = vunpack.c.2.s8 %v447
    %v1760 = vunpack.c.2.s8 %v448
    %v1761 = vunpack.c.2.s8 %v449
    %v1762 = vunpack.c.2.s8 %v450
    %v1763 = vunpack.c.2.s8 %v451
    %v1764 = vunpack.c.2.s8 %v452
    %v1765 = vunpack.c.2.s8 %v453
    %v1766 = vunpack.c.2.s8 %v454
    %v1767 = vunpack.c.2.s8 %v455
    %v1768 = vunpack.c.2.s8 %v456
    %v1769 = vunpack.c.2.s8 %v457
    %v1770 = vunpack.c.3.s8 %v442
    %v1771 = vunpack.c.3.s8 %v443
    %v1772 = vunpack.c.3.s8 %v444
    %v1773 = vunpack.c.3.s8 %v445
    %v1774 = vunpack.c.3.s8 %v446
    %v1775 = vunpack.c.3.s8 %v447
    %v1776 = vunpack.c.3.s8 %v448
    %v1777 = vunpack.c.3.s8 %v449
    %v1778 = vunpack.c.3.s8 %v450
    %v1779 = vunpack.c.3.s8 %v451
    %v1780 = vunpack.c.3.s8 %v452
    %v1781 = vunpack.c.3.s8 %v453
    %v1782 = vunpack.c.3.s8 %v454
    %v1783 = vunpack.c.3.s8 %v455
    %v1784 = vunpack.c.3.s8 %v456
    %v1785 = vunpack.c.3.s8 %v457
    %v1786 = vunpack.c.0.s8 %v458
    %v1787 = vunpack.c.0.s8 %v459
    %v1788 = vunpack.c.0.s8 %v460
    %v1789 = vunpack.c.0.s8 %v461
    %v1790 = vunpack.c.0.s8 %v462
    %v1791 = vunpack.c.0.s8 %v463
    %v1792 = vunpack.c.0.s8 %v464
    %v1793 = vunpack.c.0.s8 %v465
    %v1794 = vunpack.c.0.s8 %v466
    %v1795 = vunpack.c.0.s8 %v467
    %v1796 = vunpack.c.0.s8 %v468
    %v1797 = vunpack.c.0.s8 %v469
    %v1798 = vunpack.c.0.s8 %v470
    %v1799 = vunpack.c.0.s8 %v471
    %v1800 = vunpack.c.0.s8 %v472
    %v1801 = vunpack.c.0.s8 %v473
    %v1802 = vunpack.c.1.s8 %v458
    %v1803 = vunpack.c.1.s8 %v459
    %v1804 = vunpack.c.1.s8 %v460
    %v1805 = vunpack.c.1.s8 %v461
    %v1806 = vunpack.c.1.s8 %v462
    %v1807 = vunpack.c.1.s8 %v463
    %v1808 = vunpack.c.1.s8 %v464
    %v1809 = vunpack.c.1.s8 %v465
    %v1810 = vunpack.c.1.s8 %v466
    %v1811 = vunpack.c.1.s8 %v467
    %v1812 = vunpack.c.1.s8 %v468
    %v1813 = vunpack.c.1.s8 %v469
    %v1814 = vunpack.c.1.s8 %v470
    %v1815 = vunpack.c.1.s8 %v471
    %v1816 = vunpack.c.1.s8 %v472
    %v1817 = vunpack.c.1.s8 %v473
    %v1818 = vunpack.c.2.s8 %v458
    %v1819 = vunpack.c.2.s8 %v459
    %v1820 = vunpack.c.2.s8 %v460
    %v1821 = vunpack.c.2.s8 %v461
    %v1822 = vunpack.c.2.s8 %v462
    %v1823 = vunpack.c.2.s8 %v463
    %v1824 = vunpack.c.2.s8 %v464
    %v1825 = vunpack.c.2.s8 %v465
    %v1826 = vunpack.c.2.s8 %v466
    %v1827 = vunpack.c.2.s8 %v467
    %v1828 = vunpack.c.2.s8 %v468
    %v1829 = vunpack.c.2.s8 %v469
    %v1830 = vunpack.c.2.s8 %v470
    %v1831 = vunpack.c.2.s8 %v471
    %v1832 = vunpack.c.2.s8 %v472
    %v1833 = vunpack.c.2.s8 %v473
    %v1834 = vunpack.c.3.s8 %v458
    %v1835 = vunpack.c.3.s8 %v459
    %v1836 = vunpack.c.3.s8 %v460
    %v1837 = vunpack.c.3.s8 %v461
    %v1838 = vunpack.c.3.s8 %v462
    %v1839 = vunpack.c.3.s8 %v463
    %v1840 = vunpack.c.3.s8 %v464
    %v1841 = vunpack.c.3.s8 %v465
    %v1842 = vunpack.c.3.s8 %v466
    %v1843 = vunpack.c.3.s8 %v467
    %v1844 = vunpack.c.3.s8 %v468
    %v1845 = vunpack.c.3.s8 %v469
    %v1846 = vunpack.c.3.s8 %v470
    %v1847 = vunpack.c.3.s8 %v471
    %v1848 = vunpack.c.3.s8 %v472
    %v1849 = vunpack.c.3.s8 %v473
    %v1850 = vunpack.c.0.s8 %v474
    %v1851 = vunpack.c.0.s8 %v475
    %v1852 = vunpack.c.0.s8 %v476
    %v1853 = vunpack.c.0.s8 %v477
    %v1854 = vunpack.c.0.s8 %v478
    %v1855 = vunpack.c.0.s8 %v479
    %v1856 = vunpack.c.0.s8 %v480
    %v1857 = vunpack.c.0.s8 %v481
    %v1858 = vunpack.c.0.s8 %v482
    %v1859 = vunpack.c.0.s8 %v483
    %v1860 = vunpack.c.0.s8 %v484
    %v1861 = vunpack.c.0.s8 %v485
    %v1862 = vunpack.c.0.s8 %v486
    %v1863 = vunpack.c.0.s8 %v487
    %v1864 = vunpack.c.0.s8 %v488
    %v1865 = vunpack.c.0.s8 %v489
    %v1866 = vunpack.c.1.s8 %v474
    %v1867 = vunpack.c.1.s8 %v475
    %v1868 = vunpack.c.1.s8 %v476
    %v1869 = vunpack.c.1.s8 %v477
    %v1870 = vunpack.c.1.s8 %v478
    %v1871 = vunpack.c.1.s8 %v479
    %v1872 = vunpack.c.1.s8 %v480
    %v1873 = vunpack.c.1.s8 %v481
    %v1874 = vunpack.c.1.s8 %v482
    %v1875 = vunpack.c.1.s8 %v483
    %v1876 = vunpack.c.1.s8 %v484
    %v1877 = vunpack.c.1.s8 %v485
    %v1878 = vunpack.c.1.s8 %v486
    %v1879 = vunpack.c.1.s8 %v487
    %v1880 = vunpack.c.1.s8 %v488
    %v1881 = vunpack.c.1.s8 %v489
    %v1882 = vunpack.c.2.s8 %v474
    %v1883 = vunpack.c.2.s8 %v475
    %v1884 = vunpack.c.2.s8 %v476
    %v1885 = vunpack.c.2.s8 %v477
    %v1886 = vunpack.c.2.s8 %v478
    %v1887 = vunpack.c.2.s8 %v479
    %v1888 = vunpack.c.2.s8 %v480
    %v1889 = vunpack.c.2.s8 %v481
    %v1890 = vunpack.c.2.s8 %v482
    %v1891 = vunpack.c.2.s8 %v483
    %v1892 = vunpack.c.2.s8 %v484
    %v1893 = vunpack.c.2.s8 %v485
    %v1894 = vunpack.c.2.s8 %v486
    %v1895 = vunpack.c.2.s8 %v487
    %v1896 = vunpack.c.2.s8 %v488
    %v1897 = vunpack.c.2.s8 %v489
    %v1898 = vunpack.c.3.s8 %v474
    %v1899 = vunpack.c.3.s8 %v475
    %v1900 = vunpack.c.3.s8 %v476
    %v1901 = vunpack.c.3.s8 %v477
    %v1902 = vunpack.c.3.s8 %v478
    %v1903 = vunpack.c.3.s8 %v479
    %v1904 = vunpack.c.3.s8 %v480
    %v1905 = vunpack.c.3.s8 %v481
    %v1906 = vunpack.c.3.s8 %v482
    %v1907 = vunpack.c.3.s8 %v483
    %v1908 = vunpack.c.3.s8 %v484
    %v1909 = vunpack.c.3.s8 %v485
    %v1910 = vunpack.c.3.s8 %v486
    %v1911 = vunpack.c.3.s8 %v487
    %v1912 = vunpack.c.3.s8 %v488
    %v1913 = vunpack.c.3.s8 %v489
    %v1914 = vunpack.c.0.s8 %v490
    %v1915 = vunpack.c.0.s8 %v491
    %v1916 = vunpack.c.0.s8 %v492
    %v1917 = vunpack.c.0.s8 %v493
    %v1918 = vunpack.c.0.s8 %v494
    %v1919 = vunpack.c.0.s8 %v495
    %v1920 = vunpack.c.0.s8 %v496
    %v1921 = vunpack.c.0.s8 %v497
    %v1922 = vunpack.c.0.s8 %v498
    %v1923 = vunpack.c.0.s8 %v499
    %v1924 = vunpack.c.0.s8 %v500
    %v1925 = vunpack.c.0.s8 %v501
    %v1926 = vunpack.c.0.s8 %v502
    %v1927 = vunpack.c.0.s8 %v503
    %v1928 = vunpack.c.0.s8 %v504
    %v1929 = vunpack.c.0.s8 %v505
    %v1930 = vunpack.c.1.s8 %v490
    %v1931 = vunpack.c.1.s8 %v491
    %v1932 = vunpack.c.1.s8 %v492
    %v1933 = vunpack.c.1.s8 %v493
    %v1934 = vunpack.c.1.s8 %v494
    %v1935 = vunpack.c.1.s8 %v495
    %v1936 = vunpack.c.1.s8 %v496
    %v1937 = vunpack.c.1.s8 %v497
    %v1938 = vunpack.c.1.s8 %v498
    %v1939 = vunpack.c.1.s8 %v499
    %v1940 = vunpack.c.1.s8 %v500
    %v1941 = vunpack.c.1.s8 %v501
    %v1942 = vunpack.c.1.s8 %v502
    %v1943 = vunpack.c.1.s8 %v503
    %v1944 = vunpack.c.1.s8 %v504
    %v1945 = vunpack.c.1.s8 %v505
    %v1946 = vunpack.c.2.s8 %v490
    %v1947 = vunpack.c.2.s8 %v491
    %v1948 = vunpack.c.2.s8 %v492
    %v1949 = vunpack.c.2.s8 %v493
    %v1950 = vunpack.c.2.s8 %v494
    %v1951 = vunpack.c.2.s8 %v495
    %v1952 = vunpack.c.2.s8 %v496
    %v1953 = vunpack.c.2.s8 %v497
    %v1954 = vunpack.c.2.s8 %v498
    %v1955 = vunpack.c.2.s8 %v499
    %v1956 = vunpack.c.2.s8 %v500
    %v1957 = vunpack.c.2.s8 %v501
    %v1958 = vunpack.c.2.s8 %v502
    %v1959 = vunpack.c.2.s8 %v503
    %v1960 = vunpack.c.2.s8 %v504
    %v1961 = vunpack.c.2.s8 %v505
    %v1962 = vunpack.c.3.s8 %v490
    %v1963 = vunpack.c.3.s8 %v491
    %v1964 = vunpack.c.3.s8 %v492
    %v1965 = vunpack.c.3.s8 %v493
    %v1966 = vunpack.c.3.s8 %v494
    %v1967 = vunpack.c.3.s8 %v495
    %v1968 = vunpack.c.3.s8 %v496
    %v1969 = vunpack.c.3.s8 %v497
    %v1970 = vunpack.c.3.s8 %v498
    %v1971 = vunpack.c.3.s8 %v499
    %v1972 = vunpack.c.3.s8 %v500
    %v1973 = vunpack.c.3.s8 %v501
    %v1974 = vunpack.c.3.s8 %v502
    %v1975 = vunpack.c.3.s8 %v503
    %v1976 = vunpack.c.3.s8 %v504
    %v1977 = vunpack.c.3.s8 %v505
    %v1978 = vunpack.c.0.s8 %v506
    %v1979 = vunpack.c.0.s8 %v507
    %v1980 = vunpack.c.0.s8 %v508
    %v1981 = vunpack.c.0.s8 %v509
    %v1982 = vunpack.c.0.s8 %v510
    %v1983 = vunpack.c.0.s8 %v511
    %v1984 = vunpack.c.0.s8 %v512
    %v1985 = vunpack.c.0.s8 %v513
    %v1986 = vunpack.c.0.s8 %v514
    %v1987 = vunpack.c.0.s8 %v515
    %v1988 = vunpack.c.0.s8 %v516
    %v1989 = vunpack.c.0.s8 %v517
    %v1990 = vunpack.c.0.s8 %v518
    %v1991 = vunpack.c.0.s8 %v519
    %v1992 = vunpack.c.0.s8 %v520
    %v1993 = vunpack.c.0.s8 %v521
    %v1994 = vunpack.c.1.s8 %v506
    %v1995 = vunpack.c.1.s8 %v507
    %v1996 = vunpack.c.1.s8 %v508
    %v1997 = vunpack.c.1.s8 %v509
    %v1998 = vunpack.c.1.s8 %v510
    %v1999 = vunpack.c.1.s8 %v511
    %v2000 = vunpack.c.1.s8 %v512
    %v2001 = vunpack.c.1.s8 %v513
    %v2002 = vunpack.c.1.s8 %v514
    %v2003 = vunpack.c.1.s8 %v515
    %v2004 = vunpack.c.1.s8 %v516
    %v2005 = vunpack.c.1.s8 %v517
    %v2006 = vunpack.c.1.s8 %v518
    %v2007 = vunpack.c.1.s8 %v519
    %v2008 = vunpack.c.1.s8 %v520
    %v2009 = vunpack.c.1.s8 %v521
    %v2010 = vunpack.c.2.s8 %v506
    %v2011 = vunpack.c.2.s8 %v507
    %v2012 = vunpack.c.2.s8 %v508
    %v2013 = vunpack.c.2.s8 %v509
    %v2014 = vunpack.c.2.s8 %v510
    %v2015 = vunpack.c.2.s8 %v511
    %v2016 = vunpack.c.2.s8 %v512
    %v2017 = vunpack.c.2.s8 %v513
    %v2018 = vunpack.c.2.s8 %v514
    %v2019 = vunpack.c.2.s8 %v515
    %v2020 = vunpack.c.2.s8 %v516
    %v2021 = vunpack.c.2.s8 %v517
    %v2022 = vunpack.c.2.s8 %v518
    %v2023 = vunpack.c.2.s8 %v519
    %v2024 = vunpack.c.2.s8 %v520
    %v2025 = vunpack.c.2.s8 %v521
    %v2026 = vunpack.c.3.s8 %v506
    %v2027 = vunpack.c.3.s8 %v507
    %v2028 = vunpack.c.3.s8 %v508
    %v2029 = vunpack.c.3.s8 %v509
    %v2030 = vunpack.c.3.s8 %v510
    %v2031 = vunpack.c.3.s8 %v511
    %v2032 = vunpack.c.3.s8 %v512
    %v2033 = vunpack.c.3.s8 %v513
    %v2034 = vunpack.c.3.s8 %v514
    %v2035 = vunpack.c.3.s8 %v515
    %v2036 = vunpack.c.3.s8 %v516
    %v2037 = vunpack.c.3.s8 %v517
    %v2038 = vunpack.c.3.s8 %v518
    %v2039 = vunpack.c.3.s8 %v519
    %v2040 = vunpack.c.3.s8 %v520
    %v2041 = vunpack.c.3.s8 %v521
    %v2042 = vunpack.c.0.s8 %v522
    %v2043 = vunpack.c.0.s8 %v523
    %v2044 = vunpack.c.0.s8 %v524
    %v2045 = vunpack.c.0.s8 %v525
    %v2046 = vunpack.c.0.s8 %v526
    %v2047 = vunpack.c.0.s8 %v527
    %v2048 = vunpack.c.0.s8 %v528
    %v2049 = vunpack.c.0.s8 %v529
    %v2050 = vunpack.c.0.s8 %v530
    %v2051 = vunpack.c.0.s8 %v531
    %v2052 = vunpack.c.0.s8 %v532
    %v2053 = vunpack.c.0.s8 %v533
    %v2054 = vunpack.c.0.s8 %v534
    %v2055 = vunpack.c.0.s8 %v535
    %v2056 = vunpack.c.0.s8 %v536
    %v2057 = vunpack.c.0.s8 %v537
    %v2058 = vunpack.c.1.s8 %v522
    %v2059 = vunpack.c.1.s8 %v523
    %v2060 = vunpack.c.1.s8 %v524
    %v2061 = vunpack.c.1.s8 %v525
    %v2062 = vunpack.c.1.s8 %v526
    %v2063 = vunpack.c.1.s8 %v527
    %v2064 = vunpack.c.1.s8 %v528
    %v2065 = vunpack.c.1.s8 %v529
    %v2066 = vunpack.c.1.s8 %v530
    %v2067 = vunpack.c.1.s8 %v531
    %v2068 = vunpack.c.1.s8 %v532
    %v2069 = vunpack.c.1.s8 %v533
    %v2070 = vunpack.c.1.s8 %v534
    %v2071 = vunpack.c.1.s8 %v535
    %v2072 = vunpack.c.1.s8 %v536
    %v2073 = vunpack.c.1.s8 %v537
    %v2074 = vunpack.c.2.s8 %v522
    %v2075 = vunpack.c.2.s8 %v523
    %v2076 = vunpack.c.2.s8 %v524
    %v2077 = vunpack.c.2.s8 %v525
    %v2078 = vunpack.c.2.s8 %v526
    %v2079 = vunpack.c.2.s8 %v527
    %v2080 = vunpack.c.2.s8 %v528
    %v2081 = vunpack.c.2.s8 %v529
    %v2082 = vunpack.c.2.s8 %v530
    %v2083 = vunpack.c.2.s8 %v531
    %v2084 = vunpack.c.2.s8 %v532
    %v2085 = vunpack.c.2.s8 %v533
    %v2086 = vunpack.c.2.s8 %v534
    %v2087 = vunpack.c.2.s8 %v535
    %v2088 = vunpack.c.2.s8 %v536
    %v2089 = vunpack.c.2.s8 %v537
    %v2090 = vunpack.c.3.s8 %v522
    %v2091 = vunpack.c.3.s8 %v523
    %v2092 = vunpack.c.3.s8 %v524
    %v2093 = vunpack.c.3.s8 %v525
    %v2094 = vunpack.c.3.s8 %v526
    %v2095 = vunpack.c.3.s8 %v527
    %v2096 = vunpack.c.3.s8 %v528
    %v2097 = vunpack.c.3.s8 %v529
    %v2098 = vunpack.c.3.s8 %v530
    %v2099 = vunpack.c.3.s8 %v531
    %v2100 = vunpack.c.3.s8 %v532
    %v2101 = vunpack.c.3.s8 %v533
    %v2102 = vunpack.c.3.s8 %v534
    %v2103 = vunpack.c.3.s8 %v535
    %v2104 = vunpack.c.3.s8 %v536
    %v2105 = vunpack.c.3.s8 %v537
    %v2106 = vunpack.c.0.s8 %v538
    %v2107 = vunpack.c.0.s8 %v539
    %v2108 = vunpack.c.0.s8 %v540
    %v2109 = vunpack.c.0.s8 %v541
    %v2110 = vunpack.c.0.s8 %v542
    %v2111 = vunpack.c.0.s8 %v543
    %v2112 = vunpack.c.0.s8 %v544
    %v2113 = vunpack.c.0.s8 %v545
    %v2114 = vunpack.c.0.s8 %v546
    %v2115 = vunpack.c.0.s8 %v547
    %v2116 = vunpack.c.0.s8 %v548
    %v2117 = vunpack.c.0.s8 %v549
    %v2118 = vunpack.c.0.s8 %v550
    %v2119 = vunpack.c.0.s8 %v551
    %v2120 = vunpack.c.0.s8 %v552
    %v2121 = vunpack.c.0.s8 %v553
    %v2122 = vunpack.c.1.s8 %v538
    %v2123 = vunpack.c.1.s8 %v539
    %v2124 = vunpack.c.1.s8 %v540
    %v2125 = vunpack.c.1.s8 %v541
    %v2126 = vunpack.c.1.s8 %v542
    %v2127 = vunpack.c.1.s8 %v543
    %v2128 = vunpack.c.1.s8 %v544
    %v2129 = vunpack.c.1.s8 %v545
    %v2130 = vunpack.c.1.s8 %v546
    %v2131 = vunpack.c.1.s8 %v547
    %v2132 = vunpack.c.1.s8 %v548
    %v2133 = vunpack.c.1.s8 %v549
    %v2134 = vunpack.c.1.s8 %v550
    %v2135 = vunpack.c.1.s8 %v551
    %v2136 = vunpack.c.1.s8 %v552
    %v2137 = vunpack.c.1.s8 %v553
    %v2138 = vunpack.c.2.s8 %v538
    %v2139 = vunpack.c.2.s8 %v539
    %v2140 = vunpack.c.2.s8 %v540
    %v2141 = vunpack.c.2.s8 %v541
    %v2142 = vunpack.c.2.s8 %v542
    %v2143 = vunpack.c.2.s8 %v543
    %v2144 = vunpack.c.2.s8 %v544
    %v2145 = vunpack.c.2.s8 %v545
    %v2146 = vunpack.c.2.s8 %v546
    %v2147 = vunpack.c.2.s8 %v547
    %v2148 = vunpack.c.2.s8 %v548
    %v2149 = vunpack.c.2.s8 %v549
    %v2150 = vunpack.c.2.s8 %v550
    %v2151 = vunpack.c.2.s8 %v551
    %v2152 = vunpack.c.2.s8 %v552
    %v2153 = vunpack.c.2.s8 %v553
    %v2154 = vunpack.c.3.s8 %v538
    %v2155 = vunpack.c.3.s8 %v539
    %v2156 = vunpack.c.3.s8 %v540
    %v2157 = vunpack.c.3.s8 %v541
    %v2158 = vunpack.c.3.s8 %v542
    %v2159 = vunpack.c.3.s8 %v543
    %v2160 = vunpack.c.3.s8 %v544
    %v2161 = vunpack.c.3.s8 %v545
    %v2162 = vunpack.c.3.s8 %v546
    %v2163 = vunpack.c.3.s8 %v547
    %v2164 = vunpack.c.3.s8 %v548
    %v2165 = vunpack.c.3.s8 %v549
    %v2166 = vunpack.c.3.s8 %v550
    %v2167 = vunpack.c.3.s8 %v551
    %v2168 = vunpack.c.3.s8 %v552
    %v2169 = vunpack.c.3.s8 %v553
    %v2170 = vunpack.c.0.s8 %v554
    %v2171 = vunpack.c.0.s8 %v555
    %v2172 = vunpack.c.0.s8 %v556
    %v2173 = vunpack.c.0.s8 %v557
    %v2174 = vunpack.c.0.s8 %v558
    %v2175 = vunpack.c.0.s8 %v559
    %v2176 = vunpack.c.0.s8 %v560
    %v2177 = vunpack.c.0.s8 %v561
    %v2178 = vunpack.c.0.s8 %v562
    %v2179 = vunpack.c.0.s8 %v563
    %v2180 = vunpack.c.0.s8 %v564
    %v2181 = vunpack.c.0.s8 %v565
    %v2182 = vunpack.c.0.s8 %v566
    %v2183 = vunpack.c.0.s8 %v567
    %v2184 = vunpack.c.0.s8 %v568
    %v2185 = vunpack.c.0.s8 %v569
    %v2186 = vunpack.c.1.s8 %v554
    %v2187 = vunpack.c.1.s8 %v555
    %v2188 = vunpack.c.1.s8 %v556
    %v2189 = vunpack.c.1.s8 %v557
    %v2190 = vunpack.c.1.s8 %v558
    %v2191 = vunpack.c.1.s8 %v559
    %v2192 = vunpack.c.1.s8 %v560
    %v2193 = vunpack.c.1.s8 %v561
    %v2194 = vunpack.c.1.s8 %v562
    %v2195 = vunpack.c.1.s8 %v563
    %v2196 = vunpack.c.1.s8 %v564
    %v2197 = vunpack.c.1.s8 %v565
    %v2198 = vunpack.c.1.s8 %v566
    %v2199 = vunpack.c.1.s8 %v567
    %v2200 = vunpack.c.1.s8 %v568
    %v2201 = vunpack.c.1.s8 %v569
    %v2202 = vunpack.c.2.s8 %v554
    %v2203 = vunpack.c.2.s8 %v555
    %v2204 = vunpack.c.2.s8 %v556
    %v2205 = vunpack.c.2.s8 %v557
    %v2206 = vunpack.c.2.s8 %v558
    %v2207 = vunpack.c.2.s8 %v559
    %v2208 = vunpack.c.2.s8 %v560
    %v2209 = vunpack.c.2.s8 %v561
    %v2210 = vunpack.c.2.s8 %v562
    %v2211 = vunpack.c.2.s8 %v563
    %v2212 = vunpack.c.2.s8 %v564
    %v2213 = vunpack.c.2.s8 %v565
    %v2214 = vunpack.c.2.s8 %v566
    %v2215 = vunpack.c.2.s8 %v567
    %v2216 = vunpack.c.2.s8 %v568
    %v2217 = vunpack.c.2.s8 %v569
    %v2218 = vunpack.c.3.s8 %v554
    %v2219 = vunpack.c.3.s8 %v555
    %v2220 = vunpack.c.3.s8 %v556
    %v2221 = vunpack.c.3.s8 %v557
    %v2222 = vunpack.c.3.s8 %v558
    %v2223 = vunpack.c.3.s8 %v559
    %v2224 = vunpack.c.3.s8 %v560
    %v2225 = vunpack.c.3.s8 %v561
    %v2226 = vunpack.c.3.s8 %v562
    %v2227 = vunpack.c.3.s8 %v563
    %v2228 = vunpack.c.3.s8 %v564
    %v2229 = vunpack.c.3.s8 %v565
    %v2230 = vunpack.c.3.s8 %v566
    %v2231 = vunpack.c.3.s8 %v567
    %v2232 = vunpack.c.3.s8 %v568
    %v2233 = vunpack.c.3.s8 %v569
    %v2234 = vunpack.c.0.s8 %v570
    %v2235 = vunpack.c.0.s8 %v571
    %v2236 = vunpack.c.0.s8 %v572
    %v2237 = vunpack.c.0.s8 %v573
    %v2238 = vunpack.c.0.s8 %v574
    %v2239 = vunpack.c.0.s8 %v575
    %v2240 = vunpack.c.0.s8 %v576
    %v2241 = vunpack.c.0.s8 %v577
    %v2242 = vunpack.c.0.s8 %v578
    %v2243 = vunpack.c.0.s8 %v579
    %v2244 = vunpack.c.0.s8 %v580
    %v2245 = vunpack.c.0.s8 %v581
    %v2246 = vunpack.c.0.s8 %v582
    %v2247 = vunpack.c.0.s8 %v583
    %v2248 = vunpack.c.0.s8 %v584
    %v2249 = vunpack.c.0.s8 %v585
    %v2250 = vunpack.c.1.s8 %v570
    %v2251 = vunpack.c.1.s8 %v571
    %v2252 = vunpack.c.1.s8 %v572
    %v2253 = vunpack.c.1.s8 %v573
    %v2254 = vunpack.c.1.s8 %v574
    %v2255 = vunpack.c.1.s8 %v575
    %v2256 = vunpack.c.1.s8 %v576
    %v2257 = vunpack.c.1.s8 %v577
    %v2258 = vunpack.c.1.s8 %v578
    %v2259 = vunpack.c.1.s8 %v579
    %v2260 = vunpack.c.1.s8 %v580
    %v2261 = vunpack.c.1.s8 %v581
    %v2262 = vunpack.c.1.s8 %v582
    %v2263 = vunpack.c.1.s8 %v583
    %v2264 = vunpack.c.1.s8 %v584
    %v2265 = vunpack.c.1.s8 %v585
    %v2266 = vunpack.c.2.s8 %v570
    %v2267 = vunpack.c.2.s8 %v571
    %v2268 = vunpack.c.2.s8 %v572
    %v2269 = vunpack.c.2.s8 %v573
    %v2270 = vunpack.c.2.s8 %v574
    %v2271 = vunpack.c.2.s8 %v575
    %v2272 = vunpack.c.2.s8 %v576
    %v2273 = vunpack.c.2.s8 %v577
    %v2274 = vunpack.c.2.s8 %v578
    %v2275 = vunpack.c.2.s8 %v579
    %v2276 = vunpack.c.2.s8 %v580
    %v2277 = vunpack.c.2.s8 %v581
    %v2278 = vunpack.c.2.s8 %v582
    %v2279 = vunpack.c.2.s8 %v583
    %v2280 = vunpack.c.2.s8 %v584
    %v2281 = vunpack.c.2.s8 %v585
    %v2282 = vunpack.c.3.s8 %v570
    %v2283 = vunpack.c.3.s8 %v571
    %v2284 = vunpack.c.3.s8 %v572
    %v2285 = vunpack.c.3.s8 %v573
    %v2286 = vunpack.c.3.s8 %v574
    %v2287 = vunpack.c.3.s8 %v575
    %v2288 = vunpack.c.3.s8 %v576
    %v2289 = vunpack.c.3.s8 %v577
    %v2290 = vunpack.c.3.s8 %v578
    %v2291 = vunpack.c.3.s8 %v579
    %v2292 = vunpack.c.3.s8 %v580
    %v2293 = vunpack.c.3.s8 %v581
    %v2294 = vunpack.c.3.s8 %v582
    %v2295 = vunpack.c.3.s8 %v583
    %v2296 = vunpack.c.3.s8 %v584
    %v2297 = vunpack.c.3.s8 %v585
    %v2298 = vunpack.c.0.s8 %v586
    %v2299 = vunpack.c.0.s8 %v587
    %v2300 = vunpack.c.0.s8 %v588
    %v2301 = vunpack.c.0.s8 %v589
    %v2302 = vunpack.c.0.s8 %v590
    %v2303 = vunpack.c.0.s8 %v591
    %v2304 = vunpack.c.0.s8 %v592
    %v2305 = vunpack.c.0.s8 %v593
    %v2306 = vunpack.c.0.s8 %v594
    %v2307 = vunpack.c.0.s8 %v595
    %v2308 = vunpack.c.0.s8 %v596
    %v2309 = vunpack.c.0.s8 %v597
    %v2310 = vunpack.c.0.s8 %v598
    %v2311 = vunpack.c.0.s8 %v599
    %v2312 = vunpack.c.0.s8 %v600
    %v2313 = vunpack.c.0.s8 %v601
    %v2314 = vunpack.c.1.s8 %v586
    %v2315 = vunpack.c.1.s8 %v587
    %v2316 = vunpack.c.1.s8 %v588
    %v2317 = vunpack.c.1.s8 %v589
    %v2318 = vunpack.c.1.s8 %v590
    %v2319 = vunpack.c.1.s8 %v591
    %v2320 = vunpack.c.1.s8 %v592
    %v2321 = vunpack.c.1.s8 %v593
    %v2322 = vunpack.c.1.s8 %v594
    %v2323 = vunpack.c.1.s8 %v595
    %v2324 = vunpack.c.1.s8 %v596
    %v2325 = vunpack.c.1.s8 %v597
    %v2326 = vunpack.c.1.s8 %v598
    %v2327 = vunpack.c.1.s8 %v599
    %v2328 = vunpack.c.1.s8 %v600
    %v2329 = vunpack.c.1.s8 %v601
    %v2330 = vunpack.c.2.s8 %v586
    %v2331 = vunpack.c.2.s8 %v587
    %v2332 = vunpack.c.2.s8 %v588
    %v2333 = vunpack.c.2.s8 %v589
    %v2334 = vunpack.c.2.s8 %v590
    %v2335 = vunpack.c.2.s8 %v591
    %v2336 = vunpack.c.2.s8 %v592
    %v2337 = vunpack.c.2.s8 %v593
    %v2338 = vunpack.c.2.s8 %v594
    %v2339 = vunpack.c.2.s8 %v595
    %v2340 = vunpack.c.2.s8 %v596
    %v2341 = vunpack.c.2.s8 %v597
    %v2342 = vunpack.c.2.s8 %v598
    %v2343 = vunpack.c.2.s8 %v599
    %v2344 = vunpack.c.2.s8 %v600
    %v2345 = vunpack.c.2.s8 %v601
    %v2346 = vunpack.c.3.s8 %v586
    %v2347 = vunpack.c.3.s8 %v587
    %v2348 = vunpack.c.3.s8 %v588
    %v2349 = vunpack.c.3.s8 %v589
    %v2350 = vunpack.c.3.s8 %v590
    %v2351 = vunpack.c.3.s8 %v591
    %v2352 = vunpack.c.3.s8 %v592
    %v2353 = vunpack.c.3.s8 %v593
    %v2354 = vunpack.c.3.s8 %v594
    %v2355 = vunpack.c.3.s8 %v595
    %v2356 = vunpack.c.3.s8 %v596
    %v2357 = vunpack.c.3.s8 %v597
    %v2358 = vunpack.c.3.s8 %v598
    %v2359 = vunpack.c.3.s8 %v599
    %v2360 = vunpack.c.3.s8 %v600
    %v2361 = vunpack.c.3.s8 %v601
    %v2362 = vunpack.c.0.s8 %v602
    %v2363 = vunpack.c.0.s8 %v603
    %v2364 = vunpack.c.0.s8 %v604
    %v2365 = vunpack.c.0.s8 %v605
    %v2366 = vunpack.c.0.s8 %v606
    %v2367 = vunpack.c.0.s8 %v607
    %v2368 = vunpack.c.0.s8 %v608
    %v2369 = vunpack.c.0.s8 %v609
    %v2370 = vunpack.c.0.s8 %v610
    %v2371 = vunpack.c.0.s8 %v611
    %v2372 = vunpack.c.0.s8 %v612
    %v2373 = vunpack.c.0.s8 %v613
    %v2374 = vunpack.c.0.s8 %v614
    %v2375 = vunpack.c.0.s8 %v615
    %v2376 = vunpack.c.0.s8 %v616
    %v2377 = vunpack.c.0.s8 %v617
    %v2378 = vunpack.c.1.s8 %v602
    %v2379 = vunpack.c.1.s8 %v603
    %v2380 = vunpack.c.1.s8 %v604
    %v2381 = vunpack.c.1.s8 %v605
    %v2382 = vunpack.c.1.s8 %v606
    %v2383 = vunpack.c.1.s8 %v607
    %v2384 = vunpack.c.1.s8 %v608
    %v2385 = vunpack.c.1.s8 %v609
    %v2386 = vunpack.c.1.s8 %v610
    %v2387 = vunpack.c.1.s8 %v611
    %v2388 = vunpack.c.1.s8 %v612
    %v2389 = vunpack.c.1.s8 %v613
    %v2390 = vunpack.c.1.s8 %v614
    %v2391 = vunpack.c.1.s8 %v615
    %v2392 = vunpack.c.1.s8 %v616
    %v2393 = vunpack.c.1.s8 %v617
    %v2394 = vunpack.c.2.s8 %v602
    %v2395 = vunpack.c.2.s8 %v603
    %v2396 = vunpack.c.2.s8 %v604
    %v2397 = vunpack.c.2.s8 %v605
    %v2398 = vunpack.c.2.s8 %v606
    %v2399 = vunpack.c.2.s8 %v607
    %v2400 = vunpack.c.2.s8 %v608
    %v2401 = vunpack.c.2.s8 %v609
    %v2402 = vunpack.c.2.s8 %v610
    %v2403 = vunpack.c.2.s8 %v611
    %v2404 = vunpack.c.2.s8 %v612
    %v2405 = vunpack.c.2.s8 %v613
    %v2406 = vunpack.c.2.s8 %v614
    %v2407 = vunpack.c.2.s8 %v615
    %v2408 = vunpack.c.2.s8 %v616
    %v2409 = vunpack.c.2.s8 %v617
    %v2410 = vunpack.c.3.s8 %v602
    %v2411 = vunpack.c.3.s8 %v603
    %v2412 = vunpack.c.3.s8 %v604
    %v2413 = vunpack.c.3.s8 %v605
    %v2414 = vunpack.c.3.s8 %v606
    %v2415 = vunpack.c.3.s8 %v607
    %v2416 = vunpack.c.3.s8 %v608
    %v2417 = vunpack.c.3.s8 %v609
    %v2418 = vunpack.c.3.s8 %v610
    %v2419 = vunpack.c.3.s8 %v611
    %v2420 = vunpack.c.3.s8 %v612
    %v2421 = vunpack.c.3.s8 %v613
    %v2422 = vunpack.c.3.s8 %v614
    %v2423 = vunpack.c.3.s8 %v615
    %v2424 = vunpack.c.3.s8 %v616
    %v2425 = vunpack.c.3.s8 %v617
    %v2426 = vunpack.c.0.s8 %v618
    %v2427 = vunpack.c.0.s8 %v619
    %v2428 = vunpack.c.0.s8 %v620
    %v2429 = vunpack.c.0.s8 %v621
    %v2430 = vunpack.c.0.s8 %v622
    %v2431 = vunpack.c.0.s8 %v623
    %v2432 = vunpack.c.0.s8 %v624
    %v2433 = vunpack.c.0.s8 %v625
    %v2434 = vunpack.c.0.s8 %v626
    %v2435 = vunpack.c.0.s8 %v627
    %v2436 = vunpack.c.0.s8 %v628
    %v2437 = vunpack.c.0.s8 %v629
    %v2438 = vunpack.c.0.s8 %v630
    %v2439 = vunpack.c.0.s8 %v631
    %v2440 = vunpack.c.0.s8 %v632
    %v2441 = vunpack.c.0.s8 %v633
    %v2442 = vunpack.c.1.s8 %v618
    %v2443 = vunpack.c.1.s8 %v619
    %v2444 = vunpack.c.1.s8 %v620
    %v2445 = vunpack.c.1.s8 %v621
    %v2446 = vunpack.c.1.s8 %v622
    %v2447 = vunpack.c.1.s8 %v623
    %v2448 = vunpack.c.1.s8 %v624
    %v2449 = vunpack.c.1.s8 %v625
    %v2450 = vunpack.c.1.s8 %v626
    %v2451 = vunpack.c.1.s8 %v627
    %v2452 = vunpack.c.1.s8 %v628
    %v2453 = vunpack.c.1.s8 %v629
    %v2454 = vunpack.c.1.s8 %v630
    %v2455 = vunpack.c.1.s8 %v631
    %v2456 = vunpack.c.1.s8 %v632
    %v2457 = vunpack.c.1.s8 %v633
    %v2458 = vunpack.c.2.s8 %v618
    %v2459 = vunpack.c.2.s8 %v619
    %v2460 = vunpack.c.2.s8 %v620
    %v2461 = vunpack.c.2.s8 %v621
    %v2462 = vunpack.c.2.s8 %v622
    %v2463 = vunpack.c.2.s8 %v623
    %v2464 = vunpack.c.2.s8 %v624
    %v2465 = vunpack.c.2.s8 %v625
    %v2466 = vunpack.c.2.s8 %v626
    %v2467 = vunpack.c.2.s8 %v627
    %v2468 = vunpack.c.2.s8 %v628
    %v2469 = vunpack.c.2.s8 %v629
    %v2470 = vunpack.c.2.s8 %v630
    %v2471 = vunpack.c.2.s8 %v631
    %v2472 = vunpack.c.2.s8 %v632
    %v2473 = vunpack.c.2.s8 %v633
    %v2474 = vunpack.c.3.s8 %v618
    %v2475 = vunpack.c.3.s8 %v619
    %v2476 = vunpack.c.3.s8 %v620
    %v2477 = vunpack.c.3.s8 %v621
    %v2478 = vunpack.c.3.s8 %v622
    %v2479 = vunpack.c.3.s8 %v623
    %v2480 = vunpack.c.3.s8 %v624
    %v2481 = vunpack.c.3.s8 %v625
    %v2482 = vunpack.c.3.s8 %v626
    %v2483 = vunpack.c.3.s8 %v627
    %v2484 = vunpack.c.3.s8 %v628
    %v2485 = vunpack.c.3.s8 %v629
    %v2486 = vunpack.c.3.s8 %v630
    %v2487 = vunpack.c.3.s8 %v631
    %v2488 = vunpack.c.3.s8 %v632
    %v2489 = vunpack.c.3.s8 %v633
    %v2490 = vunpack.c.0.s8 %v634
    %v2491 = vunpack.c.0.s8 %v635
    %v2492 = vunpack.c.0.s8 %v636
    %v2493 = vunpack.c.0.s8 %v637
    %v2494 = vunpack.c.0.s8 %v638
    %v2495 = vunpack.c.0.s8 %v639
    %v2496 = vunpack.c.0.s8 %v640
    %v2497 = vunpack.c.0.s8 %v641
    %v2498 = vunpack.c.0.s8 %v642
    %v2499 = vunpack.c.0.s8 %v643
    %v2500 = vunpack.c.0.s8 %v644
    %v2501 = vunpack.c.0.s8 %v645
    %v2502 = vunpack.c.0.s8 %v646
    %v2503 = vunpack.c.0.s8 %v647
    %v2504 = vunpack.c.0.s8 %v648
    %v2505 = vunpack.c.0.s8 %v649
    %v2506 = vunpack.c.1.s8 %v634
    %v2507 = vunpack.c.1.s8 %v635
    %v2508 = vunpack.c.1.s8 %v636
    %v2509 = vunpack.c.1.s8 %v637
    %v2510 = vunpack.c.1.s8 %v638
    %v2511 = vunpack.c.1.s8 %v639
    %v2512 = vunpack.c.1.s8 %v640
    %v2513 = vunpack.c.1.s8 %v641
    %v2514 = vunpack.c.1.s8 %v642
    %v2515 = vunpack.c.1.s8 %v643
    %v2516 = vunpack.c.1.s8 %v644
    %v2517 = vunpack.c.1.s8 %v645
    %v2518 = vunpack.c.1.s8 %v646
    %v2519 = vunpack.c.1.s8 %v647
    %v2520 = vunpack.c.1.s8 %v648
    %v2521 = vunpack.c.1.s8 %v649
    %v2522 = vunpack.c.2.s8 %v634
    %v2523 = vunpack.c.2.s8 %v635
    %v2524 = vunpack.c.2.s8 %v636
    %v2525 = vunpack.c.2.s8 %v637
    %v2526 = vunpack.c.2.s8 %v638
    %v2527 = vunpack.c.2.s8 %v639
    %v2528 = vunpack.c.2.s8 %v640
    %v2529 = vunpack.c.2.s8 %v641
    %v2530 = vunpack.c.2.s8 %v642
    %v2531 = vunpack.c.2.s8 %v643
    %v2532 = vunpack.c.2.s8 %v644
    %v2533 = vunpack.c.2.s8 %v645
    %v2534 = vunpack.c.2.s8 %v646
    %v2535 = vunpack.c.2.s8 %v647
    %v2536 = vunpack.c.2.s8 %v648
    %v2537 = vunpack.c.2.s8 %v649
    %v2538 = vunpack.c.3.s8 %v634
    %v2539 = vunpack.c.3.s8 %v635
    %v2540 = vunpack.c.3.s8 %v636
    %v2541 = vunpack.c.3.s8 %v637
    %v2542 = vunpack.c.3.s8 %v638
    %v2543 = vunpack.c.3.s8 %v639
    %v2544 = vunpack.c.3.s8 %v640
    %v2545 = vunpack.c.3.s8 %v641
    %v2546 = vunpack.c.3.s8 %v642
    %v2547 = vunpack.c.3.s8 %v643
    %v2548 = vunpack.c.3.s8 %v644
    %v2549 = vunpack.c.3.s8 %v645
    %v2550 = vunpack.c.3.s8 %v646
    %v2551 = vunpack.c.3.s8 %v647
    %v2552 = vunpack.c.3.s8 %v648
    %v2553 = vunpack.c.3.s8 %v649
    %v2554 = vunpack.c.0.s8 %v650
    %v2555 = vunpack.c.0.s8 %v651
    %v2556 = vunpack.c.0.s8 %v652
    %v2557 = vunpack.c.0.s8 %v653
    %v2558 = vunpack.c.0.s8 %v654
    %v2559 = vunpack.c.0.s8 %v655
    %v2560 = vunpack.c.0.s8 %v656
    %v2561 = vunpack.c.0.s8 %v657
    %v2562 = vunpack.c.0.s8 %v658
    %v2563 = vunpack.c.0.s8 %v659
    %v2564 = vunpack.c.0.s8 %v660
    %v2565 = vunpack.c.0.s8 %v661
    %v2566 = vunpack.c.0.s8 %v662
    %v2567 = vunpack.c.0.s8 %v663
    %v2568 = vunpack.c.0.s8 %v664
    %v2569 = vunpack.c.0.s8 %v665
    %v2570 = vunpack.c.1.s8 %v650
    %v2571 = vunpack.c.1.s8 %v651
    %v2572 = vunpack.c.1.s8 %v652
    %v2573 = vunpack.c.1.s8 %v653
    %v2574 = vunpack.c.1.s8 %v654
    %v2575 = vunpack.c.1.s8 %v655
    %v2576 = vunpack.c.1.s8 %v656
    %v2577 = vunpack.c.1.s8 %v657
    %v2578 = vunpack.c.1.s8 %v658
    %v2579 = vunpack.c.1.s8 %v659
    %v2580 = vunpack.c.1.s8 %v660
    %v2581 = vunpack.c.1.s8 %v661
    %v2582 = vunpack.c.1.s8 %v662
    %v2583 = vunpack.c.1.s8 %v663
    %v2584 = vunpack.c.1.s8 %v664
    %v2585 = vunpack.c.1.s8 %v665
    %v2586 = vunpack.c.2.s8 %v650
    %v2587 = vunpack.c.2.s8 %v651
    %v2588 = vunpack.c.2.s8 %v652
    %v2589 = vunpack.c.2.s8 %v653
    %v2590 = vunpack.c.2.s8 %v654
    %v2591 = vunpack.c.2.s8 %v655
    %v2592 = vunpack.c.2.s8 %v656
    %v2593 = vunpack.c.2.s8 %v657
    %v2594 = vunpack.c.2.s8 %v658
    %v2595 = vunpack.c.2.s8 %v659
    %v2596 = vunpack.c.2.s8 %v660
    %v2597 = vunpack.c.2.s8 %v661
    %v2598 = vunpack.c.2.s8 %v662
    %v2599 = vunpack.c.2.s8 %v663
    %v2600 = vunpack.c.2.s8 %v664
    %v2601 = vunpack.c.2.s8 %v665
    %v2602 = vunpack.c.3.s8 %v650
    %v2603 = vunpack.c.3.s8 %v651
    %v2604 = vunpack.c.3.s8 %v652
    %v2605 = vunpack.c.3.s8 %v653
    %v2606 = vunpack.c.3.s8 %v654
    %v2607 = vunpack.c.3.s8 %v655
    %v2608 = vunpack.c.3.s8 %v656
    %v2609 = vunpack.c.3.s8 %v657
    %v2610 = vunpack.c.3.s8 %v658
    %v2611 = vunpack.c.3.s8 %v659
    %v2612 = vunpack.c.3.s8 %v660
    %v2613 = vunpack.c.3.s8 %v661
    %v2614 = vunpack.c.3.s8 %v662
    %v2615 = vunpack.c.3.s8 %v663
    %v2616 = vunpack.c.3.s8 %v664
    %v2617 = vunpack.c.3.s8 %v665
    %v2618 = vunpack.c.0.s8 %v666
    %v2619 = vunpack.c.0.s8 %v667
    %v2620 = vunpack.c.0.s8 %v668
    %v2621 = vunpack.c.0.s8 %v669
    %v2622 = vunpack.c.0.s8 %v670
    %v2623 = vunpack.c.0.s8 %v671
    %v2624 = vunpack.c.0.s8 %v672
    %v2625 = vunpack.c.0.s8 %v673
    %v2626 = vunpack.c.0.s8 %v674
    %v2627 = vunpack.c.0.s8 %v675
    %v2628 = vunpack.c.0.s8 %v676
    %v2629 = vunpack.c.0.s8 %v677
    %v2630 = vunpack.c.0.s8 %v678
    %v2631 = vunpack.c.0.s8 %v679
    %v2632 = vunpack.c.0.s8 %v680
    %v2633 = vunpack.c.0.s8 %v681
    %v2634 = vunpack.c.1.s8 %v666
    %v2635 = vunpack.c.1.s8 %v667
    %v2636 = vunpack.c.1.s8 %v668
    %v2637 = vunpack.c.1.s8 %v669
    %v2638 = vunpack.c.1.s8 %v670
    %v2639 = vunpack.c.1.s8 %v671
    %v2640 = vunpack.c.1.s8 %v672
    %v2641 = vunpack.c.1.s8 %v673
    %v2642 = vunpack.c.1.s8 %v674
    %v2643 = vunpack.c.1.s8 %v675
    %v2644 = vunpack.c.1.s8 %v676
    %v2645 = vunpack.c.1.s8 %v677
    %v2646 = vunpack.c.1.s8 %v678
    %v2647 = vunpack.c.1.s8 %v679
    %v2648 = vunpack.c.1.s8 %v680
    %v2649 = vunpack.c.1.s8 %v681
    %v2650 = vunpack.c.2.s8 %v666
    %v2651 = vunpack.c.2.s8 %v667
    %v2652 = vunpack.c.2.s8 %v668
    %v2653 = vunpack.c.2.s8 %v669
    %v2654 = vunpack.c.2.s8 %v670
    %v2655 = vunpack.c.2.s8 %v671
    %v2656 = vunpack.c.2.s8 %v672
    %v2657 = vunpack.c.2.s8 %v673
    %v2658 = vunpack.c.2.s8 %v674
    %v2659 = vunpack.c.2.s8 %v675
    %v2660 = vunpack.c.2.s8 %v676
    %v2661 = vunpack.c.2.s8 %v677
    %v2662 = vunpack.c.2.s8 %v678
    %v2663 = vunpack.c.2.s8 %v679
    %v2664 = vunpack.c.2.s8 %v680
    %v2665 = vunpack.c.2.s8 %v681
    %v2666 = vunpack.c.3.s8 %v666
    %v2667 = vunpack.c.3.s8 %v667
    %v2668 = vunpack.c.3.s8 %v668
    %v2669 = vunpack.c.3.s8 %v669
    %v2670 = vunpack.c.3.s8 %v670
    %v2671 = vunpack.c.3.s8 %v671
    %v2672 = vunpack.c.3.s8 %v672
    %v2673 = vunpack.c.3.s8 %v673
    %v2674 = vunpack.c.3.s8 %v674
    %v2675 = vunpack.c.3.s8 %v675
    %v2676 = vunpack.c.3.s8 %v676
    %v2677 = vunpack.c.3.s8 %v677
    %v2678 = vunpack.c.3.s8 %v678
    %v2679 = vunpack.c.3.s8 %v679
    %v2680 = vunpack.c.3.s8 %v680
    %v2681 = vunpack.c.3.s8 %v681
    %v2682 = vunpack.c.0.s8 %v682
    %v2683 = vunpack.c.0.s8 %v683
    %v2684 = vunpack.c.0.s8 %v684
    %v2685 = vunpack.c.0.s8 %v685
    %v2686 = vunpack.c.0.s8 %v686
    %v2687 = vunpack.c.0.s8 %v687
    %v2688 = vunpack.c.0.s8 %v688
    %v2689 = vunpack.c.0.s8 %v689
    %v2690 = vunpack.c.0.s8 %v690
    %v2691 = vunpack.c.0.s8 %v691
    %v2692 = vunpack.c.0.s8 %v692
    %v2693 = vunpack.c.0.s8 %v693
    %v2694 = vunpack.c.0.s8 %v694
    %v2695 = vunpack.c.0.s8 %v695
    %v2696 = vunpack.c.0.s8 %v696
    %v2697 = vunpack.c.0.s8 %v697
    %v2698 = vunpack.c.1.s8 %v682
    %v2699 = vunpack.c.1.s8 %v683
    %v2700 = vunpack.c.1.s8 %v684
    %v2701 = vunpack.c.1.s8 %v685
    %v2702 = vunpack.c.1.s8 %v686
    %v2703 = vunpack.c.1.s8 %v687
    %v2704 = vunpack.c.1.s8 %v688
    %v2705 = vunpack.c.1.s8 %v689
    %v2706 = vunpack.c.1.s8 %v690
    %v2707 = vunpack.c.1.s8 %v691
    %v2708 = vunpack.c.1.s8 %v692
    %v2709 = vunpack.c.1.s8 %v693
    %v2710 = vunpack.c.1.s8 %v694
    %v2711 = vunpack.c.1.s8 %v695
    %v2712 = vunpack.c.1.s8 %v696
    %v2713 = vunpack.c.1.s8 %v697
    %v2714 = vunpack.c.2.s8 %v682
    %v2715 = vunpack.c.2.s8 %v683
    %v2716 = vunpack.c.2.s8 %v684
    %v2717 = vunpack.c.2.s8 %v685
    %v2718 = vunpack.c.2.s8 %v686
    %v2719 = vunpack.c.2.s8 %v687
    %v2720 = vunpack.c.2.s8 %v688
    %v2721 = vunpack.c.2.s8 %v689
    %v2722 = vunpack.c.2.s8 %v690
    %v2723 = vunpack.c.2.s8 %v691
    %v2724 = vunpack.c.2.s8 %v692
    %v2725 = vunpack.c.2.s8 %v693
    %v2726 = vunpack.c.2.s8 %v694
    %v2727 = vunpack.c.2.s8 %v695
    %v2728 = vunpack.c.2.s8 %v696
    %v2729 = vunpack.c.2.s8 %v697
    %v2730 = vunpack.c.3.s8 %v682
    %v2731 = vunpack.c.3.s8 %v683
    %v2732 = vunpack.c.3.s8 %v684
    %v2733 = vunpack.c.3.s8 %v685
    %v2734 = vunpack.c.3.s8 %v686
    %v2735 = vunpack.c.3.s8 %v687
    %v2736 = vunpack.c.3.s8 %v688
    %v2737 = vunpack.c.3.s8 %v689
    %v2738 = vunpack.c.3.s8 %v690
    %v2739 = vunpack.c.3.s8 %v691
    %v2740 = vunpack.c.3.s8 %v692
    %v2741 = vunpack.c.3.s8 %v693
    %v2742 = vunpack.c.3.s8 %v694
    %v2743 = vunpack.c.3.s8 %v695
    %v2744 = vunpack.c.3.s8 %v696
    %v2745 = vunpack.c.3.s8 %v697
    %v2746 = vcvt.s32.f32 %v698
    %v2747 = vcvt.s32.f32 %v699
    %v2748 = vcvt.s32.f32 %v700
    %v2749 = vcvt.s32.f32 %v701
    %v2750 = vcvt.s32.f32 %v702
    %v2751 = vcvt.s32.f32 %v703
    %v2752 = vcvt.s32.f32 %v704
    %v2753 = vcvt.s32.f32 %v705
    %v2754 = vcvt.s32.f32 %v706
    %v2755 = vcvt.s32.f32 %v707
    %v2756 = vcvt.s32.f32 %v708
    %v2757 = vcvt.s32.f32 %v709
    %v2758 = vcvt.s32.f32 %v710
    %v2759 = vcvt.s32.f32 %v711
    %v2760 = vcvt.s32.f32 %v712
    %v2761 = vcvt.s32.f32 %v713
    %v2762 = vcvt.s32.f32 %v714
    %v2763 = vcvt.s32.f32 %v715
    %v2764 = vcvt.s32.f32 %v716
    %v2765 = vcvt.s32.f32 %v717
    %v2766 = vcvt.s32.f32 %v718
    %v2767 = vcvt.s32.f32 %v719
    %v2768 = vcvt.s32.f32 %v720
    %v2769 = vcvt.s32.f32 %v721
    %v2770 = vcvt.s32.f32 %v722
    %v2771 = vcvt.s32.f32 %v723
    %v2772 = vcvt.s32.f32 %v724
    %v2773 = vcvt.s32.f32 %v725
    %v2774 = vcvt.s32.f32 %v726
    %v2775 = vcvt.s32.f32 %v727
    %v2776 = vcvt.s32.f32 %v728
    %v2777 = vcvt.s32.f32 %v729
    %v2778 = vcvt.s32.f32 %v730
    %v2779 = vcvt.s32.f32 %v731
    %v2780 = vcvt.s32.f32 %v732
    %v2781 = vcvt.s32.f32 %v733
    %v2782 = vcvt.s32.f32 %v734
    %v2783 = vcvt.s32.f32 %v735
    %v2784 = vcvt.s32.f32 %v736
    %v2785 = vcvt.s32.f32 %v737
    %v2786 = vcvt.s32.f32 %v738
    %v2787 = vcvt.s32.f32 %v739
    %v2788 = vcvt.s32.f32 %v740
    %v2789 = vcvt.s32.f32 %v741
    %v2790 = vcvt.s32.f32 %v742
    %v2791 = vcvt.s32.f32 %v743
    %v2792 = vcvt.s32.f32 %v744
    %v2793 = vcvt.s32.f32 %v745
    %v2794 = vcvt.s32.f32 %v746
    %v2795 = vcvt.s32.f32 %v747
    %v2796 = vcvt.s32.f32 %v748
    %v2797 = vcvt.s32.f32 %v749
    %v2798 = vcvt.s32.f32 %v750
    %v2799 = vcvt.s32.f32 %v751
    %v2800 = vcvt.s32.f32 %v752
    %v2801 = vcvt.s32.f32 %v753
    %v2802 = vcvt.s32.f32 %v754
    %v2803 = vcvt.s32.f32 %v755
    %v2804 = vcvt.s32.f32 %v756
    %v2805 = vcvt.s32.f32 %v757
    %v2806 = vcvt.s32.f32 %v758
    %v2807 = vcvt.s32.f32 %v759
    %v2808 = vcvt.s32.f32 %v760
    %v2809 = vcvt.s32.f32 %v761
    %v2810 = vcvt.s32.f32 %v762
    %v2811 = vcvt.s32.f32 %v763
    %v2812 = vcvt.s32.f32 %v764
    %v2813 = vcvt.s32.f32 %v765
    %v2814 = vcvt.s32.f32 %v766
    %v2815 = vcvt.s32.f32 %v767
    %v2816 = vcvt.s32.f32 %v768
    %v2817 = vcvt.s32.f32 %v769
    %v2818 = vcvt.s32.f32 %v770
    %v2819 = vcvt.s32.f32 %v771
    %v2820 = vcvt.s32.f32 %v772
    %v2821 = vcvt.s32.f32 %v773
    %v2822 = vcvt.s32.f32 %v774
    %v2823 = vcvt.s32.f32 %v775
    %v2824 = vcvt.s32.f32 %v776
    %v2825 = vcvt.s32.f32 %v777
    %v2826 = vcvt.s32.f32 %v778
    %v2827 = vcvt.s32.f32 %v779
    %v2828 = vcvt.s32.f32 %v780
    %v2829 = vcvt.s32.f32 %v781
    %v2830 = vcvt.s32.f32 %v782
    %v2831 = vcvt.s32.f32 %v783
    %v2832 = vcvt.s32.f32 %v784
    %v2833 = vcvt.s32.f32 %v785
    %v2834 = vcvt.s32.f32 %v786
    %v2835 = vcvt.s32.f32 %v787
    %v2836 = vcvt.s32.f32 %v788
    %v2837 = vcvt.s32.f32 %v789
    %v2838 = vcvt.s32.f32 %v790
    %v2839 = vcvt.s32.f32 %v791
    %v2840 = vcvt.s32.f32 %v792
    %v2841 = vcvt.s32.f32 %v793
    %v2842 = vcvt.s32.f32 %v794
    %v2843 = vcvt.s32.f32 %v795
    %v2844 = vcvt.s32.f32 %v796
    %v2845 = vcvt.s32.f32 %v797
    %v2846 = vcvt.s32.f32 %v798
    %v2847 = vcvt.s32.f32 %v799
    %v2848 = vcvt.s32.f32 %v800
    %v2849 = vcvt.s32.f32 %v801
    %v2850 = vcvt.s32.f32 %v802
    %v2851 = vcvt.s32.f32 %v803
    %v2852 = vcvt.s32.f32 %v804
    %v2853 = vcvt.s32.f32 %v805
    %v2854 = vcvt.s32.f32 %v806
    %v2855 = vcvt.s32.f32 %v807
    %v2856 = vcvt.s32.f32 %v808
    %v2857 = vcvt.s32.f32 %v809
    %v2858 = vcvt.s32.f32 %v810
    %v2859 = vcvt.s32.f32 %v811
    %v2860 = vcvt.s32.f32 %v812
    %v2861 = vcvt.s32.f32 %v813
    %v2862 = vcvt.s32.f32 %v814
    %v2863 = vcvt.s32.f32 %v815
    %v2864 = vcvt.s32.f32 %v816
    %v2865 = vcvt.s32.f32 %v817
    %v2866 = vcvt.s32.f32 %v818
    %v2867 = vcvt.s32.f32 %v819
    %v2868 = vcvt.s32.f32 %v820
    %v2869 = vcvt.s32.f32 %v821
    %v2870 = vcvt.s32.f32 %v822
    %v2871 = vcvt.s32.f32 %v823
    %v2872 = vcvt.s32.f32 %v824
    %v2873 = vcvt.s32.f32 %v825
    %v2874 = vcvt.s32.f32 %v826
    %v2875 = vcvt.s32.f32 %v827
    %v2876 = vcvt.s32.f32 %v828
    %v2877 = vcvt.s32.f32 %v829
    %v2878 = vcvt.s32.f32 %v830
    %v2879 = vcvt.s32.f32 %v831
    %v2880 = vcvt.s32.f32 %v832
    %v2881 = vcvt.s32.f32 %v833
    %v2882 = vcvt.s32.f32 %v834
    %v2883 = vcvt.s32.f32 %v835
    %v2884 = vcvt.s32.f32 %v836
    %v2885 = vcvt.s32.f32 %v837
    %v2886 = vcvt.s32.f32 %v838
    %v2887 = vcvt.s32.f32 %v839
    %v2888 = vcvt.s32.f32 %v840
    %v2889 = vcvt.s32.f32 %v841
    %v2890 = vcvt.s32.f32 %v842
    %v2891 = vcvt.s32.f32 %v843
    %v2892 = vcvt.s32.f32 %v844
    %v2893 = vcvt.s32.f32 %v845
    %v2894 = vcvt.s32.f32 %v846
    %v2895 = vcvt.s32.f32 %v847
    %v2896 = vcvt.s32.f32 %v848
    %v2897 = vcvt.s32.f32 %v849
    %v2898 = vcvt.s32.f32 %v850
    %v2899 = vcvt.s32.f32 %v851
    %v2900 = vcvt.s32.f32 %v852
    %v2901 = vcvt.s32.f32 %v853
    %v2902 = vcvt.s32.f32 %v854
    %v2903 = vcvt.s32.f32 %v855
    %v2904 = vcvt.s32.f32 %v856
    %v2905 = vcvt.s32.f32 %v857
    %v2906 = vcvt.s32.f32 %v858
    %v2907 = vcvt.s32.f32 %v859
    %v2908 = vcvt.s32.f32 %v860
    %v2909 = vcvt.s32.f32 %v861
    %v2910 = vcvt.s32.f32 %v862
    %v2911 = vcvt.s32.f32 %v863
    %v2912 = vcvt.s32.f32 %v864
    %v2913 = vcvt.s32.f32 %v865
    %v2914 = vcvt.s32.f32 %v866
    %v2915 = vcvt.s32.f32 %v867
    %v2916 = vcvt.s32.f32 %v868
    %v2917 = vcvt.s32.f32 %v869
    %v2918 = vcvt.s32.f32 %v870
    %v2919 = vcvt.s32.f32 %v871
    %v2920 = vcvt.s32.f32 %v872
    %v2921 = vcvt.s32.f32 %v873
    %v2922 = vcvt.s32.f32 %v874
    %v2923 = vcvt.s32.f32 %v875
    %v2924 = vcvt.s32.f32 %v876
    %v2925 = vcvt.s32.f32 %v877
    %v2926 = vcvt.s32.f32 %v878
    %v2927 = vcvt.s32.f32 %v879
    %v2928 = vcvt.s32.f32 %v880
    %v2929 = vcvt.s32.f32 %v881
    %v2930 = vcvt.s32.f32 %v882
    %v2931 = vcvt.s32.f32 %v883
    %v2932 = vcvt.s32.f32 %v884
    %v2933 = vcvt.s32.f32 %v885
    %v2934 = vcvt.s32.f32 %v886
    %v2935 = vcvt.s32.f32 %v887
    %v2936 = vcvt.s32.f32 %v888
    %v2937 = vcvt.s32.f32 %v889
    %v2938 = vcvt.s32.f32 %v890
    %v2939 = vcvt.s32.f32 %v891
    %v2940 = vcvt.s32.f32 %v892
    %v2941 = vcvt.s32.f32 %v893
    %v2942 = vcvt.s32.f32 %v894
    %v2943 = vcvt.s32.f32 %v895
    %v2944 = vcvt.s32.f32 %v896
    %v2945 = vcvt.s32.f32 %v897
    %v2946 = vcvt.s32.f32 %v898
    %v2947 = vcvt.s32.f32 %v899
    %v2948 = vcvt.s32.f32 %v900
    %v2949 = vcvt.s32.f32 %v901
    %v2950 = vcvt.s32.f32 %v902
    %v2951 = vcvt.s32.f32 %v903
    %v2952 = vcvt.s32.f32 %v904
    %v2953 = vcvt.s32.f32 %v905
    %v2954 = vcvt.s32.f32 %v906
    %v2955 = vcvt.s32.f32 %v907
    %v2956 = vcvt.s32.f32 %v908
    %v2957 = vcvt.s32.f32 %v909
    %v2958 = vcvt.s32.f32 %v910
    %v2959 = vcvt.s32.f32 %v911
    %v2960 = vcvt.s32.f32 %v912
    %v2961 = vcvt.s32.f32 %v913
    %v2962 = vcvt.s32.f32 %v914
    %v2963 = vcvt.s32.f32 %v915
    %v2964 = vcvt.s32.f32 %v916
    %v2965 = vcvt.s32.f32 %v917
    %v2966 = vcvt.s32.f32 %v918
    %v2967 = vcvt.s32.f32 %v919
    %v2968 = vcvt.s32.f32 %v920
    %v2969 = vcvt.s32.f32 %v921
    %v2970 = vcvt.s32.f32 %v922
    %v2971 = vcvt.s32.f32 %v923
    %v2972 = vcvt.s32.f32 %v924
    %v2973 = vcvt.s32.f32 %v925
    %v2974 = vcvt.s32.f32 %v926
    %v2975 = vcvt.s32.f32 %v927
    %v2976 = vcvt.s32.f32 %v928
    %v2977 = vcvt.s32.f32 %v929
    %v2978 = vcvt.s32.f32 %v930
    %v2979 = vcvt.s32.f32 %v931
    %v2980 = vcvt.s32.f32 %v932
    %v2981 = vcvt.s32.f32 %v933
    %v2982 = vcvt.s32.f32 %v934
    %v2983 = vcvt.s32.f32 %v935
    %v2984 = vcvt.s32.f32 %v936
    %v2985 = vcvt.s32.f32 %v937
    %v2986 = vcvt.s32.f32 %v938
    %v2987 = vcvt.s32.f32 %v939
    %v2988 = vcvt.s32.f32 %v940
    %v2989 = vcvt.s32.f32 %v941
    %v2990 = vcvt.s32.f32 %v942
    %v2991 = vcvt.s32.f32 %v943
    %v2992 = vcvt.s32.f32 %v944
    %v2993 = vcvt.s32.f32 %v945
    %v2994 = vcvt.s32.f32 %v946
    %v2995 = vcvt.s32.f32 %v947
    %v2996 = vcvt.s32.f32 %v948
    %v2997 = vcvt.s32.f32 %v949
    %v2998 = vcvt.s32.f32 %v950
    %v2999 = vcvt.s32.f32 %v951
    %v3000 = vcvt.s32.f32 %v952
    %v3001 = vcvt.s32.f32 %v953
    %v3002 = vcvt.s32.f32 %v954
    %v3003 = vcvt.s32.f32 %v955
    %v3004 = vcvt.s32.f32 %v956
    %v3005 = vcvt.s32.f32 %v957
    %v3006 = vcvt.s32.f32 %v958
    %v3007 = vcvt.s32.f32 %v959
    %v3008 = vcvt.s32.f32 %v960
    %v3009 = vcvt.s32.f32 %v961
    %v3010 = vcvt.s32.f32 %v962
    %v3011 = vcvt.s32.f32 %v963
    %v3012 = vcvt.s32.f32 %v964
    %v3013 = vcvt.s32.f32 %v965
    %v3014 = vcvt.s32.f32 %v966
    %v3015 = vcvt.s32.f32 %v967
    %v3016 = vcvt.s32.f32 %v968
    %v3017 = vcvt.s32.f32 %v969
    %v3018 = vcvt.s32.f32 %v970
    %v3019 = vcvt.s32.f32 %v971
    %v3020 = vcvt.s32.f32 %v972
    %v3021 = vcvt.s32.f32 %v973
    %v3022 = vcvt.s32.f32 %v974
    %v3023 = vcvt.s32.f32 %v975
    %v3024 = vcvt.s32.f32 %v976
    %v3025 = vcvt.s32.f32 %v977
    %v3026 = vcvt.s32.f32 %v978
    %v3027 = vcvt.s32.f32 %v979
    %v3028 = vcvt.s32.f32 %v980
    %v3029 = vcvt.s32.f32 %v981
    %v3030 = vcvt.s32.f32 %v982
    %v3031 = vcvt.s32.f32 %v983
    %v3032 = vcvt.s32.f32 %v984
    %v3033 = vcvt.s32.f32 %v985
    %v3034 = vcvt.s32.f32 %v986
    %v3035 = vcvt.s32.f32 %v987
    %v3036 = vcvt.s32.f32 %v988
    %v3037 = vcvt.s32.f32 %v989
    %v3038 = vcvt.s32.f32 %v990
    %v3039 = vcvt.s32.f32 %v991
    %v3040 = vcvt.s32.f32 %v992
    %v3041 = vcvt.s32.f32 %v993
    %v3042 = vcvt.s32.f32 %v994
    %v3043 = vcvt.s32.f32 %v995
    %v3044 = vcvt.s32.f32 %v996
    %v3045 = vcvt.s32.f32 %v997
    %v3046 = vcvt.s32.f32 %v998
    %v3047 = vcvt.s32.f32 %v999
    %v3048 = vcvt.s32.f32 %v1000
    %v3049 = vcvt.s32.f32 %v1001
    %v3050 = vcvt.s32.f32 %v1002
    %v3051 = vcvt.s32.f32 %v1003
    %v3052 = vcvt.s32.f32 %v1004
    %v3053 = vcvt.s32.f32 %v1005
    %v3054 = vcvt.s32.f32 %v1006
    %v3055 = vcvt.s32.f32 %v1007
    %v3056 = vcvt.s32.f32 %v1008
    %v3057 = vcvt.s32.f32 %v1009
    %v3058 = vcvt.s32.f32 %v1010
    %v3059 = vcvt.s32.f32 %v1011
    %v3060 = vcvt.s32.f32 %v1012
    %v3061 = vcvt.s32.f32 %v1013
    %v3062 = vcvt.s32.f32 %v1014
    %v3063 = vcvt.s32.f32 %v1015
    %v3064 = vcvt.s32.f32 %v1016
    %v3065 = vcvt.s32.f32 %v1017
    %v3066 = vcvt.s32.f32 %v1018
    %v3067 = vcvt.s32.f32 %v1019
    %v3068 = vcvt.s32.f32 %v1020
    %v3069 = vcvt.s32.f32 %v1021
    %v3070 = vcvt.s32.f32 %v1022
    %v3071 = vcvt.s32.f32 %v1023
    %v3072 = vcvt.s32.f32 %v1024
    %v3073 = vcvt.s32.f32 %v1025
    %v3074 = vcvt.s32.f32 %v1026
    %v3075 = vcvt.s32.f32 %v1027
    %v3076 = vcvt.s32.f32 %v1028
    %v3077 = vcvt.s32.f32 %v1029
    %v3078 = vcvt.s32.f32 %v1030
    %v3079 = vcvt.s32.f32 %v1031
    %v3080 = vcvt.s32.f32 %v1032
    %v3081 = vcvt.s32.f32 %v1033
    %v3082 = vcvt.s32.f32 %v1034
    %v3083 = vcvt.s32.f32 %v1035
    %v3084 = vcvt.s32.f32 %v1036
    %v3085 = vcvt.s32.f32 %v1037
    %v3086 = vcvt.s32.f32 %v1038
    %v3087 = vcvt.s32.f32 %v1039
    %v3088 = vcvt.s32.f32 %v1040
    %v3089 = vcvt.s32.f32 %v1041
    %v3090 = vcvt.s32.f32 %v1042
    %v3091 = vcvt.s32.f32 %v1043
    %v3092 = vcvt.s32.f32 %v1044
    %v3093 = vcvt.s32.f32 %v1045
    %v3094 = vcvt.s32.f32 %v1046
    %v3095 = vcvt.s32.f32 %v1047
    %v3096 = vcvt.s32.f32 %v1048
    %v3097 = vcvt.s32.f32 %v1049
    %v3098 = vcvt.s32.f32 %v1050
    %v3099 = vcvt.s32.f32 %v1051
    %v3100 = vcvt.s32.f32 %v1052
    %v3101 = vcvt.s32.f32 %v1053
    %v3102 = vcvt.s32.f32 %v1054
    %v3103 = vcvt.s32.f32 %v1055
    %v3104 = vcvt.s32.f32 %v1056
    %v3105 = vcvt.s32.f32 %v1057
    %v3106 = vcvt.s32.f32 %v1058
    %v3107 = vcvt.s32.f32 %v1059
    %v3108 = vcvt.s32.f32 %v1060
    %v3109 = vcvt.s32.f32 %v1061
    %v3110 = vcvt.s32.f32 %v1062
    %v3111 = vcvt.s32.f32 %v1063
    %v3112 = vcvt.s32.f32 %v1064
    %v3113 = vcvt.s32.f32 %v1065
    %v3114 = vcvt.s32.f32 %v1066
    %v3115 = vcvt.s32.f32 %v1067
    %v3116 = vcvt.s32.f32 %v1068
    %v3117 = vcvt.s32.f32 %v1069
    %v3118 = vcvt.s32.f32 %v1070
    %v3119 = vcvt.s32.f32 %v1071
    %v3120 = vcvt.s32.f32 %v1072
    %v3121 = vcvt.s32.f32 %v1073
    %v3122 = vcvt.s32.f32 %v1074
    %v3123 = vcvt.s32.f32 %v1075
    %v3124 = vcvt.s32.f32 %v1076
    %v3125 = vcvt.s32.f32 %v1077
    %v3126 = vcvt.s32.f32 %v1078
    %v3127 = vcvt.s32.f32 %v1079
    %v3128 = vcvt.s32.f32 %v1080
    %v3129 = vcvt.s32.f32 %v1081
    %v3130 = vcvt.s32.f32 %v1082
    %v3131 = vcvt.s32.f32 %v1083
    %v3132 = vcvt.s32.f32 %v1084
    %v3133 = vcvt.s32.f32 %v1085
    %v3134 = vcvt.s32.f32 %v1086
    %v3135 = vcvt.s32.f32 %v1087
    %v3136 = vcvt.s32.f32 %v1088
    %v3137 = vcvt.s32.f32 %v1089
    %v3138 = vcvt.s32.f32 %v1090
    %v3139 = vcvt.s32.f32 %v1091
    %v3140 = vcvt.s32.f32 %v1092
    %v3141 = vcvt.s32.f32 %v1093
    %v3142 = vcvt.s32.f32 %v1094
    %v3143 = vcvt.s32.f32 %v1095
    %v3144 = vcvt.s32.f32 %v1096
    %v3145 = vcvt.s32.f32 %v1097
    %v3146 = vcvt.s32.f32 %v1098
    %v3147 = vcvt.s32.f32 %v1099
    %v3148 = vcvt.s32.f32 %v1100
    %v3149 = vcvt.s32.f32 %v1101
    %v3150 = vcvt.s32.f32 %v1102
    %v3151 = vcvt.s32.f32 %v1103
    %v3152 = vcvt.s32.f32 %v1104
    %v3153 = vcvt.s32.f32 %v1105
    %v3154 = vcvt.s32.f32 %v1106
    %v3155 = vcvt.s32.f32 %v1107
    %v3156 = vcvt.s32.f32 %v1108
    %v3157 = vcvt.s32.f32 %v1109
    %v3158 = vcvt.s32.f32 %v1110
    %v3159 = vcvt.s32.f32 %v1111
    %v3160 = vcvt.s32.f32 %v1112
    %v3161 = vcvt.s32.f32 %v1113
    %v3162 = vcvt.s32.f32 %v1114
    %v3163 = vcvt.s32.f32 %v1115
    %v3164 = vcvt.s32.f32 %v1116
    %v3165 = vcvt.s32.f32 %v1117
    %v3166 = vcvt.s32.f32 %v1118
    %v3167 = vcvt.s32.f32 %v1119
    %v3168 = vcvt.s32.f32 %v1120
    %v3169 = vcvt.s32.f32 %v1121
    %v3170 = vcvt.s32.f32 %v1122
    %v3171 = vcvt.s32.f32 %v1123
    %v3172 = vcvt.s32.f32 %v1124
    %v3173 = vcvt.s32.f32 %v1125
    %v3174 = vcvt.s32.f32 %v1126
    %v3175 = vcvt.s32.f32 %v1127
    %v3176 = vcvt.s32.f32 %v1128
    %v3177 = vcvt.s32.f32 %v1129
    %v3178 = vcvt.s32.f32 %v1130
    %v3179 = vcvt.s32.f32 %v1131
    %v3180 = vcvt.s32.f32 %v1132
    %v3181 = vcvt.s32.f32 %v1133
    %v3182 = vcvt.s32.f32 %v1134
    %v3183 = vcvt.s32.f32 %v1135
    %v3184 = vcvt.s32.f32 %v1136
    %v3185 = vcvt.s32.f32 %v1137
    %v3186 = vcvt.s32.f32 %v1138
    %v3187 = vcvt.s32.f32 %v1139
    %v3188 = vcvt.s32.f32 %v1140
    %v3189 = vcvt.s32.f32 %v1141
    %v3190 = vcvt.s32.f32 %v1142
    %v3191 = vcvt.s32.f32 %v1143
    %v3192 = vcvt.s32.f32 %v1144
    %v3193 = vcvt.s32.f32 %v1145
    %v3194 = vcvt.s32.f32 %v1146
    %v3195 = vcvt.s32.f32 %v1147
    %v3196 = vcvt.s32.f32 %v1148
    %v3197 = vcvt.s32.f32 %v1149
    %v3198 = vcvt.s32.f32 %v1150
    %v3199 = vcvt.s32.f32 %v1151
    %v3200 = vcvt.s32.f32 %v1152
    %v3201 = vcvt.s32.f32 %v1153
    %v3202 = vcvt.s32.f32 %v1154
    %v3203 = vcvt.s32.f32 %v1155
    %v3204 = vcvt.s32.f32 %v1156
    %v3205 = vcvt.s32.f32 %v1157
    %v3206 = vcvt.s32.f32 %v1158
    %v3207 = vcvt.s32.f32 %v1159
    %v3208 = vcvt.s32.f32 %v1160
    %v3209 = vcvt.s32.f32 %v1161
    %v3210 = vcvt.s32.f32 %v1162
    %v3211 = vcvt.s32.f32 %v1163
    %v3212 = vcvt.s32.f32 %v1164
    %v3213 = vcvt.s32.f32 %v1165
    %v3214 = vcvt.s32.f32 %v1166
    %v3215 = vcvt.s32.f32 %v1167
    %v3216 = vcvt.s32.f32 %v1168
    %v3217 = vcvt.s32.f32 %v1169
    %v3218 = vcvt.s32.f32 %v1170
    %v3219 = vcvt.s32.f32 %v1171
    %v3220 = vcvt.s32.f32 %v1172
    %v3221 = vcvt.s32.f32 %v1173
    %v3222 = vcvt.s32.f32 %v1174
    %v3223 = vcvt.s32.f32 %v1175
    %v3224 = vcvt.s32.f32 %v1176
    %v3225 = vcvt.s32.f32 %v1177
    %v3226 = vcvt.s32.f32 %v1178
    %v3227 = vcvt.s32.f32 %v1179
    %v3228 = vcvt.s32.f32 %v1180
    %v3229 = vcvt.s32.f32 %v1181
    %v3230 = vcvt.s32.f32 %v1182
    %v3231 = vcvt.s32.f32 %v1183
    %v3232 = vcvt.s32.f32 %v1184
    %v3233 = vcvt.s32.f32 %v1185
    %v3234 = vcvt.s32.f32 %v1186
    %v3235 = vcvt.s32.f32 %v1187
    %v3236 = vcvt.s32.f32 %v1188
    %v3237 = vcvt.s32.f32 %v1189
    %v3238 = vcvt.s32.f32 %v1190
    %v3239 = vcvt.s32.f32 %v1191
    %v3240 = vcvt.s32.f32 %v1192
    %v3241 = vcvt.s32.f32 %v1193
    %v3242 = vcvt.s32.f32 %v1194
    %v3243 = vcvt.s32.f32 %v1195
    %v3244 = vcvt.s32.f32 %v1196
    %v3245 = vcvt.s32.f32 %v1197
    %v3246 = vcvt.s32.f32 %v1198
    %v3247 = vcvt.s32.f32 %v1199
    %v3248 = vcvt.s32.f32 %v1200
    %v3249 = vcvt.s32.f32 %v1201
    %v3250 = vcvt.s32.f32 %v1202
    %v3251 = vcvt.s32.f32 %v1203
    %v3252 = vcvt.s32.f32 %v1204
    %v3253 = vcvt.s32.f32 %v1205
    %v3254 = vcvt.s32.f32 %v1206
    %v3255 = vcvt.s32.f32 %v1207
    %v3256 = vcvt.s32.f32 %v1208
    %v3257 = vcvt.s32.f32 %v1209
    %v3258 = vcvt.s32.f32 %v1210
    %v3259 = vcvt.s32.f32 %v1211
    %v3260 = vcvt.s32.f32 %v1212
    %v3261 = vcvt.s32.f32 %v1213
    %v3262 = vcvt.s32.f32 %v1214
    %v3263 = vcvt.s32.f32 %v1215
    %v3264 = vcvt.s32.f32 %v1216
    %v3265 = vcvt.s32.f32 %v1217
    %v3266 = vcvt.s32.f32 %v1218
    %v3267 = vcvt.s32.f32 %v1219
    %v3268 = vcvt.s32.f32 %v1220
    %v3269 = vcvt.s32.f32 %v1221
    %v3270 = vcvt.s32.f32 %v1222
    %v3271 = vcvt.s32.f32 %v1223
    %v3272 = vcvt.s32.f32 %v1224
    %v3273 = vcvt.s32.f32 %v1225
    %v3274 = vcvt.s32.f32 %v1226
    %v3275 = vcvt.s32.f32 %v1227
    %v3276 = vcvt.s32.f32 %v1228
    %v3277 = vcvt.s32.f32 %v1229
    %v3278 = vcvt.s32.f32 %v1230
    %v3279 = vcvt.s32.f32 %v1231
    %v3280 = vcvt.s32.f32 %v1232
    %v3281 = vcvt.s32.f32 %v1233
    %v3282 = vcvt.s32.f32 %v1234
    %v3283 = vcvt.s32.f32 %v1235
    %v3284 = vcvt.s32.f32 %v1236
    %v3285 = vcvt.s32.f32 %v1237
    %v3286 = vcvt.s32.f32 %v1238
    %v3287 = vcvt.s32.f32 %v1239
    %v3288 = vcvt.s32.f32 %v1240
    %v3289 = vcvt.s32.f32 %v1241
    %v3290 = vcvt.s32.f32 %v1242
    %v3291 = vcvt.s32.f32 %v1243
    %v3292 = vcvt.s32.f32 %v1244
    %v3293 = vcvt.s32.f32 %v1245
    %v3294 = vcvt.s32.f32 %v1246
    %v3295 = vcvt.s32.f32 %v1247
    %v3296 = vcvt.s32.f32 %v1248
    %v3297 = vcvt.s32.f32 %v1249
    %v3298 = vcvt.s32.f32 %v1250
    %v3299 = vcvt.s32.f32 %v1251
    %v3300 = vcvt.s32.f32 %v1252
    %v3301 = vcvt.s32.f32 %v1253
    %v3302 = vcvt.s32.f32 %v1254
    %v3303 = vcvt.s32.f32 %v1255
    %v3304 = vcvt.s32.f32 %v1256
    %v3305 = vcvt.s32.f32 %v1257
    %v3306 = vcvt.s32.f32 %v1258
    %v3307 = vcvt.s32.f32 %v1259
    %v3308 = vcvt.s32.f32 %v1260
    %v3309 = vcvt.s32.f32 %v1261
    %v3310 = vcvt.s32.f32 %v1262
    %v3311 = vcvt.s32.f32 %v1263
    %v3312 = vcvt.s32.f32 %v1264
    %v3313 = vcvt.s32.f32 %v1265
    %v3314 = vcvt.s32.f32 %v1266
    %v3315 = vcvt.s32.f32 %v1267
    %v3316 = vcvt.s32.f32 %v1268
    %v3317 = vcvt.s32.f32 %v1269
    %v3318 = vcvt.s32.f32 %v1270
    %v3319 = vcvt.s32.f32 %v1271
    %v3320 = vcvt.s32.f32 %v1272
    %v3321 = vcvt.s32.f32 %v1273
    %v3322 = vcvt.s32.f32 %v1274
    %v3323 = vcvt.s32.f32 %v1275
    %v3324 = vcvt.s32.f32 %v1276
    %v3325 = vcvt.s32.f32 %v1277
    %v3326 = vcvt.s32.f32 %v1278
    %v3327 = vcvt.s32.f32 %v1279
    %v3328 = vcvt.s32.f32 %v1280
    %v3329 = vcvt.s32.f32 %v1281
    %v3330 = vcvt.s32.f32 %v1282
    %v3331 = vcvt.s32.f32 %v1283
    %v3332 = vcvt.s32.f32 %v1284
    %v3333 = vcvt.s32.f32 %v1285
    %v3334 = vcvt.s32.f32 %v1286
    %v3335 = vcvt.s32.f32 %v1287
    %v3336 = vcvt.s32.f32 %v1288
    %v3337 = vcvt.s32.f32 %v1289
    %v3338 = vcvt.s32.f32 %v1290
    %v3339 = vcvt.s32.f32 %v1291
    %v3340 = vcvt.s32.f32 %v1292
    %v3341 = vcvt.s32.f32 %v1293
    %v3342 = vcvt.s32.f32 %v1294
    %v3343 = vcvt.s32.f32 %v1295
    %v3344 = vcvt.s32.f32 %v1296
    %v3345 = vcvt.s32.f32 %v1297
    %v3346 = vcvt.s32.f32 %v1298
    %v3347 = vcvt.s32.f32 %v1299
    %v3348 = vcvt.s32.f32 %v1300
    %v3349 = vcvt.s32.f32 %v1301
    %v3350 = vcvt.s32.f32 %v1302
    %v3351 = vcvt.s32.f32 %v1303
    %v3352 = vcvt.s32.f32 %v1304
    %v3353 = vcvt.s32.f32 %v1305
    %v3354 = vcvt.s32.f32 %v1306
    %v3355 = vcvt.s32.f32 %v1307
    %v3356 = vcvt.s32.f32 %v1308
    %v3357 = vcvt.s32.f32 %v1309
    %v3358 = vcvt.s32.f32 %v1310
    %v3359 = vcvt.s32.f32 %v1311
    %v3360 = vcvt.s32.f32 %v1312
    %v3361 = vcvt.s32.f32 %v1313
    %v3362 = vcvt.s32.f32 %v1314
    %v3363 = vcvt.s32.f32 %v1315
    %v3364 = vcvt.s32.f32 %v1316
    %v3365 = vcvt.s32.f32 %v1317
    %v3366 = vcvt.s32.f32 %v1318
    %v3367 = vcvt.s32.f32 %v1319
    %v3368 = vcvt.s32.f32 %v1320
    %v3369 = vcvt.s32.f32 %v1321
    %v3370 = vcvt.s32.f32 %v1322
    %v3371 = vcvt.s32.f32 %v1323
    %v3372 = vcvt.s32.f32 %v1324
    %v3373 = vcvt.s32.f32 %v1325
    %v3374 = vcvt.s32.f32 %v1326
    %v3375 = vcvt.s32.f32 %v1327
    %v3376 = vcvt.s32.f32 %v1328
    %v3377 = vcvt.s32.f32 %v1329
    %v3378 = vcvt.s32.f32 %v1330
    %v3379 = vcvt.s32.f32 %v1331
    %v3380 = vcvt.s32.f32 %v1332
    %v3381 = vcvt.s32.f32 %v1333
    %v3382 = vcvt.s32.f32 %v1334
    %v3383 = vcvt.s32.f32 %v1335
    %v3384 = vcvt.s32.f32 %v1336
    %v3385 = vcvt.s32.f32 %v1337
    %v3386 = vcvt.s32.f32 %v1338
    %v3387 = vcvt.s32.f32 %v1339
    %v3388 = vcvt.s32.f32 %v1340
    %v3389 = vcvt.s32.f32 %v1341
    %v3390 = vcvt.s32.f32 %v1342
    %v3391 = vcvt.s32.f32 %v1343
    %v3392 = vcvt.s32.f32 %v1344
    %v3393 = vcvt.s32.f32 %v1345
    %v3394 = vcvt.s32.f32 %v1346
    %v3395 = vcvt.s32.f32 %v1347
    %v3396 = vcvt.s32.f32 %v1348
    %v3397 = vcvt.s32.f32 %v1349
    %v3398 = vcvt.s32.f32 %v1350
    %v3399 = vcvt.s32.f32 %v1351
    %v3400 = vcvt.s32.f32 %v1352
    %v3401 = vcvt.s32.f32 %v1353
    %v3402 = vcvt.s32.f32 %v1354
    %v3403 = vcvt.s32.f32 %v1355
    %v3404 = vcvt.s32.f32 %v1356
    %v3405 = vcvt.s32.f32 %v1357
    %v3406 = vcvt.s32.f32 %v1358
    %v3407 = vcvt.s32.f32 %v1359
    %v3408 = vcvt.s32.f32 %v1360
    %v3409 = vcvt.s32.f32 %v1361
    %v3410 = vcvt.s32.f32 %v1362
    %v3411 = vcvt.s32.f32 %v1363
    %v3412 = vcvt.s32.f32 %v1364
    %v3413 = vcvt.s32.f32 %v1365
    %v3414 = vcvt.s32.f32 %v1366
    %v3415 = vcvt.s32.f32 %v1367
    %v3416 = vcvt.s32.f32 %v1368
    %v3417 = vcvt.s32.f32 %v1369
    %v3418 = vcvt.s32.f32 %v1370
    %v3419 = vcvt.s32.f32 %v1371
    %v3420 = vcvt.s32.f32 %v1372
    %v3421 = vcvt.s32.f32 %v1373
    %v3422 = vcvt.s32.f32 %v1374
    %v3423 = vcvt.s32.f32 %v1375
    %v3424 = vcvt.s32.f32 %v1376
    %v3425 = vcvt.s32.f32 %v1377
    %v3426 = vcvt.s32.f32 %v1378
    %v3427 = vcvt.s32.f32 %v1379
    %v3428 = vcvt.s32.f32 %v1380
    %v3429 = vcvt.s32.f32 %v1381
    %v3430 = vcvt.s32.f32 %v1382
    %v3431 = vcvt.s32.f32 %v1383
    %v3432 = vcvt.s32.f32 %v1384
    %v3433 = vcvt.s32.f32 %v1385
    %v3434 = vcvt.s32.f32 %v1386
    %v3435 = vcvt.s32.f32 %v1387
    %v3436 = vcvt.s32.f32 %v1388
    %v3437 = vcvt.s32.f32 %v1389
    %v3438 = vcvt.s32.f32 %v1390
    %v3439 = vcvt.s32.f32 %v1391
    %v3440 = vcvt.s32.f32 %v1392
    %v3441 = vcvt.s32.f32 %v1393
    %v3442 = vcvt.s32.f32 %v1394
    %v3443 = vcvt.s32.f32 %v1395
    %v3444 = vcvt.s32.f32 %v1396
    %v3445 = vcvt.s32.f32 %v1397
    %v3446 = vcvt.s32.f32 %v1398
    %v3447 = vcvt.s32.f32 %v1399
    %v3448 = vcvt.s32.f32 %v1400
    %v3449 = vcvt.s32.f32 %v1401
    %v3450 = vcvt.s32.f32 %v1402
    %v3451 = vcvt.s32.f32 %v1403
    %v3452 = vcvt.s32.f32 %v1404
    %v3453 = vcvt.s32.f32 %v1405
    %v3454 = vcvt.s32.f32 %v1406
    %v3455 = vcvt.s32.f32 %v1407
    %v3456 = vcvt.s32.f32 %v1408
    %v3457 = vcvt.s32.f32 %v1409
    %v3458 = vcvt.s32.f32 %v1410
    %v3459 = vcvt.s32.f32 %v1411
    %v3460 = vcvt.s32.f32 %v1412
    %v3461 = vcvt.s32.f32 %v1413
    %v3462 = vcvt.s32.f32 %v1414
    %v3463 = vcvt.s32.f32 %v1415
    %v3464 = vcvt.s32.f32 %v1416
    %v3465 = vcvt.s32.f32 %v1417
    %v3466 = vcvt.s32.f32 %v1418
    %v3467 = vcvt.s32.f32 %v1419
    %v3468 = vcvt.s32.f32 %v1420
    %v3469 = vcvt.s32.f32 %v1421
    %v3470 = vcvt.s32.f32 %v1422
    %v3471 = vcvt.s32.f32 %v1423
    %v3472 = vcvt.s32.f32 %v1424
    %v3473 = vcvt.s32.f32 %v1425
    %v3474 = vcvt.s32.f32 %v1426
    %v3475 = vcvt.s32.f32 %v1427
    %v3476 = vcvt.s32.f32 %v1428
    %v3477 = vcvt.s32.f32 %v1429
    %v3478 = vcvt.s32.f32 %v1430
    %v3479 = vcvt.s32.f32 %v1431
    %v3480 = vcvt.s32.f32 %v1432
    %v3481 = vcvt.s32.f32 %v1433
    %v3482 = vcvt.s32.f32 %v1434
    %v3483 = vcvt.s32.f32 %v1435
    %v3484 = vcvt.s32.f32 %v1436
    %v3485 = vcvt.s32.f32 %v1437
    %v3486 = vcvt.s32.f32 %v1438
    %v3487 = vcvt.s32.f32 %v1439
    %v3488 = vcvt.s32.f32 %v1440
    %v3489 = vcvt.s32.f32 %v1441
    %v3490 = vcvt.s32.f32 %v1442
    %v3491 = vcvt.s32.f32 %v1443
    %v3492 = vcvt.s32.f32 %v1444
    %v3493 = vcvt.s32.f32 %v1445
    %v3494 = vcvt.s32.f32 %v1446
    %v3495 = vcvt.s32.f32 %v1447
    %v3496 = vcvt.s32.f32 %v1448
    %v3497 = vcvt.s32.f32 %v1449
    %v3498 = vcvt.s32.f32 %v1450
    %v3499 = vcvt.s32.f32 %v1451
    %v3500 = vcvt.s32.f32 %v1452
    %v3501 = vcvt.s32.f32 %v1453
    %v3502 = vcvt.s32.f32 %v1454
    %v3503 = vcvt.s32.f32 %v1455
    %v3504 = vcvt.s32.f32 %v1456
    %v3505 = vcvt.s32.f32 %v1457
    %v3506 = vcvt.s32.f32 %v1458
    %v3507 = vcvt.s32.f32 %v1459
    %v3508 = vcvt.s32.f32 %v1460
    %v3509 = vcvt.s32.f32 %v1461
    %v3510 = vcvt.s32.f32 %v1462
    %v3511 = vcvt.s32.f32 %v1463
    %v3512 = vcvt.s32.f32 %v1464
    %v3513 = vcvt.s32.f32 %v1465
    %v3514 = vcvt.s32.f32 %v1466
    %v3515 = vcvt.s32.f32 %v1467
    %v3516 = vcvt.s32.f32 %v1468
    %v3517 = vcvt.s32.f32 %v1469
    %v3518 = vcvt.s32.f32 %v1470
    %v3519 = vcvt.s32.f32 %v1471
    %v3520 = vcvt.s32.f32 %v1472
    %v3521 = vcvt.s32.f32 %v1473
    %v3522 = vcvt.s32.f32 %v1474
    %v3523 = vcvt.s32.f32 %v1475
    %v3524 = vcvt.s32.f32 %v1476
    %v3525 = vcvt.s32.f32 %v1477
    %v3526 = vcvt.s32.f32 %v1478
    %v3527 = vcvt.s32.f32 %v1479
    %v3528 = vcvt.s32.f32 %v1480
    %v3529 = vcvt.s32.f32 %v1481
    %v3530 = vcvt.s32.f32 %v1482
    %v3531 = vcvt.s32.f32 %v1483
    %v3532 = vcvt.s32.f32 %v1484
    %v3533 = vcvt.s32.f32 %v1485
    %v3534 = vcvt.s32.f32 %v1486
    %v3535 = vcvt.s32.f32 %v1487
    %v3536 = vcvt.s32.f32 %v1488
    %v3537 = vcvt.s32.f32 %v1489
    %v3538 = vcvt.s32.f32 %v1490
    %v3539 = vcvt.s32.f32 %v1491
    %v3540 = vcvt.s32.f32 %v1492
    %v3541 = vcvt.s32.f32 %v1493
    %v3542 = vcvt.s32.f32 %v1494
    %v3543 = vcvt.s32.f32 %v1495
    %v3544 = vcvt.s32.f32 %v1496
    %v3545 = vcvt.s32.f32 %v1497
    %v3546 = vcvt.s32.f32 %v1498
    %v3547 = vcvt.s32.f32 %v1499
    %v3548 = vcvt.s32.f32 %v1500
    %v3549 = vcvt.s32.f32 %v1501
    %v3550 = vcvt.s32.f32 %v1502
    %v3551 = vcvt.s32.f32 %v1503
    %v3552 = vcvt.s32.f32 %v1504
    %v3553 = vcvt.s32.f32 %v1505
    %v3554 = vcvt.s32.f32 %v1506
    %v3555 = vcvt.s32.f32 %v1507
    %v3556 = vcvt.s32.f32 %v1508
    %v3557 = vcvt.s32.f32 %v1509
    %v3558 = vcvt.s32.f32 %v1510
    %v3559 = vcvt.s32.f32 %v1511
    %v3560 = vcvt.s32.f32 %v1512
    %v3561 = vcvt.s32.f32 %v1513
    %v3562 = vcvt.s32.f32 %v1514
    %v3563 = vcvt.s32.f32 %v1515
    %v3564 = vcvt.s32.f32 %v1516
    %v3565 = vcvt.s32.f32 %v1517
    %v3566 = vcvt.s32.f32 %v1518
    %v3567 = vcvt.s32.f32 %v1519
    %v3568 = vcvt.s32.f32 %v1520
    %v3569 = vcvt.s32.f32 %v1521
    %v3570 = vcvt.s32.f32 %v1522
    %v3571 = vcvt.s32.f32 %v1523
    %v3572 = vcvt.s32.f32 %v1524
    %v3573 = vcvt.s32.f32 %v1525
    %v3574 = vcvt.s32.f32 %v1526
    %v3575 = vcvt.s32.f32 %v1527
    %v3576 = vcvt.s32.f32 %v1528
    %v3577 = vcvt.s32.f32 %v1529
    %v3578 = vcvt.s32.f32 %v1530
    %v3579 = vcvt.s32.f32 %v1531
    %v3580 = vcvt.s32.f32 %v1532
    %v3581 = vcvt.s32.f32 %v1533
    %v3582 = vcvt.s32.f32 %v1534
    %v3583 = vcvt.s32.f32 %v1535
    %v3584 = vcvt.s32.f32 %v1536
    %v3585 = vcvt.s32.f32 %v1537
    %v3586 = vcvt.s32.f32 %v1538
    %v3587 = vcvt.s32.f32 %v1539
    %v3588 = vcvt.s32.f32 %v1540
    %v3589 = vcvt.s32.f32 %v1541
    %v3590 = vcvt.s32.f32 %v1542
    %v3591 = vcvt.s32.f32 %v1543
    %v3592 = vcvt.s32.f32 %v1544
    %v3593 = vcvt.s32.f32 %v1545
    %v3594 = vcvt.s32.f32 %v1546
    %v3595 = vcvt.s32.f32 %v1547
    %v3596 = vcvt.s32.f32 %v1548
    %v3597 = vcvt.s32.f32 %v1549
    %v3598 = vcvt.s32.f32 %v1550
    %v3599 = vcvt.s32.f32 %v1551
    %v3600 = vcvt.s32.f32 %v1552
    %v3601 = vcvt.s32.f32 %v1553
    %v3602 = vcvt.s32.f32 %v1554
    %v3603 = vcvt.s32.f32 %v1555
    %v3604 = vcvt.s32.f32 %v1556
    %v3605 = vcvt.s32.f32 %v1557
    %v3606 = vcvt.s32.f32 %v1558
    %v3607 = vcvt.s32.f32 %v1559
    %v3608 = vcvt.s32.f32 %v1560
    %v3609 = vcvt.s32.f32 %v1561
    %v3610 = vcvt.s32.f32 %v1562
    %v3611 = vcvt.s32.f32 %v1563
    %v3612 = vcvt.s32.f32 %v1564
    %v3613 = vcvt.s32.f32 %v1565
    %v3614 = vcvt.s32.f32 %v1566
    %v3615 = vcvt.s32.f32 %v1567
    %v3616 = vcvt.s32.f32 %v1568
    %v3617 = vcvt.s32.f32 %v1569
    %v3618 = vcvt.s32.f32 %v1570
    %v3619 = vcvt.s32.f32 %v1571
    %v3620 = vcvt.s32.f32 %v1572
    %v3621 = vcvt.s32.f32 %v1573
    %v3622 = vcvt.s32.f32 %v1574
    %v3623 = vcvt.s32.f32 %v1575
    %v3624 = vcvt.s32.f32 %v1576
    %v3625 = vcvt.s32.f32 %v1577
    %v3626 = vcvt.s32.f32 %v1578
    %v3627 = vcvt.s32.f32 %v1579
    %v3628 = vcvt.s32.f32 %v1580
    %v3629 = vcvt.s32.f32 %v1581
    %v3630 = vcvt.s32.f32 %v1582
    %v3631 = vcvt.s32.f32 %v1583
    %v3632 = vcvt.s32.f32 %v1584
    %v3633 = vcvt.s32.f32 %v1585
    %v3634 = vcvt.s32.f32 %v1586
    %v3635 = vcvt.s32.f32 %v1587
    %v3636 = vcvt.s32.f32 %v1588
    %v3637 = vcvt.s32.f32 %v1589
    %v3638 = vcvt.s32.f32 %v1590
    %v3639 = vcvt.s32.f32 %v1591
    %v3640 = vcvt.s32.f32 %v1592
    %v3641 = vcvt.s32.f32 %v1593
    %v3642 = vcvt.s32.f32 %v1594
    %v3643 = vcvt.s32.f32 %v1595
    %v3644 = vcvt.s32.f32 %v1596
    %v3645 = vcvt.s32.f32 %v1597
    %v3646 = vcvt.s32.f32 %v1598
    %v3647 = vcvt.s32.f32 %v1599
    %v3648 = vcvt.s32.f32 %v1600
    %v3649 = vcvt.s32.f32 %v1601
    %v3650 = vcvt.s32.f32 %v1602
    %v3651 = vcvt.s32.f32 %v1603
    %v3652 = vcvt.s32.f32 %v1604
    %v3653 = vcvt.s32.f32 %v1605
    %v3654 = vcvt.s32.f32 %v1606
    %v3655 = vcvt.s32.f32 %v1607
    %v3656 = vcvt.s32.f32 %v1608
    %v3657 = vcvt.s32.f32 %v1609
    %v3658 = vcvt.s32.f32 %v1610
    %v3659 = vcvt.s32.f32 %v1611
    %v3660 = vcvt.s32.f32 %v1612
    %v3661 = vcvt.s32.f32 %v1613
    %v3662 = vcvt.s32.f32 %v1614
    %v3663 = vcvt.s32.f32 %v1615
    %v3664 = vcvt.s32.f32 %v1616
    %v3665 = vcvt.s32.f32 %v1617
    %v3666 = vcvt.s32.f32 %v1618
    %v3667 = vcvt.s32.f32 %v1619
    %v3668 = vcvt.s32.f32 %v1620
    %v3669 = vcvt.s32.f32 %v1621
    %v3670 = vcvt.s32.f32 %v1622
    %v3671 = vcvt.s32.f32 %v1623
    %v3672 = vcvt.s32.f32 %v1624
    %v3673 = vcvt.s32.f32 %v1625
    %v3674 = vcvt.s32.f32 %v1626
    %v3675 = vcvt.s32.f32 %v1627
    %v3676 = vcvt.s32.f32 %v1628
    %v3677 = vcvt.s32.f32 %v1629
    %v3678 = vcvt.s32.f32 %v1630
    %v3679 = vcvt.s32.f32 %v1631
    %v3680 = vcvt.s32.f32 %v1632
    %v3681 = vcvt.s32.f32 %v1633
    %v3682 = vcvt.s32.f32 %v1634
    %v3683 = vcvt.s32.f32 %v1635
    %v3684 = vcvt.s32.f32 %v1636
    %v3685 = vcvt.s32.f32 %v1637
    %v3686 = vcvt.s32.f32 %v1638
    %v3687 = vcvt.s32.f32 %v1639
    %v3688 = vcvt.s32.f32 %v1640
    %v3689 = vcvt.s32.f32 %v1641
    %v3690 = vcvt.s32.f32 %v1642
    %v3691 = vcvt.s32.f32 %v1643
    %v3692 = vcvt.s32.f32 %v1644
    %v3693 = vcvt.s32.f32 %v1645
    %v3694 = vcvt.s32.f32 %v1646
    %v3695 = vcvt.s32.f32 %v1647
    %v3696 = vcvt.s32.f32 %v1648
    %v3697 = vcvt.s32.f32 %v1649
    %v3698 = vcvt.s32.f32 %v1650
    %v3699 = vcvt.s32.f32 %v1651
    %v3700 = vcvt.s32.f32 %v1652
    %v3701 = vcvt.s32.f32 %v1653
    %v3702 = vcvt.s32.f32 %v1654
    %v3703 = vcvt.s32.f32 %v1655
    %v3704 = vcvt.s32.f32 %v1656
    %v3705 = vcvt.s32.f32 %v1657
    %v3706 = vcvt.s32.f32 %v1658
    %v3707 = vcvt.s32.f32 %v1659
    %v3708 = vcvt.s32.f32 %v1660
    %v3709 = vcvt.s32.f32 %v1661
    %v3710 = vcvt.s32.f32 %v1662
    %v3711 = vcvt.s32.f32 %v1663
    %v3712 = vcvt.s32.f32 %v1664
    %v3713 = vcvt.s32.f32 %v1665
    %v3714 = vcvt.s32.f32 %v1666
    %v3715 = vcvt.s32.f32 %v1667
    %v3716 = vcvt.s32.f32 %v1668
    %v3717 = vcvt.s32.f32 %v1669
    %v3718 = vcvt.s32.f32 %v1670
    %v3719 = vcvt.s32.f32 %v1671
    %v3720 = vcvt.s32.f32 %v1672
    %v3721 = vcvt.s32.f32 %v1673
    %v3722 = vcvt.s32.f32 %v1674
    %v3723 = vcvt.s32.f32 %v1675
    %v3724 = vcvt.s32.f32 %v1676
    %v3725 = vcvt.s32.f32 %v1677
    %v3726 = vcvt.s32.f32 %v1678
    %v3727 = vcvt.s32.f32 %v1679
    %v3728 = vcvt.s32.f32 %v1680
    %v3729 = vcvt.s32.f32 %v1681
    %v3730 = vcvt.s32.f32 %v1682
    %v3731 = vcvt.s32.f32 %v1683
    %v3732 = vcvt.s32.f32 %v1684
    %v3733 = vcvt.s32.f32 %v1685
    %v3734 = vcvt.s32.f32 %v1686
    %v3735 = vcvt.s32.f32 %v1687
    %v3736 = vcvt.s32.f32 %v1688
    %v3737 = vcvt.s32.f32 %v1689
    %v3738 = vcvt.s32.f32 %v1690
    %v3739 = vcvt.s32.f32 %v1691
    %v3740 = vcvt.s32.f32 %v1692
    %v3741 = vcvt.s32.f32 %v1693
    %v3742 = vcvt.s32.f32 %v1694
    %v3743 = vcvt.s32.f32 %v1695
    %v3744 = vcvt.s32.f32 %v1696
    %v3745 = vcvt.s32.f32 %v1697
    %v3746 = vcvt.s32.f32 %v1698
    %v3747 = vcvt.s32.f32 %v1699
    %v3748 = vcvt.s32.f32 %v1700
    %v3749 = vcvt.s32.f32 %v1701
    %v3750 = vcvt.s32.f32 %v1702
    %v3751 = vcvt.s32.f32 %v1703
    %v3752 = vcvt.s32.f32 %v1704
    %v3753 = vcvt.s32.f32 %v1705
    %v3754 = vcvt.s32.f32 %v1706
    %v3755 = vcvt.s32.f32 %v1707
    %v3756 = vcvt.s32.f32 %v1708
    %v3757 = vcvt.s32.f32 %v1709
    %v3758 = vcvt.s32.f32 %v1710
    %v3759 = vcvt.s32.f32 %v1711
    %v3760 = vcvt.s32.f32 %v1712
    %v3761 = vcvt.s32.f32 %v1713
    %v3762 = vcvt.s32.f32 %v1714
    %v3763 = vcvt.s32.f32 %v1715
    %v3764 = vcvt.s32.f32 %v1716
    %v3765 = vcvt.s32.f32 %v1717
    %v3766 = vcvt.s32.f32 %v1718
    %v3767 = vcvt.s32.f32 %v1719
    %v3768 = vcvt.s32.f32 %v1720
    %v3769 = vcvt.s32.f32 %v1721
    %v3770 = vcvt.s32.f32 %v1722
    %v3771 = vcvt.s32.f32 %v1723
    %v3772 = vcvt.s32.f32 %v1724
    %v3773 = vcvt.s32.f32 %v1725
    %v3774 = vcvt.s32.f32 %v1726
    %v3775 = vcvt.s32.f32 %v1727
    %v3776 = vcvt.s32.f32 %v1728
    %v3777 = vcvt.s32.f32 %v1729
    %v3778 = vcvt.s32.f32 %v1730
    %v3779 = vcvt.s32.f32 %v1731
    %v3780 = vcvt.s32.f32 %v1732
    %v3781 = vcvt.s32.f32 %v1733
    %v3782 = vcvt.s32.f32 %v1734
    %v3783 = vcvt.s32.f32 %v1735
    %v3784 = vcvt.s32.f32 %v1736
    %v3785 = vcvt.s32.f32 %v1737
    %v3786 = vcvt.s32.f32 %v1738
    %v3787 = vcvt.s32.f32 %v1739
    %v3788 = vcvt.s32.f32 %v1740
    %v3789 = vcvt.s32.f32 %v1741
    %v3790 = vcvt.s32.f32 %v1742
    %v3791 = vcvt.s32.f32 %v1743
    %v3792 = vcvt.s32.f32 %v1744
    %v3793 = vcvt.s32.f32 %v1745
    %v3794 = vcvt.s32.f32 %v1746
    %v3795 = vcvt.s32.f32 %v1747
    %v3796 = vcvt.s32.f32 %v1748
    %v3797 = vcvt.s32.f32 %v1749
    %v3798 = vcvt.s32.f32 %v1750
    %v3799 = vcvt.s32.f32 %v1751
    %v3800 = vcvt.s32.f32 %v1752
    %v3801 = vcvt.s32.f32 %v1753
    %v3802 = vcvt.s32.f32 %v1754
    %v3803 = vcvt.s32.f32 %v1755
    %v3804 = vcvt.s32.f32 %v1756
    %v3805 = vcvt.s32.f32 %v1757
    %v3806 = vcvt.s32.f32 %v1758
    %v3807 = vcvt.s32.f32 %v1759
    %v3808 = vcvt.s32.f32 %v1760
    %v3809 = vcvt.s32.f32 %v1761
    %v3810 = vcvt.s32.f32 %v1762
    %v3811 = vcvt.s32.f32 %v1763
    %v3812 = vcvt.s32.f32 %v1764
    %v3813 = vcvt.s32.f32 %v1765
    %v3814 = vcvt.s32.f32 %v1766
    %v3815 = vcvt.s32.f32 %v1767
    %v3816 = vcvt.s32.f32 %v1768
    %v3817 = vcvt.s32.f32 %v1769
    %v3818 = vcvt.s32.f32 %v1770
    %v3819 = vcvt.s32.f32 %v1771
    %v3820 = vcvt.s32.f32 %v1772
    %v3821 = vcvt.s32.f32 %v1773
    %v3822 = vcvt.s32.f32 %v1774
    %v3823 = vcvt.s32.f32 %v1775
    %v3824 = vcvt.s32.f32 %v1776
    %v3825 = vcvt.s32.f32 %v1777
    %v3826 = vcvt.s32.f32 %v1778
    %v3827 = vcvt.s32.f32 %v1779
    %v3828 = vcvt.s32.f32 %v1780
    %v3829 = vcvt.s32.f32 %v1781
    %v3830 = vcvt.s32.f32 %v1782
    %v3831 = vcvt.s32.f32 %v1783
    %v3832 = vcvt.s32.f32 %v1784
    %v3833 = vcvt.s32.f32 %v1785
    %v3834 = vcvt.s32.f32 %v1786
    %v3835 = vcvt.s32.f32 %v1787
    %v3836 = vcvt.s32.f32 %v1788
    %v3837 = vcvt.s32.f32 %v1789
    %v3838 = vcvt.s32.f32 %v1790
    %v3839 = vcvt.s32.f32 %v1791
    %v3840 = vcvt.s32.f32 %v1792
    %v3841 = vcvt.s32.f32 %v1793
    %v3842 = vcvt.s32.f32 %v1794
    %v3843 = vcvt.s32.f32 %v1795
    %v3844 = vcvt.s32.f32 %v1796
    %v3845 = vcvt.s32.f32 %v1797
    %v3846 = vcvt.s32.f32 %v1798
    %v3847 = vcvt.s32.f32 %v1799
    %v3848 = vcvt.s32.f32 %v1800
    %v3849 = vcvt.s32.f32 %v1801
    %v3850 = vcvt.s32.f32 %v1802
    %v3851 = vcvt.s32.f32 %v1803
    %v3852 = vcvt.s32.f32 %v1804
    %v3853 = vcvt.s32.f32 %v1805
    %v3854 = vcvt.s32.f32 %v1806
    %v3855 = vcvt.s32.f32 %v1807
    %v3856 = vcvt.s32.f32 %v1808
    %v3857 = vcvt.s32.f32 %v1809
    %v3858 = vcvt.s32.f32 %v1810
    %v3859 = vcvt.s32.f32 %v1811
    %v3860 = vcvt.s32.f32 %v1812
    %v3861 = vcvt.s32.f32 %v1813
    %v3862 = vcvt.s32.f32 %v1814
    %v3863 = vcvt.s32.f32 %v1815
    %v3864 = vcvt.s32.f32 %v1816
    %v3865 = vcvt.s32.f32 %v1817
    %v3866 = vcvt.s32.f32 %v1818
    %v3867 = vcvt.s32.f32 %v1819
    %v3868 = vcvt.s32.f32 %v1820
    %v3869 = vcvt.s32.f32 %v1821
    %v3870 = vcvt.s32.f32 %v1822
    %v3871 = vcvt.s32.f32 %v1823
    %v3872 = vcvt.s32.f32 %v1824
    %v3873 = vcvt.s32.f32 %v1825
    %v3874 = vcvt.s32.f32 %v1826
    %v3875 = vcvt.s32.f32 %v1827
    %v3876 = vcvt.s32.f32 %v1828
    %v3877 = vcvt.s32.f32 %v1829
    %v3878 = vcvt.s32.f32 %v1830
    %v3879 = vcvt.s32.f32 %v1831
    %v3880 = vcvt.s32.f32 %v1832
    %v3881 = vcvt.s32.f32 %v1833
    %v3882 = vcvt.s32.f32 %v1834
    %v3883 = vcvt.s32.f32 %v1835
    %v3884 = vcvt.s32.f32 %v1836
    %v3885 = vcvt.s32.f32 %v1837
    %v3886 = vcvt.s32.f32 %v1838
    %v3887 = vcvt.s32.f32 %v1839
    %v3888 = vcvt.s32.f32 %v1840
    %v3889 = vcvt.s32.f32 %v1841
    %v3890 = vcvt.s32.f32 %v1842
    %v3891 = vcvt.s32.f32 %v1843
    %v3892 = vcvt.s32.f32 %v1844
    %v3893 = vcvt.s32.f32 %v1845
    %v3894 = vcvt.s32.f32 %v1846
    %v3895 = vcvt.s32.f32 %v1847
    %v3896 = vcvt.s32.f32 %v1848
    %v3897 = vcvt.s32.f32 %v1849
    %v3898 = vcvt.s32.f32 %v1850
    %v3899 = vcvt.s32.f32 %v1851
    %v3900 = vcvt.s32.f32 %v1852
    %v3901 = vcvt.s32.f32 %v1853
    %v3902 = vcvt.s32.f32 %v1854
    %v3903 = vcvt.s32.f32 %v1855
    %v3904 = vcvt.s32.f32 %v1856
    %v3905 = vcvt.s32.f32 %v1857
    %v3906 = vcvt.s32.f32 %v1858
    %v3907 = vcvt.s32.f32 %v1859
    %v3908 = vcvt.s32.f32 %v1860
    %v3909 = vcvt.s32.f32 %v1861
    %v3910 = vcvt.s32.f32 %v1862
    %v3911 = vcvt.s32.f32 %v1863
    %v3912 = vcvt.s32.f32 %v1864
    %v3913 = vcvt.s32.f32 %v1865
    %v3914 = vcvt.s32.f32 %v1866
    %v3915 = vcvt.s32.f32 %v1867
    %v3916 = vcvt.s32.f32 %v1868
    %v3917 = vcvt.s32.f32 %v1869
    %v3918 = vcvt.s32.f32 %v1870
    %v3919 = vcvt.s32.f32 %v1871
    %v3920 = vcvt.s32.f32 %v1872
    %v3921 = vcvt.s32.f32 %v1873
    %v3922 = vcvt.s32.f32 %v1874
    %v3923 = vcvt.s32.f32 %v1875
    %v3924 = vcvt.s32.f32 %v1876
    %v3925 = vcvt.s32.f32 %v1877
    %v3926 = vcvt.s32.f32 %v1878
    %v3927 = vcvt.s32.f32 %v1879
    %v3928 = vcvt.s32.f32 %v1880
    %v3929 = vcvt.s32.f32 %v1881
    %v3930 = vcvt.s32.f32 %v1882
    %v3931 = vcvt.s32.f32 %v1883
    %v3932 = vcvt.s32.f32 %v1884
    %v3933 = vcvt.s32.f32 %v1885
    %v3934 = vcvt.s32.f32 %v1886
    %v3935 = vcvt.s32.f32 %v1887
    %v3936 = vcvt.s32.f32 %v1888
    %v3937 = vcvt.s32.f32 %v1889
    %v3938 = vcvt.s32.f32 %v1890
    %v3939 = vcvt.s32.f32 %v1891
    %v3940 = vcvt.s32.f32 %v1892
    %v3941 = vcvt.s32.f32 %v1893
    %v3942 = vcvt.s32.f32 %v1894
    %v3943 = vcvt.s32.f32 %v1895
    %v3944 = vcvt.s32.f32 %v1896
    %v3945 = vcvt.s32.f32 %v1897
    %v3946 = vcvt.s32.f32 %v1898
    %v3947 = vcvt.s32.f32 %v1899
    %v3948 = vcvt.s32.f32 %v1900
    %v3949 = vcvt.s32.f32 %v1901
    %v3950 = vcvt.s32.f32 %v1902
    %v3951 = vcvt.s32.f32 %v1903
    %v3952 = vcvt.s32.f32 %v1904
    %v3953 = vcvt.s32.f32 %v1905
    %v3954 = vcvt.s32.f32 %v1906
    %v3955 = vcvt.s32.f32 %v1907
    %v3956 = vcvt.s32.f32 %v1908
    %v3957 = vcvt.s32.f32 %v1909
    %v3958 = vcvt.s32.f32 %v1910
    %v3959 = vcvt.s32.f32 %v1911
    %v3960 = vcvt.s32.f32 %v1912
    %v3961 = vcvt.s32.f32 %v1913
    %v3962 = vcvt.s32.f32 %v1914
    %v3963 = vcvt.s32.f32 %v1915
    %v3964 = vcvt.s32.f32 %v1916
    %v3965 = vcvt.s32.f32 %v1917
    %v3966 = vcvt.s32.f32 %v1918
    %v3967 = vcvt.s32.f32 %v1919
    %v3968 = vcvt.s32.f32 %v1920
    %v3969 = vcvt.s32.f32 %v1921
    %v3970 = vcvt.s32.f32 %v1922
    %v3971 = vcvt.s32.f32 %v1923
    %v3972 = vcvt.s32.f32 %v1924
    %v3973 = vcvt.s32.f32 %v1925
    %v3974 = vcvt.s32.f32 %v1926
    %v3975 = vcvt.s32.f32 %v1927
    %v3976 = vcvt.s32.f32 %v1928
    %v3977 = vcvt.s32.f32 %v1929
    %v3978 = vcvt.s32.f32 %v1930
    %v3979 = vcvt.s32.f32 %v1931
    %v3980 = vcvt.s32.f32 %v1932
    %v3981 = vcvt.s32.f32 %v1933
    %v3982 = vcvt.s32.f32 %v1934
    %v3983 = vcvt.s32.f32 %v1935
    %v3984 = vcvt.s32.f32 %v1936
    %v3985 = vcvt.s32.f32 %v1937
    %v3986 = vcvt.s32.f32 %v1938
    %v3987 = vcvt.s32.f32 %v1939
    %v3988 = vcvt.s32.f32 %v1940
    %v3989 = vcvt.s32.f32 %v1941
    %v3990 = vcvt.s32.f32 %v1942
    %v3991 = vcvt.s32.f32 %v1943
    %v3992 = vcvt.s32.f32 %v1944
    %v3993 = vcvt.s32.f32 %v1945
    %v3994 = vcvt.s32.f32 %v1946
    %v3995 = vcvt.s32.f32 %v1947
    %v3996 = vcvt.s32.f32 %v1948
    %v3997 = vcvt.s32.f32 %v1949
    %v3998 = vcvt.s32.f32 %v1950
    %v3999 = vcvt.s32.f32 %v1951
    %v4000 = vcvt.s32.f32 %v1952
    %v4001 = vcvt.s32.f32 %v1953
    %v4002 = vcvt.s32.f32 %v1954
    %v4003 = vcvt.s32.f32 %v1955
    %v4004 = vcvt.s32.f32 %v1956
    %v4005 = vcvt.s32.f32 %v1957
    %v4006 = vcvt.s32.f32 %v1958
    %v4007 = vcvt.s32.f32 %v1959
    %v4008 = vcvt.s32.f32 %v1960
    %v4009 = vcvt.s32.f32 %v1961
    %v4010 = vcvt.s32.f32 %v1962
    %v4011 = vcvt.s32.f32 %v1963
    %v4012 = vcvt.s32.f32 %v1964
    %v4013 = vcvt.s32.f32 %v1965
    %v4014 = vcvt.s32.f32 %v1966
    %v4015 = vcvt.s32.f32 %v1967
    %v4016 = vcvt.s32.f32 %v1968
    %v4017 = vcvt.s32.f32 %v1969
    %v4018 = vcvt.s32.f32 %v1970
    %v4019 = vcvt.s32.f32 %v1971
    %v4020 = vcvt.s32.f32 %v1972
    %v4021 = vcvt.s32.f32 %v1973
    %v4022 = vcvt.s32.f32 %v1974
    %v4023 = vcvt.s32.f32 %v1975
    %v4024 = vcvt.s32.f32 %v1976
    %v4025 = vcvt.s32.f32 %v1977
    %v4026 = vcvt.s32.f32 %v1978
    %v4027 = vcvt.s32.f32 %v1979
    %v4028 = vcvt.s32.f32 %v1980
    %v4029 = vcvt.s32.f32 %v1981
    %v4030 = vcvt.s32.f32 %v1982
    %v4031 = vcvt.s32.f32 %v1983
    %v4032 = vcvt.s32.f32 %v1984
    %v4033 = vcvt.s32.f32 %v1985
    %v4034 = vcvt.s32.f32 %v1986
    %v4035 = vcvt.s32.f32 %v1987
    %v4036 = vcvt.s32.f32 %v1988
    %v4037 = vcvt.s32.f32 %v1989
    %v4038 = vcvt.s32.f32 %v1990
    %v4039 = vcvt.s32.f32 %v1991
    %v4040 = vcvt.s32.f32 %v1992
    %v4041 = vcvt.s32.f32 %v1993
    %v4042 = vcvt.s32.f32 %v1994
    %v4043 = vcvt.s32.f32 %v1995
    %v4044 = vcvt.s32.f32 %v1996
    %v4045 = vcvt.s32.f32 %v1997
    %v4046 = vcvt.s32.f32 %v1998
    %v4047 = vcvt.s32.f32 %v1999
    %v4048 = vcvt.s32.f32 %v2000
    %v4049 = vcvt.s32.f32 %v2001
    %v4050 = vcvt.s32.f32 %v2002
    %v4051 = vcvt.s32.f32 %v2003
    %v4052 = vcvt.s32.f32 %v2004
    %v4053 = vcvt.s32.f32 %v2005
    %v4054 = vcvt.s32.f32 %v2006
    %v4055 = vcvt.s32.f32 %v2007
    %v4056 = vcvt.s32.f32 %v2008
    %v4057 = vcvt.s32.f32 %v2009
    %v4058 = vcvt.s32.f32 %v2010
    %v4059 = vcvt.s32.f32 %v2011
    %v4060 = vcvt.s32.f32 %v2012
    %v4061 = vcvt.s32.f32 %v2013
    %v4062 = vcvt.s32.f32 %v2014
    %v4063 = vcvt.s32.f32 %v2015
    %v4064 = vcvt.s32.f32 %v2016
    %v4065 = vcvt.s32.f32 %v2017
    %v4066 = vcvt.s32.f32 %v2018
    %v4067 = vcvt.s32.f32 %v2019
    %v4068 = vcvt.s32.f32 %v2020
    %v4069 = vcvt.s32.f32 %v2021
    %v4070 = vcvt.s32.f32 %v2022
    %v4071 = vcvt.s32.f32 %v2023
    %v4072 = vcvt.s32.f32 %v2024
    %v4073 = vcvt.s32.f32 %v2025
    %v4074 = vcvt.s32.f32 %v2026
    %v4075 = vcvt.s32.f32 %v2027
    %v4076 = vcvt.s32.f32 %v2028
    %v4077 = vcvt.s32.f32 %v2029
    %v4078 = vcvt.s32.f32 %v2030
    %v4079 = vcvt.s32.f32 %v2031
    %v4080 = vcvt.s32.f32 %v2032
    %v4081 = vcvt.s32.f32 %v2033
    %v4082 = vcvt.s32.f32 %v2034
    %v4083 = vcvt.s32.f32 %v2035
    %v4084 = vcvt.s32.f32 %v2036
    %v4085 = vcvt.s32.f32 %v2037
    %v4086 = vcvt.s32.f32 %v2038
    %v4087 = vcvt.s32.f32 %v2039
    %v4088 = vcvt.s32.f32 %v2040
    %v4089 = vcvt.s32.f32 %v2041
    %v4090 = vcvt.s32.f32 %v2042
    %v4091 = vcvt.s32.f32 %v2043
    %v4092 = vcvt.s32.f32 %v2044
    %v4093 = vcvt.s32.f32 %v2045
    %v4094 = vcvt.s32.f32 %v2046
    %v4095 = vcvt.s32.f32 %v2047
    %v4096 = vcvt.s32.f32 %v2048
    %v4097 = vcvt.s32.f32 %v2049
    %v4098 = vcvt.s32.f32 %v2050
    %v4099 = vcvt.s32.f32 %v2051
    %v4100 = vcvt.s32.f32 %v2052
    %v4101 = vcvt.s32.f32 %v2053
    %v4102 = vcvt.s32.f32 %v2054
    %v4103 = vcvt.s32.f32 %v2055
    %v4104 = vcvt.s32.f32 %v2056
    %v4105 = vcvt.s32.f32 %v2057
    %v4106 = vcvt.s32.f32 %v2058
    %v4107 = vcvt.s32.f32 %v2059
    %v4108 = vcvt.s32.f32 %v2060
    %v4109 = vcvt.s32.f32 %v2061
    %v4110 = vcvt.s32.f32 %v2062
    %v4111 = vcvt.s32.f32 %v2063
    %v4112 = vcvt.s32.f32 %v2064
    %v4113 = vcvt.s32.f32 %v2065
    %v4114 = vcvt.s32.f32 %v2066
    %v4115 = vcvt.s32.f32 %v2067
    %v4116 = vcvt.s32.f32 %v2068
    %v4117 = vcvt.s32.f32 %v2069
    %v4118 = vcvt.s32.f32 %v2070
    %v4119 = vcvt.s32.f32 %v2071
    %v4120 = vcvt.s32.f32 %v2072
    %v4121 = vcvt.s32.f32 %v2073
    %v4122 = vcvt.s32.f32 %v2074
    %v4123 = vcvt.s32.f32 %v2075
    %v4124 = vcvt.s32.f32 %v2076
    %v4125 = vcvt.s32.f32 %v2077
    %v4126 = vcvt.s32.f32 %v2078
    %v4127 = vcvt.s32.f32 %v2079
    %v4128 = vcvt.s32.f32 %v2080
    %v4129 = vcvt.s32.f32 %v2081
    %v4130 = vcvt.s32.f32 %v2082
    %v4131 = vcvt.s32.f32 %v2083
    %v4132 = vcvt.s32.f32 %v2084
    %v4133 = vcvt.s32.f32 %v2085
    %v4134 = vcvt.s32.f32 %v2086
    %v4135 = vcvt.s32.f32 %v2087
    %v4136 = vcvt.s32.f32 %v2088
    %v4137 = vcvt.s32.f32 %v2089
    %v4138 = vcvt.s32.f32 %v2090
    %v4139 = vcvt.s32.f32 %v2091
    %v4140 = vcvt.s32.f32 %v2092
    %v4141 = vcvt.s32.f32 %v2093
    %v4142 = vcvt.s32.f32 %v2094
    %v4143 = vcvt.s32.f32 %v2095
    %v4144 = vcvt.s32.f32 %v2096
    %v4145 = vcvt.s32.f32 %v2097
    %v4146 = vcvt.s32.f32 %v2098
    %v4147 = vcvt.s32.f32 %v2099
    %v4148 = vcvt.s32.f32 %v2100
    %v4149 = vcvt.s32.f32 %v2101
    %v4150 = vcvt.s32.f32 %v2102
    %v4151 = vcvt.s32.f32 %v2103
    %v4152 = vcvt.s32.f32 %v2104
    %v4153 = vcvt.s32.f32 %v2105
    %v4154 = vcvt.s32.f32 %v2106
    %v4155 = vcvt.s32.f32 %v2107
    %v4156 = vcvt.s32.f32 %v2108
    %v4157 = vcvt.s32.f32 %v2109
    %v4158 = vcvt.s32.f32 %v2110
    %v4159 = vcvt.s32.f32 %v2111
    %v4160 = vcvt.s32.f32 %v2112
    %v4161 = vcvt.s32.f32 %v2113
    %v4162 = vcvt.s32.f32 %v2114
    %v4163 = vcvt.s32.f32 %v2115
    %v4164 = vcvt.s32.f32 %v2116
    %v4165 = vcvt.s32.f32 %v2117
    %v4166 = vcvt.s32.f32 %v2118
    %v4167 = vcvt.s32.f32 %v2119
    %v4168 = vcvt.s32.f32 %v2120
    %v4169 = vcvt.s32.f32 %v2121
    %v4170 = vcvt.s32.f32 %v2122
    %v4171 = vcvt.s32.f32 %v2123
    %v4172 = vcvt.s32.f32 %v2124
    %v4173 = vcvt.s32.f32 %v2125
    %v4174 = vcvt.s32.f32 %v2126
    %v4175 = vcvt.s32.f32 %v2127
    %v4176 = vcvt.s32.f32 %v2128
    %v4177 = vcvt.s32.f32 %v2129
    %v4178 = vcvt.s32.f32 %v2130
    %v4179 = vcvt.s32.f32 %v2131
    %v4180 = vcvt.s32.f32 %v2132
    %v4181 = vcvt.s32.f32 %v2133
    %v4182 = vcvt.s32.f32 %v2134
    %v4183 = vcvt.s32.f32 %v2135
    %v4184 = vcvt.s32.f32 %v2136
    %v4185 = vcvt.s32.f32 %v2137
    %v4186 = vcvt.s32.f32 %v2138
    %v4187 = vcvt.s32.f32 %v2139
    %v4188 = vcvt.s32.f32 %v2140
    %v4189 = vcvt.s32.f32 %v2141
    %v4190 = vcvt.s32.f32 %v2142
    %v4191 = vcvt.s32.f32 %v2143
    %v4192 = vcvt.s32.f32 %v2144
    %v4193 = vcvt.s32.f32 %v2145
    %v4194 = vcvt.s32.f32 %v2146
    %v4195 = vcvt.s32.f32 %v2147
    %v4196 = vcvt.s32.f32 %v2148
    %v4197 = vcvt.s32.f32 %v2149
    %v4198 = vcvt.s32.f32 %v2150
    %v4199 = vcvt.s32.f32 %v2151
    %v4200 = vcvt.s32.f32 %v2152
    %v4201 = vcvt.s32.f32 %v2153
    %v4202 = vcvt.s32.f32 %v2154
    %v4203 = vcvt.s32.f32 %v2155
    %v4204 = vcvt.s32.f32 %v2156
    %v4205 = vcvt.s32.f32 %v2157
    %v4206 = vcvt.s32.f32 %v2158
    %v4207 = vcvt.s32.f32 %v2159
    %v4208 = vcvt.s32.f32 %v2160
    %v4209 = vcvt.s32.f32 %v2161
    %v4210 = vcvt.s32.f32 %v2162
    %v4211 = vcvt.s32.f32 %v2163
    %v4212 = vcvt.s32.f32 %v2164
    %v4213 = vcvt.s32.f32 %v2165
    %v4214 = vcvt.s32.f32 %v2166
    %v4215 = vcvt.s32.f32 %v2167
    %v4216 = vcvt.s32.f32 %v2168
    %v4217 = vcvt.s32.f32 %v2169
    %v4218 = vcvt.s32.f32 %v2170
    %v4219 = vcvt.s32.f32 %v2171
    %v4220 = vcvt.s32.f32 %v2172
    %v4221 = vcvt.s32.f32 %v2173
    %v4222 = vcvt.s32.f32 %v2174
    %v4223 = vcvt.s32.f32 %v2175
    %v4224 = vcvt.s32.f32 %v2176
    %v4225 = vcvt.s32.f32 %v2177
    %v4226 = vcvt.s32.f32 %v2178
    %v4227 = vcvt.s32.f32 %v2179
    %v4228 = vcvt.s32.f32 %v2180
    %v4229 = vcvt.s32.f32 %v2181
    %v4230 = vcvt.s32.f32 %v2182
    %v4231 = vcvt.s32.f32 %v2183
    %v4232 = vcvt.s32.f32 %v2184
    %v4233 = vcvt.s32.f32 %v2185
    %v4234 = vcvt.s32.f32 %v2186
    %v4235 = vcvt.s32.f32 %v2187
    %v4236 = vcvt.s32.f32 %v2188
    %v4237 = vcvt.s32.f32 %v2189
    %v4238 = vcvt.s32.f32 %v2190
    %v4239 = vcvt.s32.f32 %v2191
    %v4240 = vcvt.s32.f32 %v2192
    %v4241 = vcvt.s32.f32 %v2193
    %v4242 = vcvt.s32.f32 %v2194
    %v4243 = vcvt.s32.f32 %v2195
    %v4244 = vcvt.s32.f32 %v2196
    %v4245 = vcvt.s32.f32 %v2197
    %v4246 = vcvt.s32.f32 %v2198
    %v4247 = vcvt.s32.f32 %v2199
    %v4248 = vcvt.s32.f32 %v2200
    %v4249 = vcvt.s32.f32 %v2201
    %v4250 = vcvt.s32.f32 %v2202
    %v4251 = vcvt.s32.f32 %v2203
    %v4252 = vcvt.s32.f32 %v2204
    %v4253 = vcvt.s32.f32 %v2205
    %v4254 = vcvt.s32.f32 %v2206
    %v4255 = vcvt.s32.f32 %v2207
    %v4256 = vcvt.s32.f32 %v2208
    %v4257 = vcvt.s32.f32 %v2209
    %v4258 = vcvt.s32.f32 %v2210
    %v4259 = vcvt.s32.f32 %v2211
    %v4260 = vcvt.s32.f32 %v2212
    %v4261 = vcvt.s32.f32 %v2213
    %v4262 = vcvt.s32.f32 %v2214
    %v4263 = vcvt.s32.f32 %v2215
    %v4264 = vcvt.s32.f32 %v2216
    %v4265 = vcvt.s32.f32 %v2217
    %v4266 = vcvt.s32.f32 %v2218
    %v4267 = vcvt.s32.f32 %v2219
    %v4268 = vcvt.s32.f32 %v2220
    %v4269 = vcvt.s32.f32 %v2221
    %v4270 = vcvt.s32.f32 %v2222
    %v4271 = vcvt.s32.f32 %v2223
    %v4272 = vcvt.s32.f32 %v2224
    %v4273 = vcvt.s32.f32 %v2225
    %v4274 = vcvt.s32.f32 %v2226
    %v4275 = vcvt.s32.f32 %v2227
    %v4276 = vcvt.s32.f32 %v2228
    %v4277 = vcvt.s32.f32 %v2229
    %v4278 = vcvt.s32.f32 %v2230
    %v4279 = vcvt.s32.f32 %v2231
    %v4280 = vcvt.s32.f32 %v2232
    %v4281 = vcvt.s32.f32 %v2233
    %v4282 = vcvt.s32.f32 %v2234
    %v4283 = vcvt.s32.f32 %v2235
    %v4284 = vcvt.s32.f32 %v2236
    %v4285 = vcvt.s32.f32 %v2237
    %v4286 = vcvt.s32.f32 %v2238
    %v4287 = vcvt.s32.f32 %v2239
    %v4288 = vcvt.s32.f32 %v2240
    %v4289 = vcvt.s32.f32 %v2241
    %v4290 = vcvt.s32.f32 %v2242
    %v4291 = vcvt.s32.f32 %v2243
    %v4292 = vcvt.s32.f32 %v2244
    %v4293 = vcvt.s32.f32 %v2245
    %v4294 = vcvt.s32.f32 %v2246
    %v4295 = vcvt.s32.f32 %v2247
    %v4296 = vcvt.s32.f32 %v2248
    %v4297 = vcvt.s32.f32 %v2249
    %v4298 = vcvt.s32.f32 %v2250
    %v4299 = vcvt.s32.f32 %v2251
    %v4300 = vcvt.s32.f32 %v2252
    %v4301 = vcvt.s32.f32 %v2253
    %v4302 = vcvt.s32.f32 %v2254
    %v4303 = vcvt.s32.f32 %v2255
    %v4304 = vcvt.s32.f32 %v2256
    %v4305 = vcvt.s32.f32 %v2257
    %v4306 = vcvt.s32.f32 %v2258
    %v4307 = vcvt.s32.f32 %v2259
    %v4308 = vcvt.s32.f32 %v2260
    %v4309 = vcvt.s32.f32 %v2261
    %v4310 = vcvt.s32.f32 %v2262
    %v4311 = vcvt.s32.f32 %v2263
    %v4312 = vcvt.s32.f32 %v2264
    %v4313 = vcvt.s32.f32 %v2265
    %v4314 = vcvt.s32.f32 %v2266
    %v4315 = vcvt.s32.f32 %v2267
    %v4316 = vcvt.s32.f32 %v2268
    %v4317 = vcvt.s32.f32 %v2269
    %v4318 = vcvt.s32.f32 %v2270
    %v4319 = vcvt.s32.f32 %v2271
    %v4320 = vcvt.s32.f32 %v2272
    %v4321 = vcvt.s32.f32 %v2273
    %v4322 = vcvt.s32.f32 %v2274
    %v4323 = vcvt.s32.f32 %v2275
    %v4324 = vcvt.s32.f32 %v2276
    %v4325 = vcvt.s32.f32 %v2277
    %v4326 = vcvt.s32.f32 %v2278
    %v4327 = vcvt.s32.f32 %v2279
    %v4328 = vcvt.s32.f32 %v2280
    %v4329 = vcvt.s32.f32 %v2281
    %v4330 = vcvt.s32.f32 %v2282
    %v4331 = vcvt.s32.f32 %v2283
    %v4332 = vcvt.s32.f32 %v2284
    %v4333 = vcvt.s32.f32 %v2285
    %v4334 = vcvt.s32.f32 %v2286
    %v4335 = vcvt.s32.f32 %v2287
    %v4336 = vcvt.s32.f32 %v2288
    %v4337 = vcvt.s32.f32 %v2289
    %v4338 = vcvt.s32.f32 %v2290
    %v4339 = vcvt.s32.f32 %v2291
    %v4340 = vcvt.s32.f32 %v2292
    %v4341 = vcvt.s32.f32 %v2293
    %v4342 = vcvt.s32.f32 %v2294
    %v4343 = vcvt.s32.f32 %v2295
    %v4344 = vcvt.s32.f32 %v2296
    %v4345 = vcvt.s32.f32 %v2297
    %v4346 = vcvt.s32.f32 %v2298
    %v4347 = vcvt.s32.f32 %v2299
    %v4348 = vcvt.s32.f32 %v2300
    %v4349 = vcvt.s32.f32 %v2301
    %v4350 = vcvt.s32.f32 %v2302
    %v4351 = vcvt.s32.f32 %v2303
    %v4352 = vcvt.s32.f32 %v2304
    %v4353 = vcvt.s32.f32 %v2305
    %v4354 = vcvt.s32.f32 %v2306
    %v4355 = vcvt.s32.f32 %v2307
    %v4356 = vcvt.s32.f32 %v2308
    %v4357 = vcvt.s32.f32 %v2309
    %v4358 = vcvt.s32.f32 %v2310
    %v4359 = vcvt.s32.f32 %v2311
    %v4360 = vcvt.s32.f32 %v2312
    %v4361 = vcvt.s32.f32 %v2313
    %v4362 = vcvt.s32.f32 %v2314
    %v4363 = vcvt.s32.f32 %v2315
    %v4364 = vcvt.s32.f32 %v2316
    %v4365 = vcvt.s32.f32 %v2317
    %v4366 = vcvt.s32.f32 %v2318
    %v4367 = vcvt.s32.f32 %v2319
    %v4368 = vcvt.s32.f32 %v2320
    %v4369 = vcvt.s32.f32 %v2321
    %v4370 = vcvt.s32.f32 %v2322
    %v4371 = vcvt.s32.f32 %v2323
    %v4372 = vcvt.s32.f32 %v2324
    %v4373 = vcvt.s32.f32 %v2325
    %v4374 = vcvt.s32.f32 %v2326
    %v4375 = vcvt.s32.f32 %v2327
    %v4376 = vcvt.s32.f32 %v2328
    %v4377 = vcvt.s32.f32 %v2329
    %v4378 = vcvt.s32.f32 %v2330
    %v4379 = vcvt.s32.f32 %v2331
    %v4380 = vcvt.s32.f32 %v2332
    %v4381 = vcvt.s32.f32 %v2333
    %v4382 = vcvt.s32.f32 %v2334
    %v4383 = vcvt.s32.f32 %v2335
    %v4384 = vcvt.s32.f32 %v2336
    %v4385 = vcvt.s32.f32 %v2337
    %v4386 = vcvt.s32.f32 %v2338
    %v4387 = vcvt.s32.f32 %v2339
    %v4388 = vcvt.s32.f32 %v2340
    %v4389 = vcvt.s32.f32 %v2341
    %v4390 = vcvt.s32.f32 %v2342
    %v4391 = vcvt.s32.f32 %v2343
    %v4392 = vcvt.s32.f32 %v2344
    %v4393 = vcvt.s32.f32 %v2345
    %v4394 = vcvt.s32.f32 %v2346
    %v4395 = vcvt.s32.f32 %v2347
    %v4396 = vcvt.s32.f32 %v2348
    %v4397 = vcvt.s32.f32 %v2349
    %v4398 = vcvt.s32.f32 %v2350
    %v4399 = vcvt.s32.f32 %v2351
    %v4400 = vcvt.s32.f32 %v2352
    %v4401 = vcvt.s32.f32 %v2353
    %v4402 = vcvt.s32.f32 %v2354
    %v4403 = vcvt.s32.f32 %v2355
    %v4404 = vcvt.s32.f32 %v2356
    %v4405 = vcvt.s32.f32 %v2357
    %v4406 = vcvt.s32.f32 %v2358
    %v4407 = vcvt.s32.f32 %v2359
    %v4408 = vcvt.s32.f32 %v2360
    %v4409 = vcvt.s32.f32 %v2361
    %v4410 = vcvt.s32.f32 %v2362
    %v4411 = vcvt.s32.f32 %v2363
    %v4412 = vcvt.s32.f32 %v2364
    %v4413 = vcvt.s32.f32 %v2365
    %v4414 = vcvt.s32.f32 %v2366
    %v4415 = vcvt.s32.f32 %v2367
    %v4416 = vcvt.s32.f32 %v2368
    %v4417 = vcvt.s32.f32 %v2369
    %v4418 = vcvt.s32.f32 %v2370
    %v4419 = vcvt.s32.f32 %v2371
    %v4420 = vcvt.s32.f32 %v2372
    %v4421 = vcvt.s32.f32 %v2373
    %v4422 = vcvt.s32.f32 %v2374
    %v4423 = vcvt.s32.f32 %v2375
    %v4424 = vcvt.s32.f32 %v2376
    %v4425 = vcvt.s32.f32 %v2377
    %v4426 = vcvt.s32.f32 %v2378
    %v4427 = vcvt.s32.f32 %v2379
    %v4428 = vcvt.s32.f32 %v2380
    %v4429 = vcvt.s32.f32 %v2381
    %v4430 = vcvt.s32.f32 %v2382
    %v4431 = vcvt.s32.f32 %v2383
    %v4432 = vcvt.s32.f32 %v2384
    %v4433 = vcvt.s32.f32 %v2385
    %v4434 = vcvt.s32.f32 %v2386
    %v4435 = vcvt.s32.f32 %v2387
    %v4436 = vcvt.s32.f32 %v2388
    %v4437 = vcvt.s32.f32 %v2389
    %v4438 = vcvt.s32.f32 %v2390
    %v4439 = vcvt.s32.f32 %v2391
    %v4440 = vcvt.s32.f32 %v2392
    %v4441 = vcvt.s32.f32 %v2393
    %v4442 = vcvt.s32.f32 %v2394
    %v4443 = vcvt.s32.f32 %v2395
    %v4444 = vcvt.s32.f32 %v2396
    %v4445 = vcvt.s32.f32 %v2397
    %v4446 = vcvt.s32.f32 %v2398
    %v4447 = vcvt.s32.f32 %v2399
    %v4448 = vcvt.s32.f32 %v2400
    %v4449 = vcvt.s32.f32 %v2401
    %v4450 = vcvt.s32.f32 %v2402
    %v4451 = vcvt.s32.f32 %v2403
    %v4452 = vcvt.s32.f32 %v2404
    %v4453 = vcvt.s32.f32 %v2405
    %v4454 = vcvt.s32.f32 %v2406
    %v4455 = vcvt.s32.f32 %v2407
    %v4456 = vcvt.s32.f32 %v2408
    %v4457 = vcvt.s32.f32 %v2409
    %v4458 = vcvt.s32.f32 %v2410
    %v4459 = vcvt.s32.f32 %v2411
    %v4460 = vcvt.s32.f32 %v2412
    %v4461 = vcvt.s32.f32 %v2413
    %v4462 = vcvt.s32.f32 %v2414
    %v4463 = vcvt.s32.f32 %v2415
    %v4464 = vcvt.s32.f32 %v2416
    %v4465 = vcvt.s32.f32 %v2417
    %v4466 = vcvt.s32.f32 %v2418
    %v4467 = vcvt.s32.f32 %v2419
    %v4468 = vcvt.s32.f32 %v2420
    %v4469 = vcvt.s32.f32 %v2421
    %v4470 = vcvt.s32.f32 %v2422
    %v4471 = vcvt.s32.f32 %v2423
    %v4472 = vcvt.s32.f32 %v2424
    %v4473 = vcvt.s32.f32 %v2425
    %v4474 = vcvt.s32.f32 %v2426
    %v4475 = vcvt.s32.f32 %v2427
    %v4476 = vcvt.s32.f32 %v2428
    %v4477 = vcvt.s32.f32 %v2429
    %v4478 = vcvt.s32.f32 %v2430
    %v4479 = vcvt.s32.f32 %v2431
    %v4480 = vcvt.s32.f32 %v2432
    %v4481 = vcvt.s32.f32 %v2433
    %v4482 = vcvt.s32.f32 %v2434
    %v4483 = vcvt.s32.f32 %v2435
    %v4484 = vcvt.s32.f32 %v2436
    %v4485 = vcvt.s32.f32 %v2437
    %v4486 = vcvt.s32.f32 %v2438
    %v4487 = vcvt.s32.f32 %v2439
    %v4488 = vcvt.s32.f32 %v2440
    %v4489 = vcvt.s32.f32 %v2441
    %v4490 = vcvt.s32.f32 %v2442
    %v4491 = vcvt.s32.f32 %v2443
    %v4492 = vcvt.s32.f32 %v2444
    %v4493 = vcvt.s32.f32 %v2445
    %v4494 = vcvt.s32.f32 %v2446
    %v4495 = vcvt.s32.f32 %v2447
    %v4496 = vcvt.s32.f32 %v2448
    %v4497 = vcvt.s32.f32 %v2449
    %v4498 = vcvt.s32.f32 %v2450
    %v4499 = vcvt.s32.f32 %v2451
    %v4500 = vcvt.s32.f32 %v2452
    %v4501 = vcvt.s32.f32 %v2453
    %v4502 = vcvt.s32.f32 %v2454
    %v4503 = vcvt.s32.f32 %v2455
    %v4504 = vcvt.s32.f32 %v2456
    %v4505 = vcvt.s32.f32 %v2457
    %v4506 = vcvt.s32.f32 %v2458
    %v4507 = vcvt.s32.f32 %v2459
    %v4508 = vcvt.s32.f32 %v2460
    %v4509 = vcvt.s32.f32 %v2461
    %v4510 = vcvt.s32.f32 %v2462
    %v4511 = vcvt.s32.f32 %v2463
    %v4512 = vcvt.s32.f32 %v2464
    %v4513 = vcvt.s32.f32 %v2465
    %v4514 = vcvt.s32.f32 %v2466
    %v4515 = vcvt.s32.f32 %v2467
    %v4516 = vcvt.s32.f32 %v2468
    %v4517 = vcvt.s32.f32 %v2469
    %v4518 = vcvt.s32.f32 %v2470
    %v4519 = vcvt.s32.f32 %v2471
    %v4520 = vcvt.s32.f32 %v2472
    %v4521 = vcvt.s32.f32 %v2473
    %v4522 = vcvt.s32.f32 %v2474
    %v4523 = vcvt.s32.f32 %v2475
    %v4524 = vcvt.s32.f32 %v2476
    %v4525 = vcvt.s32.f32 %v2477
    %v4526 = vcvt.s32.f32 %v2478
    %v4527 = vcvt.s32.f32 %v2479
    %v4528 = vcvt.s32.f32 %v2480
    %v4529 = vcvt.s32.f32 %v2481
    %v4530 = vcvt.s32.f32 %v2482
    %v4531 = vcvt.s32.f32 %v2483
    %v4532 = vcvt.s32.f32 %v2484
    %v4533 = vcvt.s32.f32 %v2485
    %v4534 = vcvt.s32.f32 %v2486
    %v4535 = vcvt.s32.f32 %v2487
    %v4536 = vcvt.s32.f32 %v2488
    %v4537 = vcvt.s32.f32 %v2489
    %v4538 = vcvt.s32.f32 %v2490
    %v4539 = vcvt.s32.f32 %v2491
    %v4540 = vcvt.s32.f32 %v2492
    %v4541 = vcvt.s32.f32 %v2493
    %v4542 = vcvt.s32.f32 %v2494
    %v4543 = vcvt.s32.f32 %v2495
    %v4544 = vcvt.s32.f32 %v2496
    %v4545 = vcvt.s32.f32 %v2497
    %v4546 = vcvt.s32.f32 %v2498
    %v4547 = vcvt.s32.f32 %v2499
    %v4548 = vcvt.s32.f32 %v2500
    %v4549 = vcvt.s32.f32 %v2501
    %v4550 = vcvt.s32.f32 %v2502
    %v4551 = vcvt.s32.f32 %v2503
    %v4552 = vcvt.s32.f32 %v2504
    %v4553 = vcvt.s32.f32 %v2505
    %v4554 = vcvt.s32.f32 %v2506
    %v4555 = vcvt.s32.f32 %v2507
    %v4556 = vcvt.s32.f32 %v2508
    %v4557 = vcvt.s32.f32 %v2509
    %v4558 = vcvt.s32.f32 %v2510
    %v4559 = vcvt.s32.f32 %v2511
    %v4560 = vcvt.s32.f32 %v2512
    %v4561 = vcvt.s32.f32 %v2513
    %v4562 = vcvt.s32.f32 %v2514
    %v4563 = vcvt.s32.f32 %v2515
    %v4564 = vcvt.s32.f32 %v2516
    %v4565 = vcvt.s32.f32 %v2517
    %v4566 = vcvt.s32.f32 %v2518
    %v4567 = vcvt.s32.f32 %v2519
    %v4568 = vcvt.s32.f32 %v2520
    %v4569 = vcvt.s32.f32 %v2521
    %v4570 = vcvt.s32.f32 %v2522
    %v4571 = vcvt.s32.f32 %v2523
    %v4572 = vcvt.s32.f32 %v2524
    %v4573 = vcvt.s32.f32 %v2525
    %v4574 = vcvt.s32.f32 %v2526
    %v4575 = vcvt.s32.f32 %v2527
    %v4576 = vcvt.s32.f32 %v2528
    %v4577 = vcvt.s32.f32 %v2529
    %v4578 = vcvt.s32.f32 %v2530
    %v4579 = vcvt.s32.f32 %v2531
    %v4580 = vcvt.s32.f32 %v2532
    %v4581 = vcvt.s32.f32 %v2533
    %v4582 = vcvt.s32.f32 %v2534
    %v4583 = vcvt.s32.f32 %v2535
    %v4584 = vcvt.s32.f32 %v2536
    %v4585 = vcvt.s32.f32 %v2537
    %v4586 = vcvt.s32.f32 %v2538
    %v4587 = vcvt.s32.f32 %v2539
    %v4588 = vcvt.s32.f32 %v2540
    %v4589 = vcvt.s32.f32 %v2541
    %v4590 = vcvt.s32.f32 %v2542
    %v4591 = vcvt.s32.f32 %v2543
    %v4592 = vcvt.s32.f32 %v2544
    %v4593 = vcvt.s32.f32 %v2545
    %v4594 = vcvt.s32.f32 %v2546
    %v4595 = vcvt.s32.f32 %v2547
    %v4596 = vcvt.s32.f32 %v2548
    %v4597 = vcvt.s32.f32 %v2549
    %v4598 = vcvt.s32.f32 %v2550
    %v4599 = vcvt.s32.f32 %v2551
    %v4600 = vcvt.s32.f32 %v2552
    %v4601 = vcvt.s32.f32 %v2553
    %v4602 = vcvt.s32.f32 %v2554
    %v4603 = vcvt.s32.f32 %v2555
    %v4604 = vcvt.s32.f32 %v2556
    %v4605 = vcvt.s32.f32 %v2557
    %v4606 = vcvt.s32.f32 %v2558
    %v4607 = vcvt.s32.f32 %v2559
    %v4608 = vcvt.s32.f32 %v2560
    %v4609 = vcvt.s32.f32 %v2561
    %v4610 = vcvt.s32.f32 %v2562
    %v4611 = vcvt.s32.f32 %v2563
    %v4612 = vcvt.s32.f32 %v2564
    %v4613 = vcvt.s32.f32 %v2565
    %v4614 = vcvt.s32.f32 %v2566
    %v4615 = vcvt.s32.f32 %v2567
    %v4616 = vcvt.s32.f32 %v2568
    %v4617 = vcvt.s32.f32 %v2569
    %v4618 = vcvt.s32.f32 %v2570
    %v4619 = vcvt.s32.f32 %v2571
    %v4620 = vcvt.s32.f32 %v2572
    %v4621 = vcvt.s32.f32 %v2573
    %v4622 = vcvt.s32.f32 %v2574
    %v4623 = vcvt.s32.f32 %v2575
    %v4624 = vcvt.s32.f32 %v2576
    %v4625 = vcvt.s32.f32 %v2577
    %v4626 = vcvt.s32.f32 %v2578
    %v4627 = vcvt.s32.f32 %v2579
    %v4628 = vcvt.s32.f32 %v2580
    %v4629 = vcvt.s32.f32 %v2581
    %v4630 = vcvt.s32.f32 %v2582
    %v4631 = vcvt.s32.f32 %v2583
    %v4632 = vcvt.s32.f32 %v2584
    %v4633 = vcvt.s32.f32 %v2585
    %v4634 = vcvt.s32.f32 %v2586
    %v4635 = vcvt.s32.f32 %v2587
    %v4636 = vcvt.s32.f32 %v2588
    %v4637 = vcvt.s32.f32 %v2589
    %v4638 = vcvt.s32.f32 %v2590
    %v4639 = vcvt.s32.f32 %v2591
    %v4640 = vcvt.s32.f32 %v2592
    %v4641 = vcvt.s32.f32 %v2593
    %v4642 = vcvt.s32.f32 %v2594
    %v4643 = vcvt.s32.f32 %v2595
    %v4644 = vcvt.s32.f32 %v2596
    %v4645 = vcvt.s32.f32 %v2597
    %v4646 = vcvt.s32.f32 %v2598
    %v4647 = vcvt.s32.f32 %v2599
    %v4648 = vcvt.s32.f32 %v2600
    %v4649 = vcvt.s32.f32 %v2601
    %v4650 = vcvt.s32.f32 %v2602
    %v4651 = vcvt.s32.f32 %v2603
    %v4652 = vcvt.s32.f32 %v2604
    %v4653 = vcvt.s32.f32 %v2605
    %v4654 = vcvt.s32.f32 %v2606
    %v4655 = vcvt.s32.f32 %v2607
    %v4656 = vcvt.s32.f32 %v2608
    %v4657 = vcvt.s32.f32 %v2609
    %v4658 = vcvt.s32.f32 %v2610
    %v4659 = vcvt.s32.f32 %v2611
    %v4660 = vcvt.s32.f32 %v2612
    %v4661 = vcvt.s32.f32 %v2613
    %v4662 = vcvt.s32.f32 %v2614
    %v4663 = vcvt.s32.f32 %v2615
    %v4664 = vcvt.s32.f32 %v2616
    %v4665 = vcvt.s32.f32 %v2617
    %v4666 = vcvt.s32.f32 %v2618
    %v4667 = vcvt.s32.f32 %v2619
    %v4668 = vcvt.s32.f32 %v2620
    %v4669 = vcvt.s32.f32 %v2621
    %v4670 = vcvt.s32.f32 %v2622
    %v4671 = vcvt.s32.f32 %v2623
    %v4672 = vcvt.s32.f32 %v2624
    %v4673 = vcvt.s32.f32 %v2625
    %v4674 = vcvt.s32.f32 %v2626
    %v4675 = vcvt.s32.f32 %v2627
    %v4676 = vcvt.s32.f32 %v2628
    %v4677 = vcvt.s32.f32 %v2629
    %v4678 = vcvt.s32.f32 %v2630
    %v4679 = vcvt.s32.f32 %v2631
    %v4680 = vcvt.s32.f32 %v2632
    %v4681 = vcvt.s32.f32 %v2633
    %v4682 = vcvt.s32.f32 %v2634
    %v4683 = vcvt.s32.f32 %v2635
    %v4684 = vcvt.s32.f32 %v2636
    %v4685 = vcvt.s32.f32 %v2637
    %v4686 = vcvt.s32.f32 %v2638
    %v4687 = vcvt.s32.f32 %v2639
    %v4688 = vcvt.s32.f32 %v2640
    %v4689 = vcvt.s32.f32 %v2641
    %v4690 = vcvt.s32.f32 %v2642
    %v4691 = vcvt.s32.f32 %v2643
    %v4692 = vcvt.s32.f32 %v2644
    %v4693 = vcvt.s32.f32 %v2645
    %v4694 = vcvt.s32.f32 %v2646
    %v4695 = vcvt.s32.f32 %v2647
    %v4696 = vcvt.s32.f32 %v2648
    %v4697 = vcvt.s32.f32 %v2649
    %v4698 = vcvt.s32.f32 %v2650
    %v4699 = vcvt.s32.f32 %v2651
    %v4700 = vcvt.s32.f32 %v2652
    %v4701 = vcvt.s32.f32 %v2653
    %v4702 = vcvt.s32.f32 %v2654
    %v4703 = vcvt.s32.f32 %v2655
    %v4704 = vcvt.s32.f32 %v2656
    %v4705 = vcvt.s32.f32 %v2657
    %v4706 = vcvt.s32.f32 %v2658
    %v4707 = vcvt.s32.f32 %v2659
    %v4708 = vcvt.s32.f32 %v2660
    %v4709 = vcvt.s32.f32 %v2661
    %v4710 = vcvt.s32.f32 %v2662
    %v4711 = vcvt.s32.f32 %v2663
    %v4712 = vcvt.s32.f32 %v2664
    %v4713 = vcvt.s32.f32 %v2665
    %v4714 = vcvt.s32.f32 %v2666
    %v4715 = vcvt.s32.f32 %v2667
    %v4716 = vcvt.s32.f32 %v2668
    %v4717 = vcvt.s32.f32 %v2669
    %v4718 = vcvt.s32.f32 %v2670
    %v4719 = vcvt.s32.f32 %v2671
    %v4720 = vcvt.s32.f32 %v2672
    %v4721 = vcvt.s32.f32 %v2673
    %v4722 = vcvt.s32.f32 %v2674
    %v4723 = vcvt.s32.f32 %v2675
    %v4724 = vcvt.s32.f32 %v2676
    %v4725 = vcvt.s32.f32 %v2677
    %v4726 = vcvt.s32.f32 %v2678
    %v4727 = vcvt.s32.f32 %v2679
    %v4728 = vcvt.s32.f32 %v2680
    %v4729 = vcvt.s32.f32 %v2681
    %v4730 = vcvt.s32.f32 %v2682
    %v4731 = vcvt.s32.f32 %v2683
    %v4732 = vcvt.s32.f32 %v2684
    %v4733 = vcvt.s32.f32 %v2685
    %v4734 = vcvt.s32.f32 %v2686
    %v4735 = vcvt.s32.f32 %v2687
    %v4736 = vcvt.s32.f32 %v2688
    %v4737 = vcvt.s32.f32 %v2689
    %v4738 = vcvt.s32.f32 %v2690
    %v4739 = vcvt.s32.f32 %v2691
    %v4740 = vcvt.s32.f32 %v2692
    %v4741 = vcvt.s32.f32 %v2693
    %v4742 = vcvt.s32.f32 %v2694
    %v4743 = vcvt.s32.f32 %v2695
    %v4744 = vcvt.s32.f32 %v2696
    %v4745 = vcvt.s32.f32 %v2697
    %v4746 = vcvt.s32.f32 %v2698
    %v4747 = vcvt.s32.f32 %v2699
    %v4748 = vcvt.s32.f32 %v2700
    %v4749 = vcvt.s32.f32 %v2701
    %v4750 = vcvt.s32.f32 %v2702
    %v4751 = vcvt.s32.f32 %v2703
    %v4752 = vcvt.s32.f32 %v2704
    %v4753 = vcvt.s32.f32 %v2705
    %v4754 = vcvt.s32.f32 %v2706
    %v4755 = vcvt.s32.f32 %v2707
    %v4756 = vcvt.s32.f32 %v2708
    %v4757 = vcvt.s32.f32 %v2709
    %v4758 = vcvt.s32.f32 %v2710
    %v4759 = vcvt.s32.f32 %v2711
    %v4760 = vcvt.s32.f32 %v2712
    %v4761 = vcvt.s32.f32 %v2713
    %v4762 = vcvt.s32.f32 %v2714
    %v4763 = vcvt.s32.f32 %v2715
    %v4764 = vcvt.s32.f32 %v2716
    %v4765 = vcvt.s32.f32 %v2717
    %v4766 = vcvt.s32.f32 %v2718
    %v4767 = vcvt.s32.f32 %v2719
    %v4768 = vcvt.s32.f32 %v2720
    %v4769 = vcvt.s32.f32 %v2721
    %v4770 = vcvt.s32.f32 %v2722
    %v4771 = vcvt.s32.f32 %v2723
    %v4772 = vcvt.s32.f32 %v2724
    %v4773 = vcvt.s32.f32 %v2725
    %v4774 = vcvt.s32.f32 %v2726
    %v4775 = vcvt.s32.f32 %v2727
    %v4776 = vcvt.s32.f32 %v2728
    %v4777 = vcvt.s32.f32 %v2729
    %v4778 = vcvt.s32.f32 %v2730
    %v4779 = vcvt.s32.f32 %v2731
    %v4780 = vcvt.s32.f32 %v2732
    %v4781 = vcvt.s32.f32 %v2733
    %v4782 = vcvt.s32.f32 %v2734
    %v4783 = vcvt.s32.f32 %v2735
    %v4784 = vcvt.s32.f32 %v2736
    %v4785 = vcvt.s32.f32 %v2737
    %v4786 = vcvt.s32.f32 %v2738
    %v4787 = vcvt.s32.f32 %v2739
    %v4788 = vcvt.s32.f32 %v2740
    %v4789 = vcvt.s32.f32 %v2741
    %v4790 = vcvt.s32.f32 %v2742
    %v4791 = vcvt.s32.f32 %v2743
    %v4792 = vcvt.s32.f32 %v2744
    %v4793 = vcvt.s32.f32 %v2745
    %v4794 = vpack.c.bf16 %v2762, %v2746
    %v4795 = vpack.c.bf16 %v2763, %v2747
    %v4796 = vpack.c.bf16 %v2764, %v2748
    %v4797 = vpack.c.bf16 %v2765, %v2749
    %v4798 = vpack.c.bf16 %v2766, %v2750
    %v4799 = vpack.c.bf16 %v2767, %v2751
    %v4800 = vpack.c.bf16 %v2768, %v2752
    %v4801 = vpack.c.bf16 %v2769, %v2753
    %v4802 = vpack.c.bf16 %v2770, %v2754
    %v4803 = vpack.c.bf16 %v2771, %v2755
    %v4804 = vpack.c.bf16 %v2772, %v2756
    %v4805 = vpack.c.bf16 %v2773, %v2757
    %v4806 = vpack.c.bf16 %v2774, %v2758
    %v4807 = vpack.c.bf16 %v2775, %v2759
    %v4808 = vpack.c.bf16 %v2776, %v2760
    %v4809 = vpack.c.bf16 %v2777, %v2761
    %v4810 = vpack.c.bf16 %v2794, %v2778
    %v4811 = vpack.c.bf16 %v2795, %v2779
    %v4812 = vpack.c.bf16 %v2796, %v2780
    %v4813 = vpack.c.bf16 %v2797, %v2781
    %v4814 = vpack.c.bf16 %v2798, %v2782
    %v4815 = vpack.c.bf16 %v2799, %v2783
    %v4816 = vpack.c.bf16 %v2800, %v2784
    %v4817 = vpack.c.bf16 %v2801, %v2785
    %v4818 = vpack.c.bf16 %v2802, %v2786
    %v4819 = vpack.c.bf16 %v2803, %v2787
    %v4820 = vpack.c.bf16 %v2804, %v2788
    %v4821 = vpack.c.bf16 %v2805, %v2789
    %v4822 = vpack.c.bf16 %v2806, %v2790
    %v4823 = vpack.c.bf16 %v2807, %v2791
    %v4824 = vpack.c.bf16 %v2808, %v2792
    %v4825 = vpack.c.bf16 %v2809, %v2793
    %v4826 = vpack.c.bf16 %v2826, %v2810
    %v4827 = vpack.c.bf16 %v2827, %v2811
    %v4828 = vpack.c.bf16 %v2828, %v2812
    %v4829 = vpack.c.bf16 %v2829, %v2813
    %v4830 = vpack.c.bf16 %v2830, %v2814
    %v4831 = vpack.c.bf16 %v2831, %v2815
    %v4832 = vpack.c.bf16 %v2832, %v2816
    %v4833 = vpack.c.bf16 %v2833, %v2817
    %v4834 = vpack.c.bf16 %v2834, %v2818
    %v4835 = vpack.c.bf16 %v2835, %v2819
    %v4836 = vpack.c.bf16 %v2836, %v2820
    %v4837 = vpack.c.bf16 %v2837, %v2821
    %v4838 = vpack.c.bf16 %v2838, %v2822
    %v4839 = vpack.c.bf16 %v2839, %v2823
    %v4840 = vpack.c.bf16 %v2840, %v2824
    %v4841 = vpack.c.bf16 %v2841, %v2825
    %v4842 = vpack.c.bf16 %v2858, %v2842
    %v4843 = vpack.c.bf16 %v2859, %v2843
    %v4844 = vpack.c.bf16 %v2860, %v2844
    %v4845 = vpack.c.bf16 %v2861, %v2845
    %v4846 = vpack.c.bf16 %v2862, %v2846
    %v4847 = vpack.c.bf16 %v2863, %v2847
    %v4848 = vpack.c.bf16 %v2864, %v2848
    %v4849 = vpack.c.bf16 %v2865, %v2849
    %v4850 = vpack.c.bf16 %v2866, %v2850
    %v4851 = vpack.c.bf16 %v2867, %v2851
    %v4852 = vpack.c.bf16 %v2868, %v2852
    %v4853 = vpack.c.bf16 %v2869, %v2853
    %v4854 = vpack.c.bf16 %v2870, %v2854
    %v4855 = vpack.c.bf16 %v2871, %v2855
    %v4856 = vpack.c.bf16 %v2872, %v2856
    %v4857 = vpack.c.bf16 %v2873, %v2857
    %v4858 = vpack.c.bf16 %v2890, %v2874
    %v4859 = vpack.c.bf16 %v2891, %v2875
    %v4860 = vpack.c.bf16 %v2892, %v2876
    %v4861 = vpack.c.bf16 %v2893, %v2877
    %v4862 = vpack.c.bf16 %v2894, %v2878
    %v4863 = vpack.c.bf16 %v2895, %v2879
    %v4864 = vpack.c.bf16 %v2896, %v2880
    %v4865 = vpack.c.bf16 %v2897, %v2881
    %v4866 = vpack.c.bf16 %v2898, %v2882
    %v4867 = vpack.c.bf16 %v2899, %v2883
    %v4868 = vpack.c.bf16 %v2900, %v2884
    %v4869 = vpack.c.bf16 %v2901, %v2885
    %v4870 = vpack.c.bf16 %v2902, %v2886
    %v4871 = vpack.c.bf16 %v2903, %v2887
    %v4872 = vpack.c.bf16 %v2904, %v2888
    %v4873 = vpack.c.bf16 %v2905, %v2889
    %v4874 = vpack.c.bf16 %v2922, %v2906
    %v4875 = vpack.c.bf16 %v2923, %v2907
    %v4876 = vpack.c.bf16 %v2924, %v2908
    %v4877 = vpack.c.bf16 %v2925, %v2909
    %v4878 = vpack.c.bf16 %v2926, %v2910
    %v4879 = vpack.c.bf16 %v2927, %v2911
    %v4880 = vpack.c.bf16 %v2928, %v2912
    %v4881 = vpack.c.bf16 %v2929, %v2913
    %v4882 = vpack.c.bf16 %v2930, %v2914
    %v4883 = vpack.c.bf16 %v2931, %v2915
    %v4884 = vpack.c.bf16 %v2932, %v2916
    %v4885 = vpack.c.bf16 %v2933, %v2917
    %v4886 = vpack.c.bf16 %v2934, %v2918
    %v4887 = vpack.c.bf16 %v2935, %v2919
    %v4888 = vpack.c.bf16 %v2936, %v2920
    %v4889 = vpack.c.bf16 %v2937, %v2921
    %v4890 = vpack.c.bf16 %v2954, %v2938
    %v4891 = vpack.c.bf16 %v2955, %v2939
    %v4892 = vpack.c.bf16 %v2956, %v2940
    %v4893 = vpack.c.bf16 %v2957, %v2941
    %v4894 = vpack.c.bf16 %v2958, %v2942
    %v4895 = vpack.c.bf16 %v2959, %v2943
    %v4896 = vpack.c.bf16 %v2960, %v2944
    %v4897 = vpack.c.bf16 %v2961, %v2945
    %v4898 = vpack.c.bf16 %v2962, %v2946
    %v4899 = vpack.c.bf16 %v2963, %v2947
    %v4900 = vpack.c.bf16 %v2964, %v2948
    %v4901 = vpack.c.bf16 %v2965, %v2949
    %v4902 = vpack.c.bf16 %v2966, %v2950
    %v4903 = vpack.c.bf16 %v2967, %v2951
    %v4904 = vpack.c.bf16 %v2968, %v2952
    %v4905 = vpack.c.bf16 %v2969, %v2953
    %v4906 = vpack.c.bf16 %v2986, %v2970
    %v4907 = vpack.c.bf16 %v2987, %v2971
    %v4908 = vpack.c.bf16 %v2988, %v2972
    %v4909 = vpack.c.bf16 %v2989, %v2973
    %v4910 = vpack.c.bf16 %v2990, %v2974
    %v4911 = vpack.c.bf16 %v2991, %v2975
    %v4912 = vpack.c.bf16 %v2992, %v2976
    %v4913 = vpack.c.bf16 %v2993, %v2977
    %v4914 = vpack.c.bf16 %v2994, %v2978
    %v4915 = vpack.c.bf16 %v2995, %v2979
    %v4916 = vpack.c.bf16 %v2996, %v2980
    %v4917 = vpack.c.bf16 %v2997, %v2981
    %v4918 = vpack.c.bf16 %v2998, %v2982
    %v4919 = vpack.c.bf16 %v2999, %v2983
    %v4920 = vpack.c.bf16 %v3000, %v2984
    %v4921 = vpack.c.bf16 %v3001, %v2985
    %v4922 = vpack.c.bf16 %v3018, %v3002
    %v4923 = vpack.c.bf16 %v3019, %v3003
    %v4924 = vpack.c.bf16 %v3020, %v3004
    %v4925 = vpack.c.bf16 %v3021, %v3005
    %v4926 = vpack.c.bf16 %v3022, %v3006
    %v4927 = vpack.c.bf16 %v3023, %v3007
    %v4928 = vpack.c.bf16 %v3024, %v3008
    %v4929 = vpack.c.bf16 %v3025, %v3009
    %v4930 = vpack.c.bf16 %v3026, %v3010
    %v4931 = vpack.c.bf16 %v3027, %v3011
    %v4932 = vpack.c.bf16 %v3028, %v3012
    %v4933 = vpack.c.bf16 %v3029, %v3013
    %v4934 = vpack.c.bf16 %v3030, %v3014
    %v4935 = vpack.c.bf16 %v3031, %v3015
    %v4936 = vpack.c.bf16 %v3032, %v3016
    %v4937 = vpack.c.bf16 %v3033, %v3017
    %v4938 = vpack.c.bf16 %v3050, %v3034
    %v4939 = vpack.c.bf16 %v3051, %v3035
    %v4940 = vpack.c.bf16 %v3052, %v3036
    %v4941 = vpack.c.bf16 %v3053, %v3037
    %v4942 = vpack.c.bf16 %v3054, %v3038
    %v4943 = vpack.c.bf16 %v3055, %v3039
    %v4944 = vpack.c.bf16 %v3056, %v3040
    %v4945 = vpack.c.bf16 %v3057, %v3041
    %v4946 = vpack.c.bf16 %v3058, %v3042
    %v4947 = vpack.c.bf16 %v3059, %v3043
    %v4948 = vpack.c.bf16 %v3060, %v3044
    %v4949 = vpack.c.bf16 %v3061, %v3045
    %v4950 = vpack.c.bf16 %v3062, %v3046
    %v4951 = vpack.c.bf16 %v3063, %v3047
    %v4952 = vpack.c.bf16 %v3064, %v3048
    %v4953 = vpack.c.bf16 %v3065, %v3049
    %v4954 = vpack.c.bf16 %v3082, %v3066
    %v4955 = vpack.c.bf16 %v3083, %v3067
    %v4956 = vpack.c.bf16 %v3084, %v3068
    %v4957 = vpack.c.bf16 %v3085, %v3069
    %v4958 = vpack.c.bf16 %v3086, %v3070
    %v4959 = vpack.c.bf16 %v3087, %v3071
    %v4960 = vpack.c.bf16 %v3088, %v3072
    %v4961 = vpack.c.bf16 %v3089, %v3073
    %v4962 = vpack.c.bf16 %v3090, %v3074
    %v4963 = vpack.c.bf16 %v3091, %v3075
    %v4964 = vpack.c.bf16 %v3092, %v3076
    %v4965 = vpack.c.bf16 %v3093, %v3077
    %v4966 = vpack.c.bf16 %v3094, %v3078
    %v4967 = vpack.c.bf16 %v3095, %v3079
    %v4968 = vpack.c.bf16 %v3096, %v3080
    %v4969 = vpack.c.bf16 %v3097, %v3081
    %v4970 = vpack.c.bf16 %v3114, %v3098
    %v4971 = vpack.c.bf16 %v3115, %v3099
    %v4972 = vpack.c.bf16 %v3116, %v3100
    %v4973 = vpack.c.bf16 %v3117, %v3101
    %v4974 = vpack.c.bf16 %v3118, %v3102
    %v4975 = vpack.c.bf16 %v3119, %v3103
    %v4976 = vpack.c.bf16 %v3120, %v3104
    %v4977 = vpack.c.bf16 %v3121, %v3105
    %v4978 = vpack.c.bf16 %v3122, %v3106
    %v4979 = vpack.c.bf16 %v3123, %v3107
    %v4980 = vpack.c.bf16 %v3124, %v3108
    %v4981 = vpack.c.bf16 %v3125, %v3109
    %v4982 = vpack.c.bf16 %v3126, %v3110
    %v4983 = vpack.c.bf16 %v3127, %v3111
    %v4984 = vpack.c.bf16 %v3128, %v3112
    %v4985 = vpack.c.bf16 %v3129, %v3113
    %v4986 = vpack.c.bf16 %v3146, %v3130
    %v4987 = vpack.c.bf16 %v3147, %v3131
    %v4988 = vpack.c.bf16 %v3148, %v3132
    %v4989 = vpack.c.bf16 %v3149, %v3133
    %v4990 = vpack.c.bf16 %v3150, %v3134
    %v4991 = vpack.c.bf16 %v3151, %v3135
    %v4992 = vpack.c.bf16 %v3152, %v3136
    %v4993 = vpack.c.bf16 %v3153, %v3137
    %v4994 = vpack.c.bf16 %v3154, %v3138
    %v4995 = vpack.c.bf16 %v3155, %v3139
    %v4996 = vpack.c.bf16 %v3156, %v3140
    %v4997 = vpack.c.bf16 %v3157, %v3141
    %v4998 = vpack.c.bf16 %v3158, %v3142
    %v4999 = vpack.c.bf16 %v3159, %v3143
    %v5000 = vpack.c.bf16 %v3160, %v3144
    %v5001 = vpack.c.bf16 %v3161, %v3145
    %v5002 = vpack.c.bf16 %v3178, %v3162
    %v5003 = vpack.c.bf16 %v3179, %v3163
    %v5004 = vpack.c.bf16 %v3180, %v3164
    %v5005 = vpack.c.bf16 %v3181, %v3165
    %v5006 = vpack.c.bf16 %v3182, %v3166
    %v5007 = vpack.c.bf16 %v3183, %v3167
    %v5008 = vpack.c.bf16 %v3184, %v3168
    %v5009 = vpack.c.bf16 %v3185, %v3169
    %v5010 = vpack.c.bf16 %v3186, %v3170
    %v5011 = vpack.c.bf16 %v3187, %v3171
    %v5012 = vpack.c.bf16 %v3188, %v3172
    %v5013 = vpack.c.bf16 %v3189, %v3173
    %v5014 = vpack.c.bf16 %v3190, %v3174
    %v5015 = vpack.c.bf16 %v3191, %v3175
    %v5016 = vpack.c.bf16 %v3192, %v3176
    %v5017 = vpack.c.bf16 %v3193, %v3177
    %v5018 = vpack.c.bf16 %v3210, %v3194
    %v5019 = vpack.c.bf16 %v3211, %v3195
    %v5020 = vpack.c.bf16 %v3212, %v3196
    %v5021 = vpack.c.bf16 %v3213, %v3197
    %v5022 = vpack.c.bf16 %v3214, %v3198
    %v5023 = vpack.c.bf16 %v3215, %v3199
    %v5024 = vpack.c.bf16 %v3216, %v3200
    %v5025 = vpack.c.bf16 %v3217, %v3201
    %v5026 = vpack.c.bf16 %v3218, %v3202
    %v5027 = vpack.c.bf16 %v3219, %v3203
    %v5028 = vpack.c.bf16 %v3220, %v3204
    %v5029 = vpack.c.bf16 %v3221, %v3205
    %v5030 = vpack.c.bf16 %v3222, %v3206
    %v5031 = vpack.c.bf16 %v3223, %v3207
    %v5032 = vpack.c.bf16 %v3224, %v3208
    %v5033 = vpack.c.bf16 %v3225, %v3209
    %v5034 = vpack.c.bf16 %v3242, %v3226
    %v5035 = vpack.c.bf16 %v3243, %v3227
    %v5036 = vpack.c.bf16 %v3244, %v3228
    %v5037 = vpack.c.bf16 %v3245, %v3229
    %v5038 = vpack.c.bf16 %v3246, %v3230
    %v5039 = vpack.c.bf16 %v3247, %v3231
    %v5040 = vpack.c.bf16 %v3248, %v3232
    %v5041 = vpack.c.bf16 %v3249, %v3233
    %v5042 = vpack.c.bf16 %v3250, %v3234
    %v5043 = vpack.c.bf16 %v3251, %v3235
    %v5044 = vpack.c.bf16 %v3252, %v3236
    %v5045 = vpack.c.bf16 %v3253, %v3237
    %v5046 = vpack.c.bf16 %v3254, %v3238
    %v5047 = vpack.c.bf16 %v3255, %v3239
    %v5048 = vpack.c.bf16 %v3256, %v3240
    %v5049 = vpack.c.bf16 %v3257, %v3241
    %v5050 = vpack.c.bf16 %v3274, %v3258
    %v5051 = vpack.c.bf16 %v3275, %v3259
    %v5052 = vpack.c.bf16 %v3276, %v3260
    %v5053 = vpack.c.bf16 %v3277, %v3261
    %v5054 = vpack.c.bf16 %v3278, %v3262
    %v5055 = vpack.c.bf16 %v3279, %v3263
    %v5056 = vpack.c.bf16 %v3280, %v3264
    %v5057 = vpack.c.bf16 %v3281, %v3265
    %v5058 = vpack.c.bf16 %v3282, %v3266
    %v5059 = vpack.c.bf16 %v3283, %v3267
    %v5060 = vpack.c.bf16 %v3284, %v3268
    %v5061 = vpack.c.bf16 %v3285, %v3269
    %v5062 = vpack.c.bf16 %v3286, %v3270
    %v5063 = vpack.c.bf16 %v3287, %v3271
    %v5064 = vpack.c.bf16 %v3288, %v3272
    %v5065 = vpack.c.bf16 %v3289, %v3273
    %v5066 = vpack.c.bf16 %v3306, %v3290
    %v5067 = vpack.c.bf16 %v3307, %v3291
    %v5068 = vpack.c.bf16 %v3308, %v3292
    %v5069 = vpack.c.bf16 %v3309, %v3293
    %v5070 = vpack.c.bf16 %v3310, %v3294
    %v5071 = vpack.c.bf16 %v3311, %v3295
    %v5072 = vpack.c.bf16 %v3312, %v3296
    %v5073 = vpack.c.bf16 %v3313, %v3297
    %v5074 = vpack.c.bf16 %v3314, %v3298
    %v5075 = vpack.c.bf16 %v3315, %v3299
    %v5076 = vpack.c.bf16 %v3316, %v3300
    %v5077 = vpack.c.bf16 %v3317, %v3301
    %v5078 = vpack.c.bf16 %v3318, %v3302
    %v5079 = vpack.c.bf16 %v3319, %v3303
    %v5080 = vpack.c.bf16 %v3320, %v3304
    %v5081 = vpack.c.bf16 %v3321, %v3305
    %v5082 = vpack.c.bf16 %v3338, %v3322
    %v5083 = vpack.c.bf16 %v3339, %v3323
    %v5084 = vpack.c.bf16 %v3340, %v3324
    %v5085 = vpack.c.bf16 %v3341, %v3325
    %v5086 = vpack.c.bf16 %v3342, %v3326
    %v5087 = vpack.c.bf16 %v3343, %v3327
    %v5088 = vpack.c.bf16 %v3344, %v3328
    %v5089 = vpack.c.bf16 %v3345, %v3329
    %v5090 = vpack.c.bf16 %v3346, %v3330
    %v5091 = vpack.c.bf16 %v3347, %v3331
    %v5092 = vpack.c.bf16 %v3348, %v3332
    %v5093 = vpack.c.bf16 %v3349, %v3333
    %v5094 = vpack.c.bf16 %v3350, %v3334
    %v5095 = vpack.c.bf16 %v3351, %v3335
    %v5096 = vpack.c.bf16 %v3352, %v3336
    %v5097 = vpack.c.bf16 %v3353, %v3337
    %v5098 = vpack.c.bf16 %v3370, %v3354
    %v5099 = vpack.c.bf16 %v3371, %v3355
    %v5100 = vpack.c.bf16 %v3372, %v3356
    %v5101 = vpack.c.bf16 %v3373, %v3357
    %v5102 = vpack.c.bf16 %v3374, %v3358
    %v5103 = vpack.c.bf16 %v3375, %v3359
    %v5104 = vpack.c.bf16 %v3376, %v3360
    %v5105 = vpack.c.bf16 %v3377, %v3361
    %v5106 = vpack.c.bf16 %v3378, %v3362
    %v5107 = vpack.c.bf16 %v3379, %v3363
    %v5108 = vpack.c.bf16 %v3380, %v3364
    %v5109 = vpack.c.bf16 %v3381, %v3365
    %v5110 = vpack.c.bf16 %v3382, %v3366
    %v5111 = vpack.c.bf16 %v3383, %v3367
    %v5112 = vpack.c.bf16 %v3384, %v3368
    %v5113 = vpack.c.bf16 %v3385, %v3369
    %v5114 = vpack.c.bf16 %v3402, %v3386
    %v5115 = vpack.c.bf16 %v3403, %v3387
    %v5116 = vpack.c.bf16 %v3404, %v3388
    %v5117 = vpack.c.bf16 %v3405, %v3389
    %v5118 = vpack.c.bf16 %v3406, %v3390
    %v5119 = vpack.c.bf16 %v3407, %v3391
    %v5120 = vpack.c.bf16 %v3408, %v3392
    %v5121 = vpack.c.bf16 %v3409, %v3393
    %v5122 = vpack.c.bf16 %v3410, %v3394
    %v5123 = vpack.c.bf16 %v3411, %v3395
    %v5124 = vpack.c.bf16 %v3412, %v3396
    %v5125 = vpack.c.bf16 %v3413, %v3397
    %v5126 = vpack.c.bf16 %v3414, %v3398
    %v5127 = vpack.c.bf16 %v3415, %v3399
    %v5128 = vpack.c.bf16 %v3416, %v3400
    %v5129 = vpack.c.bf16 %v3417, %v3401
    %v5130 = vpack.c.bf16 %v3434, %v3418
    %v5131 = vpack.c.bf16 %v3435, %v3419
    %v5132 = vpack.c.bf16 %v3436, %v3420
    %v5133 = vpack.c.bf16 %v3437, %v3421
    %v5134 = vpack.c.bf16 %v3438, %v3422
    %v5135 = vpack.c.bf16 %v3439, %v3423
    %v5136 = vpack.c.bf16 %v3440, %v3424
    %v5137 = vpack.c.bf16 %v3441, %v3425
    %v5138 = vpack.c.bf16 %v3442, %v3426
    %v5139 = vpack.c.bf16 %v3443, %v3427
    %v5140 = vpack.c.bf16 %v3444, %v3428
    %v5141 = vpack.c.bf16 %v3445, %v3429
    %v5142 = vpack.c.bf16 %v3446, %v3430
    %v5143 = vpack.c.bf16 %v3447, %v3431
    %v5144 = vpack.c.bf16 %v3448, %v3432
    %v5145 = vpack.c.bf16 %v3449, %v3433
    %v5146 = vpack.c.bf16 %v3466, %v3450
    %v5147 = vpack.c.bf16 %v3467, %v3451
    %v5148 = vpack.c.bf16 %v3468, %v3452
    %v5149 = vpack.c.bf16 %v3469, %v3453
    %v5150 = vpack.c.bf16 %v3470, %v3454
    %v5151 = vpack.c.bf16 %v3471, %v3455
    %v5152 = vpack.c.bf16 %v3472, %v3456
    %v5153 = vpack.c.bf16 %v3473, %v3457
    %v5154 = vpack.c.bf16 %v3474, %v3458
    %v5155 = vpack.c.bf16 %v3475, %v3459
    %v5156 = vpack.c.bf16 %v3476, %v3460
    %v5157 = vpack.c.bf16 %v3477, %v3461
    %v5158 = vpack.c.bf16 %v3478, %v3462
    %v5159 = vpack.c.bf16 %v3479, %v3463
    %v5160 = vpack.c.bf16 %v3480, %v3464
    %v5161 = vpack.c.bf16 %v3481, %v3465
    %v5162 = vpack.c.bf16 %v3498, %v3482
    %v5163 = vpack.c.bf16 %v3499, %v3483
    %v5164 = vpack.c.bf16 %v3500, %v3484
    %v5165 = vpack.c.bf16 %v3501, %v3485
    %v5166 = vpack.c.bf16 %v3502, %v3486
    %v5167 = vpack.c.bf16 %v3503, %v3487
    %v5168 = vpack.c.bf16 %v3504, %v3488
    %v5169 = vpack.c.bf16 %v3505, %v3489
    %v5170 = vpack.c.bf16 %v3506, %v3490
    %v5171 = vpack.c.bf16 %v3507, %v3491
    %v5172 = vpack.c.bf16 %v3508, %v3492
    %v5173 = vpack.c.bf16 %v3509, %v3493
    %v5174 = vpack.c.bf16 %v3510, %v3494
    %v5175 = vpack.c.bf16 %v3511, %v3495
    %v5176 = vpack.c.bf16 %v3512, %v3496
    %v5177 = vpack.c.bf16 %v3513, %v3497
    %v5178 = vpack.c.bf16 %v3530, %v3514
    %v5179 = vpack.c.bf16 %v3531, %v3515
    %v5180 = vpack.c.bf16 %v3532, %v3516
    %v5181 = vpack.c.bf16 %v3533, %v3517
    %v5182 = vpack.c.bf16 %v3534, %v3518
    %v5183 = vpack.c.bf16 %v3535, %v3519
    %v5184 = vpack.c.bf16 %v3536, %v3520
    %v5185 = vpack.c.bf16 %v3537, %v3521
    %v5186 = vpack.c.bf16 %v3538, %v3522
    %v5187 = vpack.c.bf16 %v3539, %v3523
    %v5188 = vpack.c.bf16 %v3540, %v3524
    %v5189 = vpack.c.bf16 %v3541, %v3525
    %v5190 = vpack.c.bf16 %v3542, %v3526
    %v5191 = vpack.c.bf16 %v3543, %v3527
    %v5192 = vpack.c.bf16 %v3544, %v3528
    %v5193 = vpack.c.bf16 %v3545, %v3529
    %v5194 = vpack.c.bf16 %v3562, %v3546
    %v5195 = vpack.c.bf16 %v3563, %v3547
    %v5196 = vpack.c.bf16 %v3564, %v3548
    %v5197 = vpack.c.bf16 %v3565, %v3549
    %v5198 = vpack.c.bf16 %v3566, %v3550
    %v5199 = vpack.c.bf16 %v3567, %v3551
    %v5200 = vpack.c.bf16 %v3568, %v3552
    %v5201 = vpack.c.bf16 %v3569, %v3553
    %v5202 = vpack.c.bf16 %v3570, %v3554
    %v5203 = vpack.c.bf16 %v3571, %v3555
    %v5204 = vpack.c.bf16 %v3572, %v3556
    %v5205 = vpack.c.bf16 %v3573, %v3557
    %v5206 = vpack.c.bf16 %v3574, %v3558
    %v5207 = vpack.c.bf16 %v3575, %v3559
    %v5208 = vpack.c.bf16 %v3576, %v3560
    %v5209 = vpack.c.bf16 %v3577, %v3561
    %v5210 = vpack.c.bf16 %v3594, %v3578
    %v5211 = vpack.c.bf16 %v3595, %v3579
    %v5212 = vpack.c.bf16 %v3596, %v3580
    %v5213 = vpack.c.bf16 %v3597, %v3581
    %v5214 = vpack.c.bf16 %v3598, %v3582
    %v5215 = vpack.c.bf16 %v3599, %v3583
    %v5216 = vpack.c.bf16 %v3600, %v3584
    %v5217 = vpack.c.bf16 %v3601, %v3585
    %v5218 = vpack.c.bf16 %v3602, %v3586
    %v5219 = vpack.c.bf16 %v3603, %v3587
    %v5220 = vpack.c.bf16 %v3604, %v3588
    %v5221 = vpack.c.bf16 %v3605, %v3589
    %v5222 = vpack.c.bf16 %v3606, %v3590
    %v5223 = vpack.c.bf16 %v3607, %v3591
    %v5224 = vpack.c.bf16 %v3608, %v3592
    %v5225 = vpack.c.bf16 %v3609, %v3593
    %v5226 = vpack.c.bf16 %v3626, %v3610
    %v5227 = vpack.c.bf16 %v3627, %v3611
    %v5228 = vpack.c.bf16 %v3628, %v3612
    %v5229 = vpack.c.bf16 %v3629, %v3613
    %v5230 = vpack.c.bf16 %v3630, %v3614
    %v5231 = vpack.c.bf16 %v3631, %v3615
    %v5232 = vpack.c.bf16 %v3632, %v3616
    %v5233 = vpack.c.bf16 %v3633, %v3617
    %v5234 = vpack.c.bf16 %v3634, %v3618
    %v5235 = vpack.c.bf16 %v3635, %v3619
    %v5236 = vpack.c.bf16 %v3636, %v3620
    %v5237 = vpack.c.bf16 %v3637, %v3621
    %v5238 = vpack.c.bf16 %v3638, %v3622
    %v5239 = vpack.c.bf16 %v3639, %v3623
    %v5240 = vpack.c.bf16 %v3640, %v3624
    %v5241 = vpack.c.bf16 %v3641, %v3625
    %v5242 = vpack.c.bf16 %v3658, %v3642
    %v5243 = vpack.c.bf16 %v3659, %v3643
    %v5244 = vpack.c.bf16 %v3660, %v3644
    %v5245 = vpack.c.bf16 %v3661, %v3645
    %v5246 = vpack.c.bf16 %v3662, %v3646
    %v5247 = vpack.c.bf16 %v3663, %v3647
    %v5248 = vpack.c.bf16 %v3664, %v3648
    %v5249 = vpack.c.bf16 %v3665, %v3649
    %v5250 = vpack.c.bf16 %v3666, %v3650
    %v5251 = vpack.c.bf16 %v3667, %v3651
    %v5252 = vpack.c.bf16 %v3668, %v3652
    %v5253 = vpack.c.bf16 %v3669, %v3653
    %v5254 = vpack.c.bf16 %v3670, %v3654
    %v5255 = vpack.c.bf16 %v3671, %v3655
    %v5256 = vpack.c.bf16 %v3672, %v3656
    %v5257 = vpack.c.bf16 %v3673, %v3657
    %v5258 = vpack.c.bf16 %v3690, %v3674
    %v5259 = vpack.c.bf16 %v3691, %v3675
    %v5260 = vpack.c.bf16 %v3692, %v3676
    %v5261 = vpack.c.bf16 %v3693, %v3677
    %v5262 = vpack.c.bf16 %v3694, %v3678
    %v5263 = vpack.c.bf16 %v3695, %v3679
    %v5264 = vpack.c.bf16 %v3696, %v3680
    %v5265 = vpack.c.bf16 %v3697, %v3681
    %v5266 = vpack.c.bf16 %v3698, %v3682
    %v5267 = vpack.c.bf16 %v3699, %v3683
    %v5268 = vpack.c.bf16 %v3700, %v3684
    %v5269 = vpack.c.bf16 %v3701, %v3685
    %v5270 = vpack.c.bf16 %v3702, %v3686
    %v5271 = vpack.c.bf16 %v3703, %v3687
    %v5272 = vpack.c.bf16 %v3704, %v3688
    %v5273 = vpack.c.bf16 %v3705, %v3689
    %v5274 = vpack.c.bf16 %v3722, %v3706
    %v5275 = vpack.c.bf16 %v3723, %v3707
    %v5276 = vpack.c.bf16 %v3724, %v3708
    %v5277 = vpack.c.bf16 %v3725, %v3709
    %v5278 = vpack.c.bf16 %v3726, %v3710
    %v5279 = vpack.c.bf16 %v3727, %v3711
    %v5280 = vpack.c.bf16 %v3728, %v3712
    %v5281 = vpack.c.bf16 %v3729, %v3713
    %v5282 = vpack.c.bf16 %v3730, %v3714
    %v5283 = vpack.c.bf16 %v3731, %v3715
    %v5284 = vpack.c.bf16 %v3732, %v3716
    %v5285 = vpack.c.bf16 %v3733, %v3717
    %v5286 = vpack.c.bf16 %v3734, %v3718
    %v5287 = vpack.c.bf16 %v3735, %v3719
    %v5288 = vpack.c.bf16 %v3736, %v3720
    %v5289 = vpack.c.bf16 %v3737, %v3721
    %v5290 = vpack.c.bf16 %v3754, %v3738
    %v5291 = vpack.c.bf16 %v3755, %v3739
    %v5292 = vpack.c.bf16 %v3756, %v3740
    %v5293 = vpack.c.bf16 %v3757, %v3741
    %v5294 = vpack.c.bf16 %v3758, %v3742
    %v5295 = vpack.c.bf16 %v3759, %v3743
    %v5296 = vpack.c.bf16 %v3760, %v3744
    %v5297 = vpack.c.bf16 %v3761, %v3745
    %v5298 = vpack.c.bf16 %v3762, %v3746
    %v5299 = vpack.c.bf16 %v3763, %v3747
    %v5300 = vpack.c.bf16 %v3764, %v3748
    %v5301 = vpack.c.bf16 %v3765, %v3749
    %v5302 = vpack.c.bf16 %v3766, %v3750
    %v5303 = vpack.c.bf16 %v3767, %v3751
    %v5304 = vpack.c.bf16 %v3768, %v3752
    %v5305 = vpack.c.bf16 %v3769, %v3753
    %v5306 = vpack.c.bf16 %v3786, %v3770
    %v5307 = vpack.c.bf16 %v3787, %v3771
    %v5308 = vpack.c.bf16 %v3788, %v3772
    %v5309 = vpack.c.bf16 %v3789, %v3773
    %v5310 = vpack.c.bf16 %v3790, %v3774
    %v5311 = vpack.c.bf16 %v3791, %v3775
    %v5312 = vpack.c.bf16 %v3792, %v3776
    %v5313 = vpack.c.bf16 %v3793, %v3777
    %v5314 = vpack.c.bf16 %v3794, %v3778
    %v5315 = vpack.c.bf16 %v3795, %v3779
    %v5316 = vpack.c.bf16 %v3796, %v3780
    %v5317 = vpack.c.bf16 %v3797, %v3781
    %v5318 = vpack.c.bf16 %v3798, %v3782
    %v5319 = vpack.c.bf16 %v3799, %v3783
    %v5320 = vpack.c.bf16 %v3800, %v3784
    %v5321 = vpack.c.bf16 %v3801, %v3785
    %v5322 = vpack.c.bf16 %v3818, %v3802
    %v5323 = vpack.c.bf16 %v3819, %v3803
    %v5324 = vpack.c.bf16 %v3820, %v3804
    %v5325 = vpack.c.bf16 %v3821, %v3805
    %v5326 = vpack.c.bf16 %v3822, %v3806
    %v5327 = vpack.c.bf16 %v3823, %v3807
    %v5328 = vpack.c.bf16 %v3824, %v3808
    %v5329 = vpack.c.bf16 %v3825, %v3809
    %v5330 = vpack.c.bf16 %v3826, %v3810
    %v5331 = vpack.c.bf16 %v3827, %v3811
    %v5332 = vpack.c.bf16 %v3828, %v3812
    %v5333 = vpack.c.bf16 %v3829, %v3813
    %v5334 = vpack.c.bf16 %v3830, %v3814
    %v5335 = vpack.c.bf16 %v3831, %v3815
    %v5336 = vpack.c.bf16 %v3832, %v3816
    %v5337 = vpack.c.bf16 %v3833, %v3817
    %v5338 = vpack.c.bf16 %v3850, %v3834
    %v5339 = vpack.c.bf16 %v3851, %v3835
    %v5340 = vpack.c.bf16 %v3852, %v3836
    %v5341 = vpack.c.bf16 %v3853, %v3837
    %v5342 = vpack.c.bf16 %v3854, %v3838
    %v5343 = vpack.c.bf16 %v3855, %v3839
    %v5344 = vpack.c.bf16 %v3856, %v3840
    %v5345 = vpack.c.bf16 %v3857, %v3841
    %v5346 = vpack.c.bf16 %v3858, %v3842
    %v5347 = vpack.c.bf16 %v3859, %v3843
    %v5348 = vpack.c.bf16 %v3860, %v3844
    %v5349 = vpack.c.bf16 %v3861, %v3845
    %v5350 = vpack.c.bf16 %v3862, %v3846
    %v5351 = vpack.c.bf16 %v3863, %v3847
    %v5352 = vpack.c.bf16 %v3864, %v3848
    %v5353 = vpack.c.bf16 %v3865, %v3849
    %v5354 = vpack.c.bf16 %v3882, %v3866
    %v5355 = vpack.c.bf16 %v3883, %v3867
    %v5356 = vpack.c.bf16 %v3884, %v3868
    %v5357 = vpack.c.bf16 %v3885, %v3869
    %v5358 = vpack.c.bf16 %v3886, %v3870
    %v5359 = vpack.c.bf16 %v3887, %v3871
    %v5360 = vpack.c.bf16 %v3888, %v3872
    %v5361 = vpack.c.bf16 %v3889, %v3873
    %v5362 = vpack.c.bf16 %v3890, %v3874
    %v5363 = vpack.c.bf16 %v3891, %v3875
    %v5364 = vpack.c.bf16 %v3892, %v3876
    %v5365 = vpack.c.bf16 %v3893, %v3877
    %v5366 = vpack.c.bf16 %v3894, %v3878
    %v5367 = vpack.c.bf16 %v3895, %v3879
    %v5368 = vpack.c.bf16 %v3896, %v3880
    %v5369 = vpack.c.bf16 %v3897, %v3881
    %v5370 = vpack.c.bf16 %v3914, %v3898
    %v5371 = vpack.c.bf16 %v3915, %v3899
    %v5372 = vpack.c.bf16 %v3916, %v3900
    %v5373 = vpack.c.bf16 %v3917, %v3901
    %v5374 = vpack.c.bf16 %v3918, %v3902
    %v5375 = vpack.c.bf16 %v3919, %v3903
    %v5376 = vpack.c.bf16 %v3920, %v3904
    %v5377 = vpack.c.bf16 %v3921, %v3905
    %v5378 = vpack.c.bf16 %v3922, %v3906
    %v5379 = vpack.c.bf16 %v3923, %v3907
    %v5380 = vpack.c.bf16 %v3924, %v3908
    %v5381 = vpack.c.bf16 %v3925, %v3909
    %v5382 = vpack.c.bf16 %v3926, %v3910
    %v5383 = vpack.c.bf16 %v3927, %v3911
    %v5384 = vpack.c.bf16 %v3928, %v3912
    %v5385 = vpack.c.bf16 %v3929, %v3913
    %v5386 = vpack.c.bf16 %v3946, %v3930
    %v5387 = vpack.c.bf16 %v3947, %v3931
    %v5388 = vpack.c.bf16 %v3948, %v3932
    %v5389 = vpack.c.bf16 %v3949, %v3933
    %v5390 = vpack.c.bf16 %v3950, %v3934
    %v5391 = vpack.c.bf16 %v3951, %v3935
    %v5392 = vpack.c.bf16 %v3952, %v3936
    %v5393 = vpack.c.bf16 %v3953, %v3937
    %v5394 = vpack.c.bf16 %v3954, %v3938
    %v5395 = vpack.c.bf16 %v3955, %v3939
    %v5396 = vpack.c.bf16 %v3956, %v3940
    %v5397 = vpack.c.bf16 %v3957, %v3941
    %v5398 = vpack.c.bf16 %v3958, %v3942
    %v5399 = vpack.c.bf16 %v3959, %v3943
    %v5400 = vpack.c.bf16 %v3960, %v3944
    %v5401 = vpack.c.bf16 %v3961, %v3945
    %v5402 = vpack.c.bf16 %v3978, %v3962
    %v5403 = vpack.c.bf16 %v3979, %v3963
    %v5404 = vpack.c.bf16 %v3980, %v3964
    %v5405 = vpack.c.bf16 %v3981, %v3965
    %v5406 = vpack.c.bf16 %v3982, %v3966
    %v5407 = vpack.c.bf16 %v3983, %v3967
    %v5408 = vpack.c.bf16 %v3984, %v3968
    %v5409 = vpack.c.bf16 %v3985, %v3969
    %v5410 = vpack.c.bf16 %v3986, %v3970
    %v5411 = vpack.c.bf16 %v3987, %v3971
    %v5412 = vpack.c.bf16 %v3988, %v3972
    %v5413 = vpack.c.bf16 %v3989, %v3973
    %v5414 = vpack.c.bf16 %v3990, %v3974
    %v5415 = vpack.c.bf16 %v3991, %v3975
    %v5416 = vpack.c.bf16 %v3992, %v3976
    %v5417 = vpack.c.bf16 %v3993, %v3977
    %v5418 = vpack.c.bf16 %v4010, %v3994
    %v5419 = vpack.c.bf16 %v4011, %v3995
    %v5420 = vpack.c.bf16 %v4012, %v3996
    %v5421 = vpack.c.bf16 %v4013, %v3997
    %v5422 = vpack.c.bf16 %v4014, %v3998
    %v5423 = vpack.c.bf16 %v4015, %v3999
    %v5424 = vpack.c.bf16 %v4016, %v4000
    %v5425 = vpack.c.bf16 %v4017, %v4001
    %v5426 = vpack.c.bf16 %v4018, %v4002
    %v5427 = vpack.c.bf16 %v4019, %v4003
    %v5428 = vpack.c.bf16 %v4020, %v4004
    %v5429 = vpack.c.bf16 %v4021, %v4005
    %v5430 = vpack.c.bf16 %v4022, %v4006
    %v5431 = vpack.c.bf16 %v4023, %v4007
    %v5432 = vpack.c.bf16 %v4024, %v4008
    %v5433 = vpack.c.bf16 %v4025, %v4009
    %v5434 = vpack.c.bf16 %v4042, %v4026
    %v5435 = vpack.c.bf16 %v4043, %v4027
    %v5436 = vpack.c.bf16 %v4044, %v4028
    %v5437 = vpack.c.bf16 %v4045, %v4029
    %v5438 = vpack.c.bf16 %v4046, %v4030
    %v5439 = vpack.c.bf16 %v4047, %v4031
    %v5440 = vpack.c.bf16 %v4048, %v4032
    %v5441 = vpack.c.bf16 %v4049, %v4033
    %v5442 = vpack.c.bf16 %v4050, %v4034
    %v5443 = vpack.c.bf16 %v4051, %v4035
    %v5444 = vpack.c.bf16 %v4052, %v4036
    %v5445 = vpack.c.bf16 %v4053, %v4037
    %v5446 = vpack.c.bf16 %v4054, %v4038
    %v5447 = vpack.c.bf16 %v4055, %v4039
    %v5448 = vpack.c.bf16 %v4056, %v4040
    %v5449 = vpack.c.bf16 %v4057, %v4041
    %v5450 = vpack.c.bf16 %v4074, %v4058
    %v5451 = vpack.c.bf16 %v4075, %v4059
    %v5452 = vpack.c.bf16 %v4076, %v4060
    %v5453 = vpack.c.bf16 %v4077, %v4061
    %v5454 = vpack.c.bf16 %v4078, %v4062
    %v5455 = vpack.c.bf16 %v4079, %v4063
    %v5456 = vpack.c.bf16 %v4080, %v4064
    %v5457 = vpack.c.bf16 %v4081, %v4065
    %v5458 = vpack.c.bf16 %v4082, %v4066
    %v5459 = vpack.c.bf16 %v4083, %v4067
    %v5460 = vpack.c.bf16 %v4084, %v4068
    %v5461 = vpack.c.bf16 %v4085, %v4069
    %v5462 = vpack.c.bf16 %v4086, %v4070
    %v5463 = vpack.c.bf16 %v4087, %v4071
    %v5464 = vpack.c.bf16 %v4088, %v4072
    %v5465 = vpack.c.bf16 %v4089, %v4073
    %v5466 = vpack.c.bf16 %v4106, %v4090
    %v5467 = vpack.c.bf16 %v4107, %v4091
    %v5468 = vpack.c.bf16 %v4108, %v4092
    %v5469 = vpack.c.bf16 %v4109, %v4093
    %v5470 = vpack.c.bf16 %v4110, %v4094
    %v5471 = vpack.c.bf16 %v4111, %v4095
    %v5472 = vpack.c.bf16 %v4112, %v4096
    %v5473 = vpack.c.bf16 %v4113, %v4097
    %v5474 = vpack.c.bf16 %v4114, %v4098
    %v5475 = vpack.c.bf16 %v4115, %v4099
    %v5476 = vpack.c.bf16 %v4116, %v4100
    %v5477 = vpack.c.bf16 %v4117, %v4101
    %v5478 = vpack.c.bf16 %v4118, %v4102
    %v5479 = vpack.c.bf16 %v4119, %v4103
    %v5480 = vpack.c.bf16 %v4120, %v4104
    %v5481 = vpack.c.bf16 %v4121, %v4105
    %v5482 = vpack.c.bf16 %v4138, %v4122
    %v5483 = vpack.c.bf16 %v4139, %v4123
    %v5484 = vpack.c.bf16 %v4140, %v4124
    %v5485 = vpack.c.bf16 %v4141, %v4125
    %v5486 = vpack.c.bf16 %v4142, %v4126
    %v5487 = vpack.c.bf16 %v4143, %v4127
    %v5488 = vpack.c.bf16 %v4144, %v4128
    %v5489 = vpack.c.bf16 %v4145, %v4129
    %v5490 = vpack.c.bf16 %v4146, %v4130
    %v5491 = vpack.c.bf16 %v4147, %v4131
    %v5492 = vpack.c.bf16 %v4148, %v4132
    %v5493 = vpack.c.bf16 %v4149, %v4133
    %v5494 = vpack.c.bf16 %v4150, %v4134
    %v5495 = vpack.c.bf16 %v4151, %v4135
    %v5496 = vpack.c.bf16 %v4152, %v4136
    %v5497 = vpack.c.bf16 %v4153, %v4137
    %v5498 = vpack.c.bf16 %v4170, %v4154
    %v5499 = vpack.c.bf16 %v4171, %v4155
    %v5500 = vpack.c.bf16 %v4172, %v4156
    %v5501 = vpack.c.bf16 %v4173, %v4157
    %v5502 = vpack.c.bf16 %v4174, %v4158
    %v5503 = vpack.c.bf16 %v4175, %v4159
    %v5504 = vpack.c.bf16 %v4176, %v4160
    %v5505 = vpack.c.bf16 %v4177, %v4161
    %v5506 = vpack.c.bf16 %v4178, %v4162
    %v5507 = vpack.c.bf16 %v4179, %v4163
    %v5508 = vpack.c.bf16 %v4180, %v4164
    %v5509 = vpack.c.bf16 %v4181, %v4165
    %v5510 = vpack.c.bf16 %v4182, %v4166
    %v5511 = vpack.c.bf16 %v4183, %v4167
    %v5512 = vpack.c.bf16 %v4184, %v4168
    %v5513 = vpack.c.bf16 %v4185, %v4169
    %v5514 = vpack.c.bf16 %v4202, %v4186
    %v5515 = vpack.c.bf16 %v4203, %v4187
    %v5516 = vpack.c.bf16 %v4204, %v4188
    %v5517 = vpack.c.bf16 %v4205, %v4189
    %v5518 = vpack.c.bf16 %v4206, %v4190
    %v5519 = vpack.c.bf16 %v4207, %v4191
    %v5520 = vpack.c.bf16 %v4208, %v4192
    %v5521 = vpack.c.bf16 %v4209, %v4193
    %v5522 = vpack.c.bf16 %v4210, %v4194
    %v5523 = vpack.c.bf16 %v4211, %v4195
    %v5524 = vpack.c.bf16 %v4212, %v4196
    %v5525 = vpack.c.bf16 %v4213, %v4197
    %v5526 = vpack.c.bf16 %v4214, %v4198
    %v5527 = vpack.c.bf16 %v4215, %v4199
    %v5528 = vpack.c.bf16 %v4216, %v4200
    %v5529 = vpack.c.bf16 %v4217, %v4201
    %v5530 = vpack.c.bf16 %v4234, %v4218
    %v5531 = vpack.c.bf16 %v4235, %v4219
    %v5532 = vpack.c.bf16 %v4236, %v4220
    %v5533 = vpack.c.bf16 %v4237, %v4221
    %v5534 = vpack.c.bf16 %v4238, %v4222
    %v5535 = vpack.c.bf16 %v4239, %v4223
    %v5536 = vpack.c.bf16 %v4240, %v4224
    %v5537 = vpack.c.bf16 %v4241, %v4225
    %v5538 = vpack.c.bf16 %v4242, %v4226
    %v5539 = vpack.c.bf16 %v4243, %v4227
    %v5540 = vpack.c.bf16 %v4244, %v4228
    %v5541 = vpack.c.bf16 %v4245, %v4229
    %v5542 = vpack.c.bf16 %v4246, %v4230
    %v5543 = vpack.c.bf16 %v4247, %v4231
    %v5544 = vpack.c.bf16 %v4248, %v4232
    %v5545 = vpack.c.bf16 %v4249, %v4233
    %v5546 = vpack.c.bf16 %v4266, %v4250
    %v5547 = vpack.c.bf16 %v4267, %v4251
    %v5548 = vpack.c.bf16 %v4268, %v4252
    %v5549 = vpack.c.bf16 %v4269, %v4253
    %v5550 = vpack.c.bf16 %v4270, %v4254
    %v5551 = vpack.c.bf16 %v4271, %v4255
    %v5552 = vpack.c.bf16 %v4272, %v4256
    %v5553 = vpack.c.bf16 %v4273, %v4257
    %v5554 = vpack.c.bf16 %v4274, %v4258
    %v5555 = vpack.c.bf16 %v4275, %v4259
    %v5556 = vpack.c.bf16 %v4276, %v4260
    %v5557 = vpack.c.bf16 %v4277, %v4261
    %v5558 = vpack.c.bf16 %v4278, %v4262
    %v5559 = vpack.c.bf16 %v4279, %v4263
    %v5560 = vpack.c.bf16 %v4280, %v4264
    %v5561 = vpack.c.bf16 %v4281, %v4265
    %v5562 = vpack.c.bf16 %v4298, %v4282
    %v5563 = vpack.c.bf16 %v4299, %v4283
    %v5564 = vpack.c.bf16 %v4300, %v4284
    %v5565 = vpack.c.bf16 %v4301, %v4285
    %v5566 = vpack.c.bf16 %v4302, %v4286
    %v5567 = vpack.c.bf16 %v4303, %v4287
    %v5568 = vpack.c.bf16 %v4304, %v4288
    %v5569 = vpack.c.bf16 %v4305, %v4289
    %v5570 = vpack.c.bf16 %v4306, %v4290
    %v5571 = vpack.c.bf16 %v4307, %v4291
    %v5572 = vpack.c.bf16 %v4308, %v4292
    %v5573 = vpack.c.bf16 %v4309, %v4293
    %v5574 = vpack.c.bf16 %v4310, %v4294
    %v5575 = vpack.c.bf16 %v4311, %v4295
    %v5576 = vpack.c.bf16 %v4312, %v4296
    %v5577 = vpack.c.bf16 %v4313, %v4297
    %v5578 = vpack.c.bf16 %v4330, %v4314
    %v5579 = vpack.c.bf16 %v4331, %v4315
    %v5580 = vpack.c.bf16 %v4332, %v4316
    %v5581 = vpack.c.bf16 %v4333, %v4317
    %v5582 = vpack.c.bf16 %v4334, %v4318
    %v5583 = vpack.c.bf16 %v4335, %v4319
    %v5584 = vpack.c.bf16 %v4336, %v4320
    %v5585 = vpack.c.bf16 %v4337, %v4321
    %v5586 = vpack.c.bf16 %v4338, %v4322
    %v5587 = vpack.c.bf16 %v4339, %v4323
    %v5588 = vpack.c.bf16 %v4340, %v4324
    %v5589 = vpack.c.bf16 %v4341, %v4325
    %v5590 = vpack.c.bf16 %v4342, %v4326
    %v5591 = vpack.c.bf16 %v4343, %v4327
    %v5592 = vpack.c.bf16 %v4344, %v4328
    %v5593 = vpack.c.bf16 %v4345, %v4329
    %v5594 = vpack.c.bf16 %v4362, %v4346
    %v5595 = vpack.c.bf16 %v4363, %v4347
    %v5596 = vpack.c.bf16 %v4364, %v4348
    %v5597 = vpack.c.bf16 %v4365, %v4349
    %v5598 = vpack.c.bf16 %v4366, %v4350
    %v5599 = vpack.c.bf16 %v4367, %v4351
    %v5600 = vpack.c.bf16 %v4368, %v4352
    %v5601 = vpack.c.bf16 %v4369, %v4353
    %v5602 = vpack.c.bf16 %v4370, %v4354
    %v5603 = vpack.c.bf16 %v4371, %v4355
    %v5604 = vpack.c.bf16 %v4372, %v4356
    %v5605 = vpack.c.bf16 %v4373, %v4357
    %v5606 = vpack.c.bf16 %v4374, %v4358
    %v5607 = vpack.c.bf16 %v4375, %v4359
    %v5608 = vpack.c.bf16 %v4376, %v4360
    %v5609 = vpack.c.bf16 %v4377, %v4361
    %v5610 = vpack.c.bf16 %v4394, %v4378
    %v5611 = vpack.c.bf16 %v4395, %v4379
    %v5612 = vpack.c.bf16 %v4396, %v4380
    %v5613 = vpack.c.bf16 %v4397, %v4381
    %v5614 = vpack.c.bf16 %v4398, %v4382
    %v5615 = vpack.c.bf16 %v4399, %v4383
    %v5616 = vpack.c.bf16 %v4400, %v4384
    %v5617 = vpack.c.bf16 %v4401, %v4385
    %v5618 = vpack.c.bf16 %v4402, %v4386
    %v5619 = vpack.c.bf16 %v4403, %v4387
    %v5620 = vpack.c.bf16 %v4404, %v4388
    %v5621 = vpack.c.bf16 %v4405, %v4389
    %v5622 = vpack.c.bf16 %v4406, %v4390
    %v5623 = vpack.c.bf16 %v4407, %v4391
    %v5624 = vpack.c.bf16 %v4408, %v4392
    %v5625 = vpack.c.bf16 %v4409, %v4393
    %v5626 = vpack.c.bf16 %v4426, %v4410
    %v5627 = vpack.c.bf16 %v4427, %v4411
    %v5628 = vpack.c.bf16 %v4428, %v4412
    %v5629 = vpack.c.bf16 %v4429, %v4413
    %v5630 = vpack.c.bf16 %v4430, %v4414
    %v5631 = vpack.c.bf16 %v4431, %v4415
    %v5632 = vpack.c.bf16 %v4432, %v4416
    %v5633 = vpack.c.bf16 %v4433, %v4417
    %v5634 = vpack.c.bf16 %v4434, %v4418
    %v5635 = vpack.c.bf16 %v4435, %v4419
    %v5636 = vpack.c.bf16 %v4436, %v4420
    %v5637 = vpack.c.bf16 %v4437, %v4421
    %v5638 = vpack.c.bf16 %v4438, %v4422
    %v5639 = vpack.c.bf16 %v4439, %v4423
    %v5640 = vpack.c.bf16 %v4440, %v4424
    %v5641 = vpack.c.bf16 %v4441, %v4425
    %v5642 = vpack.c.bf16 %v4458, %v4442
    %v5643 = vpack.c.bf16 %v4459, %v4443
    %v5644 = vpack.c.bf16 %v4460, %v4444
    %v5645 = vpack.c.bf16 %v4461, %v4445
    %v5646 = vpack.c.bf16 %v4462, %v4446
    %v5647 = vpack.c.bf16 %v4463, %v4447
    %v5648 = vpack.c.bf16 %v4464, %v4448
    %v5649 = vpack.c.bf16 %v4465, %v4449
    %v5650 = vpack.c.bf16 %v4466, %v4450
    %v5651 = vpack.c.bf16 %v4467, %v4451
    %v5652 = vpack.c.bf16 %v4468, %v4452
    %v5653 = vpack.c.bf16 %v4469, %v4453
    %v5654 = vpack.c.bf16 %v4470, %v4454
    %v5655 = vpack.c.bf16 %v4471, %v4455
    %v5656 = vpack.c.bf16 %v4472, %v4456
    %v5657 = vpack.c.bf16 %v4473, %v4457
    %v5658 = vpack.c.bf16 %v4490, %v4474
    %v5659 = vpack.c.bf16 %v4491, %v4475
    %v5660 = vpack.c.bf16 %v4492, %v4476
    %v5661 = vpack.c.bf16 %v4493, %v4477
    %v5662 = vpack.c.bf16 %v4494, %v4478
    %v5663 = vpack.c.bf16 %v4495, %v4479
    %v5664 = vpack.c.bf16 %v4496, %v4480
    %v5665 = vpack.c.bf16 %v4497, %v4481
    %v5666 = vpack.c.bf16 %v4498, %v4482
    %v5667 = vpack.c.bf16 %v4499, %v4483
    %v5668 = vpack.c.bf16 %v4500, %v4484
    %v5669 = vpack.c.bf16 %v4501, %v4485
    %v5670 = vpack.c.bf16 %v4502, %v4486
    %v5671 = vpack.c.bf16 %v4503, %v4487
    %v5672 = vpack.c.bf16 %v4504, %v4488
    %v5673 = vpack.c.bf16 %v4505, %v4489
    %v5674 = vpack.c.bf16 %v4522, %v4506
    %v5675 = vpack.c.bf16 %v4523, %v4507
    %v5676 = vpack.c.bf16 %v4524, %v4508
    %v5677 = vpack.c.bf16 %v4525, %v4509
    %v5678 = vpack.c.bf16 %v4526, %v4510
    %v5679 = vpack.c.bf16 %v4527, %v4511
    %v5680 = vpack.c.bf16 %v4528, %v4512
    %v5681 = vpack.c.bf16 %v4529, %v4513
    %v5682 = vpack.c.bf16 %v4530, %v4514
    %v5683 = vpack.c.bf16 %v4531, %v4515
    %v5684 = vpack.c.bf16 %v4532, %v4516
    %v5685 = vpack.c.bf16 %v4533, %v4517
    %v5686 = vpack.c.bf16 %v4534, %v4518
    %v5687 = vpack.c.bf16 %v4535, %v4519
    %v5688 = vpack.c.bf16 %v4536, %v4520
    %v5689 = vpack.c.bf16 %v4537, %v4521
    %v5690 = vpack.c.bf16 %v4554, %v4538
    %v5691 = vpack.c.bf16 %v4555, %v4539
    %v5692 = vpack.c.bf16 %v4556, %v4540
    %v5693 = vpack.c.bf16 %v4557, %v4541
    %v5694 = vpack.c.bf16 %v4558, %v4542
    %v5695 = vpack.c.bf16 %v4559, %v4543
    %v5696 = vpack.c.bf16 %v4560, %v4544
    %v5697 = vpack.c.bf16 %v4561, %v4545
    %v5698 = vpack.c.bf16 %v4562, %v4546
    %v5699 = vpack.c.bf16 %v4563, %v4547
    %v5700 = vpack.c.bf16 %v4564, %v4548
    %v5701 = vpack.c.bf16 %v4565, %v4549
    %v5702 = vpack.c.bf16 %v4566, %v4550
    %v5703 = vpack.c.bf16 %v4567, %v4551
    %v5704 = vpack.c.bf16 %v4568, %v4552
    %v5705 = vpack.c.bf16 %v4569, %v4553
    %v5706 = vpack.c.bf16 %v4586, %v4570
    %v5707 = vpack.c.bf16 %v4587, %v4571
    %v5708 = vpack.c.bf16 %v4588, %v4572
    %v5709 = vpack.c.bf16 %v4589, %v4573
    %v5710 = vpack.c.bf16 %v4590, %v4574
    %v5711 = vpack.c.bf16 %v4591, %v4575
    %v5712 = vpack.c.bf16 %v4592, %v4576
    %v5713 = vpack.c.bf16 %v4593, %v4577
    %v5714 = vpack.c.bf16 %v4594, %v4578
    %v5715 = vpack.c.bf16 %v4595, %v4579
    %v5716 = vpack.c.bf16 %v4596, %v4580
    %v5717 = vpack.c.bf16 %v4597, %v4581
    %v5718 = vpack.c.bf16 %v4598, %v4582
    %v5719 = vpack.c.bf16 %v4599, %v4583
    %v5720 = vpack.c.bf16 %v4600, %v4584
    %v5721 = vpack.c.bf16 %v4601, %v4585
    %v5722 = vpack.c.bf16 %v4618, %v4602
    %v5723 = vpack.c.bf16 %v4619, %v4603
    %v5724 = vpack.c.bf16 %v4620, %v4604
    %v5725 = vpack.c.bf16 %v4621, %v4605
    %v5726 = vpack.c.bf16 %v4622, %v4606
    %v5727 = vpack.c.bf16 %v4623, %v4607
    %v5728 = vpack.c.bf16 %v4624, %v4608
    %v5729 = vpack.c.bf16 %v4625, %v4609
    %v5730 = vpack.c.bf16 %v4626, %v4610
    %v5731 = vpack.c.bf16 %v4627, %v4611
    %v5732 = vpack.c.bf16 %v4628, %v4612
    %v5733 = vpack.c.bf16 %v4629, %v4613
    %v5734 = vpack.c.bf16 %v4630, %v4614
    %v5735 = vpack.c.bf16 %v4631, %v4615
    %v5736 = vpack.c.bf16 %v4632, %v4616
    %v5737 = vpack.c.bf16 %v4633, %v4617
    %v5738 = vpack.c.bf16 %v4650, %v4634
    %v5739 = vpack.c.bf16 %v4651, %v4635
    %v5740 = vpack.c.bf16 %v4652, %v4636
    %v5741 = vpack.c.bf16 %v4653, %v4637
    %v5742 = vpack.c.bf16 %v4654, %v4638
    %v5743 = vpack.c.bf16 %v4655, %v4639
    %v5744 = vpack.c.bf16 %v4656, %v4640
    %v5745 = vpack.c.bf16 %v4657, %v4641
    %v5746 = vpack.c.bf16 %v4658, %v4642
    %v5747 = vpack.c.bf16 %v4659, %v4643
    %v5748 = vpack.c.bf16 %v4660, %v4644
    %v5749 = vpack.c.bf16 %v4661, %v4645
    %v5750 = vpack.c.bf16 %v4662, %v4646
    %v5751 = vpack.c.bf16 %v4663, %v4647
    %v5752 = vpack.c.bf16 %v4664, %v4648
    %v5753 = vpack.c.bf16 %v4665, %v4649
    %v5754 = vpack.c.bf16 %v4682, %v4666
    %v5755 = vpack.c.bf16 %v4683, %v4667
    %v5756 = vpack.c.bf16 %v4684, %v4668
    %v5757 = vpack.c.bf16 %v4685, %v4669
    %v5758 = vpack.c.bf16 %v4686, %v4670
    %v5759 = vpack.c.bf16 %v4687, %v4671
    %v5760 = vpack.c.bf16 %v4688, %v4672
    %v5761 = vpack.c.bf16 %v4689, %v4673
    %v5762 = vpack.c.bf16 %v4690, %v4674
    %v5763 = vpack.c.bf16 %v4691, %v4675
    %v5764 = vpack.c.bf16 %v4692, %v4676
    %v5765 = vpack.c.bf16 %v4693, %v4677
    %v5766 = vpack.c.bf16 %v4694, %v4678
    %v5767 = vpack.c.bf16 %v4695, %v4679
    %v5768 = vpack.c.bf16 %v4696, %v4680
    %v5769 = vpack.c.bf16 %v4697, %v4681
    %v5770 = vpack.c.bf16 %v4714, %v4698
    %v5771 = vpack.c.bf16 %v4715, %v4699
    %v5772 = vpack.c.bf16 %v4716, %v4700
    %v5773 = vpack.c.bf16 %v4717, %v4701
    %v5774 = vpack.c.bf16 %v4718, %v4702
    %v5775 = vpack.c.bf16 %v4719, %v4703
    %v5776 = vpack.c.bf16 %v4720, %v4704
    %v5777 = vpack.c.bf16 %v4721, %v4705
    %v5778 = vpack.c.bf16 %v4722, %v4706
    %v5779 = vpack.c.bf16 %v4723, %v4707
    %v5780 = vpack.c.bf16 %v4724, %v4708
    %v5781 = vpack.c.bf16 %v4725, %v4709
    %v5782 = vpack.c.bf16 %v4726, %v4710
    %v5783 = vpack.c.bf16 %v4727, %v4711
    %v5784 = vpack.c.bf16 %v4728, %v4712
    %v5785 = vpack.c.bf16 %v4729, %v4713
    %v5786 = vpack.c.bf16 %v4746, %v4730
    %v5787 = vpack.c.bf16 %v4747, %v4731
    %v5788 = vpack.c.bf16 %v4748, %v4732
    %v5789 = vpack.c.bf16 %v4749, %v4733
    %v5790 = vpack.c.bf16 %v4750, %v4734
    %v5791 = vpack.c.bf16 %v4751, %v4735
    %v5792 = vpack.c.bf16 %v4752, %v4736
    %v5793 = vpack.c.bf16 %v4753, %v4737
    %v5794 = vpack.c.bf16 %v4754, %v4738
    %v5795 = vpack.c.bf16 %v4755, %v4739
    %v5796 = vpack.c.bf16 %v4756, %v4740
    %v5797 = vpack.c.bf16 %v4757, %v4741
    %v5798 = vpack.c.bf16 %v4758, %v4742
    %v5799 = vpack.c.bf16 %v4759, %v4743
    %v5800 = vpack.c.bf16 %v4760, %v4744
    %v5801 = vpack.c.bf16 %v4761, %v4745
    %v5802 = vpack.c.bf16 %v4778, %v4762
    %v5803 = vpack.c.bf16 %v4779, %v4763
    %v5804 = vpack.c.bf16 %v4780, %v4764
    %v5805 = vpack.c.bf16 %v4781, %v4765
    %v5806 = vpack.c.bf16 %v4782, %v4766
    %v5807 = vpack.c.bf16 %v4783, %v4767
    %v5808 = vpack.c.bf16 %v4784, %v4768
    %v5809 = vpack.c.bf16 %v4785, %v4769
    %v5810 = vpack.c.bf16 %v4786, %v4770
    %v5811 = vpack.c.bf16 %v4787, %v4771
    %v5812 = vpack.c.bf16 %v4788, %v4772
    %v5813 = vpack.c.bf16 %v4789, %v4773
    %v5814 = vpack.c.bf16 %v4790, %v4774
    %v5815 = vpack.c.bf16 %v4791, %v4775
    %v5816 = vpack.c.bf16 %v4792, %v4776
    %v5817 = vpack.c.bf16 %v4793, %v4777
    %5818 = vmatpush.bf16.msra.mxu0 %v4906
    %5819 = vmatpush.bf16.msra.mxu0 %v4890
    %5820 = vmatpush.bf16.msra.mxu0 %v4874
    %5821 = vmatpush.bf16.msra.mxu0 %v4858
    %5822 = vmatpush.bf16.msra.mxu0 %v4842
    %5823 = vmatpush.bf16.msra.mxu0 %v4826
    %5824 = vmatpush.bf16.msra.mxu0 %v4810
    %5825 = vmatpush.bf16.msra.mxu0 %v4794
    %5826 = vmatmul.bf16.gmra.mxu0 %v164
    %v5827 = vpop.f32.mrf.mxu0
    %v5828 = vadd.f32 0.0, %v5827
    %v5829 = vpop.f32.mrf.mxu0
    %5830 = vdwg.mxu0
    %5831 = vmatpush.bf16.msra.mxu0 %v5034
    %5832 = vmatpush.bf16.msra.mxu0 %v5018
    %5833 = vmatpush.bf16.msra.mxu0 %v5002
    %5834 = vmatpush.bf16.msra.mxu0 %v4986
    %5835 = vmatpush.bf16.msra.mxu0 %v4970
    %5836 = vmatpush.bf16.msra.mxu0 %v4954
    %5837 = vmatpush.bf16.msra.mxu0 %v4938
    %5838 = vmatpush.bf16.msra.mxu0 %v4922
    %5839 = vmatmul.bf16.gmra.mxu0 %v165
    %v5840 = vpop.f32.mrf.mxu0
    %v5841 = vadd.f32 %v5828, %v5840
    %v5842 = vpop.f32.mrf.mxu0
    %5843 = vdwg.mxu0
    %5844 = vmatpush.bf16.msra.mxu0 %v5162
    %5845 = vmatpush.bf16.msra.mxu0 %v5146
    %5846 = vmatpush.bf16.msra.mxu0 %v5130
    %5847 = vmatpush.bf16.msra.mxu0 %v5114
    %5848 = vmatpush.bf16.msra.mxu0 %v5098
    %5849 = vmatpush.bf16.msra.mxu0 %v5082
    %5850 = vmatpush.bf16.msra.mxu0 %v5066
    %5851 = vmatpush.bf16.msra.mxu0 %v5050
    %5852 = vmatmul.bf16.gmra.mxu0 %v166
    %v5853 = vpop.f32.mrf.mxu0
    %v5854 = vadd.f32 %v5841, %v5853
    %v5855 = vpop.f32.mrf.mxu0
    %5856 = vdwg.mxu0
    %5857 = vmatpush.bf16.msra.mxu0 %v5290
    %5858 = vmatpush.bf16.msra.mxu0 %v5274
    %5859 = vmatpush.bf16.msra.mxu0 %v5258
    %5860 = vmatpush.bf16.msra.mxu0 %v5242
    %5861 = vmatpush.bf16.msra.mxu0 %v5226
    %5862 = vmatpush.bf16.msra.mxu0 %v5210
    %5863 = vmatpush.bf16.msra.mxu0 %v5194
    %5864 = vmatpush.bf16.msra.mxu0 %v5178
    %5865 = vmatmul.bf16.gmra.mxu0 %v167
    %v5866 = vpop.f32.mrf.mxu0
    %v5867 = vadd.f32 %v5854, %v5866
    %v5868 = vpop.f32.mrf.mxu0
    %5869 = vdwg.mxu0
    %5870 = vmatpush.bf16.msra.mxu0 %v5418
    %5871 = vmatpush.bf16.msra.mxu0 %v5402
    %5872 = vmatpush.bf16.msra.mxu0 %v5386
    %5873 = vmatpush.bf16.msra.mxu0 %v5370
    %5874 = vmatpush.bf16.msra.mxu0 %v5354
    %5875 = vmatpush.bf16.msra.mxu0 %v5338
    %5876 = vmatpush.bf16.msra.mxu0 %v5322
    %5877 = vmatpush.bf16.msra.mxu0 %v5306
    %5878 = vmatmul.bf16.gmra.mxu0 %v178
    %v5879 = vpop.f32.mrf.mxu0
    %v5880 = vadd.f32 %v5867, %v5879
    %v5881 = vpop.f32.mrf.mxu0
    %5882 = vdwg.mxu0
    %5883 = vmatpush.bf16.msra.mxu0 %v5546
    %5884 = vmatpush.bf16.msra.mxu0 %v5530
    %5885 = vmatpush.bf16.msra.mxu0 %v5514
    %5886 = vmatpush.bf16.msra.mxu0 %v5498
    %5887 = vmatpush.bf16.msra.mxu0 %v5482
    %5888 = vmatpush.bf16.msra.mxu0 %v5466
    %5889 = vmatpush.bf16.msra.mxu0 %v5450
    %5890 = vmatpush.bf16.msra.mxu0 %v5434
    %5891 = vmatmul.bf16.gmra.mxu0 %v179
    %v5892 = vpop.f32.mrf.mxu0
    %v5893 = vadd.f32 %v5880, %v5892
    %v5894 = vpop.f32.mrf.mxu0
    %5895 = vdwg.mxu0
    %5896 = vmatpush.bf16.msra.mxu0 %v5674
    %5897 = vmatpush.bf16.msra.mxu0 %v5658
    %5898 = vmatpush.bf16.msra.mxu0 %v5642
    %5899 = vmatpush.bf16.msra.mxu0 %v5626
    %5900 = vmatpush.bf16.msra.mxu0 %v5610
    %5901 = vmatpush.bf16.msra.mxu0 %v5594
    %5902 = vmatpush.bf16.msra.mxu0 %v5578
    %5903 = vmatpush.bf16.msra.mxu0 %v5562
    %5904 = vmatmul.bf16.gmra.mxu0 %v180
    %v5905 = vpop.f32.mrf.mxu0
    %v5906 = vadd.f32 %v5893, %v5905
    %v5907 = vpop.f32.mrf.mxu0
    %5908 = vdwg.mxu0
    %5909 = vmatpush.bf16.msra.mxu0 %v5802
    %5910 = vmatpush.bf16.msra.mxu0 %v5786
    %5911 = vmatpush.bf16.msra.mxu0 %v5770
    %5912 = vmatpush.bf16.msra.mxu0 %v5754
    %5913 = vmatpush.bf16.msra.mxu0 %v5738
    %5914 = vmatpush.bf16.msra.mxu0 %v5722
    %5915 = vmatpush.bf16.msra.mxu0 %v5706
    %5916 = vmatpush.bf16.msra.mxu0 %v5690
    %5917 = vmatmul.bf16.gmra.mxu0 %v181
    %v5918 = vpop.f32.mrf.mxu0
    %v5919 = vadd.f32 %v5906, %v5918
    %v5920 = vpop.f32.mrf.mxu0
    %5921 = vdwg.mxu0
    %5922 = vmatpush.bf16.msra.mxu0 %v4907
    %5923 = vmatpush.bf16.msra.mxu0 %v4891
    %5924 = vmatpush.bf16.msra.mxu0 %v4875
    %5925 = vmatpush.bf16.msra.mxu0 %v4859
    %5926 = vmatpush.bf16.msra.mxu0 %v4843
    %5927 = vmatpush.bf16.msra.mxu0 %v4827
    %5928 = vmatpush.bf16.msra.mxu0 %v4811
    %5929 = vmatpush.bf16.msra.mxu0 %v4795
    %5930 = vmatmul.bf16.gmra.mxu0 %v164
    %v5931 = vpop.f32.mrf.mxu0
    %v5932 = vadd.f32 0.0, %v5931
    %v5933 = vpop.f32.mrf.mxu0
    %5934 = vdwg.mxu0
    %5935 = vmatpush.bf16.msra.mxu0 %v5035
    %5936 = vmatpush.bf16.msra.mxu0 %v5019
    %5937 = vmatpush.bf16.msra.mxu0 %v5003
    %5938 = vmatpush.bf16.msra.mxu0 %v4987
    %5939 = vmatpush.bf16.msra.mxu0 %v4971
    %5940 = vmatpush.bf16.msra.mxu0 %v4955
    %5941 = vmatpush.bf16.msra.mxu0 %v4939
    %5942 = vmatpush.bf16.msra.mxu0 %v4923
    %5943 = vmatmul.bf16.gmra.mxu0 %v165
    %v5944 = vpop.f32.mrf.mxu0
    %v5945 = vadd.f32 %v5932, %v5944
    %v5946 = vpop.f32.mrf.mxu0
    %5947 = vdwg.mxu0
    %5948 = vmatpush.bf16.msra.mxu0 %v5163
    %5949 = vmatpush.bf16.msra.mxu0 %v5147
    %5950 = vmatpush.bf16.msra.mxu0 %v5131
    %5951 = vmatpush.bf16.msra.mxu0 %v5115
    %5952 = vmatpush.bf16.msra.mxu0 %v5099
    %5953 = vmatpush.bf16.msra.mxu0 %v5083
    %5954 = vmatpush.bf16.msra.mxu0 %v5067
    %5955 = vmatpush.bf16.msra.mxu0 %v5051
    %5956 = vmatmul.bf16.gmra.mxu0 %v166
    %v5957 = vpop.f32.mrf.mxu0
    %v5958 = vadd.f32 %v5945, %v5957
    %v5959 = vpop.f32.mrf.mxu0
    %5960 = vdwg.mxu0
    %5961 = vmatpush.bf16.msra.mxu0 %v5291
    %5962 = vmatpush.bf16.msra.mxu0 %v5275
    %5963 = vmatpush.bf16.msra.mxu0 %v5259
    %5964 = vmatpush.bf16.msra.mxu0 %v5243
    %5965 = vmatpush.bf16.msra.mxu0 %v5227
    %5966 = vmatpush.bf16.msra.mxu0 %v5211
    %5967 = vmatpush.bf16.msra.mxu0 %v5195
    %5968 = vmatpush.bf16.msra.mxu0 %v5179
    %5969 = vmatmul.bf16.gmra.mxu0 %v167
    %v5970 = vpop.f32.mrf.mxu0
    %v5971 = vadd.f32 %v5958, %v5970
    %v5972 = vpop.f32.mrf.mxu0
    %5973 = vdwg.mxu0
    %5974 = vmatpush.bf16.msra.mxu0 %v5419
    %5975 = vmatpush.bf16.msra.mxu0 %v5403
    %5976 = vmatpush.bf16.msra.mxu0 %v5387
    %5977 = vmatpush.bf16.msra.mxu0 %v5371
    %5978 = vmatpush.bf16.msra.mxu0 %v5355
    %5979 = vmatpush.bf16.msra.mxu0 %v5339
    %5980 = vmatpush.bf16.msra.mxu0 %v5323
    %5981 = vmatpush.bf16.msra.mxu0 %v5307
    %5982 = vmatmul.bf16.gmra.mxu0 %v178
    %v5983 = vpop.f32.mrf.mxu0
    %v5984 = vadd.f32 %v5971, %v5983
    %v5985 = vpop.f32.mrf.mxu0
    %5986 = vdwg.mxu0
    %5987 = vmatpush.bf16.msra.mxu0 %v5547
    %5988 = vmatpush.bf16.msra.mxu0 %v5531
    %5989 = vmatpush.bf16.msra.mxu0 %v5515
    %5990 = vmatpush.bf16.msra.mxu0 %v5499
    %5991 = vmatpush.bf16.msra.mxu0 %v5483
    %5992 = vmatpush.bf16.msra.mxu0 %v5467
    %5993 = vmatpush.bf16.msra.mxu0 %v5451
    %5994 = vmatpush.bf16.msra.mxu0 %v5435
    %5995 = vmatmul.bf16.gmra.mxu0 %v179
    %v5996 = vpop.f32.mrf.mxu0
    %v5997 = vadd.f32 %v5984, %v5996
    %v5998 = vpop.f32.mrf.mxu0
    %5999 = vdwg.mxu0
    %6000 = vmatpush.bf16.msra.mxu0 %v5675
    %6001 = vmatpush.bf16.msra.mxu0 %v5659
    %6002 = vmatpush.bf16.msra.mxu0 %v5643
    %6003 = vmatpush.bf16.msra.mxu0 %v5627
    %6004 = vmatpush.bf16.msra.mxu0 %v5611
    %6005 = vmatpush.bf16.msra.mxu0 %v5595
    %6006 = vmatpush.bf16.msra.mxu0 %v5579
    %6007 = vmatpush.bf16.msra.mxu0 %v5563
    %6008 = vmatmul.bf16.gmra.mxu0 %v180
    %v6009 = vpop.f32.mrf.mxu0
    %v6010 = vadd.f32 %v5997, %v6009
    %v6011 = vpop.f32.mrf.mxu0
    %6012 = vdwg.mxu0
    %6013 = vmatpush.bf16.msra.mxu0 %v5803
    %6014 = vmatpush.bf16.msra.mxu0 %v5787
    %6015 = vmatpush.bf16.msra.mxu0 %v5771
    %6016 = vmatpush.bf16.msra.mxu0 %v5755
    %6017 = vmatpush.bf16.msra.mxu0 %v5739
    %6018 = vmatpush.bf16.msra.mxu0 %v5723
    %6019 = vmatpush.bf16.msra.mxu0 %v5707
    %6020 = vmatpush.bf16.msra.mxu0 %v5691
    %6021 = vmatmul.bf16.gmra.mxu0 %v181
    %v6022 = vpop.f32.mrf.mxu0
    %v6023 = vadd.f32 %v6010, %v6022
    %v6024 = vpop.f32.mrf.mxu0
    %6025 = vdwg.mxu0
    %6026 = vmatpush.bf16.msra.mxu0 %v4908
    %6027 = vmatpush.bf16.msra.mxu0 %v4892
    %6028 = vmatpush.bf16.msra.mxu0 %v4876
    %6029 = vmatpush.bf16.msra.mxu0 %v4860
    %6030 = vmatpush.bf16.msra.mxu0 %v4844
    %6031 = vmatpush.bf16.msra.mxu0 %v4828
    %6032 = vmatpush.bf16.msra.mxu0 %v4812
    %6033 = vmatpush.bf16.msra.mxu0 %v4796
    %6034 = vmatmul.bf16.gmra.mxu0 %v164
    %v6035 = vpop.f32.mrf.mxu0
    %v6036 = vadd.f32 0.0, %v6035
    %v6037 = vpop.f32.mrf.mxu0
    %6038 = vdwg.mxu0
    %6039 = vmatpush.bf16.msra.mxu0 %v5036
    %6040 = vmatpush.bf16.msra.mxu0 %v5020
    %6041 = vmatpush.bf16.msra.mxu0 %v5004
    %6042 = vmatpush.bf16.msra.mxu0 %v4988
    %6043 = vmatpush.bf16.msra.mxu0 %v4972
    %6044 = vmatpush.bf16.msra.mxu0 %v4956
    %6045 = vmatpush.bf16.msra.mxu0 %v4940
    %6046 = vmatpush.bf16.msra.mxu0 %v4924
    %6047 = vmatmul.bf16.gmra.mxu0 %v165
    %v6048 = vpop.f32.mrf.mxu0
    %v6049 = vadd.f32 %v6036, %v6048
    %v6050 = vpop.f32.mrf.mxu0
    %6051 = vdwg.mxu0
    %6052 = vmatpush.bf16.msra.mxu0 %v5164
    %6053 = vmatpush.bf16.msra.mxu0 %v5148
    %6054 = vmatpush.bf16.msra.mxu0 %v5132
    %6055 = vmatpush.bf16.msra.mxu0 %v5116
    %6056 = vmatpush.bf16.msra.mxu0 %v5100
    %6057 = vmatpush.bf16.msra.mxu0 %v5084
    %6058 = vmatpush.bf16.msra.mxu0 %v5068
    %6059 = vmatpush.bf16.msra.mxu0 %v5052
    %6060 = vmatmul.bf16.gmra.mxu0 %v166
    %v6061 = vpop.f32.mrf.mxu0
    %v6062 = vadd.f32 %v6049, %v6061
    %v6063 = vpop.f32.mrf.mxu0
    %6064 = vdwg.mxu0
    %6065 = vmatpush.bf16.msra.mxu0 %v5292
    %6066 = vmatpush.bf16.msra.mxu0 %v5276
    %6067 = vmatpush.bf16.msra.mxu0 %v5260
    %6068 = vmatpush.bf16.msra.mxu0 %v5244
    %6069 = vmatpush.bf16.msra.mxu0 %v5228
    %6070 = vmatpush.bf16.msra.mxu0 %v5212
    %6071 = vmatpush.bf16.msra.mxu0 %v5196
    %6072 = vmatpush.bf16.msra.mxu0 %v5180
    %6073 = vmatmul.bf16.gmra.mxu0 %v167
    %v6074 = vpop.f32.mrf.mxu0
    %v6075 = vadd.f32 %v6062, %v6074
    %v6076 = vpop.f32.mrf.mxu0
    %6077 = vdwg.mxu0
    %6078 = vmatpush.bf16.msra.mxu0 %v5420
    %6079 = vmatpush.bf16.msra.mxu0 %v5404
    %6080 = vmatpush.bf16.msra.mxu0 %v5388
    %6081 = vmatpush.bf16.msra.mxu0 %v5372
    %6082 = vmatpush.bf16.msra.mxu0 %v5356
    %6083 = vmatpush.bf16.msra.mxu0 %v5340
    %6084 = vmatpush.bf16.msra.mxu0 %v5324
    %6085 = vmatpush.bf16.msra.mxu0 %v5308
    %6086 = vmatmul.bf16.gmra.mxu0 %v178
    %v6087 = vpop.f32.mrf.mxu0
    %v6088 = vadd.f32 %v6075, %v6087
    %v6089 = vpop.f32.mrf.mxu0
    %6090 = vdwg.mxu0
    %6091 = vmatpush.bf16.msra.mxu0 %v5548
    %6092 = vmatpush.bf16.msra.mxu0 %v5532
    %6093 = vmatpush.bf16.msra.mxu0 %v5516
    %6094 = vmatpush.bf16.msra.mxu0 %v5500
    %6095 = vmatpush.bf16.msra.mxu0 %v5484
    %6096 = vmatpush.bf16.msra.mxu0 %v5468
    %6097 = vmatpush.bf16.msra.mxu0 %v5452
    %6098 = vmatpush.bf16.msra.mxu0 %v5436
    %6099 = vmatmul.bf16.gmra.mxu0 %v179
    %v6100 = vpop.f32.mrf.mxu0
    %v6101 = vadd.f32 %v6088, %v6100
    %v6102 = vpop.f32.mrf.mxu0
    %6103 = vdwg.mxu0
    %6104 = vmatpush.bf16.msra.mxu0 %v5676
    %6105 = vmatpush.bf16.msra.mxu0 %v5660
    %6106 = vmatpush.bf16.msra.mxu0 %v5644
    %6107 = vmatpush.bf16.msra.mxu0 %v5628
    %6108 = vmatpush.bf16.msra.mxu0 %v5612
    %6109 = vmatpush.bf16.msra.mxu0 %v5596
    %6110 = vmatpush.bf16.msra.mxu0 %v5580
    %6111 = vmatpush.bf16.msra.mxu0 %v5564
    %6112 = vmatmul.bf16.gmra.mxu0 %v180
    %v6113 = vpop.f32.mrf.mxu0
    %v6114 = vadd.f32 %v6101, %v6113
    %v6115 = vpop.f32.mrf.mxu0
    %6116 = vdwg.mxu0
    %6117 = vmatpush.bf16.msra.mxu0 %v5804
    %6118 = vmatpush.bf16.msra.mxu0 %v5788
    %6119 = vmatpush.bf16.msra.mxu0 %v5772
    %6120 = vmatpush.bf16.msra.mxu0 %v5756
    %6121 = vmatpush.bf16.msra.mxu0 %v5740
    %6122 = vmatpush.bf16.msra.mxu0 %v5724
    %6123 = vmatpush.bf16.msra.mxu0 %v5708
    %6124 = vmatpush.bf16.msra.mxu0 %v5692
    %6125 = vmatmul.bf16.gmra.mxu0 %v181
    %v6126 = vpop.f32.mrf.mxu0
    %v6127 = vadd.f32 %v6114, %v6126
    %v6128 = vpop.f32.mrf.mxu0
    %6129 = vdwg.mxu0
    %6130 = vmatpush.bf16.msra.mxu0 %v4909
    %6131 = vmatpush.bf16.msra.mxu0 %v4893
    %6132 = vmatpush.bf16.msra.mxu0 %v4877
    %6133 = vmatpush.bf16.msra.mxu0 %v4861
    %6134 = vmatpush.bf16.msra.mxu0 %v4845
    %6135 = vmatpush.bf16.msra.mxu0 %v4829
    %6136 = vmatpush.bf16.msra.mxu0 %v4813
    %6137 = vmatpush.bf16.msra.mxu0 %v4797
    %6138 = vmatmul.bf16.gmra.mxu0 %v164
    %v6139 = vpop.f32.mrf.mxu0
    %v6140 = vadd.f32 0.0, %v6139
    %v6141 = vpop.f32.mrf.mxu0
    %6142 = vdwg.mxu0
    %6143 = vmatpush.bf16.msra.mxu0 %v5037
    %6144 = vmatpush.bf16.msra.mxu0 %v5021
    %6145 = vmatpush.bf16.msra.mxu0 %v5005
    %6146 = vmatpush.bf16.msra.mxu0 %v4989
    %6147 = vmatpush.bf16.msra.mxu0 %v4973
    %6148 = vmatpush.bf16.msra.mxu0 %v4957
    %6149 = vmatpush.bf16.msra.mxu0 %v4941
    %6150 = vmatpush.bf16.msra.mxu0 %v4925
    %6151 = vmatmul.bf16.gmra.mxu0 %v165
    %v6152 = vpop.f32.mrf.mxu0
    %v6153 = vadd.f32 %v6140, %v6152
    %v6154 = vpop.f32.mrf.mxu0
    %6155 = vdwg.mxu0
    %6156 = vmatpush.bf16.msra.mxu0 %v5165
    %6157 = vmatpush.bf16.msra.mxu0 %v5149
    %6158 = vmatpush.bf16.msra.mxu0 %v5133
    %6159 = vmatpush.bf16.msra.mxu0 %v5117
    %6160 = vmatpush.bf16.msra.mxu0 %v5101
    %6161 = vmatpush.bf16.msra.mxu0 %v5085
    %6162 = vmatpush.bf16.msra.mxu0 %v5069
    %6163 = vmatpush.bf16.msra.mxu0 %v5053
    %6164 = vmatmul.bf16.gmra.mxu0 %v166
    %v6165 = vpop.f32.mrf.mxu0
    %v6166 = vadd.f32 %v6153, %v6165
    %v6167 = vpop.f32.mrf.mxu0
    %6168 = vdwg.mxu0
    %6169 = vmatpush.bf16.msra.mxu0 %v5293
    %6170 = vmatpush.bf16.msra.mxu0 %v5277
    %6171 = vmatpush.bf16.msra.mxu0 %v5261
    %6172 = vmatpush.bf16.msra.mxu0 %v5245
    %6173 = vmatpush.bf16.msra.mxu0 %v5229
    %6174 = vmatpush.bf16.msra.mxu0 %v5213
    %6175 = vmatpush.bf16.msra.mxu0 %v5197
    %6176 = vmatpush.bf16.msra.mxu0 %v5181
    %6177 = vmatmul.bf16.gmra.mxu0 %v167
    %v6178 = vpop.f32.mrf.mxu0
    %v6179 = vadd.f32 %v6166, %v6178
    %v6180 = vpop.f32.mrf.mxu0
    %6181 = vdwg.mxu0
    %6182 = vmatpush.bf16.msra.mxu0 %v5421
    %6183 = vmatpush.bf16.msra.mxu0 %v5405
    %6184 = vmatpush.bf16.msra.mxu0 %v5389
    %6185 = vmatpush.bf16.msra.mxu0 %v5373
    %6186 = vmatpush.bf16.msra.mxu0 %v5357
    %6187 = vmatpush.bf16.msra.mxu0 %v5341
    %6188 = vmatpush.bf16.msra.mxu0 %v5325
    %6189 = vmatpush.bf16.msra.mxu0 %v5309
    %6190 = vmatmul.bf16.gmra.mxu0 %v178
    %v6191 = vpop.f32.mrf.mxu0
    %v6192 = vadd.f32 %v6179, %v6191
    %v6193 = vpop.f32.mrf.mxu0
    %6194 = vdwg.mxu0
    %6195 = vmatpush.bf16.msra.mxu0 %v5549
    %6196 = vmatpush.bf16.msra.mxu0 %v5533
    %6197 = vmatpush.bf16.msra.mxu0 %v5517
    %6198 = vmatpush.bf16.msra.mxu0 %v5501
    %6199 = vmatpush.bf16.msra.mxu0 %v5485
    %6200 = vmatpush.bf16.msra.mxu0 %v5469
    %6201 = vmatpush.bf16.msra.mxu0 %v5453
    %6202 = vmatpush.bf16.msra.mxu0 %v5437
    %6203 = vmatmul.bf16.gmra.mxu0 %v179
    %v6204 = vpop.f32.mrf.mxu0
    %v6205 = vadd.f32 %v6192, %v6204
    %v6206 = vpop.f32.mrf.mxu0
    %6207 = vdwg.mxu0
    %6208 = vmatpush.bf16.msra.mxu0 %v5677
    %6209 = vmatpush.bf16.msra.mxu0 %v5661
    %6210 = vmatpush.bf16.msra.mxu0 %v5645
    %6211 = vmatpush.bf16.msra.mxu0 %v5629
    %6212 = vmatpush.bf16.msra.mxu0 %v5613
    %6213 = vmatpush.bf16.msra.mxu0 %v5597
    %6214 = vmatpush.bf16.msra.mxu0 %v5581
    %6215 = vmatpush.bf16.msra.mxu0 %v5565
    %6216 = vmatmul.bf16.gmra.mxu0 %v180
    %v6217 = vpop.f32.mrf.mxu0
    %v6218 = vadd.f32 %v6205, %v6217
    %v6219 = vpop.f32.mrf.mxu0
    %6220 = vdwg.mxu0
    %6221 = vmatpush.bf16.msra.mxu0 %v5805
    %6222 = vmatpush.bf16.msra.mxu0 %v5789
    %6223 = vmatpush.bf16.msra.mxu0 %v5773
    %6224 = vmatpush.bf16.msra.mxu0 %v5757
    %6225 = vmatpush.bf16.msra.mxu0 %v5741
    %6226 = vmatpush.bf16.msra.mxu0 %v5725
    %6227 = vmatpush.bf16.msra.mxu0 %v5709
    %6228 = vmatpush.bf16.msra.mxu0 %v5693
    %6229 = vmatmul.bf16.gmra.mxu0 %v181
    %v6230 = vpop.f32.mrf.mxu0
    %v6231 = vadd.f32 %v6218, %v6230
    %v6232 = vpop.f32.mrf.mxu0
    %6233 = vdwg.mxu0
    %6234 = vmatpush.bf16.msra.mxu0 %v4910
    %6235 = vmatpush.bf16.msra.mxu0 %v4894
    %6236 = vmatpush.bf16.msra.mxu0 %v4878
    %6237 = vmatpush.bf16.msra.mxu0 %v4862
    %6238 = vmatpush.bf16.msra.mxu0 %v4846
    %6239 = vmatpush.bf16.msra.mxu0 %v4830
    %6240 = vmatpush.bf16.msra.mxu0 %v4814
    %6241 = vmatpush.bf16.msra.mxu0 %v4798
    %6242 = vmatmul.bf16.gmra.mxu0 %v164
    %v6243 = vpop.f32.mrf.mxu0
    %v6244 = vadd.f32 0.0, %v6243
    %v6245 = vpop.f32.mrf.mxu0
    %6246 = vdwg.mxu0
    %6247 = vmatpush.bf16.msra.mxu0 %v5038
    %6248 = vmatpush.bf16.msra.mxu0 %v5022
    %6249 = vmatpush.bf16.msra.mxu0 %v5006
    %6250 = vmatpush.bf16.msra.mxu0 %v4990
    %6251 = vmatpush.bf16.msra.mxu0 %v4974
    %6252 = vmatpush.bf16.msra.mxu0 %v4958
    %6253 = vmatpush.bf16.msra.mxu0 %v4942
    %6254 = vmatpush.bf16.msra.mxu0 %v4926
    %6255 = vmatmul.bf16.gmra.mxu0 %v165
    %v6256 = vpop.f32.mrf.mxu0
    %v6257 = vadd.f32 %v6244, %v6256
    %v6258 = vpop.f32.mrf.mxu0
    %6259 = vdwg.mxu0
    %6260 = vmatpush.bf16.msra.mxu0 %v5166
    %6261 = vmatpush.bf16.msra.mxu0 %v5150
    %6262 = vmatpush.bf16.msra.mxu0 %v5134
    %6263 = vmatpush.bf16.msra.mxu0 %v5118
    %6264 = vmatpush.bf16.msra.mxu0 %v5102
    %6265 = vmatpush.bf16.msra.mxu0 %v5086
    %6266 = vmatpush.bf16.msra.mxu0 %v5070
    %6267 = vmatpush.bf16.msra.mxu0 %v5054
    %6268 = vmatmul.bf16.gmra.mxu0 %v166
    %v6269 = vpop.f32.mrf.mxu0
    %v6270 = vadd.f32 %v6257, %v6269
    %v6271 = vpop.f32.mrf.mxu0
    %6272 = vdwg.mxu0
    %6273 = vmatpush.bf16.msra.mxu0 %v5294
    %6274 = vmatpush.bf16.msra.mxu0 %v5278
    %6275 = vmatpush.bf16.msra.mxu0 %v5262
    %6276 = vmatpush.bf16.msra.mxu0 %v5246
    %6277 = vmatpush.bf16.msra.mxu0 %v5230
    %6278 = vmatpush.bf16.msra.mxu0 %v5214
    %6279 = vmatpush.bf16.msra.mxu0 %v5198
    %6280 = vmatpush.bf16.msra.mxu0 %v5182
    %6281 = vmatmul.bf16.gmra.mxu0 %v167
    %v6282 = vpop.f32.mrf.mxu0
    %v6283 = vadd.f32 %v6270, %v6282
    %v6284 = vpop.f32.mrf.mxu0
    %6285 = vdwg.mxu0
    %6286 = vmatpush.bf16.msra.mxu0 %v5422
    %6287 = vmatpush.bf16.msra.mxu0 %v5406
    %6288 = vmatpush.bf16.msra.mxu0 %v5390
    %6289 = vmatpush.bf16.msra.mxu0 %v5374
    %6290 = vmatpush.bf16.msra.mxu0 %v5358
    %6291 = vmatpush.bf16.msra.mxu0 %v5342
    %6292 = vmatpush.bf16.msra.mxu0 %v5326
    %6293 = vmatpush.bf16.msra.mxu0 %v5310
    %6294 = vmatmul.bf16.gmra.mxu0 %v178
    %v6295 = vpop.f32.mrf.mxu0
    %v6296 = vadd.f32 %v6283, %v6295
    %v6297 = vpop.f32.mrf.mxu0
    %6298 = vdwg.mxu0
    %6299 = vmatpush.bf16.msra.mxu0 %v5550
    %6300 = vmatpush.bf16.msra.mxu0 %v5534
    %6301 = vmatpush.bf16.msra.mxu0 %v5518
    %6302 = vmatpush.bf16.msra.mxu0 %v5502
    %6303 = vmatpush.bf16.msra.mxu0 %v5486
    %6304 = vmatpush.bf16.msra.mxu0 %v5470
    %6305 = vmatpush.bf16.msra.mxu0 %v5454
    %6306 = vmatpush.bf16.msra.mxu0 %v5438
    %6307 = vmatmul.bf16.gmra.mxu0 %v179
    %v6308 = vpop.f32.mrf.mxu0
    %v6309 = vadd.f32 %v6296, %v6308
    %v6310 = vpop.f32.mrf.mxu0
    %6311 = vdwg.mxu0
    %6312 = vmatpush.bf16.msra.mxu0 %v5678
    %6313 = vmatpush.bf16.msra.mxu0 %v5662
    %6314 = vmatpush.bf16.msra.mxu0 %v5646
    %6315 = vmatpush.bf16.msra.mxu0 %v5630
    %6316 = vmatpush.bf16.msra.mxu0 %v5614
    %6317 = vmatpush.bf16.msra.mxu0 %v5598
    %6318 = vmatpush.bf16.msra.mxu0 %v5582
    %6319 = vmatpush.bf16.msra.mxu0 %v5566
    %6320 = vmatmul.bf16.gmra.mxu0 %v180
    %v6321 = vpop.f32.mrf.mxu0
    %v6322 = vadd.f32 %v6309, %v6321
    %v6323 = vpop.f32.mrf.mxu0
    %6324 = vdwg.mxu0
    %6325 = vmatpush.bf16.msra.mxu0 %v5806
    %6326 = vmatpush.bf16.msra.mxu0 %v5790
    %6327 = vmatpush.bf16.msra.mxu0 %v5774
    %6328 = vmatpush.bf16.msra.mxu0 %v5758
    %6329 = vmatpush.bf16.msra.mxu0 %v5742
    %6330 = vmatpush.bf16.msra.mxu0 %v5726
    %6331 = vmatpush.bf16.msra.mxu0 %v5710
    %6332 = vmatpush.bf16.msra.mxu0 %v5694
    %6333 = vmatmul.bf16.gmra.mxu0 %v181
    %v6334 = vpop.f32.mrf.mxu0
    %v6335 = vadd.f32 %v6322, %v6334
    %v6336 = vpop.f32.mrf.mxu0
    %6337 = vdwg.mxu0
    %6338 = vmatpush.bf16.msra.mxu0 %v4911
    %6339 = vmatpush.bf16.msra.mxu0 %v4895
    %6340 = vmatpush.bf16.msra.mxu0 %v4879
    %6341 = vmatpush.bf16.msra.mxu0 %v4863
    %6342 = vmatpush.bf16.msra.mxu0 %v4847
    %6343 = vmatpush.bf16.msra.mxu0 %v4831
    %6344 = vmatpush.bf16.msra.mxu0 %v4815
    %6345 = vmatpush.bf16.msra.mxu0 %v4799
    %6346 = vmatmul.bf16.gmra.mxu0 %v164
    %v6347 = vpop.f32.mrf.mxu0
    %v6348 = vadd.f32 0.0, %v6347
    %v6349 = vpop.f32.mrf.mxu0
    %6350 = vdwg.mxu0
    %6351 = vmatpush.bf16.msra.mxu0 %v5039
    %6352 = vmatpush.bf16.msra.mxu0 %v5023
    %6353 = vmatpush.bf16.msra.mxu0 %v5007
    %6354 = vmatpush.bf16.msra.mxu0 %v4991
    %6355 = vmatpush.bf16.msra.mxu0 %v4975
    %6356 = vmatpush.bf16.msra.mxu0 %v4959
    %6357 = vmatpush.bf16.msra.mxu0 %v4943
    %6358 = vmatpush.bf16.msra.mxu0 %v4927
    %6359 = vmatmul.bf16.gmra.mxu0 %v165
    %v6360 = vpop.f32.mrf.mxu0
    %v6361 = vadd.f32 %v6348, %v6360
    %v6362 = vpop.f32.mrf.mxu0
    %6363 = vdwg.mxu0
    %6364 = vmatpush.bf16.msra.mxu0 %v5167
    %6365 = vmatpush.bf16.msra.mxu0 %v5151
    %6366 = vmatpush.bf16.msra.mxu0 %v5135
    %6367 = vmatpush.bf16.msra.mxu0 %v5119
    %6368 = vmatpush.bf16.msra.mxu0 %v5103
    %6369 = vmatpush.bf16.msra.mxu0 %v5087
    %6370 = vmatpush.bf16.msra.mxu0 %v5071
    %6371 = vmatpush.bf16.msra.mxu0 %v5055
    %6372 = vmatmul.bf16.gmra.mxu0 %v166
    %v6373 = vpop.f32.mrf.mxu0
    %v6374 = vadd.f32 %v6361, %v6373
    %v6375 = vpop.f32.mrf.mxu0
    %6376 = vdwg.mxu0
    %6377 = vmatpush.bf16.msra.mxu0 %v5295
    %6378 = vmatpush.bf16.msra.mxu0 %v5279
    %6379 = vmatpush.bf16.msra.mxu0 %v5263
    %6380 = vmatpush.bf16.msra.mxu0 %v5247
    %6381 = vmatpush.bf16.msra.mxu0 %v5231
    %6382 = vmatpush.bf16.msra.mxu0 %v5215
    %6383 = vmatpush.bf16.msra.mxu0 %v5199
    %6384 = vmatpush.bf16.msra.mxu0 %v5183
    %6385 = vmatmul.bf16.gmra.mxu0 %v167
    %v6386 = vpop.f32.mrf.mxu0
    %v6387 = vadd.f32 %v6374, %v6386
    %v6388 = vpop.f32.mrf.mxu0
    %6389 = vdwg.mxu0
    %6390 = vmatpush.bf16.msra.mxu0 %v5423
    %6391 = vmatpush.bf16.msra.mxu0 %v5407
    %6392 = vmatpush.bf16.msra.mxu0 %v5391
    %6393 = vmatpush.bf16.msra.mxu0 %v5375
    %6394 = vmatpush.bf16.msra.mxu0 %v5359
    %6395 = vmatpush.bf16.msra.mxu0 %v5343
    %6396 = vmatpush.bf16.msra.mxu0 %v5327
    %6397 = vmatpush.bf16.msra.mxu0 %v5311
    %6398 = vmatmul.bf16.gmra.mxu0 %v178
    %v6399 = vpop.f32.mrf.mxu0
    %v6400 = vadd.f32 %v6387, %v6399
    %v6401 = vpop.f32.mrf.mxu0
    %6402 = vdwg.mxu0
    %6403 = vmatpush.bf16.msra.mxu0 %v5551
    %6404 = vmatpush.bf16.msra.mxu0 %v5535
    %6405 = vmatpush.bf16.msra.mxu0 %v5519
    %6406 = vmatpush.bf16.msra.mxu0 %v5503
    %6407 = vmatpush.bf16.msra.mxu0 %v5487
    %6408 = vmatpush.bf16.msra.mxu0 %v5471
    %6409 = vmatpush.bf16.msra.mxu0 %v5455
    %6410 = vmatpush.bf16.msra.mxu0 %v5439
    %6411 = vmatmul.bf16.gmra.mxu0 %v179
    %v6412 = vpop.f32.mrf.mxu0
    %v6413 = vadd.f32 %v6400, %v6412
    %v6414 = vpop.f32.mrf.mxu0
    %6415 = vdwg.mxu0
    %6416 = vmatpush.bf16.msra.mxu0 %v5679
    %6417 = vmatpush.bf16.msra.mxu0 %v5663
    %6418 = vmatpush.bf16.msra.mxu0 %v5647
    %6419 = vmatpush.bf16.msra.mxu0 %v5631
    %6420 = vmatpush.bf16.msra.mxu0 %v5615
    %6421 = vmatpush.bf16.msra.mxu0 %v5599
    %6422 = vmatpush.bf16.msra.mxu0 %v5583
    %6423 = vmatpush.bf16.msra.mxu0 %v5567
    %6424 = vmatmul.bf16.gmra.mxu0 %v180
    %v6425 = vpop.f32.mrf.mxu0
    %v6426 = vadd.f32 %v6413, %v6425
    %v6427 = vpop.f32.mrf.mxu0
    %6428 = vdwg.mxu0
    %6429 = vmatpush.bf16.msra.mxu0 %v5807
    %6430 = vmatpush.bf16.msra.mxu0 %v5791
    %6431 = vmatpush.bf16.msra.mxu0 %v5775
    %6432 = vmatpush.bf16.msra.mxu0 %v5759
    %6433 = vmatpush.bf16.msra.mxu0 %v5743
    %6434 = vmatpush.bf16.msra.mxu0 %v5727
    %6435 = vmatpush.bf16.msra.mxu0 %v5711
    %6436 = vmatpush.bf16.msra.mxu0 %v5695
    %6437 = vmatmul.bf16.gmra.mxu0 %v181
    %v6438 = vpop.f32.mrf.mxu0
    %v6439 = vadd.f32 %v6426, %v6438
    %v6440 = vpop.f32.mrf.mxu0
    %6441 = vdwg.mxu0
    %6442 = vmatpush.bf16.msra.mxu0 %v4912
    %6443 = vmatpush.bf16.msra.mxu0 %v4896
    %6444 = vmatpush.bf16.msra.mxu0 %v4880
    %6445 = vmatpush.bf16.msra.mxu0 %v4864
    %6446 = vmatpush.bf16.msra.mxu0 %v4848
    %6447 = vmatpush.bf16.msra.mxu0 %v4832
    %6448 = vmatpush.bf16.msra.mxu0 %v4816
    %6449 = vmatpush.bf16.msra.mxu0 %v4800
    %6450 = vmatmul.bf16.gmra.mxu0 %v164
    %v6451 = vpop.f32.mrf.mxu0
    %v6452 = vadd.f32 0.0, %v6451
    %v6453 = vpop.f32.mrf.mxu0
    %6454 = vdwg.mxu0
    %6455 = vmatpush.bf16.msra.mxu0 %v5040
    %6456 = vmatpush.bf16.msra.mxu0 %v5024
    %6457 = vmatpush.bf16.msra.mxu0 %v5008
    %6458 = vmatpush.bf16.msra.mxu0 %v4992
    %6459 = vmatpush.bf16.msra.mxu0 %v4976
    %6460 = vmatpush.bf16.msra.mxu0 %v4960
    %6461 = vmatpush.bf16.msra.mxu0 %v4944
    %6462 = vmatpush.bf16.msra.mxu0 %v4928
    %6463 = vmatmul.bf16.gmra.mxu0 %v165
    %v6464 = vpop.f32.mrf.mxu0
    %v6465 = vadd.f32 %v6452, %v6464
    %v6466 = vpop.f32.mrf.mxu0
    %6467 = vdwg.mxu0
    %6468 = vmatpush.bf16.msra.mxu0 %v5168
    %6469 = vmatpush.bf16.msra.mxu0 %v5152
    %6470 = vmatpush.bf16.msra.mxu0 %v5136
    %6471 = vmatpush.bf16.msra.mxu0 %v5120
    %6472 = vmatpush.bf16.msra.mxu0 %v5104
    %6473 = vmatpush.bf16.msra.mxu0 %v5088
    %6474 = vmatpush.bf16.msra.mxu0 %v5072
    %6475 = vmatpush.bf16.msra.mxu0 %v5056
    %6476 = vmatmul.bf16.gmra.mxu0 %v166
    %v6477 = vpop.f32.mrf.mxu0
    %v6478 = vadd.f32 %v6465, %v6477
    %v6479 = vpop.f32.mrf.mxu0
    %6480 = vdwg.mxu0
    %6481 = vmatpush.bf16.msra.mxu0 %v5296
    %6482 = vmatpush.bf16.msra.mxu0 %v5280
    %6483 = vmatpush.bf16.msra.mxu0 %v5264
    %6484 = vmatpush.bf16.msra.mxu0 %v5248
    %6485 = vmatpush.bf16.msra.mxu0 %v5232
    %6486 = vmatpush.bf16.msra.mxu0 %v5216
    %6487 = vmatpush.bf16.msra.mxu0 %v5200
    %6488 = vmatpush.bf16.msra.mxu0 %v5184
    %6489 = vmatmul.bf16.gmra.mxu0 %v167
    %v6490 = vpop.f32.mrf.mxu0
    %v6491 = vadd.f32 %v6478, %v6490
    %v6492 = vpop.f32.mrf.mxu0
    %6493 = vdwg.mxu0
    %6494 = vmatpush.bf16.msra.mxu0 %v5424
    %6495 = vmatpush.bf16.msra.mxu0 %v5408
    %6496 = vmatpush.bf16.msra.mxu0 %v5392
    %6497 = vmatpush.bf16.msra.mxu0 %v5376
    %6498 = vmatpush.bf16.msra.mxu0 %v5360
    %6499 = vmatpush.bf16.msra.mxu0 %v5344
    %6500 = vmatpush.bf16.msra.mxu0 %v5328
    %6501 = vmatpush.bf16.msra.mxu0 %v5312
    %6502 = vmatmul.bf16.gmra.mxu0 %v178
    %v6503 = vpop.f32.mrf.mxu0
    %v6504 = vadd.f32 %v6491, %v6503
    %v6505 = vpop.f32.mrf.mxu0
    %6506 = vdwg.mxu0
    %6507 = vmatpush.bf16.msra.mxu0 %v5552
    %6508 = vmatpush.bf16.msra.mxu0 %v5536
    %6509 = vmatpush.bf16.msra.mxu0 %v5520
    %6510 = vmatpush.bf16.msra.mxu0 %v5504
    %6511 = vmatpush.bf16.msra.mxu0 %v5488
    %6512 = vmatpush.bf16.msra.mxu0 %v5472
    %6513 = vmatpush.bf16.msra.mxu0 %v5456
    %6514 = vmatpush.bf16.msra.mxu0 %v5440
    %6515 = vmatmul.bf16.gmra.mxu0 %v179
    %v6516 = vpop.f32.mrf.mxu0
    %v6517 = vadd.f32 %v6504, %v6516
    %v6518 = vpop.f32.mrf.mxu0
    %6519 = vdwg.mxu0
    %6520 = vmatpush.bf16.msra.mxu0 %v5680
    %6521 = vmatpush.bf16.msra.mxu0 %v5664
    %6522 = vmatpush.bf16.msra.mxu0 %v5648
    %6523 = vmatpush.bf16.msra.mxu0 %v5632
    %6524 = vmatpush.bf16.msra.mxu0 %v5616
    %6525 = vmatpush.bf16.msra.mxu0 %v5600
    %6526 = vmatpush.bf16.msra.mxu0 %v5584
    %6527 = vmatpush.bf16.msra.mxu0 %v5568
    %6528 = vmatmul.bf16.gmra.mxu0 %v180
    %v6529 = vpop.f32.mrf.mxu0
    %v6530 = vadd.f32 %v6517, %v6529
    %v6531 = vpop.f32.mrf.mxu0
    %6532 = vdwg.mxu0
    %6533 = vmatpush.bf16.msra.mxu0 %v5808
    %6534 = vmatpush.bf16.msra.mxu0 %v5792
    %6535 = vmatpush.bf16.msra.mxu0 %v5776
    %6536 = vmatpush.bf16.msra.mxu0 %v5760
    %6537 = vmatpush.bf16.msra.mxu0 %v5744
    %6538 = vmatpush.bf16.msra.mxu0 %v5728
    %6539 = vmatpush.bf16.msra.mxu0 %v5712
    %6540 = vmatpush.bf16.msra.mxu0 %v5696
    %6541 = vmatmul.bf16.gmra.mxu0 %v181
    %v6542 = vpop.f32.mrf.mxu0
    %v6543 = vadd.f32 %v6530, %v6542
    %v6544 = vpop.f32.mrf.mxu0
    %6545 = vdwg.mxu0
    %6546 = vmatpush.bf16.msra.mxu0 %v4913
    %6547 = vmatpush.bf16.msra.mxu0 %v4897
    %6548 = vmatpush.bf16.msra.mxu0 %v4881
    %6549 = vmatpush.bf16.msra.mxu0 %v4865
    %6550 = vmatpush.bf16.msra.mxu0 %v4849
    %6551 = vmatpush.bf16.msra.mxu0 %v4833
    %6552 = vmatpush.bf16.msra.mxu0 %v4817
    %6553 = vmatpush.bf16.msra.mxu0 %v4801
    %6554 = vmatmul.bf16.gmra.mxu0 %v164
    %v6555 = vpop.f32.mrf.mxu0
    %v6556 = vadd.f32 0.0, %v6555
    %v6557 = vpop.f32.mrf.mxu0
    %6558 = vdwg.mxu0
    %6559 = vmatpush.bf16.msra.mxu0 %v5041
    %6560 = vmatpush.bf16.msra.mxu0 %v5025
    %6561 = vmatpush.bf16.msra.mxu0 %v5009
    %6562 = vmatpush.bf16.msra.mxu0 %v4993
    %6563 = vmatpush.bf16.msra.mxu0 %v4977
    %6564 = vmatpush.bf16.msra.mxu0 %v4961
    %6565 = vmatpush.bf16.msra.mxu0 %v4945
    %6566 = vmatpush.bf16.msra.mxu0 %v4929
    %6567 = vmatmul.bf16.gmra.mxu0 %v165
    %v6568 = vpop.f32.mrf.mxu0
    %v6569 = vadd.f32 %v6556, %v6568
    %v6570 = vpop.f32.mrf.mxu0
    %6571 = vdwg.mxu0
    %6572 = vmatpush.bf16.msra.mxu0 %v5169
    %6573 = vmatpush.bf16.msra.mxu0 %v5153
    %6574 = vmatpush.bf16.msra.mxu0 %v5137
    %6575 = vmatpush.bf16.msra.mxu0 %v5121
    %6576 = vmatpush.bf16.msra.mxu0 %v5105
    %6577 = vmatpush.bf16.msra.mxu0 %v5089
    %6578 = vmatpush.bf16.msra.mxu0 %v5073
    %6579 = vmatpush.bf16.msra.mxu0 %v5057
    %6580 = vmatmul.bf16.gmra.mxu0 %v166
    %v6581 = vpop.f32.mrf.mxu0
    %v6582 = vadd.f32 %v6569, %v6581
    %v6583 = vpop.f32.mrf.mxu0
    %6584 = vdwg.mxu0
    %6585 = vmatpush.bf16.msra.mxu0 %v5297
    %6586 = vmatpush.bf16.msra.mxu0 %v5281
    %6587 = vmatpush.bf16.msra.mxu0 %v5265
    %6588 = vmatpush.bf16.msra.mxu0 %v5249
    %6589 = vmatpush.bf16.msra.mxu0 %v5233
    %6590 = vmatpush.bf16.msra.mxu0 %v5217
    %6591 = vmatpush.bf16.msra.mxu0 %v5201
    %6592 = vmatpush.bf16.msra.mxu0 %v5185
    %6593 = vmatmul.bf16.gmra.mxu0 %v167
    %v6594 = vpop.f32.mrf.mxu0
    %v6595 = vadd.f32 %v6582, %v6594
    %v6596 = vpop.f32.mrf.mxu0
    %6597 = vdwg.mxu0
    %6598 = vmatpush.bf16.msra.mxu0 %v5425
    %6599 = vmatpush.bf16.msra.mxu0 %v5409
    %6600 = vmatpush.bf16.msra.mxu0 %v5393
    %6601 = vmatpush.bf16.msra.mxu0 %v5377
    %6602 = vmatpush.bf16.msra.mxu0 %v5361
    %6603 = vmatpush.bf16.msra.mxu0 %v5345
    %6604 = vmatpush.bf16.msra.mxu0 %v5329
    %6605 = vmatpush.bf16.msra.mxu0 %v5313
    %6606 = vmatmul.bf16.gmra.mxu0 %v178
    %v6607 = vpop.f32.mrf.mxu0
    %v6608 = vadd.f32 %v6595, %v6607
    %v6609 = vpop.f32.mrf.mxu0
    %6610 = vdwg.mxu0
    %6611 = vmatpush.bf16.msra.mxu0 %v5553
    %6612 = vmatpush.bf16.msra.mxu0 %v5537
    %6613 = vmatpush.bf16.msra.mxu0 %v5521
    %6614 = vmatpush.bf16.msra.mxu0 %v5505
    %6615 = vmatpush.bf16.msra.mxu0 %v5489
    %6616 = vmatpush.bf16.msra.mxu0 %v5473
    %6617 = vmatpush.bf16.msra.mxu0 %v5457
    %6618 = vmatpush.bf16.msra.mxu0 %v5441
    %6619 = vmatmul.bf16.gmra.mxu0 %v179
    %v6620 = vpop.f32.mrf.mxu0
    %v6621 = vadd.f32 %v6608, %v6620
    %v6622 = vpop.f32.mrf.mxu0
    %6623 = vdwg.mxu0
    %6624 = vmatpush.bf16.msra.mxu0 %v5681
    %6625 = vmatpush.bf16.msra.mxu0 %v5665
    %6626 = vmatpush.bf16.msra.mxu0 %v5649
    %6627 = vmatpush.bf16.msra.mxu0 %v5633
    %6628 = vmatpush.bf16.msra.mxu0 %v5617
    %6629 = vmatpush.bf16.msra.mxu0 %v5601
    %6630 = vmatpush.bf16.msra.mxu0 %v5585
    %6631 = vmatpush.bf16.msra.mxu0 %v5569
    %6632 = vmatmul.bf16.gmra.mxu0 %v180
    %v6633 = vpop.f32.mrf.mxu0
    %v6634 = vadd.f32 %v6621, %v6633
    %v6635 = vpop.f32.mrf.mxu0
    %6636 = vdwg.mxu0
    %6637 = vmatpush.bf16.msra.mxu0 %v5809
    %6638 = vmatpush.bf16.msra.mxu0 %v5793
    %6639 = vmatpush.bf16.msra.mxu0 %v5777
    %6640 = vmatpush.bf16.msra.mxu0 %v5761
    %6641 = vmatpush.bf16.msra.mxu0 %v5745
    %6642 = vmatpush.bf16.msra.mxu0 %v5729
    %6643 = vmatpush.bf16.msra.mxu0 %v5713
    %6644 = vmatpush.bf16.msra.mxu0 %v5697
    %6645 = vmatmul.bf16.gmra.mxu0 %v181
    %v6646 = vpop.f32.mrf.mxu0
    %v6647 = vadd.f32 %v6634, %v6646
    %v6648 = vpop.f32.mrf.mxu0
    %6649 = vdwg.mxu0
    %6650 = vmatpush.bf16.msra.mxu0 %v4914
    %6651 = vmatpush.bf16.msra.mxu0 %v4898
    %6652 = vmatpush.bf16.msra.mxu0 %v4882
    %6653 = vmatpush.bf16.msra.mxu0 %v4866
    %6654 = vmatpush.bf16.msra.mxu0 %v4850
    %6655 = vmatpush.bf16.msra.mxu0 %v4834
    %6656 = vmatpush.bf16.msra.mxu0 %v4818
    %6657 = vmatpush.bf16.msra.mxu0 %v4802
    %6658 = vmatmul.bf16.gmra.mxu0 %v164
    %v6659 = vpop.f32.mrf.mxu0
    %v6660 = vadd.f32 0.0, %v6659
    %v6661 = vpop.f32.mrf.mxu0
    %6662 = vdwg.mxu0
    %6663 = vmatpush.bf16.msra.mxu0 %v5042
    %6664 = vmatpush.bf16.msra.mxu0 %v5026
    %6665 = vmatpush.bf16.msra.mxu0 %v5010
    %6666 = vmatpush.bf16.msra.mxu0 %v4994
    %6667 = vmatpush.bf16.msra.mxu0 %v4978
    %6668 = vmatpush.bf16.msra.mxu0 %v4962
    %6669 = vmatpush.bf16.msra.mxu0 %v4946
    %6670 = vmatpush.bf16.msra.mxu0 %v4930
    %6671 = vmatmul.bf16.gmra.mxu0 %v165
    %v6672 = vpop.f32.mrf.mxu0
    %v6673 = vadd.f32 %v6660, %v6672
    %v6674 = vpop.f32.mrf.mxu0
    %6675 = vdwg.mxu0
    %6676 = vmatpush.bf16.msra.mxu0 %v5170
    %6677 = vmatpush.bf16.msra.mxu0 %v5154
    %6678 = vmatpush.bf16.msra.mxu0 %v5138
    %6679 = vmatpush.bf16.msra.mxu0 %v5122
    %6680 = vmatpush.bf16.msra.mxu0 %v5106
    %6681 = vmatpush.bf16.msra.mxu0 %v5090
    %6682 = vmatpush.bf16.msra.mxu0 %v5074
    %6683 = vmatpush.bf16.msra.mxu0 %v5058
    %6684 = vmatmul.bf16.gmra.mxu0 %v166
    %v6685 = vpop.f32.mrf.mxu0
    %v6686 = vadd.f32 %v6673, %v6685
    %v6687 = vpop.f32.mrf.mxu0
    %6688 = vdwg.mxu0
    %6689 = vmatpush.bf16.msra.mxu0 %v5298
    %6690 = vmatpush.bf16.msra.mxu0 %v5282
    %6691 = vmatpush.bf16.msra.mxu0 %v5266
    %6692 = vmatpush.bf16.msra.mxu0 %v5250
    %6693 = vmatpush.bf16.msra.mxu0 %v5234
    %6694 = vmatpush.bf16.msra.mxu0 %v5218
    %6695 = vmatpush.bf16.msra.mxu0 %v5202
    %6696 = vmatpush.bf16.msra.mxu0 %v5186
    %6697 = vmatmul.bf16.gmra.mxu0 %v167
    %v6698 = vpop.f32.mrf.mxu0
    %v6699 = vadd.f32 %v6686, %v6698
    %v6700 = vpop.f32.mrf.mxu0
    %6701 = vdwg.mxu0
    %6702 = vmatpush.bf16.msra.mxu0 %v5426
    %6703 = vmatpush.bf16.msra.mxu0 %v5410
    %6704 = vmatpush.bf16.msra.mxu0 %v5394
    %6705 = vmatpush.bf16.msra.mxu0 %v5378
    %6706 = vmatpush.bf16.msra.mxu0 %v5362
    %6707 = vmatpush.bf16.msra.mxu0 %v5346
    %6708 = vmatpush.bf16.msra.mxu0 %v5330
    %6709 = vmatpush.bf16.msra.mxu0 %v5314
    %6710 = vmatmul.bf16.gmra.mxu0 %v178
    %v6711 = vpop.f32.mrf.mxu0
    %v6712 = vadd.f32 %v6699, %v6711
    %v6713 = vpop.f32.mrf.mxu0
    %6714 = vdwg.mxu0
    %6715 = vmatpush.bf16.msra.mxu0 %v5554
    %6716 = vmatpush.bf16.msra.mxu0 %v5538
    %6717 = vmatpush.bf16.msra.mxu0 %v5522
    %6718 = vmatpush.bf16.msra.mxu0 %v5506
    %6719 = vmatpush.bf16.msra.mxu0 %v5490
    %6720 = vmatpush.bf16.msra.mxu0 %v5474
    %6721 = vmatpush.bf16.msra.mxu0 %v5458
    %6722 = vmatpush.bf16.msra.mxu0 %v5442
    %6723 = vmatmul.bf16.gmra.mxu0 %v179
    %v6724 = vpop.f32.mrf.mxu0
    %v6725 = vadd.f32 %v6712, %v6724
    %v6726 = vpop.f32.mrf.mxu0
    %6727 = vdwg.mxu0
    %6728 = vmatpush.bf16.msra.mxu0 %v5682
    %6729 = vmatpush.bf16.msra.mxu0 %v5666
    %6730 = vmatpush.bf16.msra.mxu0 %v5650
    %6731 = vmatpush.bf16.msra.mxu0 %v5634
    %6732 = vmatpush.bf16.msra.mxu0 %v5618
    %6733 = vmatpush.bf16.msra.mxu0 %v5602
    %6734 = vmatpush.bf16.msra.mxu0 %v5586
    %6735 = vmatpush.bf16.msra.mxu0 %v5570
    %6736 = vmatmul.bf16.gmra.mxu0 %v180
    %v6737 = vpop.f32.mrf.mxu0
    %v6738 = vadd.f32 %v6725, %v6737
    %v6739 = vpop.f32.mrf.mxu0
    %6740 = vdwg.mxu0
    %6741 = vmatpush.bf16.msra.mxu0 %v5810
    %6742 = vmatpush.bf16.msra.mxu0 %v5794
    %6743 = vmatpush.bf16.msra.mxu0 %v5778
    %6744 = vmatpush.bf16.msra.mxu0 %v5762
    %6745 = vmatpush.bf16.msra.mxu0 %v5746
    %6746 = vmatpush.bf16.msra.mxu0 %v5730
    %6747 = vmatpush.bf16.msra.mxu0 %v5714
    %6748 = vmatpush.bf16.msra.mxu0 %v5698
    %6749 = vmatmul.bf16.gmra.mxu0 %v181
    %v6750 = vpop.f32.mrf.mxu0
    %v6751 = vadd.f32 %v6738, %v6750
    %v6752 = vpop.f32.mrf.mxu0
    %6753 = vdwg.mxu0
    %6754 = vmatpush.bf16.msra.mxu0 %v4915
    %6755 = vmatpush.bf16.msra.mxu0 %v4899
    %6756 = vmatpush.bf16.msra.mxu0 %v4883
    %6757 = vmatpush.bf16.msra.mxu0 %v4867
    %6758 = vmatpush.bf16.msra.mxu0 %v4851
    %6759 = vmatpush.bf16.msra.mxu0 %v4835
    %6760 = vmatpush.bf16.msra.mxu0 %v4819
    %6761 = vmatpush.bf16.msra.mxu0 %v4803
    %6762 = vmatmul.bf16.gmra.mxu0 %v164
    %v6763 = vpop.f32.mrf.mxu0
    %v6764 = vadd.f32 0.0, %v6763
    %v6765 = vpop.f32.mrf.mxu0
    %6766 = vdwg.mxu0
    %6767 = vmatpush.bf16.msra.mxu0 %v5043
    %6768 = vmatpush.bf16.msra.mxu0 %v5027
    %6769 = vmatpush.bf16.msra.mxu0 %v5011
    %6770 = vmatpush.bf16.msra.mxu0 %v4995
    %6771 = vmatpush.bf16.msra.mxu0 %v4979
    %6772 = vmatpush.bf16.msra.mxu0 %v4963
    %6773 = vmatpush.bf16.msra.mxu0 %v4947
    %6774 = vmatpush.bf16.msra.mxu0 %v4931
    %6775 = vmatmul.bf16.gmra.mxu0 %v165
    %v6776 = vpop.f32.mrf.mxu0
    %v6777 = vadd.f32 %v6764, %v6776
    %v6778 = vpop.f32.mrf.mxu0
    %6779 = vdwg.mxu0
    %6780 = vmatpush.bf16.msra.mxu0 %v5171
    %6781 = vmatpush.bf16.msra.mxu0 %v5155
    %6782 = vmatpush.bf16.msra.mxu0 %v5139
    %6783 = vmatpush.bf16.msra.mxu0 %v5123
    %6784 = vmatpush.bf16.msra.mxu0 %v5107
    %6785 = vmatpush.bf16.msra.mxu0 %v5091
    %6786 = vmatpush.bf16.msra.mxu0 %v5075
    %6787 = vmatpush.bf16.msra.mxu0 %v5059
    %6788 = vmatmul.bf16.gmra.mxu0 %v166
    %v6789 = vpop.f32.mrf.mxu0
    %v6790 = vadd.f32 %v6777, %v6789
    %v6791 = vpop.f32.mrf.mxu0
    %6792 = vdwg.mxu0
    %6793 = vmatpush.bf16.msra.mxu0 %v5299
    %6794 = vmatpush.bf16.msra.mxu0 %v5283
    %6795 = vmatpush.bf16.msra.mxu0 %v5267
    %6796 = vmatpush.bf16.msra.mxu0 %v5251
    %6797 = vmatpush.bf16.msra.mxu0 %v5235
    %6798 = vmatpush.bf16.msra.mxu0 %v5219
    %6799 = vmatpush.bf16.msra.mxu0 %v5203
    %6800 = vmatpush.bf16.msra.mxu0 %v5187
    %6801 = vmatmul.bf16.gmra.mxu0 %v167
    %v6802 = vpop.f32.mrf.mxu0
    %v6803 = vadd.f32 %v6790, %v6802
    %v6804 = vpop.f32.mrf.mxu0
    %6805 = vdwg.mxu0
    %6806 = vmatpush.bf16.msra.mxu0 %v5427
    %6807 = vmatpush.bf16.msra.mxu0 %v5411
    %6808 = vmatpush.bf16.msra.mxu0 %v5395
    %6809 = vmatpush.bf16.msra.mxu0 %v5379
    %6810 = vmatpush.bf16.msra.mxu0 %v5363
    %6811 = vmatpush.bf16.msra.mxu0 %v5347
    %6812 = vmatpush.bf16.msra.mxu0 %v5331
    %6813 = vmatpush.bf16.msra.mxu0 %v5315
    %6814 = vmatmul.bf16.gmra.mxu0 %v178
    %v6815 = vpop.f32.mrf.mxu0
    %v6816 = vadd.f32 %v6803, %v6815
    %v6817 = vpop.f32.mrf.mxu0
    %6818 = vdwg.mxu0
    %6819 = vmatpush.bf16.msra.mxu0 %v5555
    %6820 = vmatpush.bf16.msra.mxu0 %v5539
    %6821 = vmatpush.bf16.msra.mxu0 %v5523
    %6822 = vmatpush.bf16.msra.mxu0 %v5507
    %6823 = vmatpush.bf16.msra.mxu0 %v5491
    %6824 = vmatpush.bf16.msra.mxu0 %v5475
    %6825 = vmatpush.bf16.msra.mxu0 %v5459
    %6826 = vmatpush.bf16.msra.mxu0 %v5443
    %6827 = vmatmul.bf16.gmra.mxu0 %v179
    %v6828 = vpop.f32.mrf.mxu0
    %v6829 = vadd.f32 %v6816, %v6828
    %v6830 = vpop.f32.mrf.mxu0
    %6831 = vdwg.mxu0
    %6832 = vmatpush.bf16.msra.mxu0 %v5683
    %6833 = vmatpush.bf16.msra.mxu0 %v5667
    %6834 = vmatpush.bf16.msra.mxu0 %v5651
    %6835 = vmatpush.bf16.msra.mxu0 %v5635
    %6836 = vmatpush.bf16.msra.mxu0 %v5619
    %6837 = vmatpush.bf16.msra.mxu0 %v5603
    %6838 = vmatpush.bf16.msra.mxu0 %v5587
    %6839 = vmatpush.bf16.msra.mxu0 %v5571
    %6840 = vmatmul.bf16.gmra.mxu0 %v180
    %v6841 = vpop.f32.mrf.mxu0
    %v6842 = vadd.f32 %v6829, %v6841
    %v6843 = vpop.f32.mrf.mxu0
    %6844 = vdwg.mxu0
    %6845 = vmatpush.bf16.msra.mxu0 %v5811
    %6846 = vmatpush.bf16.msra.mxu0 %v5795
    %6847 = vmatpush.bf16.msra.mxu0 %v5779
    %6848 = vmatpush.bf16.msra.mxu0 %v5763
    %6849 = vmatpush.bf16.msra.mxu0 %v5747
    %6850 = vmatpush.bf16.msra.mxu0 %v5731
    %6851 = vmatpush.bf16.msra.mxu0 %v5715
    %6852 = vmatpush.bf16.msra.mxu0 %v5699
    %6853 = vmatmul.bf16.gmra.mxu0 %v181
    %v6854 = vpop.f32.mrf.mxu0
    %v6855 = vadd.f32 %v6842, %v6854
    %v6856 = vpop.f32.mrf.mxu0
    %6857 = vdwg.mxu0
    %6858 = vmatpush.bf16.msra.mxu0 %v4916
    %6859 = vmatpush.bf16.msra.mxu0 %v4900
    %6860 = vmatpush.bf16.msra.mxu0 %v4884
    %6861 = vmatpush.bf16.msra.mxu0 %v4868
    %6862 = vmatpush.bf16.msra.mxu0 %v4852
    %6863 = vmatpush.bf16.msra.mxu0 %v4836
    %6864 = vmatpush.bf16.msra.mxu0 %v4820
    %6865 = vmatpush.bf16.msra.mxu0 %v4804
    %6866 = vmatmul.bf16.gmra.mxu0 %v164
    %v6867 = vpop.f32.mrf.mxu0
    %v6868 = vadd.f32 0.0, %v6867
    %v6869 = vpop.f32.mrf.mxu0
    %6870 = vdwg.mxu0
    %6871 = vmatpush.bf16.msra.mxu0 %v5044
    %6872 = vmatpush.bf16.msra.mxu0 %v5028
    %6873 = vmatpush.bf16.msra.mxu0 %v5012
    %6874 = vmatpush.bf16.msra.mxu0 %v4996
    %6875 = vmatpush.bf16.msra.mxu0 %v4980
    %6876 = vmatpush.bf16.msra.mxu0 %v4964
    %6877 = vmatpush.bf16.msra.mxu0 %v4948
    %6878 = vmatpush.bf16.msra.mxu0 %v4932
    %6879 = vmatmul.bf16.gmra.mxu0 %v165
    %v6880 = vpop.f32.mrf.mxu0
    %v6881 = vadd.f32 %v6868, %v6880
    %v6882 = vpop.f32.mrf.mxu0
    %6883 = vdwg.mxu0
    %6884 = vmatpush.bf16.msra.mxu0 %v5172
    %6885 = vmatpush.bf16.msra.mxu0 %v5156
    %6886 = vmatpush.bf16.msra.mxu0 %v5140
    %6887 = vmatpush.bf16.msra.mxu0 %v5124
    %6888 = vmatpush.bf16.msra.mxu0 %v5108
    %6889 = vmatpush.bf16.msra.mxu0 %v5092
    %6890 = vmatpush.bf16.msra.mxu0 %v5076
    %6891 = vmatpush.bf16.msra.mxu0 %v5060
    %6892 = vmatmul.bf16.gmra.mxu0 %v166
    %v6893 = vpop.f32.mrf.mxu0
    %v6894 = vadd.f32 %v6881, %v6893
    %v6895 = vpop.f32.mrf.mxu0
    %6896 = vdwg.mxu0
    %6897 = vmatpush.bf16.msra.mxu0 %v5300
    %6898 = vmatpush.bf16.msra.mxu0 %v5284
    %6899 = vmatpush.bf16.msra.mxu0 %v5268
    %6900 = vmatpush.bf16.msra.mxu0 %v5252
    %6901 = vmatpush.bf16.msra.mxu0 %v5236
    %6902 = vmatpush.bf16.msra.mxu0 %v5220
    %6903 = vmatpush.bf16.msra.mxu0 %v5204
    %6904 = vmatpush.bf16.msra.mxu0 %v5188
    %6905 = vmatmul.bf16.gmra.mxu0 %v167
    %v6906 = vpop.f32.mrf.mxu0
    %v6907 = vadd.f32 %v6894, %v6906
    %v6908 = vpop.f32.mrf.mxu0
    %6909 = vdwg.mxu0
    %6910 = vmatpush.bf16.msra.mxu0 %v5428
    %6911 = vmatpush.bf16.msra.mxu0 %v5412
    %6912 = vmatpush.bf16.msra.mxu0 %v5396
    %6913 = vmatpush.bf16.msra.mxu0 %v5380
    %6914 = vmatpush.bf16.msra.mxu0 %v5364
    %6915 = vmatpush.bf16.msra.mxu0 %v5348
    %6916 = vmatpush.bf16.msra.mxu0 %v5332
    %6917 = vmatpush.bf16.msra.mxu0 %v5316
    %6918 = vmatmul.bf16.gmra.mxu0 %v178
    %v6919 = vpop.f32.mrf.mxu0
    %v6920 = vadd.f32 %v6907, %v6919
    %v6921 = vpop.f32.mrf.mxu0
    %6922 = vdwg.mxu0
    %6923 = vmatpush.bf16.msra.mxu0 %v5556
    %6924 = vmatpush.bf16.msra.mxu0 %v5540
    %6925 = vmatpush.bf16.msra.mxu0 %v5524
    %6926 = vmatpush.bf16.msra.mxu0 %v5508
    %6927 = vmatpush.bf16.msra.mxu0 %v5492
    %6928 = vmatpush.bf16.msra.mxu0 %v5476
    %6929 = vmatpush.bf16.msra.mxu0 %v5460
    %6930 = vmatpush.bf16.msra.mxu0 %v5444
    %6931 = vmatmul.bf16.gmra.mxu0 %v179
    %v6932 = vpop.f32.mrf.mxu0
    %v6933 = vadd.f32 %v6920, %v6932
    %v6934 = vpop.f32.mrf.mxu0
    %6935 = vdwg.mxu0
    %6936 = vmatpush.bf16.msra.mxu0 %v5684
    %6937 = vmatpush.bf16.msra.mxu0 %v5668
    %6938 = vmatpush.bf16.msra.mxu0 %v5652
    %6939 = vmatpush.bf16.msra.mxu0 %v5636
    %6940 = vmatpush.bf16.msra.mxu0 %v5620
    %6941 = vmatpush.bf16.msra.mxu0 %v5604
    %6942 = vmatpush.bf16.msra.mxu0 %v5588
    %6943 = vmatpush.bf16.msra.mxu0 %v5572
    %6944 = vmatmul.bf16.gmra.mxu0 %v180
    %v6945 = vpop.f32.mrf.mxu0
    %v6946 = vadd.f32 %v6933, %v6945
    %v6947 = vpop.f32.mrf.mxu0
    %6948 = vdwg.mxu0
    %6949 = vmatpush.bf16.msra.mxu0 %v5812
    %6950 = vmatpush.bf16.msra.mxu0 %v5796
    %6951 = vmatpush.bf16.msra.mxu0 %v5780
    %6952 = vmatpush.bf16.msra.mxu0 %v5764
    %6953 = vmatpush.bf16.msra.mxu0 %v5748
    %6954 = vmatpush.bf16.msra.mxu0 %v5732
    %6955 = vmatpush.bf16.msra.mxu0 %v5716
    %6956 = vmatpush.bf16.msra.mxu0 %v5700
    %6957 = vmatmul.bf16.gmra.mxu0 %v181
    %v6958 = vpop.f32.mrf.mxu0
    %v6959 = vadd.f32 %v6946, %v6958
    %v6960 = vpop.f32.mrf.mxu0
    %6961 = vdwg.mxu0
    %6962 = vmatpush.bf16.msra.mxu0 %v4917
    %6963 = vmatpush.bf16.msra.mxu0 %v4901
    %6964 = vmatpush.bf16.msra.mxu0 %v4885
    %6965 = vmatpush.bf16.msra.mxu0 %v4869
    %6966 = vmatpush.bf16.msra.mxu0 %v4853
    %6967 = vmatpush.bf16.msra.mxu0 %v4837
    %6968 = vmatpush.bf16.msra.mxu0 %v4821
    %6969 = vmatpush.bf16.msra.mxu0 %v4805
    %6970 = vmatmul.bf16.gmra.mxu0 %v164
    %v6971 = vpop.f32.mrf.mxu0
    %v6972 = vadd.f32 0.0, %v6971
    %v6973 = vpop.f32.mrf.mxu0
    %6974 = vdwg.mxu0
    %6975 = vmatpush.bf16.msra.mxu0 %v5045
    %6976 = vmatpush.bf16.msra.mxu0 %v5029
    %6977 = vmatpush.bf16.msra.mxu0 %v5013
    %6978 = vmatpush.bf16.msra.mxu0 %v4997
    %6979 = vmatpush.bf16.msra.mxu0 %v4981
    %6980 = vmatpush.bf16.msra.mxu0 %v4965
    %6981 = vmatpush.bf16.msra.mxu0 %v4949
    %6982 = vmatpush.bf16.msra.mxu0 %v4933
    %6983 = vmatmul.bf16.gmra.mxu0 %v165
    %v6984 = vpop.f32.mrf.mxu0
    %v6985 = vadd.f32 %v6972, %v6984
    %v6986 = vpop.f32.mrf.mxu0
    %6987 = vdwg.mxu0
    %6988 = vmatpush.bf16.msra.mxu0 %v5173
    %6989 = vmatpush.bf16.msra.mxu0 %v5157
    %6990 = vmatpush.bf16.msra.mxu0 %v5141
    %6991 = vmatpush.bf16.msra.mxu0 %v5125
    %6992 = vmatpush.bf16.msra.mxu0 %v5109
    %6993 = vmatpush.bf16.msra.mxu0 %v5093
    %6994 = vmatpush.bf16.msra.mxu0 %v5077
    %6995 = vmatpush.bf16.msra.mxu0 %v5061
    %6996 = vmatmul.bf16.gmra.mxu0 %v166
    %v6997 = vpop.f32.mrf.mxu0
    %v6998 = vadd.f32 %v6985, %v6997
    %v6999 = vpop.f32.mrf.mxu0
    %7000 = vdwg.mxu0
    %7001 = vmatpush.bf16.msra.mxu0 %v5301
    %7002 = vmatpush.bf16.msra.mxu0 %v5285
    %7003 = vmatpush.bf16.msra.mxu0 %v5269
    %7004 = vmatpush.bf16.msra.mxu0 %v5253
    %7005 = vmatpush.bf16.msra.mxu0 %v5237
    %7006 = vmatpush.bf16.msra.mxu0 %v5221
    %7007 = vmatpush.bf16.msra.mxu0 %v5205
    %7008 = vmatpush.bf16.msra.mxu0 %v5189
    %7009 = vmatmul.bf16.gmra.mxu0 %v167
    %v7010 = vpop.f32.mrf.mxu0
    %v7011 = vadd.f32 %v6998, %v7010
    %v7012 = vpop.f32.mrf.mxu0
    %7013 = vdwg.mxu0
    %7014 = vmatpush.bf16.msra.mxu0 %v5429
    %7015 = vmatpush.bf16.msra.mxu0 %v5413
    %7016 = vmatpush.bf16.msra.mxu0 %v5397
    %7017 = vmatpush.bf16.msra.mxu0 %v5381
    %7018 = vmatpush.bf16.msra.mxu0 %v5365
    %7019 = vmatpush.bf16.msra.mxu0 %v5349
    %7020 = vmatpush.bf16.msra.mxu0 %v5333
    %7021 = vmatpush.bf16.msra.mxu0 %v5317
    %7022 = vmatmul.bf16.gmra.mxu0 %v178
    %v7023 = vpop.f32.mrf.mxu0
    %v7024 = vadd.f32 %v7011, %v7023
    %v7025 = vpop.f32.mrf.mxu0
    %7026 = vdwg.mxu0
    %7027 = vmatpush.bf16.msra.mxu0 %v5557
    %7028 = vmatpush.bf16.msra.mxu0 %v5541
    %7029 = vmatpush.bf16.msra.mxu0 %v5525
    %7030 = vmatpush.bf16.msra.mxu0 %v5509
    %7031 = vmatpush.bf16.msra.mxu0 %v5493
    %7032 = vmatpush.bf16.msra.mxu0 %v5477
    %7033 = vmatpush.bf16.msra.mxu0 %v5461
    %7034 = vmatpush.bf16.msra.mxu0 %v5445
    %7035 = vmatmul.bf16.gmra.mxu0 %v179
    %v7036 = vpop.f32.mrf.mxu0
    %v7037 = vadd.f32 %v7024, %v7036
    %v7038 = vpop.f32.mrf.mxu0
    %7039 = vdwg.mxu0
    %7040 = vmatpush.bf16.msra.mxu0 %v5685
    %7041 = vmatpush.bf16.msra.mxu0 %v5669
    %7042 = vmatpush.bf16.msra.mxu0 %v5653
    %7043 = vmatpush.bf16.msra.mxu0 %v5637
    %7044 = vmatpush.bf16.msra.mxu0 %v5621
    %7045 = vmatpush.bf16.msra.mxu0 %v5605
    %7046 = vmatpush.bf16.msra.mxu0 %v5589
    %7047 = vmatpush.bf16.msra.mxu0 %v5573
    %7048 = vmatmul.bf16.gmra.mxu0 %v180
    %v7049 = vpop.f32.mrf.mxu0
    %v7050 = vadd.f32 %v7037, %v7049
    %v7051 = vpop.f32.mrf.mxu0
    %7052 = vdwg.mxu0
    %7053 = vmatpush.bf16.msra.mxu0 %v5813
    %7054 = vmatpush.bf16.msra.mxu0 %v5797
    %7055 = vmatpush.bf16.msra.mxu0 %v5781
    %7056 = vmatpush.bf16.msra.mxu0 %v5765
    %7057 = vmatpush.bf16.msra.mxu0 %v5749
    %7058 = vmatpush.bf16.msra.mxu0 %v5733
    %7059 = vmatpush.bf16.msra.mxu0 %v5717
    %7060 = vmatpush.bf16.msra.mxu0 %v5701
    %7061 = vmatmul.bf16.gmra.mxu0 %v181
    %v7062 = vpop.f32.mrf.mxu0
    %v7063 = vadd.f32 %v7050, %v7062
    %v7064 = vpop.f32.mrf.mxu0
    %7065 = vdwg.mxu0
    %7066 = vmatpush.bf16.msra.mxu0 %v4918
    %7067 = vmatpush.bf16.msra.mxu0 %v4902
    %7068 = vmatpush.bf16.msra.mxu0 %v4886
    %7069 = vmatpush.bf16.msra.mxu0 %v4870
    %7070 = vmatpush.bf16.msra.mxu0 %v4854
    %7071 = vmatpush.bf16.msra.mxu0 %v4838
    %7072 = vmatpush.bf16.msra.mxu0 %v4822
    %7073 = vmatpush.bf16.msra.mxu0 %v4806
    %7074 = vmatmul.bf16.gmra.mxu0 %v164
    %v7075 = vpop.f32.mrf.mxu0
    %v7076 = vadd.f32 0.0, %v7075
    %v7077 = vpop.f32.mrf.mxu0
    %7078 = vdwg.mxu0
    %7079 = vmatpush.bf16.msra.mxu0 %v5046
    %7080 = vmatpush.bf16.msra.mxu0 %v5030
    %7081 = vmatpush.bf16.msra.mxu0 %v5014
    %7082 = vmatpush.bf16.msra.mxu0 %v4998
    %7083 = vmatpush.bf16.msra.mxu0 %v4982
    %7084 = vmatpush.bf16.msra.mxu0 %v4966
    %7085 = vmatpush.bf16.msra.mxu0 %v4950
    %7086 = vmatpush.bf16.msra.mxu0 %v4934
    %7087 = vmatmul.bf16.gmra.mxu0 %v165
    %v7088 = vpop.f32.mrf.mxu0
    %v7089 = vadd.f32 %v7076, %v7088
    %v7090 = vpop.f32.mrf.mxu0
    %7091 = vdwg.mxu0
    %7092 = vmatpush.bf16.msra.mxu0 %v5174
    %7093 = vmatpush.bf16.msra.mxu0 %v5158
    %7094 = vmatpush.bf16.msra.mxu0 %v5142
    %7095 = vmatpush.bf16.msra.mxu0 %v5126
    %7096 = vmatpush.bf16.msra.mxu0 %v5110
    %7097 = vmatpush.bf16.msra.mxu0 %v5094
    %7098 = vmatpush.bf16.msra.mxu0 %v5078
    %7099 = vmatpush.bf16.msra.mxu0 %v5062
    %7100 = vmatmul.bf16.gmra.mxu0 %v166
    %v7101 = vpop.f32.mrf.mxu0
    %v7102 = vadd.f32 %v7089, %v7101
    %v7103 = vpop.f32.mrf.mxu0
    %7104 = vdwg.mxu0
    %7105 = vmatpush.bf16.msra.mxu0 %v5302
    %7106 = vmatpush.bf16.msra.mxu0 %v5286
    %7107 = vmatpush.bf16.msra.mxu0 %v5270
    %7108 = vmatpush.bf16.msra.mxu0 %v5254
    %7109 = vmatpush.bf16.msra.mxu0 %v5238
    %7110 = vmatpush.bf16.msra.mxu0 %v5222
    %7111 = vmatpush.bf16.msra.mxu0 %v5206
    %7112 = vmatpush.bf16.msra.mxu0 %v5190
    %7113 = vmatmul.bf16.gmra.mxu0 %v167
    %v7114 = vpop.f32.mrf.mxu0
    %v7115 = vadd.f32 %v7102, %v7114
    %v7116 = vpop.f32.mrf.mxu0
    %7117 = vdwg.mxu0
    %7118 = vmatpush.bf16.msra.mxu0 %v5430
    %7119 = vmatpush.bf16.msra.mxu0 %v5414
    %7120 = vmatpush.bf16.msra.mxu0 %v5398
    %7121 = vmatpush.bf16.msra.mxu0 %v5382
    %7122 = vmatpush.bf16.msra.mxu0 %v5366
    %7123 = vmatpush.bf16.msra.mxu0 %v5350
    %7124 = vmatpush.bf16.msra.mxu0 %v5334
    %7125 = vmatpush.bf16.msra.mxu0 %v5318
    %7126 = vmatmul.bf16.gmra.mxu0 %v178
    %v7127 = vpop.f32.mrf.mxu0
    %v7128 = vadd.f32 %v7115, %v7127
    %v7129 = vpop.f32.mrf.mxu0
    %7130 = vdwg.mxu0
    %7131 = vmatpush.bf16.msra.mxu0 %v5558
    %7132 = vmatpush.bf16.msra.mxu0 %v5542
    %7133 = vmatpush.bf16.msra.mxu0 %v5526
    %7134 = vmatpush.bf16.msra.mxu0 %v5510
    %7135 = vmatpush.bf16.msra.mxu0 %v5494
    %7136 = vmatpush.bf16.msra.mxu0 %v5478
    %7137 = vmatpush.bf16.msra.mxu0 %v5462
    %7138 = vmatpush.bf16.msra.mxu0 %v5446
    %7139 = vmatmul.bf16.gmra.mxu0 %v179
    %v7140 = vpop.f32.mrf.mxu0
    %v7141 = vadd.f32 %v7128, %v7140
    %v7142 = vpop.f32.mrf.mxu0
    %7143 = vdwg.mxu0
    %7144 = vmatpush.bf16.msra.mxu0 %v5686
    %7145 = vmatpush.bf16.msra.mxu0 %v5670
    %7146 = vmatpush.bf16.msra.mxu0 %v5654
    %7147 = vmatpush.bf16.msra.mxu0 %v5638
    %7148 = vmatpush.bf16.msra.mxu0 %v5622
    %7149 = vmatpush.bf16.msra.mxu0 %v5606
    %7150 = vmatpush.bf16.msra.mxu0 %v5590
    %7151 = vmatpush.bf16.msra.mxu0 %v5574
    %7152 = vmatmul.bf16.gmra.mxu0 %v180
    %v7153 = vpop.f32.mrf.mxu0
    %v7154 = vadd.f32 %v7141, %v7153
    %v7155 = vpop.f32.mrf.mxu0
    %7156 = vdwg.mxu0
    %7157 = vmatpush.bf16.msra.mxu0 %v5814
    %7158 = vmatpush.bf16.msra.mxu0 %v5798
    %7159 = vmatpush.bf16.msra.mxu0 %v5782
    %7160 = vmatpush.bf16.msra.mxu0 %v5766
    %7161 = vmatpush.bf16.msra.mxu0 %v5750
    %7162 = vmatpush.bf16.msra.mxu0 %v5734
    %7163 = vmatpush.bf16.msra.mxu0 %v5718
    %7164 = vmatpush.bf16.msra.mxu0 %v5702
    %7165 = vmatmul.bf16.gmra.mxu0 %v181
    %v7166 = vpop.f32.mrf.mxu0
    %v7167 = vadd.f32 %v7154, %v7166
    %v7168 = vpop.f32.mrf.mxu0
    %7169 = vdwg.mxu0
    %7170 = vmatpush.bf16.msra.mxu0 %v4919
    %7171 = vmatpush.bf16.msra.mxu0 %v4903
    %7172 = vmatpush.bf16.msra.mxu0 %v4887
    %7173 = vmatpush.bf16.msra.mxu0 %v4871
    %7174 = vmatpush.bf16.msra.mxu0 %v4855
    %7175 = vmatpush.bf16.msra.mxu0 %v4839
    %7176 = vmatpush.bf16.msra.mxu0 %v4823
    %7177 = vmatpush.bf16.msra.mxu0 %v4807
    %7178 = vmatmul.bf16.gmra.mxu0 %v164
    %v7179 = vpop.f32.mrf.mxu0
    %v7180 = vadd.f32 0.0, %v7179
    %v7181 = vpop.f32.mrf.mxu0
    %7182 = vdwg.mxu0
    %7183 = vmatpush.bf16.msra.mxu0 %v5047
    %7184 = vmatpush.bf16.msra.mxu0 %v5031
    %7185 = vmatpush.bf16.msra.mxu0 %v5015
    %7186 = vmatpush.bf16.msra.mxu0 %v4999
    %7187 = vmatpush.bf16.msra.mxu0 %v4983
    %7188 = vmatpush.bf16.msra.mxu0 %v4967
    %7189 = vmatpush.bf16.msra.mxu0 %v4951
    %7190 = vmatpush.bf16.msra.mxu0 %v4935
    %7191 = vmatmul.bf16.gmra.mxu0 %v165
    %v7192 = vpop.f32.mrf.mxu0
    %v7193 = vadd.f32 %v7180, %v7192
    %v7194 = vpop.f32.mrf.mxu0
    %7195 = vdwg.mxu0
    %7196 = vmatpush.bf16.msra.mxu0 %v5175
    %7197 = vmatpush.bf16.msra.mxu0 %v5159
    %7198 = vmatpush.bf16.msra.mxu0 %v5143
    %7199 = vmatpush.bf16.msra.mxu0 %v5127
    %7200 = vmatpush.bf16.msra.mxu0 %v5111
    %7201 = vmatpush.bf16.msra.mxu0 %v5095
    %7202 = vmatpush.bf16.msra.mxu0 %v5079
    %7203 = vmatpush.bf16.msra.mxu0 %v5063
    %7204 = vmatmul.bf16.gmra.mxu0 %v166
    %v7205 = vpop.f32.mrf.mxu0
    %v7206 = vadd.f32 %v7193, %v7205
    %v7207 = vpop.f32.mrf.mxu0
    %7208 = vdwg.mxu0
    %7209 = vmatpush.bf16.msra.mxu0 %v5303
    %7210 = vmatpush.bf16.msra.mxu0 %v5287
    %7211 = vmatpush.bf16.msra.mxu0 %v5271
    %7212 = vmatpush.bf16.msra.mxu0 %v5255
    %7213 = vmatpush.bf16.msra.mxu0 %v5239
    %7214 = vmatpush.bf16.msra.mxu0 %v5223
    %7215 = vmatpush.bf16.msra.mxu0 %v5207
    %7216 = vmatpush.bf16.msra.mxu0 %v5191
    %7217 = vmatmul.bf16.gmra.mxu0 %v167
    %v7218 = vpop.f32.mrf.mxu0
    %v7219 = vadd.f32 %v7206, %v7218
    %v7220 = vpop.f32.mrf.mxu0
    %7221 = vdwg.mxu0
    %7222 = vmatpush.bf16.msra.mxu0 %v5431
    %7223 = vmatpush.bf16.msra.mxu0 %v5415
    %7224 = vmatpush.bf16.msra.mxu0 %v5399
    %7225 = vmatpush.bf16.msra.mxu0 %v5383
    %7226 = vmatpush.bf16.msra.mxu0 %v5367
    %7227 = vmatpush.bf16.msra.mxu0 %v5351
    %7228 = vmatpush.bf16.msra.mxu0 %v5335
    %7229 = vmatpush.bf16.msra.mxu0 %v5319
    %7230 = vmatmul.bf16.gmra.mxu0 %v178
    %v7231 = vpop.f32.mrf.mxu0
    %v7232 = vadd.f32 %v7219, %v7231
    %v7233 = vpop.f32.mrf.mxu0
    %7234 = vdwg.mxu0
    %7235 = vmatpush.bf16.msra.mxu0 %v5559
    %7236 = vmatpush.bf16.msra.mxu0 %v5543
    %7237 = vmatpush.bf16.msra.mxu0 %v5527
    %7238 = vmatpush.bf16.msra.mxu0 %v5511
    %7239 = vmatpush.bf16.msra.mxu0 %v5495
    %7240 = vmatpush.bf16.msra.mxu0 %v5479
    %7241 = vmatpush.bf16.msra.mxu0 %v5463
    %7242 = vmatpush.bf16.msra.mxu0 %v5447
    %7243 = vmatmul.bf16.gmra.mxu0 %v179
    %v7244 = vpop.f32.mrf.mxu0
    %v7245 = vadd.f32 %v7232, %v7244
    %v7246 = vpop.f32.mrf.mxu0
    %7247 = vdwg.mxu0
    %7248 = vmatpush.bf16.msra.mxu0 %v5687
    %7249 = vmatpush.bf16.msra.mxu0 %v5671
    %7250 = vmatpush.bf16.msra.mxu0 %v5655
    %7251 = vmatpush.bf16.msra.mxu0 %v5639
    %7252 = vmatpush.bf16.msra.mxu0 %v5623
    %7253 = vmatpush.bf16.msra.mxu0 %v5607
    %7254 = vmatpush.bf16.msra.mxu0 %v5591
    %7255 = vmatpush.bf16.msra.mxu0 %v5575
    %7256 = vmatmul.bf16.gmra.mxu0 %v180
    %v7257 = vpop.f32.mrf.mxu0
    %v7258 = vadd.f32 %v7245, %v7257
    %v7259 = vpop.f32.mrf.mxu0
    %7260 = vdwg.mxu0
    %7261 = vmatpush.bf16.msra.mxu0 %v5815
    %7262 = vmatpush.bf16.msra.mxu0 %v5799
    %7263 = vmatpush.bf16.msra.mxu0 %v5783
    %7264 = vmatpush.bf16.msra.mxu0 %v5767
    %7265 = vmatpush.bf16.msra.mxu0 %v5751
    %7266 = vmatpush.bf16.msra.mxu0 %v5735
    %7267 = vmatpush.bf16.msra.mxu0 %v5719
    %7268 = vmatpush.bf16.msra.mxu0 %v5703
    %7269 = vmatmul.bf16.gmra.mxu0 %v181
    %v7270 = vpop.f32.mrf.mxu0
    %v7271 = vadd.f32 %v7258, %v7270
    %v7272 = vpop.f32.mrf.mxu0
    %7273 = vdwg.mxu0
    %7274 = vmatpush.bf16.msra.mxu0 %v4920
    %7275 = vmatpush.bf16.msra.mxu0 %v4904
    %7276 = vmatpush.bf16.msra.mxu0 %v4888
    %7277 = vmatpush.bf16.msra.mxu0 %v4872
    %7278 = vmatpush.bf16.msra.mxu0 %v4856
    %7279 = vmatpush.bf16.msra.mxu0 %v4840
    %7280 = vmatpush.bf16.msra.mxu0 %v4824
    %7281 = vmatpush.bf16.msra.mxu0 %v4808
    %7282 = vmatmul.bf16.gmra.mxu0 %v164
    %v7283 = vpop.f32.mrf.mxu0
    %v7284 = vadd.f32 0.0, %v7283
    %v7285 = vpop.f32.mrf.mxu0
    %7286 = vdwg.mxu0
    %7287 = vmatpush.bf16.msra.mxu0 %v5048
    %7288 = vmatpush.bf16.msra.mxu0 %v5032
    %7289 = vmatpush.bf16.msra.mxu0 %v5016
    %7290 = vmatpush.bf16.msra.mxu0 %v5000
    %7291 = vmatpush.bf16.msra.mxu0 %v4984
    %7292 = vmatpush.bf16.msra.mxu0 %v4968
    %7293 = vmatpush.bf16.msra.mxu0 %v4952
    %7294 = vmatpush.bf16.msra.mxu0 %v4936
    %7295 = vmatmul.bf16.gmra.mxu0 %v165
    %v7296 = vpop.f32.mrf.mxu0
    %v7297 = vadd.f32 %v7284, %v7296
    %v7298 = vpop.f32.mrf.mxu0
    %7299 = vdwg.mxu0
    %7300 = vmatpush.bf16.msra.mxu0 %v5176
    %7301 = vmatpush.bf16.msra.mxu0 %v5160
    %7302 = vmatpush.bf16.msra.mxu0 %v5144
    %7303 = vmatpush.bf16.msra.mxu0 %v5128
    %7304 = vmatpush.bf16.msra.mxu0 %v5112
    %7305 = vmatpush.bf16.msra.mxu0 %v5096
    %7306 = vmatpush.bf16.msra.mxu0 %v5080
    %7307 = vmatpush.bf16.msra.mxu0 %v5064
    %7308 = vmatmul.bf16.gmra.mxu0 %v166
    %v7309 = vpop.f32.mrf.mxu0
    %v7310 = vadd.f32 %v7297, %v7309
    %v7311 = vpop.f32.mrf.mxu0
    %7312 = vdwg.mxu0
    %7313 = vmatpush.bf16.msra.mxu0 %v5304
    %7314 = vmatpush.bf16.msra.mxu0 %v5288
    %7315 = vmatpush.bf16.msra.mxu0 %v5272
    %7316 = vmatpush.bf16.msra.mxu0 %v5256
    %7317 = vmatpush.bf16.msra.mxu0 %v5240
    %7318 = vmatpush.bf16.msra.mxu0 %v5224
    %7319 = vmatpush.bf16.msra.mxu0 %v5208
    %7320 = vmatpush.bf16.msra.mxu0 %v5192
    %7321 = vmatmul.bf16.gmra.mxu0 %v167
    %v7322 = vpop.f32.mrf.mxu0
    %v7323 = vadd.f32 %v7310, %v7322
    %v7324 = vpop.f32.mrf.mxu0
    %7325 = vdwg.mxu0
    %7326 = vmatpush.bf16.msra.mxu0 %v5432
    %7327 = vmatpush.bf16.msra.mxu0 %v5416
    %7328 = vmatpush.bf16.msra.mxu0 %v5400
    %7329 = vmatpush.bf16.msra.mxu0 %v5384
    %7330 = vmatpush.bf16.msra.mxu0 %v5368
    %7331 = vmatpush.bf16.msra.mxu0 %v5352
    %7332 = vmatpush.bf16.msra.mxu0 %v5336
    %7333 = vmatpush.bf16.msra.mxu0 %v5320
    %7334 = vmatmul.bf16.gmra.mxu0 %v178
    %v7335 = vpop.f32.mrf.mxu0
    %v7336 = vadd.f32 %v7323, %v7335
    %v7337 = vpop.f32.mrf.mxu0
    %7338 = vdwg.mxu0
    %7339 = vmatpush.bf16.msra.mxu0 %v5560
    %7340 = vmatpush.bf16.msra.mxu0 %v5544
    %7341 = vmatpush.bf16.msra.mxu0 %v5528
    %7342 = vmatpush.bf16.msra.mxu0 %v5512
    %7343 = vmatpush.bf16.msra.mxu0 %v5496
    %7344 = vmatpush.bf16.msra.mxu0 %v5480
    %7345 = vmatpush.bf16.msra.mxu0 %v5464
    %7346 = vmatpush.bf16.msra.mxu0 %v5448
    %7347 = vmatmul.bf16.gmra.mxu0 %v179
    %v7348 = vpop.f32.mrf.mxu0
    %v7349 = vadd.f32 %v7336, %v7348
    %v7350 = vpop.f32.mrf.mxu0
    %7351 = vdwg.mxu0
    %7352 = vmatpush.bf16.msra.mxu0 %v5688
    %7353 = vmatpush.bf16.msra.mxu0 %v5672
    %7354 = vmatpush.bf16.msra.mxu0 %v5656
    %7355 = vmatpush.bf16.msra.mxu0 %v5640
    %7356 = vmatpush.bf16.msra.mxu0 %v5624
    %7357 = vmatpush.bf16.msra.mxu0 %v5608
    %7358 = vmatpush.bf16.msra.mxu0 %v5592
    %7359 = vmatpush.bf16.msra.mxu0 %v5576
    %7360 = vmatmul.bf16.gmra.mxu0 %v180
    %v7361 = vpop.f32.mrf.mxu0
    %v7362 = vadd.f32 %v7349, %v7361
    %v7363 = vpop.f32.mrf.mxu0
    %7364 = vdwg.mxu0
    %7365 = vmatpush.bf16.msra.mxu0 %v5816
    %7366 = vmatpush.bf16.msra.mxu0 %v5800
    %7367 = vmatpush.bf16.msra.mxu0 %v5784
    %7368 = vmatpush.bf16.msra.mxu0 %v5768
    %7369 = vmatpush.bf16.msra.mxu0 %v5752
    %7370 = vmatpush.bf16.msra.mxu0 %v5736
    %7371 = vmatpush.bf16.msra.mxu0 %v5720
    %7372 = vmatpush.bf16.msra.mxu0 %v5704
    %7373 = vmatmul.bf16.gmra.mxu0 %v181
    %v7374 = vpop.f32.mrf.mxu0
    %v7375 = vadd.f32 %v7362, %v7374
    %v7376 = vpop.f32.mrf.mxu0
    %7377 = vdwg.mxu0
    %7378 = vmatpush.bf16.msra.mxu0 %v4921
    %7379 = vmatpush.bf16.msra.mxu0 %v4905
    %7380 = vmatpush.bf16.msra.mxu0 %v4889
    %7381 = vmatpush.bf16.msra.mxu0 %v4873
    %7382 = vmatpush.bf16.msra.mxu0 %v4857
    %7383 = vmatpush.bf16.msra.mxu0 %v4841
    %7384 = vmatpush.bf16.msra.mxu0 %v4825
    %7385 = vmatpush.bf16.msra.mxu0 %v4809
    %7386 = vmatmul.bf16.gmra.mxu0 %v164
    %v7387 = vpop.f32.mrf.mxu0
    %v7388 = vadd.f32 0.0, %v7387
    %v7389 = vpop.f32.mrf.mxu0
    %7390 = vdwg.mxu0
    %7391 = vmatpush.bf16.msra.mxu0 %v5049
    %7392 = vmatpush.bf16.msra.mxu0 %v5033
    %7393 = vmatpush.bf16.msra.mxu0 %v5017
    %7394 = vmatpush.bf16.msra.mxu0 %v5001
    %7395 = vmatpush.bf16.msra.mxu0 %v4985
    %7396 = vmatpush.bf16.msra.mxu0 %v4969
    %7397 = vmatpush.bf16.msra.mxu0 %v4953
    %7398 = vmatpush.bf16.msra.mxu0 %v4937
    %7399 = vmatmul.bf16.gmra.mxu0 %v165
    %v7400 = vpop.f32.mrf.mxu0
    %v7401 = vadd.f32 %v7388, %v7400
    %v7402 = vpop.f32.mrf.mxu0
    %7403 = vdwg.mxu0
    %7404 = vmatpush.bf16.msra.mxu0 %v5177
    %7405 = vmatpush.bf16.msra.mxu0 %v5161
    %7406 = vmatpush.bf16.msra.mxu0 %v5145
    %7407 = vmatpush.bf16.msra.mxu0 %v5129
    %7408 = vmatpush.bf16.msra.mxu0 %v5113
    %7409 = vmatpush.bf16.msra.mxu0 %v5097
    %7410 = vmatpush.bf16.msra.mxu0 %v5081
    %7411 = vmatpush.bf16.msra.mxu0 %v5065
    %7412 = vmatmul.bf16.gmra.mxu0 %v166
    %v7413 = vpop.f32.mrf.mxu0
    %v7414 = vadd.f32 %v7401, %v7413
    %v7415 = vpop.f32.mrf.mxu0
    %7416 = vdwg.mxu0
    %7417 = vmatpush.bf16.msra.mxu0 %v5305
    %7418 = vmatpush.bf16.msra.mxu0 %v5289
    %7419 = vmatpush.bf16.msra.mxu0 %v5273
    %7420 = vmatpush.bf16.msra.mxu0 %v5257
    %7421 = vmatpush.bf16.msra.mxu0 %v5241
    %7422 = vmatpush.bf16.msra.mxu0 %v5225
    %7423 = vmatpush.bf16.msra.mxu0 %v5209
    %7424 = vmatpush.bf16.msra.mxu0 %v5193
    %7425 = vmatmul.bf16.gmra.mxu0 %v167
    %v7426 = vpop.f32.mrf.mxu0
    %v7427 = vadd.f32 %v7414, %v7426
    %v7428 = vpop.f32.mrf.mxu0
    %7429 = vdwg.mxu0
    %7430 = vmatpush.bf16.msra.mxu0 %v5433
    %7431 = vmatpush.bf16.msra.mxu0 %v5417
    %7432 = vmatpush.bf16.msra.mxu0 %v5401
    %7433 = vmatpush.bf16.msra.mxu0 %v5385
    %7434 = vmatpush.bf16.msra.mxu0 %v5369
    %7435 = vmatpush.bf16.msra.mxu0 %v5353
    %7436 = vmatpush.bf16.msra.mxu0 %v5337
    %7437 = vmatpush.bf16.msra.mxu0 %v5321
    %7438 = vmatmul.bf16.gmra.mxu0 %v178
    %v7439 = vpop.f32.mrf.mxu0
    %v7440 = vadd.f32 %v7427, %v7439
    %v7441 = vpop.f32.mrf.mxu0
    %7442 = vdwg.mxu0
    %7443 = vmatpush.bf16.msra.mxu0 %v5561
    %7444 = vmatpush.bf16.msra.mxu0 %v5545
    %7445 = vmatpush.bf16.msra.mxu0 %v5529
    %7446 = vmatpush.bf16.msra.mxu0 %v5513
    %7447 = vmatpush.bf16.msra.mxu0 %v5497
    %7448 = vmatpush.bf16.msra.mxu0 %v5481
    %7449 = vmatpush.bf16.msra.mxu0 %v5465
    %7450 = vmatpush.bf16.msra.mxu0 %v5449
    %7451 = vmatmul.bf16.gmra.mxu0 %v179
    %v7452 = vpop.f32.mrf.mxu0
    %v7453 = vadd.f32 %v7440, %v7452
    %v7454 = vpop.f32.mrf.mxu0
    %7455 = vdwg.mxu0
    %7456 = vmatpush.bf16.msra.mxu0 %v5689
    %7457 = vmatpush.bf16.msra.mxu0 %v5673
    %7458 = vmatpush.bf16.msra.mxu0 %v5657
    %7459 = vmatpush.bf16.msra.mxu0 %v5641
    %7460 = vmatpush.bf16.msra.mxu0 %v5625
    %7461 = vmatpush.bf16.msra.mxu0 %v5609
    %7462 = vmatpush.bf16.msra.mxu0 %v5593
    %7463 = vmatpush.bf16.msra.mxu0 %v5577
    %7464 = vmatmul.bf16.gmra.mxu0 %v180
    %v7465 = vpop.f32.mrf.mxu0
    %v7466 = vadd.f32 %v7453, %v7465
    %v7467 = vpop.f32.mrf.mxu0
    %7468 = vdwg.mxu0
    %7469 = vmatpush.bf16.msra.mxu0 %v5817
    %7470 = vmatpush.bf16.msra.mxu0 %v5801
    %7471 = vmatpush.bf16.msra.mxu0 %v5785
    %7472 = vmatpush.bf16.msra.mxu0 %v5769
    %7473 = vmatpush.bf16.msra.mxu0 %v5753
    %7474 = vmatpush.bf16.msra.mxu0 %v5737
    %7475 = vmatpush.bf16.msra.mxu0 %v5721
    %7476 = vmatpush.bf16.msra.mxu0 %v5705
    %7477 = vmatmul.bf16.gmra.mxu0 %v181
    %v7478 = vpop.f32.mrf.mxu0
    %v7479 = vadd.f32 %v7466, %v7478
    %v7480 = vpop.f32.mrf.mxu0
    %7481 = vdwg.mxu0
    %v7482 = vld [vmem:[#allocation8] sm:$0xff]
    %v7483 = vld [vmem:[#allocation8 + $0x8] sm:$0xff]
    %v7486 = vperm.slane %v7482, 0
    %v7487 = vperm.slane %v7482, 1
    %v7488 = vperm.slane %v7482, 2
    %v7489 = vperm.slane %v7482, 3
    %v7490 = vperm.slane %v7482, 4
    %v7491 = vperm.slane %v7482, 5
    %v7492 = vperm.slane %v7482, 6
    %v7493 = vperm.slane %v7482, 7
    %v7494 = vperm.slane %v7483, 0
    %v7495 = vperm.slane %v7483, 1
    %v7496 = vperm.slane %v7483, 2
    %v7497 = vperm.slane %v7483, 3
    %v7498 = vperm.slane %v7483, 4
    %v7499 = vperm.slane %v7483, 5
    %v7500 = vperm.slane %v7483, 6
    %v7501 = vperm.slane %v7483, 7
    %v7518 = vmul.f32 %v5919, %v7486
    %v7519 = vmul.f32 %v6023, %v7487
    %v7520 = vmul.f32 %v6127, %v7488
    %v7521 = vmul.f32 %v6231, %v7489
    %v7522 = vmul.f32 %v6335, %v7490
    %v7523 = vmul.f32 %v6439, %v7491
    %v7524 = vmul.f32 %v6543, %v7492
    %v7525 = vmul.f32 %v6647, %v7493
    %v7526 = vmul.f32 %v6751, %v7494
    %v7527 = vmul.f32 %v6855, %v7495
    %v7528 = vmul.f32 %v6959, %v7496
    %v7529 = vmul.f32 %v7063, %v7497
    %v7530 = vmul.f32 %v7167, %v7498
    %v7531 = vmul.f32 %v7271, %v7499
    %v7532 = vmul.f32 %v7375, %v7500
    %v7533 = vmul.f32 %v7479, %v7501
    %v7534 = vld [vmem:[#allocation10] sm:$0xff]
    %v7535 = vld [vmem:[#allocation10 + $0x8] sm:$0xff]
    %v7538 = vperm.slane %v7534, 0
    %v7539 = vperm.slane %v7534, 1
    %v7540 = vperm.slane %v7534, 2
    %v7541 = vperm.slane %v7534, 3
    %v7542 = vperm.slane %v7534, 4
    %v7543 = vperm.slane %v7534, 5
    %v7544 = vperm.slane %v7534, 6
    %v7545 = vperm.slane %v7534, 7
    %v7546 = vperm.slane %v7535, 0
    %v7547 = vperm.slane %v7535, 1
    %v7548 = vperm.slane %v7535, 2
    %v7549 = vperm.slane %v7535, 3
    %v7550 = vperm.slane %v7535, 4
    %v7551 = vperm.slane %v7535, 5
    %v7552 = vperm.slane %v7535, 6
    %v7553 = vperm.slane %v7535, 7
    %v7570 = vadd.f32 %v7518, %v7538
    %v7571 = vadd.f32 %v7519, %v7539
    %v7572 = vadd.f32 %v7520, %v7540
    %v7573 = vadd.f32 %v7521, %v7541
    %v7574 = vadd.f32 %v7522, %v7542
    %v7575 = vadd.f32 %v7523, %v7543
    %v7576 = vadd.f32 %v7524, %v7544
    %v7577 = vadd.f32 %v7525, %v7545
    %v7578 = vadd.f32 %v7526, %v7546
    %v7579 = vadd.f32 %v7527, %v7547
    %v7580 = vadd.f32 %v7528, %v7548
    %v7581 = vadd.f32 %v7529, %v7549
    %v7582 = vadd.f32 %v7530, %v7550
    %v7583 = vadd.f32 %v7531, %v7551
    %v7584 = vadd.f32 %v7532, %v7552
    %v7585 = vadd.f32 %v7533, %v7553
    %v7586 = vld [vmem:[#allocation11] sm:$0xff]
    %v7587 = vld [vmem:[#allocation11 + $0x8] sm:$0xff]
    %v7588 = vld [vmem:[#allocation11 + $0x10] sm:$0xff]
    %v7589 = vld [vmem:[#allocation11 + $0x18] sm:$0xff]
    %v7590 = vld [vmem:[#allocation11 + $0x20] sm:$0xff]
    %v7591 = vld [vmem:[#allocation11 + $0x28] sm:$0xff]
    %v7592 = vld [vmem:[#allocation11 + $0x30] sm:$0xff]
    %v7593 = vld [vmem:[#allocation11 + $0x38] sm:$0xff]
    %v7594 = vld [vmem:[#allocation11 + $0x40] sm:$0xff]
    %v7595 = vld [vmem:[#allocation11 + $0x48] sm:$0xff]
    %v7596 = vld [vmem:[#allocation11 + $0x50] sm:$0xff]
    %v7597 = vld [vmem:[#allocation11 + $0x58] sm:$0xff]
    %v7598 = vld [vmem:[#allocation11 + $0x60] sm:$0xff]
    %v7599 = vld [vmem:[#allocation11 + $0x68] sm:$0xff]
    %v7600 = vld [vmem:[#allocation11 + $0x70] sm:$0xff]
    %v7601 = vld [vmem:[#allocation11 + $0x78] sm:$0xff]
    %v7602 = vld [vmem:[#allocation11 + $0x80] sm:$0xff]
    %v7603 = vld [vmem:[#allocation11 + $0x88] sm:$0xff]
    %v7604 = vld [vmem:[#allocation11 + $0x90] sm:$0xff]
    %v7605 = vld [vmem:[#allocation11 + $0x98] sm:$0xff]
    %v7606 = vld [vmem:[#allocation11 + $0xa0] sm:$0xff]
    %v7607 = vld [vmem:[#allocation11 + $0xa8] sm:$0xff]
    %v7608 = vld [vmem:[#allocation11 + $0xb0] sm:$0xff]
    %v7609 = vld [vmem:[#allocation11 + $0xb8] sm:$0xff]
    %v7610 = vld [vmem:[#allocation11 + $0xc0] sm:$0xff]
    %v7611 = vld [vmem:[#allocation11 + $0xc8] sm:$0xff]
    %v7612 = vld [vmem:[#allocation11 + $0xd0] sm:$0xff]
    %v7613 = vld [vmem:[#allocation11 + $0xd8] sm:$0xff]
    %v7614 = vld [vmem:[#allocation11 + $0xe0] sm:$0xff]
    %v7615 = vld [vmem:[#allocation11 + $0xe8] sm:$0xff]
    %v7616 = vld [vmem:[#allocation11 + $0xf0] sm:$0xff]
    %v7617 = vld [vmem:[#allocation11 + $0xf8] sm:$0xff]
    %v7618 = vld [vmem:[#allocation11 + $0x100] sm:$0xff]
    %v7619 = vld [vmem:[#allocation11 + $0x108] sm:$0xff]
    %v7620 = vld [vmem:[#allocation11 + $0x110] sm:$0xff]
    %v7621 = vld [vmem:[#allocation11 + $0x118] sm:$0xff]
    %v7622 = vld [vmem:[#allocation11 + $0x120] sm:$0xff]
    %v7623 = vld [vmem:[#allocation11 + $0x128] sm:$0xff]
    %v7624 = vld [vmem:[#allocation11 + $0x130] sm:$0xff]
    %v7625 = vld [vmem:[#allocation11 + $0x138] sm:$0xff]
    %v7626 = vld [vmem:[#allocation11 + $0x140] sm:$0xff]
    %v7627 = vld [vmem:[#allocation11 + $0x148] sm:$0xff]
    %v7628 = vld [vmem:[#allocation11 + $0x150] sm:$0xff]
    %v7629 = vld [vmem:[#allocation11 + $0x158] sm:$0xff]
    %v7630 = vld [vmem:[#allocation11 + $0x160] sm:$0xff]
    %v7631 = vld [vmem:[#allocation11 + $0x168] sm:$0xff]
    %v7632 = vld [vmem:[#allocation11 + $0x170] sm:$0xff]
    %v7633 = vld [vmem:[#allocation11 + $0x178] sm:$0xff]
    %v7634 = vld [vmem:[#allocation11 + $0x180] sm:$0xff]
    %v7635 = vld [vmem:[#allocation11 + $0x188] sm:$0xff]
    %v7636 = vld [vmem:[#allocation11 + $0x190] sm:$0xff]
    %v7637 = vld [vmem:[#allocation11 + $0x198] sm:$0xff]
    %v7638 = vld [vmem:[#allocation11 + $0x1a0] sm:$0xff]
    %v7639 = vld [vmem:[#allocation11 + $0x1a8] sm:$0xff]
    %v7640 = vld [vmem:[#allocation11 + $0x1b0] sm:$0xff]
    %v7641 = vld [vmem:[#allocation11 + $0x1b8] sm:$0xff]
    %v7642 = vld [vmem:[#allocation11 + $0x1c0] sm:$0xff]
    %v7643 = vld [vmem:[#allocation11 + $0x1c8] sm:$0xff]
    %v7644 = vld [vmem:[#allocation11 + $0x1d0] sm:$0xff]
    %v7645 = vld [vmem:[#allocation11 + $0x1d8] sm:$0xff]
    %v7646 = vld [vmem:[#allocation11 + $0x1e0] sm:$0xff]
    %v7647 = vld [vmem:[#allocation11 + $0x1e8] sm:$0xff]
    %v7648 = vld [vmem:[#allocation11 + $0x1f0] sm:$0xff]
    %v7649 = vld [vmem:[#allocation11 + $0x1f8] sm:$0xff]
    %v7650 = vld [vmem:[#allocation11 + $0x200] sm:$0xff]
    %v7651 = vld [vmem:[#allocation11 + $0x208] sm:$0xff]
    %v7652 = vld [vmem:[#allocation11 + $0x210] sm:$0xff]
    %v7653 = vld [vmem:[#allocation11 + $0x218] sm:$0xff]
    %v7654 = vld [vmem:[#allocation11 + $0x220] sm:$0xff]
    %v7655 = vld [vmem:[#allocation11 + $0x228] sm:$0xff]
    %v7656 = vld [vmem:[#allocation11 + $0x230] sm:$0xff]
    %v7657 = vld [vmem:[#allocation11 + $0x238] sm:$0xff]
    %v7658 = vld [vmem:[#allocation11 + $0x240] sm:$0xff]
    %v7659 = vld [vmem:[#allocation11 + $0x248] sm:$0xff]
    %v7660 = vld [vmem:[#allocation11 + $0x250] sm:$0xff]
    %v7661 = vld [vmem:[#allocation11 + $0x258] sm:$0xff]
    %v7662 = vld [vmem:[#allocation11 + $0x260] sm:$0xff]
    %v7663 = vld [vmem:[#allocation11 + $0x268] sm:$0xff]
    %v7664 = vld [vmem:[#allocation11 + $0x270] sm:$0xff]
    %v7665 = vld [vmem:[#allocation11 + $0x278] sm:$0xff]
    %v7666 = vld [vmem:[#allocation11 + $0x280] sm:$0xff]
    %v7667 = vld [vmem:[#allocation11 + $0x288] sm:$0xff]
    %v7668 = vld [vmem:[#allocation11 + $0x290] sm:$0xff]
    %v7669 = vld [vmem:[#allocation11 + $0x298] sm:$0xff]
    %v7670 = vld [vmem:[#allocation11 + $0x2a0] sm:$0xff]
    %v7671 = vld [vmem:[#allocation11 + $0x2a8] sm:$0xff]
    %v7672 = vld [vmem:[#allocation11 + $0x2b0] sm:$0xff]
    %v7673 = vld [vmem:[#allocation11 + $0x2b8] sm:$0xff]
    %v7674 = vld [vmem:[#allocation11 + $0x2c0] sm:$0xff]
    %v7675 = vld [vmem:[#allocation11 + $0x2c8] sm:$0xff]
    %v7676 = vld [vmem:[#allocation11 + $0x2d0] sm:$0xff]
    %v7677 = vld [vmem:[#allocation11 + $0x2d8] sm:$0xff]
    %v7678 = vld [vmem:[#allocation11 + $0x2e0] sm:$0xff]
    %v7679 = vld [vmem:[#allocation11 + $0x2e8] sm:$0xff]
    %v7680 = vld [vmem:[#allocation11 + $0x2f0] sm:$0xff]
    %v7681 = vld [vmem:[#allocation11 + $0x2f8] sm:$0xff]
    %v7682 = vld [vmem:[#allocation11 + $0x300] sm:$0xff]
    %v7683 = vld [vmem:[#allocation11 + $0x308] sm:$0xff]
    %v7684 = vld [vmem:[#allocation11 + $0x310] sm:$0xff]
    %v7685 = vld [vmem:[#allocation11 + $0x318] sm:$0xff]
    %v7686 = vld [vmem:[#allocation11 + $0x320] sm:$0xff]
    %v7687 = vld [vmem:[#allocation11 + $0x328] sm:$0xff]
    %v7688 = vld [vmem:[#allocation11 + $0x330] sm:$0xff]
    %v7689 = vld [vmem:[#allocation11 + $0x338] sm:$0xff]
    %v7690 = vld [vmem:[#allocation11 + $0x340] sm:$0xff]
    %v7691 = vld [vmem:[#allocation11 + $0x348] sm:$0xff]
    %v7692 = vld [vmem:[#allocation11 + $0x350] sm:$0xff]
    %v7693 = vld [vmem:[#allocation11 + $0x358] sm:$0xff]
    %v7694 = vld [vmem:[#allocation11 + $0x360] sm:$0xff]
    %v7695 = vld [vmem:[#allocation11 + $0x368] sm:$0xff]
    %v7696 = vld [vmem:[#allocation11 + $0x370] sm:$0xff]
    %v7697 = vld [vmem:[#allocation11 + $0x378] sm:$0xff]
    %v7698 = vld [vmem:[#allocation11 + $0x380] sm:$0xff]
    %v7699 = vld [vmem:[#allocation11 + $0x388] sm:$0xff]
    %v7700 = vld [vmem:[#allocation11 + $0x390] sm:$0xff]
    %v7701 = vld [vmem:[#allocation11 + $0x398] sm:$0xff]
    %v7702 = vld [vmem:[#allocation11 + $0x3a0] sm:$0xff]
    %v7703 = vld [vmem:[#allocation11 + $0x3a8] sm:$0xff]
    %v7704 = vld [vmem:[#allocation11 + $0x3b0] sm:$0xff]
    %v7705 = vld [vmem:[#allocation11 + $0x3b8] sm:$0xff]
    %v7706 = vld [vmem:[#allocation11 + $0x3c0] sm:$0xff]
    %v7707 = vld [vmem:[#allocation11 + $0x3c8] sm:$0xff]
    %v7708 = vld [vmem:[#allocation11 + $0x3d0] sm:$0xff]
    %v7709 = vld [vmem:[#allocation11 + $0x3d8] sm:$0xff]
    %v7710 = vld [vmem:[#allocation11 + $0x3e0] sm:$0xff]
    %v7711 = vld [vmem:[#allocation11 + $0x3e8] sm:$0xff]
    %v7712 = vld [vmem:[#allocation11 + $0x3f0] sm:$0xff]
    %v7713 = vld [vmem:[#allocation11 + $0x3f8] sm:$0xff]
    %v7714 = vld [vmem:[#allocation11 + $0x400] sm:$0xff]
    %v7715 = vld [vmem:[#allocation11 + $0x408] sm:$0xff]
    %v7716 = vld [vmem:[#allocation11 + $0x410] sm:$0xff]
    %v7717 = vld [vmem:[#allocation11 + $0x418] sm:$0xff]
    %v7718 = vld [vmem:[#allocation11 + $0x420] sm:$0xff]
    %v7719 = vld [vmem:[#allocation11 + $0x428] sm:$0xff]
    %v7720 = vld [vmem:[#allocation11 + $0x430] sm:$0xff]
    %v7721 = vld [vmem:[#allocation11 + $0x438] sm:$0xff]
    %v7722 = vld [vmem:[#allocation11 + $0x440] sm:$0xff]
    %v7723 = vld [vmem:[#allocation11 + $0x448] sm:$0xff]
    %v7724 = vld [vmem:[#allocation11 + $0x450] sm:$0xff]
    %v7725 = vld [vmem:[#allocation11 + $0x458] sm:$0xff]
    %v7726 = vld [vmem:[#allocation11 + $0x460] sm:$0xff]
    %v7727 = vld [vmem:[#allocation11 + $0x468] sm:$0xff]
    %v7728 = vld [vmem:[#allocation11 + $0x470] sm:$0xff]
    %v7729 = vld [vmem:[#allocation11 + $0x478] sm:$0xff]
    %v7730 = vld [vmem:[#allocation11 + $0x480] sm:$0xff]
    %v7731 = vld [vmem:[#allocation11 + $0x488] sm:$0xff]
    %v7732 = vld [vmem:[#allocation11 + $0x490] sm:$0xff]
    %v7733 = vld [vmem:[#allocation11 + $0x498] sm:$0xff]
    %v7734 = vld [vmem:[#allocation11 + $0x4a0] sm:$0xff]
    %v7735 = vld [vmem:[#allocation11 + $0x4a8] sm:$0xff]
    %v7736 = vld [vmem:[#allocation11 + $0x4b0] sm:$0xff]
    %v7737 = vld [vmem:[#allocation11 + $0x4b8] sm:$0xff]
    %v7738 = vld [vmem:[#allocation11 + $0x4c0] sm:$0xff]
    %v7739 = vld [vmem:[#allocation11 + $0x4c8] sm:$0xff]
    %v7740 = vld [vmem:[#allocation11 + $0x4d0] sm:$0xff]
    %v7741 = vld [vmem:[#allocation11 + $0x4d8] sm:$0xff]
    %v7742 = vld [vmem:[#allocation11 + $0x4e0] sm:$0xff]
    %v7743 = vld [vmem:[#allocation11 + $0x4e8] sm:$0xff]
    %v7744 = vld [vmem:[#allocation11 + $0x4f0] sm:$0xff]
    %v7745 = vld [vmem:[#allocation11 + $0x4f8] sm:$0xff]
    %v7746 = vld [vmem:[#allocation11 + $0x500] sm:$0xff]
    %v7747 = vld [vmem:[#allocation11 + $0x508] sm:$0xff]
    %v7748 = vld [vmem:[#allocation11 + $0x510] sm:$0xff]
    %v7749 = vld [vmem:[#allocation11 + $0x518] sm:$0xff]
    %v7750 = vld [vmem:[#allocation11 + $0x520] sm:$0xff]
    %v7751 = vld [vmem:[#allocation11 + $0x528] sm:$0xff]
    %v7752 = vld [vmem:[#allocation11 + $0x530] sm:$0xff]
    %v7753 = vld [vmem:[#allocation11 + $0x538] sm:$0xff]
    %v7754 = vld [vmem:[#allocation11 + $0x540] sm:$0xff]
    %v7755 = vld [vmem:[#allocation11 + $0x548] sm:$0xff]
    %v7756 = vld [vmem:[#allocation11 + $0x550] sm:$0xff]
    %v7757 = vld [vmem:[#allocation11 + $0x558] sm:$0xff]
    %v7758 = vld [vmem:[#allocation11 + $0x560] sm:$0xff]
    %v7759 = vld [vmem:[#allocation11 + $0x568] sm:$0xff]
    %v7760 = vld [vmem:[#allocation11 + $0x570] sm:$0xff]
    %v7761 = vld [vmem:[#allocation11 + $0x578] sm:$0xff]
    %v7762 = vld [vmem:[#allocation11 + $0x580] sm:$0xff]
    %v7763 = vld [vmem:[#allocation11 + $0x588] sm:$0xff]
    %v7764 = vld [vmem:[#allocation11 + $0x590] sm:$0xff]
    %v7765 = vld [vmem:[#allocation11 + $0x598] sm:$0xff]
    %v7766 = vld [vmem:[#allocation11 + $0x5a0] sm:$0xff]
    %v7767 = vld [vmem:[#allocation11 + $0x5a8] sm:$0xff]
    %v7768 = vld [vmem:[#allocation11 + $0x5b0] sm:$0xff]
    %v7769 = vld [vmem:[#allocation11 + $0x5b8] sm:$0xff]
    %v7770 = vld [vmem:[#allocation11 + $0x5c0] sm:$0xff]
    %v7771 = vld [vmem:[#allocation11 + $0x5c8] sm:$0xff]
    %v7772 = vld [vmem:[#allocation11 + $0x5d0] sm:$0xff]
    %v7773 = vld [vmem:[#allocation11 + $0x5d8] sm:$0xff]
    %v7774 = vld [vmem:[#allocation11 + $0x5e0] sm:$0xff]
    %v7775 = vld [vmem:[#allocation11 + $0x5e8] sm:$0xff]
    %v7776 = vld [vmem:[#allocation11 + $0x5f0] sm:$0xff]
    %v7777 = vld [vmem:[#allocation11 + $0x5f8] sm:$0xff]
    %v7778 = vld [vmem:[#allocation11 + $0x600] sm:$0xff]
    %v7779 = vld [vmem:[#allocation11 + $0x608] sm:$0xff]
    %v7780 = vld [vmem:[#allocation11 + $0x610] sm:$0xff]
    %v7781 = vld [vmem:[#allocation11 + $0x618] sm:$0xff]
    %v7782 = vld [vmem:[#allocation11 + $0x620] sm:$0xff]
    %v7783 = vld [vmem:[#allocation11 + $0x628] sm:$0xff]
    %v7784 = vld [vmem:[#allocation11 + $0x630] sm:$0xff]
    %v7785 = vld [vmem:[#allocation11 + $0x638] sm:$0xff]
    %v7786 = vld [vmem:[#allocation11 + $0x640] sm:$0xff]
    %v7787 = vld [vmem:[#allocation11 + $0x648] sm:$0xff]
    %v7788 = vld [vmem:[#allocation11 + $0x650] sm:$0xff]
    %v7789 = vld [vmem:[#allocation11 + $0x658] sm:$0xff]
    %v7790 = vld [vmem:[#allocation11 + $0x660] sm:$0xff]
    %v7791 = vld [vmem:[#allocation11 + $0x668] sm:$0xff]
    %v7792 = vld [vmem:[#allocation11 + $0x670] sm:$0xff]
    %v7793 = vld [vmem:[#allocation11 + $0x678] sm:$0xff]
    %v7794 = vld [vmem:[#allocation11 + $0x680] sm:$0xff]
    %v7795 = vld [vmem:[#allocation11 + $0x688] sm:$0xff]
    %v7796 = vld [vmem:[#allocation11 + $0x690] sm:$0xff]
    %v7797 = vld [vmem:[#allocation11 + $0x698] sm:$0xff]
    %v7798 = vld [vmem:[#allocation11 + $0x6a0] sm:$0xff]
    %v7799 = vld [vmem:[#allocation11 + $0x6a8] sm:$0xff]
    %v7800 = vld [vmem:[#allocation11 + $0x6b0] sm:$0xff]
    %v7801 = vld [vmem:[#allocation11 + $0x6b8] sm:$0xff]
    %v7802 = vld [vmem:[#allocation11 + $0x6c0] sm:$0xff]
    %v7803 = vld [vmem:[#allocation11 + $0x6c8] sm:$0xff]
    %v7804 = vld [vmem:[#allocation11 + $0x6d0] sm:$0xff]
    %v7805 = vld [vmem:[#allocation11 + $0x6d8] sm:$0xff]
    %v7806 = vld [vmem:[#allocation11 + $0x6e0] sm:$0xff]
    %v7807 = vld [vmem:[#allocation11 + $0x6e8] sm:$0xff]
    %v7808 = vld [vmem:[#allocation11 + $0x6f0] sm:$0xff]
    %v7809 = vld [vmem:[#allocation11 + $0x6f8] sm:$0xff]
    %v7810 = vld [vmem:[#allocation11 + $0x700] sm:$0xff]
    %v7811 = vld [vmem:[#allocation11 + $0x708] sm:$0xff]
    %v7812 = vld [vmem:[#allocation11 + $0x710] sm:$0xff]
    %v7813 = vld [vmem:[#allocation11 + $0x718] sm:$0xff]
    %v7814 = vld [vmem:[#allocation11 + $0x720] sm:$0xff]
    %v7815 = vld [vmem:[#allocation11 + $0x728] sm:$0xff]
    %v7816 = vld [vmem:[#allocation11 + $0x730] sm:$0xff]
    %v7817 = vld [vmem:[#allocation11 + $0x738] sm:$0xff]
    %v7818 = vld [vmem:[#allocation11 + $0x740] sm:$0xff]
    %v7819 = vld [vmem:[#allocation11 + $0x748] sm:$0xff]
    %v7820 = vld [vmem:[#allocation11 + $0x750] sm:$0xff]
    %v7821 = vld [vmem:[#allocation11 + $0x758] sm:$0xff]
    %v7822 = vld [vmem:[#allocation11 + $0x760] sm:$0xff]
    %v7823 = vld [vmem:[#allocation11 + $0x768] sm:$0xff]
    %v7824 = vld [vmem:[#allocation11 + $0x770] sm:$0xff]
    %v7825 = vld [vmem:[#allocation11 + $0x778] sm:$0xff]
    %v7826 = vld [vmem:[#allocation11 + $0x780] sm:$0xff]
    %v7827 = vld [vmem:[#allocation11 + $0x788] sm:$0xff]
    %v7828 = vld [vmem:[#allocation11 + $0x790] sm:$0xff]
    %v7829 = vld [vmem:[#allocation11 + $0x798] sm:$0xff]
    %v7830 = vld [vmem:[#allocation11 + $0x7a0] sm:$0xff]
    %v7831 = vld [vmem:[#allocation11 + $0x7a8] sm:$0xff]
    %v7832 = vld [vmem:[#allocation11 + $0x7b0] sm:$0xff]
    %v7833 = vld [vmem:[#allocation11 + $0x7b8] sm:$0xff]
    %v7834 = vld [vmem:[#allocation11 + $0x7c0] sm:$0xff]
    %v7835 = vld [vmem:[#allocation11 + $0x7c8] sm:$0xff]
    %v7836 = vld [vmem:[#allocation11 + $0x7d0] sm:$0xff]
    %v7837 = vld [vmem:[#allocation11 + $0x7d8] sm:$0xff]
    %v7838 = vld [vmem:[#allocation11 + $0x7e0] sm:$0xff]
    %v7839 = vld [vmem:[#allocation11 + $0x7e8] sm:$0xff]
    %v7840 = vld [vmem:[#allocation11 + $0x7f0] sm:$0xff]
    %v7841 = vld [vmem:[#allocation11 + $0x7f8] sm:$0xff]
    %v7842 = vunpack.c.0.s8 %v7586
    %v7843 = vunpack.c.0.s8 %v7587
    %v7844 = vunpack.c.0.s8 %v7588
    %v7845 = vunpack.c.0.s8 %v7589
    %v7846 = vunpack.c.1.s8 %v7586
    %v7847 = vunpack.c.1.s8 %v7587
    %v7848 = vunpack.c.1.s8 %v7588
    %v7849 = vunpack.c.1.s8 %v7589
    %v7850 = vunpack.c.2.s8 %v7586
    %v7851 = vunpack.c.2.s8 %v7587
    %v7852 = vunpack.c.2.s8 %v7588
    %v7853 = vunpack.c.2.s8 %v7589
    %v7854 = vunpack.c.3.s8 %v7586
    %v7855 = vunpack.c.3.s8 %v7587
    %v7856 = vunpack.c.3.s8 %v7588
    %v7857 = vunpack.c.3.s8 %v7589
    %v7858 = vunpack.c.0.s8 %v7590
    %v7859 = vunpack.c.0.s8 %v7591
    %v7860 = vunpack.c.0.s8 %v7592
    %v7861 = vunpack.c.0.s8 %v7593
    %v7862 = vunpack.c.1.s8 %v7590
    %v7863 = vunpack.c.1.s8 %v7591
    %v7864 = vunpack.c.1.s8 %v7592
    %v7865 = vunpack.c.1.s8 %v7593
    %v7866 = vunpack.c.2.s8 %v7590
    %v7867 = vunpack.c.2.s8 %v7591
    %v7868 = vunpack.c.2.s8 %v7592
    %v7869 = vunpack.c.2.s8 %v7593
    %v7870 = vunpack.c.3.s8 %v7590
    %v7871 = vunpack.c.3.s8 %v7591
    %v7872 = vunpack.c.3.s8 %v7592
    %v7873 = vunpack.c.3.s8 %v7593
    %v7874 = vunpack.c.0.s8 %v7594
    %v7875 = vunpack.c.0.s8 %v7595
    %v7876 = vunpack.c.0.s8 %v7596
    %v7877 = vunpack.c.0.s8 %v7597
    %v7878 = vunpack.c.1.s8 %v7594
    %v7879 = vunpack.c.1.s8 %v7595
    %v7880 = vunpack.c.1.s8 %v7596
    %v7881 = vunpack.c.1.s8 %v7597
    %v7882 = vunpack.c.2.s8 %v7594
    %v7883 = vunpack.c.2.s8 %v7595
    %v7884 = vunpack.c.2.s8 %v7596
    %v7885 = vunpack.c.2.s8 %v7597
    %v7886 = vunpack.c.3.s8 %v7594
    %v7887 = vunpack.c.3.s8 %v7595
    %v7888 = vunpack.c.3.s8 %v7596
    %v7889 = vunpack.c.3.s8 %v7597
    %v7890 = vunpack.c.0.s8 %v7598
    %v7891 = vunpack.c.0.s8 %v7599
    %v7892 = vunpack.c.0.s8 %v7600
    %v7893 = vunpack.c.0.s8 %v7601
    %v7894 = vunpack.c.1.s8 %v7598
    %v7895 = vunpack.c.1.s8 %v7599
    %v7896 = vunpack.c.1.s8 %v7600
    %v7897 = vunpack.c.1.s8 %v7601
    %v7898 = vunpack.c.2.s8 %v7598
    %v7899 = vunpack.c.2.s8 %v7599
    %v7900 = vunpack.c.2.s8 %v7600
    %v7901 = vunpack.c.2.s8 %v7601
    %v7902 = vunpack.c.3.s8 %v7598
    %v7903 = vunpack.c.3.s8 %v7599
    %v7904 = vunpack.c.3.s8 %v7600
    %v7905 = vunpack.c.3.s8 %v7601
    %v7906 = vunpack.c.0.s8 %v7602
    %v7907 = vunpack.c.0.s8 %v7603
    %v7908 = vunpack.c.0.s8 %v7604
    %v7909 = vunpack.c.0.s8 %v7605
    %v7910 = vunpack.c.1.s8 %v7602
    %v7911 = vunpack.c.1.s8 %v7603
    %v7912 = vunpack.c.1.s8 %v7604
    %v7913 = vunpack.c.1.s8 %v7605
    %v7914 = vunpack.c.2.s8 %v7602
    %v7915 = vunpack.c.2.s8 %v7603
    %v7916 = vunpack.c.2.s8 %v7604
    %v7917 = vunpack.c.2.s8 %v7605
    %v7918 = vunpack.c.3.s8 %v7602
    %v7919 = vunpack.c.3.s8 %v7603
    %v7920 = vunpack.c.3.s8 %v7604
    %v7921 = vunpack.c.3.s8 %v7605
    %v7922 = vunpack.c.0.s8 %v7606
    %v7923 = vunpack.c.0.s8 %v7607
    %v7924 = vunpack.c.0.s8 %v7608
    %v7925 = vunpack.c.0.s8 %v7609
    %v7926 = vunpack.c.1.s8 %v7606
    %v7927 = vunpack.c.1.s8 %v7607
    %v7928 = vunpack.c.1.s8 %v7608
    %v7929 = vunpack.c.1.s8 %v7609
    %v7930 = vunpack.c.2.s8 %v7606
    %v7931 = vunpack.c.2.s8 %v7607
    %v7932 = vunpack.c.2.s8 %v7608
    %v7933 = vunpack.c.2.s8 %v7609
    %v7934 = vunpack.c.3.s8 %v7606
    %v7935 = vunpack.c.3.s8 %v7607
    %v7936 = vunpack.c.3.s8 %v7608
    %v7937 = vunpack.c.3.s8 %v7609
    %v7938 = vunpack.c.0.s8 %v7610
    %v7939 = vunpack.c.0.s8 %v7611
    %v7940 = vunpack.c.0.s8 %v7612
    %v7941 = vunpack.c.0.s8 %v7613
    %v7942 = vunpack.c.1.s8 %v7610
    %v7943 = vunpack.c.1.s8 %v7611
    %v7944 = vunpack.c.1.s8 %v7612
    %v7945 = vunpack.c.1.s8 %v7613
    %v7946 = vunpack.c.2.s8 %v7610
    %v7947 = vunpack.c.2.s8 %v7611
    %v7948 = vunpack.c.2.s8 %v7612
    %v7949 = vunpack.c.2.s8 %v7613
    %v7950 = vunpack.c.3.s8 %v7610
    %v7951 = vunpack.c.3.s8 %v7611
    %v7952 = vunpack.c.3.s8 %v7612
    %v7953 = vunpack.c.3.s8 %v7613
    %v7954 = vunpack.c.0.s8 %v7614
    %v7955 = vunpack.c.0.s8 %v7615
    %v7956 = vunpack.c.0.s8 %v7616
    %v7957 = vunpack.c.0.s8 %v7617
    %v7958 = vunpack.c.1.s8 %v7614
    %v7959 = vunpack.c.1.s8 %v7615
    %v7960 = vunpack.c.1.s8 %v7616
    %v7961 = vunpack.c.1.s8 %v7617
    %v7962 = vunpack.c.2.s8 %v7614
    %v7963 = vunpack.c.2.s8 %v7615
    %v7964 = vunpack.c.2.s8 %v7616
    %v7965 = vunpack.c.2.s8 %v7617
    %v7966 = vunpack.c.3.s8 %v7614
    %v7967 = vunpack.c.3.s8 %v7615
    %v7968 = vunpack.c.3.s8 %v7616
    %v7969 = vunpack.c.3.s8 %v7617
    %v7970 = vunpack.c.0.s8 %v7618
    %v7971 = vunpack.c.0.s8 %v7619
    %v7972 = vunpack.c.0.s8 %v7620
    %v7973 = vunpack.c.0.s8 %v7621
    %v7974 = vunpack.c.1.s8 %v7618
    %v7975 = vunpack.c.1.s8 %v7619
    %v7976 = vunpack.c.1.s8 %v7620
    %v7977 = vunpack.c.1.s8 %v7621
    %v7978 = vunpack.c.2.s8 %v7618
    %v7979 = vunpack.c.2.s8 %v7619
    %v7980 = vunpack.c.2.s8 %v7620
    %v7981 = vunpack.c.2.s8 %v7621
    %v7982 = vunpack.c.3.s8 %v7618
    %v7983 = vunpack.c.3.s8 %v7619
    %v7984 = vunpack.c.3.s8 %v7620
    %v7985 = vunpack.c.3.s8 %v7621
    %v7986 = vunpack.c.0.s8 %v7622
    %v7987 = vunpack.c.0.s8 %v7623
    %v7988 = vunpack.c.0.s8 %v7624
    %v7989 = vunpack.c.0.s8 %v7625
    %v7990 = vunpack.c.1.s8 %v7622
    %v7991 = vunpack.c.1.s8 %v7623
    %v7992 = vunpack.c.1.s8 %v7624
    %v7993 = vunpack.c.1.s8 %v7625
    %v7994 = vunpack.c.2.s8 %v7622
    %v7995 = vunpack.c.2.s8 %v7623
    %v7996 = vunpack.c.2.s8 %v7624
    %v7997 = vunpack.c.2.s8 %v7625
    %v7998 = vunpack.c.3.s8 %v7622
    %v7999 = vunpack.c.3.s8 %v7623
    %v8000 = vunpack.c.3.s8 %v7624
    %v8001 = vunpack.c.3.s8 %v7625
    %v8002 = vunpack.c.0.s8 %v7626
    %v8003 = vunpack.c.0.s8 %v7627
    %v8004 = vunpack.c.0.s8 %v7628
    %v8005 = vunpack.c.0.s8 %v7629
    %v8006 = vunpack.c.1.s8 %v7626
    %v8007 = vunpack.c.1.s8 %v7627
    %v8008 = vunpack.c.1.s8 %v7628
    %v8009 = vunpack.c.1.s8 %v7629
    %v8010 = vunpack.c.2.s8 %v7626
    %v8011 = vunpack.c.2.s8 %v7627
    %v8012 = vunpack.c.2.s8 %v7628
    %v8013 = vunpack.c.2.s8 %v7629
    %v8014 = vunpack.c.3.s8 %v7626
    %v8015 = vunpack.c.3.s8 %v7627
    %v8016 = vunpack.c.3.s8 %v7628
    %v8017 = vunpack.c.3.s8 %v7629
    %v8018 = vunpack.c.0.s8 %v7630
    %v8019 = vunpack.c.0.s8 %v7631
    %v8020 = vunpack.c.0.s8 %v7632
    %v8021 = vunpack.c.0.s8 %v7633
    %v8022 = vunpack.c.1.s8 %v7630
    %v8023 = vunpack.c.1.s8 %v7631
    %v8024 = vunpack.c.1.s8 %v7632
    %v8025 = vunpack.c.1.s8 %v7633
    %v8026 = vunpack.c.2.s8 %v7630
    %v8027 = vunpack.c.2.s8 %v7631
    %v8028 = vunpack.c.2.s8 %v7632
    %v8029 = vunpack.c.2.s8 %v7633
    %v8030 = vunpack.c.3.s8 %v7630
    %v8031 = vunpack.c.3.s8 %v7631
    %v8032 = vunpack.c.3.s8 %v7632
    %v8033 = vunpack.c.3.s8 %v7633
    %v8034 = vunpack.c.0.s8 %v7634
    %v8035 = vunpack.c.0.s8 %v7635
    %v8036 = vunpack.c.0.s8 %v7636
    %v8037 = vunpack.c.0.s8 %v7637
    %v8038 = vunpack.c.1.s8 %v7634
    %v8039 = vunpack.c.1.s8 %v7635
    %v8040 = vunpack.c.1.s8 %v7636
    %v8041 = vunpack.c.1.s8 %v7637
    %v8042 = vunpack.c.2.s8 %v7634
    %v8043 = vunpack.c.2.s8 %v7635
    %v8044 = vunpack.c.2.s8 %v7636
    %v8045 = vunpack.c.2.s8 %v7637
    %v8046 = vunpack.c.3.s8 %v7634
    %v8047 = vunpack.c.3.s8 %v7635
    %v8048 = vunpack.c.3.s8 %v7636
    %v8049 = vunpack.c.3.s8 %v7637
    %v8050 = vunpack.c.0.s8 %v7638
    %v8051 = vunpack.c.0.s8 %v7639
    %v8052 = vunpack.c.0.s8 %v7640
    %v8053 = vunpack.c.0.s8 %v7641
    %v8054 = vunpack.c.1.s8 %v7638
    %v8055 = vunpack.c.1.s8 %v7639
    %v8056 = vunpack.c.1.s8 %v7640
    %v8057 = vunpack.c.1.s8 %v7641
    %v8058 = vunpack.c.2.s8 %v7638
    %v8059 = vunpack.c.2.s8 %v7639
    %v8060 = vunpack.c.2.s8 %v7640
    %v8061 = vunpack.c.2.s8 %v7641
    %v8062 = vunpack.c.3.s8 %v7638
    %v8063 = vunpack.c.3.s8 %v7639
    %v8064 = vunpack.c.3.s8 %v7640
    %v8065 = vunpack.c.3.s8 %v7641
    %v8066 = vunpack.c.0.s8 %v7642
    %v8067 = vunpack.c.0.s8 %v7643
    %v8068 = vunpack.c.0.s8 %v7644
    %v8069 = vunpack.c.0.s8 %v7645
    %v8070 = vunpack.c.1.s8 %v7642
    %v8071 = vunpack.c.1.s8 %v7643
    %v8072 = vunpack.c.1.s8 %v7644
    %v8073 = vunpack.c.1.s8 %v7645
    %v8074 = vunpack.c.2.s8 %v7642
    %v8075 = vunpack.c.2.s8 %v7643
    %v8076 = vunpack.c.2.s8 %v7644
    %v8077 = vunpack.c.2.s8 %v7645
    %v8078 = vunpack.c.3.s8 %v7642
    %v8079 = vunpack.c.3.s8 %v7643
    %v8080 = vunpack.c.3.s8 %v7644
    %v8081 = vunpack.c.3.s8 %v7645
    %v8082 = vunpack.c.0.s8 %v7646
    %v8083 = vunpack.c.0.s8 %v7647
    %v8084 = vunpack.c.0.s8 %v7648
    %v8085 = vunpack.c.0.s8 %v7649
    %v8086 = vunpack.c.1.s8 %v7646
    %v8087 = vunpack.c.1.s8 %v7647
    %v8088 = vunpack.c.1.s8 %v7648
    %v8089 = vunpack.c.1.s8 %v7649
    %v8090 = vunpack.c.2.s8 %v7646
    %v8091 = vunpack.c.2.s8 %v7647
    %v8092 = vunpack.c.2.s8 %v7648
    %v8093 = vunpack.c.2.s8 %v7649
    %v8094 = vunpack.c.3.s8 %v7646
    %v8095 = vunpack.c.3.s8 %v7647
    %v8096 = vunpack.c.3.s8 %v7648
    %v8097 = vunpack.c.3.s8 %v7649
    %v8098 = vunpack.c.0.s8 %v7650
    %v8099 = vunpack.c.0.s8 %v7651
    %v8100 = vunpack.c.0.s8 %v7652
    %v8101 = vunpack.c.0.s8 %v7653
    %v8102 = vunpack.c.1.s8 %v7650
    %v8103 = vunpack.c.1.s8 %v7651
    %v8104 = vunpack.c.1.s8 %v7652
    %v8105 = vunpack.c.1.s8 %v7653
    %v8106 = vunpack.c.2.s8 %v7650
    %v8107 = vunpack.c.2.s8 %v7651
    %v8108 = vunpack.c.2.s8 %v7652
    %v8109 = vunpack.c.2.s8 %v7653
    %v8110 = vunpack.c.3.s8 %v7650
    %v8111 = vunpack.c.3.s8 %v7651
    %v8112 = vunpack.c.3.s8 %v7652
    %v8113 = vunpack.c.3.s8 %v7653
    %v8114 = vunpack.c.0.s8 %v7654
    %v8115 = vunpack.c.0.s8 %v7655
    %v8116 = vunpack.c.0.s8 %v7656
    %v8117 = vunpack.c.0.s8 %v7657
    %v8118 = vunpack.c.1.s8 %v7654
    %v8119 = vunpack.c.1.s8 %v7655
    %v8120 = vunpack.c.1.s8 %v7656
    %v8121 = vunpack.c.1.s8 %v7657
    %v8122 = vunpack.c.2.s8 %v7654
    %v8123 = vunpack.c.2.s8 %v7655
    %v8124 = vunpack.c.2.s8 %v7656
    %v8125 = vunpack.c.2.s8 %v7657
    %v8126 = vunpack.c.3.s8 %v7654
    %v8127 = vunpack.c.3.s8 %v7655
    %v8128 = vunpack.c.3.s8 %v7656
    %v8129 = vunpack.c.3.s8 %v7657
    %v8130 = vunpack.c.0.s8 %v7658
    %v8131 = vunpack.c.0.s8 %v7659
    %v8132 = vunpack.c.0.s8 %v7660
    %v8133 = vunpack.c.0.s8 %v7661
    %v8134 = vunpack.c.1.s8 %v7658
    %v8135 = vunpack.c.1.s8 %v7659
    %v8136 = vunpack.c.1.s8 %v7660
    %v8137 = vunpack.c.1.s8 %v7661
    %v8138 = vunpack.c.2.s8 %v7658
    %v8139 = vunpack.c.2.s8 %v7659
    %v8140 = vunpack.c.2.s8 %v7660
    %v8141 = vunpack.c.2.s8 %v7661
    %v8142 = vunpack.c.3.s8 %v7658
    %v8143 = vunpack.c.3.s8 %v7659
    %v8144 = vunpack.c.3.s8 %v7660
    %v8145 = vunpack.c.3.s8 %v7661
    %v8146 = vunpack.c.0.s8 %v7662
    %v8147 = vunpack.c.0.s8 %v7663
    %v8148 = vunpack.c.0.s8 %v7664
    %v8149 = vunpack.c.0.s8 %v7665
    %v8150 = vunpack.c.1.s8 %v7662
    %v8151 = vunpack.c.1.s8 %v7663
    %v8152 = vunpack.c.1.s8 %v7664
    %v8153 = vunpack.c.1.s8 %v7665
    %v8154 = vunpack.c.2.s8 %v7662
    %v8155 = vunpack.c.2.s8 %v7663
    %v8156 = vunpack.c.2.s8 %v7664
    %v8157 = vunpack.c.2.s8 %v7665
    %v8158 = vunpack.c.3.s8 %v7662
    %v8159 = vunpack.c.3.s8 %v7663
    %v8160 = vunpack.c.3.s8 %v7664
    %v8161 = vunpack.c.3.s8 %v7665
    %v8162 = vunpack.c.0.s8 %v7666
    %v8163 = vunpack.c.0.s8 %v7667
    %v8164 = vunpack.c.0.s8 %v7668
    %v8165 = vunpack.c.0.s8 %v7669
    %v8166 = vunpack.c.1.s8 %v7666
    %v8167 = vunpack.c.1.s8 %v7667
    %v8168 = vunpack.c.1.s8 %v7668
    %v8169 = vunpack.c.1.s8 %v7669
    %v8170 = vunpack.c.2.s8 %v7666
    %v8171 = vunpack.c.2.s8 %v7667
    %v8172 = vunpack.c.2.s8 %v7668
    %v8173 = vunpack.c.2.s8 %v7669
    %v8174 = vunpack.c.3.s8 %v7666
    %v8175 = vunpack.c.3.s8 %v7667
    %v8176 = vunpack.c.3.s8 %v7668
    %v8177 = vunpack.c.3.s8 %v7669
    %v8178 = vunpack.c.0.s8 %v7670
    %v8179 = vunpack.c.0.s8 %v7671
    %v8180 = vunpack.c.0.s8 %v7672
    %v8181 = vunpack.c.0.s8 %v7673
    %v8182 = vunpack.c.1.s8 %v7670
    %v8183 = vunpack.c.1.s8 %v7671
    %v8184 = vunpack.c.1.s8 %v7672
    %v8185 = vunpack.c.1.s8 %v7673
    %v8186 = vunpack.c.2.s8 %v7670
    %v8187 = vunpack.c.2.s8 %v7671
    %v8188 = vunpack.c.2.s8 %v7672
    %v8189 = vunpack.c.2.s8 %v7673
    %v8190 = vunpack.c.3.s8 %v7670
    %v8191 = vunpack.c.3.s8 %v7671
    %v8192 = vunpack.c.3.s8 %v7672
    %v8193 = vunpack.c.3.s8 %v7673
    %v8194 = vunpack.c.0.s8 %v7674
    %v8195 = vunpack.c.0.s8 %v7675
    %v8196 = vunpack.c.0.s8 %v7676
    %v8197 = vunpack.c.0.s8 %v7677
    %v8198 = vunpack.c.1.s8 %v7674
    %v8199 = vunpack.c.1.s8 %v7675
    %v8200 = vunpack.c.1.s8 %v7676
    %v8201 = vunpack.c.1.s8 %v7677
    %v8202 = vunpack.c.2.s8 %v7674
    %v8203 = vunpack.c.2.s8 %v7675
    %v8204 = vunpack.c.2.s8 %v7676
    %v8205 = vunpack.c.2.s8 %v7677
    %v8206 = vunpack.c.3.s8 %v7674
    %v8207 = vunpack.c.3.s8 %v7675
    %v8208 = vunpack.c.3.s8 %v7676
    %v8209 = vunpack.c.3.s8 %v7677
    %v8210 = vunpack.c.0.s8 %v7678
    %v8211 = vunpack.c.0.s8 %v7679
    %v8212 = vunpack.c.0.s8 %v7680
    %v8213 = vunpack.c.0.s8 %v7681
    %v8214 = vunpack.c.1.s8 %v7678
    %v8215 = vunpack.c.1.s8 %v7679
    %v8216 = vunpack.c.1.s8 %v7680
    %v8217 = vunpack.c.1.s8 %v7681
    %v8218 = vunpack.c.2.s8 %v7678
    %v8219 = vunpack.c.2.s8 %v7679
    %v8220 = vunpack.c.2.s8 %v7680
    %v8221 = vunpack.c.2.s8 %v7681
    %v8222 = vunpack.c.3.s8 %v7678
    %v8223 = vunpack.c.3.s8 %v7679
    %v8224 = vunpack.c.3.s8 %v7680
    %v8225 = vunpack.c.3.s8 %v7681
    %v8226 = vunpack.c.0.s8 %v7682
    %v8227 = vunpack.c.0.s8 %v7683
    %v8228 = vunpack.c.0.s8 %v7684
    %v8229 = vunpack.c.0.s8 %v7685
    %v8230 = vunpack.c.1.s8 %v7682
    %v8231 = vunpack.c.1.s8 %v7683
    %v8232 = vunpack.c.1.s8 %v7684
    %v8233 = vunpack.c.1.s8 %v7685
    %v8234 = vunpack.c.2.s8 %v7682
    %v8235 = vunpack.c.2.s8 %v7683
    %v8236 = vunpack.c.2.s8 %v7684
    %v8237 = vunpack.c.2.s8 %v7685
    %v8238 = vunpack.c.3.s8 %v7682
    %v8239 = vunpack.c.3.s8 %v7683
    %v8240 = vunpack.c.3.s8 %v7684
    %v8241 = vunpack.c.3.s8 %v7685
    %v8242 = vunpack.c.0.s8 %v7686
    %v8243 = vunpack.c.0.s8 %v7687
    %v8244 = vunpack.c.0.s8 %v7688
    %v8245 = vunpack.c.0.s8 %v7689
    %v8246 = vunpack.c.1.s8 %v7686
    %v8247 = vunpack.c.1.s8 %v7687
    %v8248 = vunpack.c.1.s8 %v7688
    %v8249 = vunpack.c.1.s8 %v7689
    %v8250 = vunpack.c.2.s8 %v7686
    %v8251 = vunpack.c.2.s8 %v7687
    %v8252 = vunpack.c.2.s8 %v7688
    %v8253 = vunpack.c.2.s8 %v7689
    %v8254 = vunpack.c.3.s8 %v7686
    %v8255 = vunpack.c.3.s8 %v7687
    %v8256 = vunpack.c.3.s8 %v7688
    %v8257 = vunpack.c.3.s8 %v7689
    %v8258 = vunpack.c.0.s8 %v7690
    %v8259 = vunpack.c.0.s8 %v7691
    %v8260 = vunpack.c.0.s8 %v7692
    %v8261 = vunpack.c.0.s8 %v7693
    %v8262 = vunpack.c.1.s8 %v7690
    %v8263 = vunpack.c.1.s8 %v7691
    %v8264 = vunpack.c.1.s8 %v7692
    %v8265 = vunpack.c.1.s8 %v7693
    %v8266 = vunpack.c.2.s8 %v7690
    %v8267 = vunpack.c.2.s8 %v7691
    %v8268 = vunpack.c.2.s8 %v7692
    %v8269 = vunpack.c.2.s8 %v7693
    %v8270 = vunpack.c.3.s8 %v7690
    %v8271 = vunpack.c.3.s8 %v7691
    %v8272 = vunpack.c.3.s8 %v7692
    %v8273 = vunpack.c.3.s8 %v7693
    %v8274 = vunpack.c.0.s8 %v7694
    %v8275 = vunpack.c.0.s8 %v7695
    %v8276 = vunpack.c.0.s8 %v7696
    %v8277 = vunpack.c.0.s8 %v7697
    %v8278 = vunpack.c.1.s8 %v7694
    %v8279 = vunpack.c.1.s8 %v7695
    %v8280 = vunpack.c.1.s8 %v7696
    %v8281 = vunpack.c.1.s8 %v7697
    %v8282 = vunpack.c.2.s8 %v7694
    %v8283 = vunpack.c.2.s8 %v7695
    %v8284 = vunpack.c.2.s8 %v7696
    %v8285 = vunpack.c.2.s8 %v7697
    %v8286 = vunpack.c.3.s8 %v7694
    %v8287 = vunpack.c.3.s8 %v7695
    %v8288 = vunpack.c.3.s8 %v7696
    %v8289 = vunpack.c.3.s8 %v7697
    %v8290 = vunpack.c.0.s8 %v7698
    %v8291 = vunpack.c.0.s8 %v7699
    %v8292 = vunpack.c.0.s8 %v7700
    %v8293 = vunpack.c.0.s8 %v7701
    %v8294 = vunpack.c.1.s8 %v7698
    %v8295 = vunpack.c.1.s8 %v7699
    %v8296 = vunpack.c.1.s8 %v7700
    %v8297 = vunpack.c.1.s8 %v7701
    %v8298 = vunpack.c.2.s8 %v7698
    %v8299 = vunpack.c.2.s8 %v7699
    %v8300 = vunpack.c.2.s8 %v7700
    %v8301 = vunpack.c.2.s8 %v7701
    %v8302 = vunpack.c.3.s8 %v7698
    %v8303 = vunpack.c.3.s8 %v7699
    %v8304 = vunpack.c.3.s8 %v7700
    %v8305 = vunpack.c.3.s8 %v7701
    %v8306 = vunpack.c.0.s8 %v7702
    %v8307 = vunpack.c.0.s8 %v7703
    %v8308 = vunpack.c.0.s8 %v7704
    %v8309 = vunpack.c.0.s8 %v7705
    %v8310 = vunpack.c.1.s8 %v7702
    %v8311 = vunpack.c.1.s8 %v7703
    %v8312 = vunpack.c.1.s8 %v7704
    %v8313 = vunpack.c.1.s8 %v7705
    %v8314 = vunpack.c.2.s8 %v7702
    %v8315 = vunpack.c.2.s8 %v7703
    %v8316 = vunpack.c.2.s8 %v7704
    %v8317 = vunpack.c.2.s8 %v7705
    %v8318 = vunpack.c.3.s8 %v7702
    %v8319 = vunpack.c.3.s8 %v7703
    %v8320 = vunpack.c.3.s8 %v7704
    %v8321 = vunpack.c.3.s8 %v7705
    %v8322 = vunpack.c.0.s8 %v7706
    %v8323 = vunpack.c.0.s8 %v7707
    %v8324 = vunpack.c.0.s8 %v7708
    %v8325 = vunpack.c.0.s8 %v7709
    %v8326 = vunpack.c.1.s8 %v7706
    %v8327 = vunpack.c.1.s8 %v7707
    %v8328 = vunpack.c.1.s8 %v7708
    %v8329 = vunpack.c.1.s8 %v7709
    %v8330 = vunpack.c.2.s8 %v7706
    %v8331 = vunpack.c.2.s8 %v7707
    %v8332 = vunpack.c.2.s8 %v7708
    %v8333 = vunpack.c.2.s8 %v7709
    %v8334 = vunpack.c.3.s8 %v7706
    %v8335 = vunpack.c.3.s8 %v7707
    %v8336 = vunpack.c.3.s8 %v7708
    %v8337 = vunpack.c.3.s8 %v7709
    %v8338 = vunpack.c.0.s8 %v7710
    %v8339 = vunpack.c.0.s8 %v7711
    %v8340 = vunpack.c.0.s8 %v7712
    %v8341 = vunpack.c.0.s8 %v7713
    %v8342 = vunpack.c.1.s8 %v7710
    %v8343 = vunpack.c.1.s8 %v7711
    %v8344 = vunpack.c.1.s8 %v7712
    %v8345 = vunpack.c.1.s8 %v7713
    %v8346 = vunpack.c.2.s8 %v7710
    %v8347 = vunpack.c.2.s8 %v7711
    %v8348 = vunpack.c.2.s8 %v7712
    %v8349 = vunpack.c.2.s8 %v7713
    %v8350 = vunpack.c.3.s8 %v7710
    %v8351 = vunpack.c.3.s8 %v7711
    %v8352 = vunpack.c.3.s8 %v7712
    %v8353 = vunpack.c.3.s8 %v7713
    %v8354 = vunpack.c.0.s8 %v7714
    %v8355 = vunpack.c.0.s8 %v7715
    %v8356 = vunpack.c.0.s8 %v7716
    %v8357 = vunpack.c.0.s8 %v7717
    %v8358 = vunpack.c.1.s8 %v7714
    %v8359 = vunpack.c.1.s8 %v7715
    %v8360 = vunpack.c.1.s8 %v7716
    %v8361 = vunpack.c.1.s8 %v7717
    %v8362 = vunpack.c.2.s8 %v7714
    %v8363 = vunpack.c.2.s8 %v7715
    %v8364 = vunpack.c.2.s8 %v7716
    %v8365 = vunpack.c.2.s8 %v7717
    %v8366 = vunpack.c.3.s8 %v7714
    %v8367 = vunpack.c.3.s8 %v7715
    %v8368 = vunpack.c.3.s8 %v7716
    %v8369 = vunpack.c.3.s8 %v7717
    %v8370 = vunpack.c.0.s8 %v7718
    %v8371 = vunpack.c.0.s8 %v7719
    %v8372 = vunpack.c.0.s8 %v7720
    %v8373 = vunpack.c.0.s8 %v7721
    %v8374 = vunpack.c.1.s8 %v7718
    %v8375 = vunpack.c.1.s8 %v7719
    %v8376 = vunpack.c.1.s8 %v7720
    %v8377 = vunpack.c.1.s8 %v7721
    %v8378 = vunpack.c.2.s8 %v7718
    %v8379 = vunpack.c.2.s8 %v7719
    %v8380 = vunpack.c.2.s8 %v7720
    %v8381 = vunpack.c.2.s8 %v7721
    %v8382 = vunpack.c.3.s8 %v7718
    %v8383 = vunpack.c.3.s8 %v7719
    %v8384 = vunpack.c.3.s8 %v7720
    %v8385 = vunpack.c.3.s8 %v7721
    %v8386 = vunpack.c.0.s8 %v7722
    %v8387 = vunpack.c.0.s8 %v7723
    %v8388 = vunpack.c.0.s8 %v7724
    %v8389 = vunpack.c.0.s8 %v7725
    %v8390 = vunpack.c.1.s8 %v7722
    %v8391 = vunpack.c.1.s8 %v7723
    %v8392 = vunpack.c.1.s8 %v7724
    %v8393 = vunpack.c.1.s8 %v7725
    %v8394 = vunpack.c.2.s8 %v7722
    %v8395 = vunpack.c.2.s8 %v7723
    %v8396 = vunpack.c.2.s8 %v7724
    %v8397 = vunpack.c.2.s8 %v7725
    %v8398 = vunpack.c.3.s8 %v7722
    %v8399 = vunpack.c.3.s8 %v7723
    %v8400 = vunpack.c.3.s8 %v7724
    %v8401 = vunpack.c.3.s8 %v7725
    %v8402 = vunpack.c.0.s8 %v7726
    %v8403 = vunpack.c.0.s8 %v7727
    %v8404 = vunpack.c.0.s8 %v7728
    %v8405 = vunpack.c.0.s8 %v7729
    %v8406 = vunpack.c.1.s8 %v7726
    %v8407 = vunpack.c.1.s8 %v7727
    %v8408 = vunpack.c.1.s8 %v7728
    %v8409 = vunpack.c.1.s8 %v7729
    %v8410 = vunpack.c.2.s8 %v7726
    %v8411 = vunpack.c.2.s8 %v7727
    %v8412 = vunpack.c.2.s8 %v7728
    %v8413 = vunpack.c.2.s8 %v7729
    %v8414 = vunpack.c.3.s8 %v7726
    %v8415 = vunpack.c.3.s8 %v7727
    %v8416 = vunpack.c.3.s8 %v7728
    %v8417 = vunpack.c.3.s8 %v7729
    %v8418 = vunpack.c.0.s8 %v7730
    %v8419 = vunpack.c.0.s8 %v7731
    %v8420 = vunpack.c.0.s8 %v7732
    %v8421 = vunpack.c.0.s8 %v7733
    %v8422 = vunpack.c.1.s8 %v7730
    %v8423 = vunpack.c.1.s8 %v7731
    %v8424 = vunpack.c.1.s8 %v7732
    %v8425 = vunpack.c.1.s8 %v7733
    %v8426 = vunpack.c.2.s8 %v7730
    %v8427 = vunpack.c.2.s8 %v7731
    %v8428 = vunpack.c.2.s8 %v7732
    %v8429 = vunpack.c.2.s8 %v7733
    %v8430 = vunpack.c.3.s8 %v7730
    %v8431 = vunpack.c.3.s8 %v7731
    %v8432 = vunpack.c.3.s8 %v7732
    %v8433 = vunpack.c.3.s8 %v7733
    %v8434 = vunpack.c.0.s8 %v7734
    %v8435 = vunpack.c.0.s8 %v7735
    %v8436 = vunpack.c.0.s8 %v7736
    %v8437 = vunpack.c.0.s8 %v7737
    %v8438 = vunpack.c.1.s8 %v7734
    %v8439 = vunpack.c.1.s8 %v7735
    %v8440 = vunpack.c.1.s8 %v7736
    %v8441 = vunpack.c.1.s8 %v7737
    %v8442 = vunpack.c.2.s8 %v7734
    %v8443 = vunpack.c.2.s8 %v7735
    %v8444 = vunpack.c.2.s8 %v7736
    %v8445 = vunpack.c.2.s8 %v7737
    %v8446 = vunpack.c.3.s8 %v7734
    %v8447 = vunpack.c.3.s8 %v7735
    %v8448 = vunpack.c.3.s8 %v7736
    %v8449 = vunpack.c.3.s8 %v7737
    %v8450 = vunpack.c.0.s8 %v7738
    %v8451 = vunpack.c.0.s8 %v7739
    %v8452 = vunpack.c.0.s8 %v7740
    %v8453 = vunpack.c.0.s8 %v7741
    %v8454 = vunpack.c.1.s8 %v7738
    %v8455 = vunpack.c.1.s8 %v7739
    %v8456 = vunpack.c.1.s8 %v7740
    %v8457 = vunpack.c.1.s8 %v7741
    %v8458 = vunpack.c.2.s8 %v7738
    %v8459 = vunpack.c.2.s8 %v7739
    %v8460 = vunpack.c.2.s8 %v7740
    %v8461 = vunpack.c.2.s8 %v7741
    %v8462 = vunpack.c.3.s8 %v7738
    %v8463 = vunpack.c.3.s8 %v7739
    %v8464 = vunpack.c.3.s8 %v7740
    %v8465 = vunpack.c.3.s8 %v7741
    %v8466 = vunpack.c.0.s8 %v7742
    %v8467 = vunpack.c.0.s8 %v7743
    %v8468 = vunpack.c.0.s8 %v7744
    %v8469 = vunpack.c.0.s8 %v7745
    %v8470 = vunpack.c.1.s8 %v7742
    %v8471 = vunpack.c.1.s8 %v7743
    %v8472 = vunpack.c.1.s8 %v7744
    %v8473 = vunpack.c.1.s8 %v7745
    %v8474 = vunpack.c.2.s8 %v7742
    %v8475 = vunpack.c.2.s8 %v7743
    %v8476 = vunpack.c.2.s8 %v7744
    %v8477 = vunpack.c.2.s8 %v7745
    %v8478 = vunpack.c.3.s8 %v7742
    %v8479 = vunpack.c.3.s8 %v7743
    %v8480 = vunpack.c.3.s8 %v7744
    %v8481 = vunpack.c.3.s8 %v7745
    %v8482 = vunpack.c.0.s8 %v7746
    %v8483 = vunpack.c.0.s8 %v7747
    %v8484 = vunpack.c.0.s8 %v7748
    %v8485 = vunpack.c.0.s8 %v7749
    %v8486 = vunpack.c.1.s8 %v7746
    %v8487 = vunpack.c.1.s8 %v7747
    %v8488 = vunpack.c.1.s8 %v7748
    %v8489 = vunpack.c.1.s8 %v7749
    %v8490 = vunpack.c.2.s8 %v7746
    %v8491 = vunpack.c.2.s8 %v7747
    %v8492 = vunpack.c.2.s8 %v7748
    %v8493 = vunpack.c.2.s8 %v7749
    %v8494 = vunpack.c.3.s8 %v7746
    %v8495 = vunpack.c.3.s8 %v7747
    %v8496 = vunpack.c.3.s8 %v7748
    %v8497 = vunpack.c.3.s8 %v7749
    %v8498 = vunpack.c.0.s8 %v7750
    %v8499 = vunpack.c.0.s8 %v7751
    %v8500 = vunpack.c.0.s8 %v7752
    %v8501 = vunpack.c.0.s8 %v7753
    %v8502 = vunpack.c.1.s8 %v7750
    %v8503 = vunpack.c.1.s8 %v7751
    %v8504 = vunpack.c.1.s8 %v7752
    %v8505 = vunpack.c.1.s8 %v7753
    %v8506 = vunpack.c.2.s8 %v7750
    %v8507 = vunpack.c.2.s8 %v7751
    %v8508 = vunpack.c.2.s8 %v7752
    %v8509 = vunpack.c.2.s8 %v7753
    %v8510 = vunpack.c.3.s8 %v7750
    %v8511 = vunpack.c.3.s8 %v7751
    %v8512 = vunpack.c.3.s8 %v7752
    %v8513 = vunpack.c.3.s8 %v7753
    %v8514 = vunpack.c.0.s8 %v7754
    %v8515 = vunpack.c.0.s8 %v7755
    %v8516 = vunpack.c.0.s8 %v7756
    %v8517 = vunpack.c.0.s8 %v7757
    %v8518 = vunpack.c.1.s8 %v7754
    %v8519 = vunpack.c.1.s8 %v7755
    %v8520 = vunpack.c.1.s8 %v7756
    %v8521 = vunpack.c.1.s8 %v7757
    %v8522 = vunpack.c.2.s8 %v7754
    %v8523 = vunpack.c.2.s8 %v7755
    %v8524 = vunpack.c.2.s8 %v7756
    %v8525 = vunpack.c.2.s8 %v7757
    %v8526 = vunpack.c.3.s8 %v7754
    %v8527 = vunpack.c.3.s8 %v7755
    %v8528 = vunpack.c.3.s8 %v7756
    %v8529 = vunpack.c.3.s8 %v7757
    %v8530 = vunpack.c.0.s8 %v7758
    %v8531 = vunpack.c.0.s8 %v7759
    %v8532 = vunpack.c.0.s8 %v7760
    %v8533 = vunpack.c.0.s8 %v7761
    %v8534 = vunpack.c.1.s8 %v7758
    %v8535 = vunpack.c.1.s8 %v7759
    %v8536 = vunpack.c.1.s8 %v7760
    %v8537 = vunpack.c.1.s8 %v7761
    %v8538 = vunpack.c.2.s8 %v7758
    %v8539 = vunpack.c.2.s8 %v7759
    %v8540 = vunpack.c.2.s8 %v7760
    %v8541 = vunpack.c.2.s8 %v7761
    %v8542 = vunpack.c.3.s8 %v7758
    %v8543 = vunpack.c.3.s8 %v7759
    %v8544 = vunpack.c.3.s8 %v7760
    %v8545 = vunpack.c.3.s8 %v7761
    %v8546 = vunpack.c.0.s8 %v7762
    %v8547 = vunpack.c.0.s8 %v7763
    %v8548 = vunpack.c.0.s8 %v7764
    %v8549 = vunpack.c.0.s8 %v7765
    %v8550 = vunpack.c.1.s8 %v7762
    %v8551 = vunpack.c.1.s8 %v7763
    %v8552 = vunpack.c.1.s8 %v7764
    %v8553 = vunpack.c.1.s8 %v7765
    %v8554 = vunpack.c.2.s8 %v7762
    %v8555 = vunpack.c.2.s8 %v7763
    %v8556 = vunpack.c.2.s8 %v7764
    %v8557 = vunpack.c.2.s8 %v7765
    %v8558 = vunpack.c.3.s8 %v7762
    %v8559 = vunpack.c.3.s8 %v7763
    %v8560 = vunpack.c.3.s8 %v7764
    %v8561 = vunpack.c.3.s8 %v7765
    %v8562 = vunpack.c.0.s8 %v7766
    %v8563 = vunpack.c.0.s8 %v7767
    %v8564 = vunpack.c.0.s8 %v7768
    %v8565 = vunpack.c.0.s8 %v7769
    %v8566 = vunpack.c.1.s8 %v7766
    %v8567 = vunpack.c.1.s8 %v7767
    %v8568 = vunpack.c.1.s8 %v7768
    %v8569 = vunpack.c.1.s8 %v7769
    %v8570 = vunpack.c.2.s8 %v7766
    %v8571 = vunpack.c.2.s8 %v7767
    %v8572 = vunpack.c.2.s8 %v7768
    %v8573 = vunpack.c.2.s8 %v7769
    %v8574 = vunpack.c.3.s8 %v7766
    %v8575 = vunpack.c.3.s8 %v7767
    %v8576 = vunpack.c.3.s8 %v7768
    %v8577 = vunpack.c.3.s8 %v7769
    %v8578 = vunpack.c.0.s8 %v7770
    %v8579 = vunpack.c.0.s8 %v7771
    %v8580 = vunpack.c.0.s8 %v7772
    %v8581 = vunpack.c.0.s8 %v7773
    %v8582 = vunpack.c.1.s8 %v7770
    %v8583 = vunpack.c.1.s8 %v7771
    %v8584 = vunpack.c.1.s8 %v7772
    %v8585 = vunpack.c.1.s8 %v7773
    %v8586 = vunpack.c.2.s8 %v7770
    %v8587 = vunpack.c.2.s8 %v7771
    %v8588 = vunpack.c.2.s8 %v7772
    %v8589 = vunpack.c.2.s8 %v7773
    %v8590 = vunpack.c.3.s8 %v7770
    %v8591 = vunpack.c.3.s8 %v7771
    %v8592 = vunpack.c.3.s8 %v7772
    %v8593 = vunpack.c.3.s8 %v7773
    %v8594 = vunpack.c.0.s8 %v7774
    %v8595 = vunpack.c.0.s8 %v7775
    %v8596 = vunpack.c.0.s8 %v7776
    %v8597 = vunpack.c.0.s8 %v7777
    %v8598 = vunpack.c.1.s8 %v7774
    %v8599 = vunpack.c.1.s8 %v7775
    %v8600 = vunpack.c.1.s8 %v7776
    %v8601 = vunpack.c.1.s8 %v7777
    %v8602 = vunpack.c.2.s8 %v7774
    %v8603 = vunpack.c.2.s8 %v7775
    %v8604 = vunpack.c.2.s8 %v7776
    %v8605 = vunpack.c.2.s8 %v7777
    %v8606 = vunpack.c.3.s8 %v7774
    %v8607 = vunpack.c.3.s8 %v7775
    %v8608 = vunpack.c.3.s8 %v7776
    %v8609 = vunpack.c.3.s8 %v7777
    %v8610 = vunpack.c.0.s8 %v7778
    %v8611 = vunpack.c.0.s8 %v7779
    %v8612 = vunpack.c.0.s8 %v7780
    %v8613 = vunpack.c.0.s8 %v7781
    %v8614 = vunpack.c.1.s8 %v7778
    %v8615 = vunpack.c.1.s8 %v7779
    %v8616 = vunpack.c.1.s8 %v7780
    %v8617 = vunpack.c.1.s8 %v7781
    %v8618 = vunpack.c.2.s8 %v7778
    %v8619 = vunpack.c.2.s8 %v7779
    %v8620 = vunpack.c.2.s8 %v7780
    %v8621 = vunpack.c.2.s8 %v7781
    %v8622 = vunpack.c.3.s8 %v7778
    %v8623 = vunpack.c.3.s8 %v7779
    %v8624 = vunpack.c.3.s8 %v7780
    %v8625 = vunpack.c.3.s8 %v7781
    %v8626 = vunpack.c.0.s8 %v7782
    %v8627 = vunpack.c.0.s8 %v7783
    %v8628 = vunpack.c.0.s8 %v7784
    %v8629 = vunpack.c.0.s8 %v7785
    %v8630 = vunpack.c.1.s8 %v7782
    %v8631 = vunpack.c.1.s8 %v7783
    %v8632 = vunpack.c.1.s8 %v7784
    %v8633 = vunpack.c.1.s8 %v7785
    %v8634 = vunpack.c.2.s8 %v7782
    %v8635 = vunpack.c.2.s8 %v7783
    %v8636 = vunpack.c.2.s8 %v7784
    %v8637 = vunpack.c.2.s8 %v7785
    %v8638 = vunpack.c.3.s8 %v7782
    %v8639 = vunpack.c.3.s8 %v7783
    %v8640 = vunpack.c.3.s8 %v7784
    %v8641 = vunpack.c.3.s8 %v7785
    %v8642 = vunpack.c.0.s8 %v7786
    %v8643 = vunpack.c.0.s8 %v7787
    %v8644 = vunpack.c.0.s8 %v7788
    %v8645 = vunpack.c.0.s8 %v7789
    %v8646 = vunpack.c.1.s8 %v7786
    %v8647 = vunpack.c.1.s8 %v7787
    %v8648 = vunpack.c.1.s8 %v7788
    %v8649 = vunpack.c.1.s8 %v7789
    %v8650 = vunpack.c.2.s8 %v7786
    %v8651 = vunpack.c.2.s8 %v7787
    %v8652 = vunpack.c.2.s8 %v7788
    %v8653 = vunpack.c.2.s8 %v7789
    %v8654 = vunpack.c.3.s8 %v7786
    %v8655 = vunpack.c.3.s8 %v7787
    %v8656 = vunpack.c.3.s8 %v7788
    %v8657 = vunpack.c.3.s8 %v7789
    %v8658 = vunpack.c.0.s8 %v7790
    %v8659 = vunpack.c.0.s8 %v7791
    %v8660 = vunpack.c.0.s8 %v7792
    %v8661 = vunpack.c.0.s8 %v7793
    %v8662 = vunpack.c.1.s8 %v7790
    %v8663 = vunpack.c.1.s8 %v7791
    %v8664 = vunpack.c.1.s8 %v7792
    %v8665 = vunpack.c.1.s8 %v7793
    %v8666 = vunpack.c.2.s8 %v7790
    %v8667 = vunpack.c.2.s8 %v7791
    %v8668 = vunpack.c.2.s8 %v7792
    %v8669 = vunpack.c.2.s8 %v7793
    %v8670 = vunpack.c.3.s8 %v7790
    %v8671 = vunpack.c.3.s8 %v7791
    %v8672 = vunpack.c.3.s8 %v7792
    %v8673 = vunpack.c.3.s8 %v7793
    %v8674 = vunpack.c.0.s8 %v7794
    %v8675 = vunpack.c.0.s8 %v7795
    %v8676 = vunpack.c.0.s8 %v7796
    %v8677 = vunpack.c.0.s8 %v7797
    %v8678 = vunpack.c.1.s8 %v7794
    %v8679 = vunpack.c.1.s8 %v7795
    %v8680 = vunpack.c.1.s8 %v7796
    %v8681 = vunpack.c.1.s8 %v7797
    %v8682 = vunpack.c.2.s8 %v7794
    %v8683 = vunpack.c.2.s8 %v7795
    %v8684 = vunpack.c.2.s8 %v7796
    %v8685 = vunpack.c.2.s8 %v7797
    %v8686 = vunpack.c.3.s8 %v7794
    %v8687 = vunpack.c.3.s8 %v7795
    %v8688 = vunpack.c.3.s8 %v7796
    %v8689 = vunpack.c.3.s8 %v7797
    %v8690 = vunpack.c.0.s8 %v7798
    %v8691 = vunpack.c.0.s8 %v7799
    %v8692 = vunpack.c.0.s8 %v7800
    %v8693 = vunpack.c.0.s8 %v7801
    %v8694 = vunpack.c.1.s8 %v7798
    %v8695 = vunpack.c.1.s8 %v7799
    %v8696 = vunpack.c.1.s8 %v7800
    %v8697 = vunpack.c.1.s8 %v7801
    %v8698 = vunpack.c.2.s8 %v7798
    %v8699 = vunpack.c.2.s8 %v7799
    %v8700 = vunpack.c.2.s8 %v7800
    %v8701 = vunpack.c.2.s8 %v7801
    %v8702 = vunpack.c.3.s8 %v7798
    %v8703 = vunpack.c.3.s8 %v7799
    %v8704 = vunpack.c.3.s8 %v7800
    %v8705 = vunpack.c.3.s8 %v7801
    %v8706 = vunpack.c.0.s8 %v7802
    %v8707 = vunpack.c.0.s8 %v7803
    %v8708 = vunpack.c.0.s8 %v7804
    %v8709 = vunpack.c.0.s8 %v7805
    %v8710 = vunpack.c.1.s8 %v7802
    %v8711 = vunpack.c.1.s8 %v7803
    %v8712 = vunpack.c.1.s8 %v7804
    %v8713 = vunpack.c.1.s8 %v7805
    %v8714 = vunpack.c.2.s8 %v7802
    %v8715 = vunpack.c.2.s8 %v7803
    %v8716 = vunpack.c.2.s8 %v7804
    %v8717 = vunpack.c.2.s8 %v7805
    %v8718 = vunpack.c.3.s8 %v7802
    %v8719 = vunpack.c.3.s8 %v7803
    %v8720 = vunpack.c.3.s8 %v7804
    %v8721 = vunpack.c.3.s8 %v7805
    %v8722 = vunpack.c.0.s8 %v7806
    %v8723 = vunpack.c.0.s8 %v7807
    %v8724 = vunpack.c.0.s8 %v7808
    %v8725 = vunpack.c.0.s8 %v7809
    %v8726 = vunpack.c.1.s8 %v7806
    %v8727 = vunpack.c.1.s8 %v7807
    %v8728 = vunpack.c.1.s8 %v7808
    %v8729 = vunpack.c.1.s8 %v7809
    %v8730 = vunpack.c.2.s8 %v7806
    %v8731 = vunpack.c.2.s8 %v7807
    %v8732 = vunpack.c.2.s8 %v7808
    %v8733 = vunpack.c.2.s8 %v7809
    %v8734 = vunpack.c.3.s8 %v7806
    %v8735 = vunpack.c.3.s8 %v7807
    %v8736 = vunpack.c.3.s8 %v7808
    %v8737 = vunpack.c.3.s8 %v7809
    %v8738 = vunpack.c.0.s8 %v7810
    %v8739 = vunpack.c.0.s8 %v7811
    %v8740 = vunpack.c.0.s8 %v7812
    %v8741 = vunpack.c.0.s8 %v7813
    %v8742 = vunpack.c.1.s8 %v7810
    %v8743 = vunpack.c.1.s8 %v7811
    %v8744 = vunpack.c.1.s8 %v7812
    %v8745 = vunpack.c.1.s8 %v7813
    %v8746 = vunpack.c.2.s8 %v7810
    %v8747 = vunpack.c.2.s8 %v7811
    %v8748 = vunpack.c.2.s8 %v7812
    %v8749 = vunpack.c.2.s8 %v7813
    %v8750 = vunpack.c.3.s8 %v7810
    %v8751 = vunpack.c.3.s8 %v7811
    %v8752 = vunpack.c.3.s8 %v7812
    %v8753 = vunpack.c.3.s8 %v7813
    %v8754 = vunpack.c.0.s8 %v7814
    %v8755 = vunpack.c.0.s8 %v7815
    %v8756 = vunpack.c.0.s8 %v7816
    %v8757 = vunpack.c.0.s8 %v7817
    %v8758 = vunpack.c.1.s8 %v7814
    %v8759 = vunpack.c.1.s8 %v7815
    %v8760 = vunpack.c.1.s8 %v7816
    %v8761 = vunpack.c.1.s8 %v7817
    %v8762 = vunpack.c.2.s8 %v7814
    %v8763 = vunpack.c.2.s8 %v7815
    %v8764 = vunpack.c.2.s8 %v7816
    %v8765 = vunpack.c.2.s8 %v7817
    %v8766 = vunpack.c.3.s8 %v7814
    %v8767 = vunpack.c.3.s8 %v7815
    %v8768 = vunpack.c.3.s8 %v7816
    %v8769 = vunpack.c.3.s8 %v7817
    %v8770 = vunpack.c.0.s8 %v7818
    %v8771 = vunpack.c.0.s8 %v7819
    %v8772 = vunpack.c.0.s8 %v7820
    %v8773 = vunpack.c.0.s8 %v7821
    %v8774 = vunpack.c.1.s8 %v7818
    %v8775 = vunpack.c.1.s8 %v7819
    %v8776 = vunpack.c.1.s8 %v7820
    %v8777 = vunpack.c.1.s8 %v7821
    %v8778 = vunpack.c.2.s8 %v7818
    %v8779 = vunpack.c.2.s8 %v7819
    %v8780 = vunpack.c.2.s8 %v7820
    %v8781 = vunpack.c.2.s8 %v7821
    %v8782 = vunpack.c.3.s8 %v7818
    %v8783 = vunpack.c.3.s8 %v7819
    %v8784 = vunpack.c.3.s8 %v7820
    %v8785 = vunpack.c.3.s8 %v7821
    %v8786 = vunpack.c.0.s8 %v7822
    %v8787 = vunpack.c.0.s8 %v7823
    %v8788 = vunpack.c.0.s8 %v7824
    %v8789 = vunpack.c.0.s8 %v7825
    %v8790 = vunpack.c.1.s8 %v7822
    %v8791 = vunpack.c.1.s8 %v7823
    %v8792 = vunpack.c.1.s8 %v7824
    %v8793 = vunpack.c.1.s8 %v7825
    %v8794 = vunpack.c.2.s8 %v7822
    %v8795 = vunpack.c.2.s8 %v7823
    %v8796 = vunpack.c.2.s8 %v7824
    %v8797 = vunpack.c.2.s8 %v7825
    %v8798 = vunpack.c.3.s8 %v7822
    %v8799 = vunpack.c.3.s8 %v7823
    %v8800 = vunpack.c.3.s8 %v7824
    %v8801 = vunpack.c.3.s8 %v7825
    %v8802 = vunpack.c.0.s8 %v7826
    %v8803 = vunpack.c.0.s8 %v7827
    %v8804 = vunpack.c.0.s8 %v7828
    %v8805 = vunpack.c.0.s8 %v7829
    %v8806 = vunpack.c.1.s8 %v7826
    %v8807 = vunpack.c.1.s8 %v7827
    %v8808 = vunpack.c.1.s8 %v7828
    %v8809 = vunpack.c.1.s8 %v7829
    %v8810 = vunpack.c.2.s8 %v7826
    %v8811 = vunpack.c.2.s8 %v7827
    %v8812 = vunpack.c.2.s8 %v7828
    %v8813 = vunpack.c.2.s8 %v7829
    %v8814 = vunpack.c.3.s8 %v7826
    %v8815 = vunpack.c.3.s8 %v7827
    %v8816 = vunpack.c.3.s8 %v7828
    %v8817 = vunpack.c.3.s8 %v7829
    %v8818 = vunpack.c.0.s8 %v7830
    %v8819 = vunpack.c.0.s8 %v7831
    %v8820 = vunpack.c.0.s8 %v7832
    %v8821 = vunpack.c.0.s8 %v7833
    %v8822 = vunpack.c.1.s8 %v7830
    %v8823 = vunpack.c.1.s8 %v7831
    %v8824 = vunpack.c.1.s8 %v7832
    %v8825 = vunpack.c.1.s8 %v7833
    %v8826 = vunpack.c.2.s8 %v7830
    %v8827 = vunpack.c.2.s8 %v7831
    %v8828 = vunpack.c.2.s8 %v7832
    %v8829 = vunpack.c.2.s8 %v7833
    %v8830 = vunpack.c.3.s8 %v7830
    %v8831 = vunpack.c.3.s8 %v7831
    %v8832 = vunpack.c.3.s8 %v7832
    %v8833 = vunpack.c.3.s8 %v7833
    %v8834 = vunpack.c.0.s8 %v7834
    %v8835 = vunpack.c.0.s8 %v7835
    %v8836 = vunpack.c.0.s8 %v7836
    %v8837 = vunpack.c.0.s8 %v7837
    %v8838 = vunpack.c.1.s8 %v7834
    %v8839 = vunpack.c.1.s8 %v7835
    %v8840 = vunpack.c.1.s8 %v7836
    %v8841 = vunpack.c.1.s8 %v7837
    %v8842 = vunpack.c.2.s8 %v7834
    %v8843 = vunpack.c.2.s8 %v7835
    %v8844 = vunpack.c.2.s8 %v7836
    %v8845 = vunpack.c.2.s8 %v7837
    %v8846 = vunpack.c.3.s8 %v7834
    %v8847 = vunpack.c.3.s8 %v7835
    %v8848 = vunpack.c.3.s8 %v7836
    %v8849 = vunpack.c.3.s8 %v7837
    %v8850 = vunpack.c.0.s8 %v7838
    %v8851 = vunpack.c.0.s8 %v7839
    %v8852 = vunpack.c.0.s8 %v7840
    %v8853 = vunpack.c.0.s8 %v7841
    %v8854 = vunpack.c.1.s8 %v7838
    %v8855 = vunpack.c.1.s8 %v7839
    %v8856 = vunpack.c.1.s8 %v7840
    %v8857 = vunpack.c.1.s8 %v7841
    %v8858 = vunpack.c.2.s8 %v7838
    %v8859 = vunpack.c.2.s8 %v7839
    %v8860 = vunpack.c.2.s8 %v7840
    %v8861 = vunpack.c.2.s8 %v7841
    %v8862 = vunpack.c.3.s8 %v7838
    %v8863 = vunpack.c.3.s8 %v7839
    %v8864 = vunpack.c.3.s8 %v7840
    %v8865 = vunpack.c.3.s8 %v7841
    %v8866 = vcvt.s32.f32 %v7842
    %v8867 = vcvt.s32.f32 %v7843
    %v8868 = vcvt.s32.f32 %v7844
    %v8869 = vcvt.s32.f32 %v7845
    %v8870 = vcvt.s32.f32 %v7846
    %v8871 = vcvt.s32.f32 %v7847
    %v8872 = vcvt.s32.f32 %v7848
    %v8873 = vcvt.s32.f32 %v7849
    %v8874 = vcvt.s32.f32 %v7850
    %v8875 = vcvt.s32.f32 %v7851
    %v8876 = vcvt.s32.f32 %v7852
    %v8877 = vcvt.s32.f32 %v7853
    %v8878 = vcvt.s32.f32 %v7854
    %v8879 = vcvt.s32.f32 %v7855
    %v8880 = vcvt.s32.f32 %v7856
    %v8881 = vcvt.s32.f32 %v7857
    %v8882 = vcvt.s32.f32 %v7858
    %v8883 = vcvt.s32.f32 %v7859
    %v8884 = vcvt.s32.f32 %v7860
    %v8885 = vcvt.s32.f32 %v7861
    %v8886 = vcvt.s32.f32 %v7862
    %v8887 = vcvt.s32.f32 %v7863
    %v8888 = vcvt.s32.f32 %v7864
    %v8889 = vcvt.s32.f32 %v7865
    %v8890 = vcvt.s32.f32 %v7866
    %v8891 = vcvt.s32.f32 %v7867
    %v8892 = vcvt.s32.f32 %v7868
    %v8893 = vcvt.s32.f32 %v7869
    %v8894 = vcvt.s32.f32 %v7870
    %v8895 = vcvt.s32.f32 %v7871
    %v8896 = vcvt.s32.f32 %v7872
    %v8897 = vcvt.s32.f32 %v7873
    %v8898 = vcvt.s32.f32 %v7874
    %v8899 = vcvt.s32.f32 %v7875
    %v8900 = vcvt.s32.f32 %v7876
    %v8901 = vcvt.s32.f32 %v7877
    %v8902 = vcvt.s32.f32 %v7878
    %v8903 = vcvt.s32.f32 %v7879
    %v8904 = vcvt.s32.f32 %v7880
    %v8905 = vcvt.s32.f32 %v7881
    %v8906 = vcvt.s32.f32 %v7882
    %v8907 = vcvt.s32.f32 %v7883
    %v8908 = vcvt.s32.f32 %v7884
    %v8909 = vcvt.s32.f32 %v7885
    %v8910 = vcvt.s32.f32 %v7886
    %v8911 = vcvt.s32.f32 %v7887
    %v8912 = vcvt.s32.f32 %v7888
    %v8913 = vcvt.s32.f32 %v7889
    %v8914 = vcvt.s32.f32 %v7890
    %v8915 = vcvt.s32.f32 %v7891
    %v8916 = vcvt.s32.f32 %v7892
    %v8917 = vcvt.s32.f32 %v7893
    %v8918 = vcvt.s32.f32 %v7894
    %v8919 = vcvt.s32.f32 %v7895
    %v8920 = vcvt.s32.f32 %v7896
    %v8921 = vcvt.s32.f32 %v7897
    %v8922 = vcvt.s32.f32 %v7898
    %v8923 = vcvt.s32.f32 %v7899
    %v8924 = vcvt.s32.f32 %v7900
    %v8925 = vcvt.s32.f32 %v7901
    %v8926 = vcvt.s32.f32 %v7902
    %v8927 = vcvt.s32.f32 %v7903
    %v8928 = vcvt.s32.f32 %v7904
    %v8929 = vcvt.s32.f32 %v7905
    %v8930 = vcvt.s32.f32 %v7906
    %v8931 = vcvt.s32.f32 %v7907
    %v8932 = vcvt.s32.f32 %v7908
    %v8933 = vcvt.s32.f32 %v7909
    %v8934 = vcvt.s32.f32 %v7910
    %v8935 = vcvt.s32.f32 %v7911
    %v8936 = vcvt.s32.f32 %v7912
    %v8937 = vcvt.s32.f32 %v7913
    %v8938 = vcvt.s32.f32 %v7914
    %v8939 = vcvt.s32.f32 %v7915
    %v8940 = vcvt.s32.f32 %v7916
    %v8941 = vcvt.s32.f32 %v7917
    %v8942 = vcvt.s32.f32 %v7918
    %v8943 = vcvt.s32.f32 %v7919
    %v8944 = vcvt.s32.f32 %v7920
    %v8945 = vcvt.s32.f32 %v7921
    %v8946 = vcvt.s32.f32 %v7922
    %v8947 = vcvt.s32.f32 %v7923
    %v8948 = vcvt.s32.f32 %v7924
    %v8949 = vcvt.s32.f32 %v7925
    %v8950 = vcvt.s32.f32 %v7926
    %v8951 = vcvt.s32.f32 %v7927
    %v8952 = vcvt.s32.f32 %v7928
    %v8953 = vcvt.s32.f32 %v7929
    %v8954 = vcvt.s32.f32 %v7930
    %v8955 = vcvt.s32.f32 %v7931
    %v8956 = vcvt.s32.f32 %v7932
    %v8957 = vcvt.s32.f32 %v7933
    %v8958 = vcvt.s32.f32 %v7934
    %v8959 = vcvt.s32.f32 %v7935
    %v8960 = vcvt.s32.f32 %v7936
    %v8961 = vcvt.s32.f32 %v7937
    %v8962 = vcvt.s32.f32 %v7938
    %v8963 = vcvt.s32.f32 %v7939
    %v8964 = vcvt.s32.f32 %v7940
    %v8965 = vcvt.s32.f32 %v7941
    %v8966 = vcvt.s32.f32 %v7942
    %v8967 = vcvt.s32.f32 %v7943
    %v8968 = vcvt.s32.f32 %v7944
    %v8969 = vcvt.s32.f32 %v7945
    %v8970 = vcvt.s32.f32 %v7946
    %v8971 = vcvt.s32.f32 %v7947
    %v8972 = vcvt.s32.f32 %v7948
    %v8973 = vcvt.s32.f32 %v7949
    %v8974 = vcvt.s32.f32 %v7950
    %v8975 = vcvt.s32.f32 %v7951
    %v8976 = vcvt.s32.f32 %v7952
    %v8977 = vcvt.s32.f32 %v7953
    %v8978 = vcvt.s32.f32 %v7954
    %v8979 = vcvt.s32.f32 %v7955
    %v8980 = vcvt.s32.f32 %v7956
    %v8981 = vcvt.s32.f32 %v7957
    %v8982 = vcvt.s32.f32 %v7958
    %v8983 = vcvt.s32.f32 %v7959
    %v8984 = vcvt.s32.f32 %v7960
    %v8985 = vcvt.s32.f32 %v7961
    %v8986 = vcvt.s32.f32 %v7962
    %v8987 = vcvt.s32.f32 %v7963
    %v8988 = vcvt.s32.f32 %v7964
    %v8989 = vcvt.s32.f32 %v7965
    %v8990 = vcvt.s32.f32 %v7966
    %v8991 = vcvt.s32.f32 %v7967
    %v8992 = vcvt.s32.f32 %v7968
    %v8993 = vcvt.s32.f32 %v7969
    %v8994 = vcvt.s32.f32 %v7970
    %v8995 = vcvt.s32.f32 %v7971
    %v8996 = vcvt.s32.f32 %v7972
    %v8997 = vcvt.s32.f32 %v7973
    %v8998 = vcvt.s32.f32 %v7974
    %v8999 = vcvt.s32.f32 %v7975
    %v9000 = vcvt.s32.f32 %v7976
    %v9001 = vcvt.s32.f32 %v7977
    %v9002 = vcvt.s32.f32 %v7978
    %v9003 = vcvt.s32.f32 %v7979
    %v9004 = vcvt.s32.f32 %v7980
    %v9005 = vcvt.s32.f32 %v7981
    %v9006 = vcvt.s32.f32 %v7982
    %v9007 = vcvt.s32.f32 %v7983
    %v9008 = vcvt.s32.f32 %v7984
    %v9009 = vcvt.s32.f32 %v7985
    %v9010 = vcvt.s32.f32 %v7986
    %v9011 = vcvt.s32.f32 %v7987
    %v9012 = vcvt.s32.f32 %v7988
    %v9013 = vcvt.s32.f32 %v7989
    %v9014 = vcvt.s32.f32 %v7990
    %v9015 = vcvt.s32.f32 %v7991
    %v9016 = vcvt.s32.f32 %v7992
    %v9017 = vcvt.s32.f32 %v7993
    %v9018 = vcvt.s32.f32 %v7994
    %v9019 = vcvt.s32.f32 %v7995
    %v9020 = vcvt.s32.f32 %v7996
    %v9021 = vcvt.s32.f32 %v7997
    %v9022 = vcvt.s32.f32 %v7998
    %v9023 = vcvt.s32.f32 %v7999
    %v9024 = vcvt.s32.f32 %v8000
    %v9025 = vcvt.s32.f32 %v8001
    %v9026 = vcvt.s32.f32 %v8002
    %v9027 = vcvt.s32.f32 %v8003
    %v9028 = vcvt.s32.f32 %v8004
    %v9029 = vcvt.s32.f32 %v8005
    %v9030 = vcvt.s32.f32 %v8006
    %v9031 = vcvt.s32.f32 %v8007
    %v9032 = vcvt.s32.f32 %v8008
    %v9033 = vcvt.s32.f32 %v8009
    %v9034 = vcvt.s32.f32 %v8010
    %v9035 = vcvt.s32.f32 %v8011
    %v9036 = vcvt.s32.f32 %v8012
    %v9037 = vcvt.s32.f32 %v8013
    %v9038 = vcvt.s32.f32 %v8014
    %v9039 = vcvt.s32.f32 %v8015
    %v9040 = vcvt.s32.f32 %v8016
    %v9041 = vcvt.s32.f32 %v8017
    %v9042 = vcvt.s32.f32 %v8018
    %v9043 = vcvt.s32.f32 %v8019
    %v9044 = vcvt.s32.f32 %v8020
    %v9045 = vcvt.s32.f32 %v8021
    %v9046 = vcvt.s32.f32 %v8022
    %v9047 = vcvt.s32.f32 %v8023
    %v9048 = vcvt.s32.f32 %v8024
    %v9049 = vcvt.s32.f32 %v8025
    %v9050 = vcvt.s32.f32 %v8026
    %v9051 = vcvt.s32.f32 %v8027
    %v9052 = vcvt.s32.f32 %v8028
    %v9053 = vcvt.s32.f32 %v8029
    %v9054 = vcvt.s32.f32 %v8030
    %v9055 = vcvt.s32.f32 %v8031
    %v9056 = vcvt.s32.f32 %v8032
    %v9057 = vcvt.s32.f32 %v8033
    %v9058 = vcvt.s32.f32 %v8034
    %v9059 = vcvt.s32.f32 %v8035
    %v9060 = vcvt.s32.f32 %v8036
    %v9061 = vcvt.s32.f32 %v8037
    %v9062 = vcvt.s32.f32 %v8038
    %v9063 = vcvt.s32.f32 %v8039
    %v9064 = vcvt.s32.f32 %v8040
    %v9065 = vcvt.s32.f32 %v8041
    %v9066 = vcvt.s32.f32 %v8042
    %v9067 = vcvt.s32.f32 %v8043
    %v9068 = vcvt.s32.f32 %v8044
    %v9069 = vcvt.s32.f32 %v8045
    %v9070 = vcvt.s32.f32 %v8046
    %v9071 = vcvt.s32.f32 %v8047
    %v9072 = vcvt.s32.f32 %v8048
    %v9073 = vcvt.s32.f32 %v8049
    %v9074 = vcvt.s32.f32 %v8050
    %v9075 = vcvt.s32.f32 %v8051
    %v9076 = vcvt.s32.f32 %v8052
    %v9077 = vcvt.s32.f32 %v8053
    %v9078 = vcvt.s32.f32 %v8054
    %v9079 = vcvt.s32.f32 %v8055
    %v9080 = vcvt.s32.f32 %v8056
    %v9081 = vcvt.s32.f32 %v8057
    %v9082 = vcvt.s32.f32 %v8058
    %v9083 = vcvt.s32.f32 %v8059
    %v9084 = vcvt.s32.f32 %v8060
    %v9085 = vcvt.s32.f32 %v8061
    %v9086 = vcvt.s32.f32 %v8062
    %v9087 = vcvt.s32.f32 %v8063
    %v9088 = vcvt.s32.f32 %v8064
    %v9089 = vcvt.s32.f32 %v8065
    %v9090 = vcvt.s32.f32 %v8066
    %v9091 = vcvt.s32.f32 %v8067
    %v9092 = vcvt.s32.f32 %v8068
    %v9093 = vcvt.s32.f32 %v8069
    %v9094 = vcvt.s32.f32 %v8070
    %v9095 = vcvt.s32.f32 %v8071
    %v9096 = vcvt.s32.f32 %v8072
    %v9097 = vcvt.s32.f32 %v8073
    %v9098 = vcvt.s32.f32 %v8074
    %v9099 = vcvt.s32.f32 %v8075
    %v9100 = vcvt.s32.f32 %v8076
    %v9101 = vcvt.s32.f32 %v8077
    %v9102 = vcvt.s32.f32 %v8078
    %v9103 = vcvt.s32.f32 %v8079
    %v9104 = vcvt.s32.f32 %v8080
    %v9105 = vcvt.s32.f32 %v8081
    %v9106 = vcvt.s32.f32 %v8082
    %v9107 = vcvt.s32.f32 %v8083
    %v9108 = vcvt.s32.f32 %v8084
    %v9109 = vcvt.s32.f32 %v8085
    %v9110 = vcvt.s32.f32 %v8086
    %v9111 = vcvt.s32.f32 %v8087
    %v9112 = vcvt.s32.f32 %v8088
    %v9113 = vcvt.s32.f32 %v8089
    %v9114 = vcvt.s32.f32 %v8090
    %v9115 = vcvt.s32.f32 %v8091
    %v9116 = vcvt.s32.f32 %v8092
    %v9117 = vcvt.s32.f32 %v8093
    %v9118 = vcvt.s32.f32 %v8094
    %v9119 = vcvt.s32.f32 %v8095
    %v9120 = vcvt.s32.f32 %v8096
    %v9121 = vcvt.s32.f32 %v8097
    %v9122 = vcvt.s32.f32 %v8098
    %v9123 = vcvt.s32.f32 %v8099
    %v9124 = vcvt.s32.f32 %v8100
    %v9125 = vcvt.s32.f32 %v8101
    %v9126 = vcvt.s32.f32 %v8102
    %v9127 = vcvt.s32.f32 %v8103
    %v9128 = vcvt.s32.f32 %v8104
    %v9129 = vcvt.s32.f32 %v8105
    %v9130 = vcvt.s32.f32 %v8106
    %v9131 = vcvt.s32.f32 %v8107
    %v9132 = vcvt.s32.f32 %v8108
    %v9133 = vcvt.s32.f32 %v8109
    %v9134 = vcvt.s32.f32 %v8110
    %v9135 = vcvt.s32.f32 %v8111
    %v9136 = vcvt.s32.f32 %v8112
    %v9137 = vcvt.s32.f32 %v8113
    %v9138 = vcvt.s32.f32 %v8114
    %v9139 = vcvt.s32.f32 %v8115
    %v9140 = vcvt.s32.f32 %v8116
    %v9141 = vcvt.s32.f32 %v8117
    %v9142 = vcvt.s32.f32 %v8118
    %v9143 = vcvt.s32.f32 %v8119
    %v9144 = vcvt.s32.f32 %v8120
    %v9145 = vcvt.s32.f32 %v8121
    %v9146 = vcvt.s32.f32 %v8122
    %v9147 = vcvt.s32.f32 %v8123
    %v9148 = vcvt.s32.f32 %v8124
    %v9149 = vcvt.s32.f32 %v8125
    %v9150 = vcvt.s32.f32 %v8126
    %v9151 = vcvt.s32.f32 %v8127
    %v9152 = vcvt.s32.f32 %v8128
    %v9153 = vcvt.s32.f32 %v8129
    %v9154 = vcvt.s32.f32 %v8130
    %v9155 = vcvt.s32.f32 %v8131
    %v9156 = vcvt.s32.f32 %v8132
    %v9157 = vcvt.s32.f32 %v8133
    %v9158 = vcvt.s32.f32 %v8134
    %v9159 = vcvt.s32.f32 %v8135
    %v9160 = vcvt.s32.f32 %v8136
    %v9161 = vcvt.s32.f32 %v8137
    %v9162 = vcvt.s32.f32 %v8138
    %v9163 = vcvt.s32.f32 %v8139
    %v9164 = vcvt.s32.f32 %v8140
    %v9165 = vcvt.s32.f32 %v8141
    %v9166 = vcvt.s32.f32 %v8142
    %v9167 = vcvt.s32.f32 %v8143
    %v9168 = vcvt.s32.f32 %v8144
    %v9169 = vcvt.s32.f32 %v8145
    %v9170 = vcvt.s32.f32 %v8146
    %v9171 = vcvt.s32.f32 %v8147
    %v9172 = vcvt.s32.f32 %v8148
    %v9173 = vcvt.s32.f32 %v8149
    %v9174 = vcvt.s32.f32 %v8150
    %v9175 = vcvt.s32.f32 %v8151
    %v9176 = vcvt.s32.f32 %v8152
    %v9177 = vcvt.s32.f32 %v8153
    %v9178 = vcvt.s32.f32 %v8154
    %v9179 = vcvt.s32.f32 %v8155
    %v9180 = vcvt.s32.f32 %v8156
    %v9181 = vcvt.s32.f32 %v8157
    %v9182 = vcvt.s32.f32 %v8158
    %v9183 = vcvt.s32.f32 %v8159
    %v9184 = vcvt.s32.f32 %v8160
    %v9185 = vcvt.s32.f32 %v8161
    %v9186 = vcvt.s32.f32 %v8162
    %v9187 = vcvt.s32.f32 %v8163
    %v9188 = vcvt.s32.f32 %v8164
    %v9189 = vcvt.s32.f32 %v8165
    %v9190 = vcvt.s32.f32 %v8166
    %v9191 = vcvt.s32.f32 %v8167
    %v9192 = vcvt.s32.f32 %v8168
    %v9193 = vcvt.s32.f32 %v8169
    %v9194 = vcvt.s32.f32 %v8170
    %v9195 = vcvt.s32.f32 %v8171
    %v9196 = vcvt.s32.f32 %v8172
    %v9197 = vcvt.s32.f32 %v8173
    %v9198 = vcvt.s32.f32 %v8174
    %v9199 = vcvt.s32.f32 %v8175
    %v9200 = vcvt.s32.f32 %v8176
    %v9201 = vcvt.s32.f32 %v8177
    %v9202 = vcvt.s32.f32 %v8178
    %v9203 = vcvt.s32.f32 %v8179
    %v9204 = vcvt.s32.f32 %v8180
    %v9205 = vcvt.s32.f32 %v8181
    %v9206 = vcvt.s32.f32 %v8182
    %v9207 = vcvt.s32.f32 %v8183
    %v9208 = vcvt.s32.f32 %v8184
    %v9209 = vcvt.s32.f32 %v8185
    %v9210 = vcvt.s32.f32 %v8186
    %v9211 = vcvt.s32.f32 %v8187
    %v9212 = vcvt.s32.f32 %v8188
    %v9213 = vcvt.s32.f32 %v8189
    %v9214 = vcvt.s32.f32 %v8190
    %v9215 = vcvt.s32.f32 %v8191
    %v9216 = vcvt.s32.f32 %v8192
    %v9217 = vcvt.s32.f32 %v8193
    %v9218 = vcvt.s32.f32 %v8194
    %v9219 = vcvt.s32.f32 %v8195
    %v9220 = vcvt.s32.f32 %v8196
    %v9221 = vcvt.s32.f32 %v8197
    %v9222 = vcvt.s32.f32 %v8198
    %v9223 = vcvt.s32.f32 %v8199
    %v9224 = vcvt.s32.f32 %v8200
    %v9225 = vcvt.s32.f32 %v8201
    %v9226 = vcvt.s32.f32 %v8202
    %v9227 = vcvt.s32.f32 %v8203
    %v9228 = vcvt.s32.f32 %v8204
    %v9229 = vcvt.s32.f32 %v8205
    %v9230 = vcvt.s32.f32 %v8206
    %v9231 = vcvt.s32.f32 %v8207
    %v9232 = vcvt.s32.f32 %v8208
    %v9233 = vcvt.s32.f32 %v8209
    %v9234 = vcvt.s32.f32 %v8210
    %v9235 = vcvt.s32.f32 %v8211
    %v9236 = vcvt.s32.f32 %v8212
    %v9237 = vcvt.s32.f32 %v8213
    %v9238 = vcvt.s32.f32 %v8214
    %v9239 = vcvt.s32.f32 %v8215
    %v9240 = vcvt.s32.f32 %v8216
    %v9241 = vcvt.s32.f32 %v8217
    %v9242 = vcvt.s32.f32 %v8218
    %v9243 = vcvt.s32.f32 %v8219
    %v9244 = vcvt.s32.f32 %v8220
    %v9245 = vcvt.s32.f32 %v8221
    %v9246 = vcvt.s32.f32 %v8222
    %v9247 = vcvt.s32.f32 %v8223
    %v9248 = vcvt.s32.f32 %v8224
    %v9249 = vcvt.s32.f32 %v8225
    %v9250 = vcvt.s32.f32 %v8226
    %v9251 = vcvt.s32.f32 %v8227
    %v9252 = vcvt.s32.f32 %v8228
    %v9253 = vcvt.s32.f32 %v8229
    %v9254 = vcvt.s32.f32 %v8230
    %v9255 = vcvt.s32.f32 %v8231
    %v9256 = vcvt.s32.f32 %v8232
    %v9257 = vcvt.s32.f32 %v8233
    %v9258 = vcvt.s32.f32 %v8234
    %v9259 = vcvt.s32.f32 %v8235
    %v9260 = vcvt.s32.f32 %v8236
    %v9261 = vcvt.s32.f32 %v8237
    %v9262 = vcvt.s32.f32 %v8238
    %v9263 = vcvt.s32.f32 %v8239
    %v9264 = vcvt.s32.f32 %v8240
    %v9265 = vcvt.s32.f32 %v8241
    %v9266 = vcvt.s32.f32 %v8242
    %v9267 = vcvt.s32.f32 %v8243
    %v9268 = vcvt.s32.f32 %v8244
    %v9269 = vcvt.s32.f32 %v8245
    %v9270 = vcvt.s32.f32 %v8246
    %v9271 = vcvt.s32.f32 %v8247
    %v9272 = vcvt.s32.f32 %v8248
    %v9273 = vcvt.s32.f32 %v8249
    %v9274 = vcvt.s32.f32 %v8250
    %v9275 = vcvt.s32.f32 %v8251
    %v9276 = vcvt.s32.f32 %v8252
    %v9277 = vcvt.s32.f32 %v8253
    %v9278 = vcvt.s32.f32 %v8254
    %v9279 = vcvt.s32.f32 %v8255
    %v9280 = vcvt.s32.f32 %v8256
    %v9281 = vcvt.s32.f32 %v8257
    %v9282 = vcvt.s32.f32 %v8258
    %v9283 = vcvt.s32.f32 %v8259
    %v9284 = vcvt.s32.f32 %v8260
    %v9285 = vcvt.s32.f32 %v8261
    %v9286 = vcvt.s32.f32 %v8262
    %v9287 = vcvt.s32.f32 %v8263
    %v9288 = vcvt.s32.f32 %v8264
    %v9289 = vcvt.s32.f32 %v8265
    %v9290 = vcvt.s32.f32 %v8266
    %v9291 = vcvt.s32.f32 %v8267
    %v9292 = vcvt.s32.f32 %v8268
    %v9293 = vcvt.s32.f32 %v8269
    %v9294 = vcvt.s32.f32 %v8270
    %v9295 = vcvt.s32.f32 %v8271
    %v9296 = vcvt.s32.f32 %v8272
    %v9297 = vcvt.s32.f32 %v8273
    %v9298 = vcvt.s32.f32 %v8274
    %v9299 = vcvt.s32.f32 %v8275
    %v9300 = vcvt.s32.f32 %v8276
    %v9301 = vcvt.s32.f32 %v8277
    %v9302 = vcvt.s32.f32 %v8278
    %v9303 = vcvt.s32.f32 %v8279
    %v9304 = vcvt.s32.f32 %v8280
    %v9305 = vcvt.s32.f32 %v8281
    %v9306 = vcvt.s32.f32 %v8282
    %v9307 = vcvt.s32.f32 %v8283
    %v9308 = vcvt.s32.f32 %v8284
    %v9309 = vcvt.s32.f32 %v8285
    %v9310 = vcvt.s32.f32 %v8286
    %v9311 = vcvt.s32.f32 %v8287
    %v9312 = vcvt.s32.f32 %v8288
    %v9313 = vcvt.s32.f32 %v8289
    %v9314 = vcvt.s32.f32 %v8290
    %v9315 = vcvt.s32.f32 %v8291
    %v9316 = vcvt.s32.f32 %v8292
    %v9317 = vcvt.s32.f32 %v8293
    %v9318 = vcvt.s32.f32 %v8294
    %v9319 = vcvt.s32.f32 %v8295
    %v9320 = vcvt.s32.f32 %v8296
    %v9321 = vcvt.s32.f32 %v8297
    %v9322 = vcvt.s32.f32 %v8298
    %v9323 = vcvt.s32.f32 %v8299
    %v9324 = vcvt.s32.f32 %v8300
    %v9325 = vcvt.s32.f32 %v8301
    %v9326 = vcvt.s32.f32 %v8302
    %v9327 = vcvt.s32.f32 %v8303
    %v9328 = vcvt.s32.f32 %v8304
    %v9329 = vcvt.s32.f32 %v8305
    %v9330 = vcvt.s32.f32 %v8306
    %v9331 = vcvt.s32.f32 %v8307
    %v9332 = vcvt.s32.f32 %v8308
    %v9333 = vcvt.s32.f32 %v8309
    %v9334 = vcvt.s32.f32 %v8310
    %v9335 = vcvt.s32.f32 %v8311
    %v9336 = vcvt.s32.f32 %v8312
    %v9337 = vcvt.s32.f32 %v8313
    %v9338 = vcvt.s32.f32 %v8314
    %v9339 = vcvt.s32.f32 %v8315
    %v9340 = vcvt.s32.f32 %v8316
    %v9341 = vcvt.s32.f32 %v8317
    %v9342 = vcvt.s32.f32 %v8318
    %v9343 = vcvt.s32.f32 %v8319
    %v9344 = vcvt.s32.f32 %v8320
    %v9345 = vcvt.s32.f32 %v8321
    %v9346 = vcvt.s32.f32 %v8322
    %v9347 = vcvt.s32.f32 %v8323
    %v9348 = vcvt.s32.f32 %v8324
    %v9349 = vcvt.s32.f32 %v8325
    %v9350 = vcvt.s32.f32 %v8326
    %v9351 = vcvt.s32.f32 %v8327
    %v9352 = vcvt.s32.f32 %v8328
    %v9353 = vcvt.s32.f32 %v8329
    %v9354 = vcvt.s32.f32 %v8330
    %v9355 = vcvt.s32.f32 %v8331
    %v9356 = vcvt.s32.f32 %v8332
    %v9357 = vcvt.s32.f32 %v8333
    %v9358 = vcvt.s32.f32 %v8334
    %v9359 = vcvt.s32.f32 %v8335
    %v9360 = vcvt.s32.f32 %v8336
    %v9361 = vcvt.s32.f32 %v8337
    %v9362 = vcvt.s32.f32 %v8338
    %v9363 = vcvt.s32.f32 %v8339
    %v9364 = vcvt.s32.f32 %v8340
    %v9365 = vcvt.s32.f32 %v8341
    %v9366 = vcvt.s32.f32 %v8342
    %v9367 = vcvt.s32.f32 %v8343
    %v9368 = vcvt.s32.f32 %v8344
    %v9369 = vcvt.s32.f32 %v8345
    %v9370 = vcvt.s32.f32 %v8346
    %v9371 = vcvt.s32.f32 %v8347
    %v9372 = vcvt.s32.f32 %v8348
    %v9373 = vcvt.s32.f32 %v8349
    %v9374 = vcvt.s32.f32 %v8350
    %v9375 = vcvt.s32.f32 %v8351
    %v9376 = vcvt.s32.f32 %v8352
    %v9377 = vcvt.s32.f32 %v8353
    %v9378 = vcvt.s32.f32 %v8354
    %v9379 = vcvt.s32.f32 %v8355
    %v9380 = vcvt.s32.f32 %v8356
    %v9381 = vcvt.s32.f32 %v8357
    %v9382 = vcvt.s32.f32 %v8358
    %v9383 = vcvt.s32.f32 %v8359
    %v9384 = vcvt.s32.f32 %v8360
    %v9385 = vcvt.s32.f32 %v8361
    %v9386 = vcvt.s32.f32 %v8362
    %v9387 = vcvt.s32.f32 %v8363
    %v9388 = vcvt.s32.f32 %v8364
    %v9389 = vcvt.s32.f32 %v8365
    %v9390 = vcvt.s32.f32 %v8366
    %v9391 = vcvt.s32.f32 %v8367
    %v9392 = vcvt.s32.f32 %v8368
    %v9393 = vcvt.s32.f32 %v8369
    %v9394 = vcvt.s32.f32 %v8370
    %v9395 = vcvt.s32.f32 %v8371
    %v9396 = vcvt.s32.f32 %v8372
    %v9397 = vcvt.s32.f32 %v8373
    %v9398 = vcvt.s32.f32 %v8374
    %v9399 = vcvt.s32.f32 %v8375
    %v9400 = vcvt.s32.f32 %v8376
    %v9401 = vcvt.s32.f32 %v8377
    %v9402 = vcvt.s32.f32 %v8378
    %v9403 = vcvt.s32.f32 %v8379
    %v9404 = vcvt.s32.f32 %v8380
    %v9405 = vcvt.s32.f32 %v8381
    %v9406 = vcvt.s32.f32 %v8382
    %v9407 = vcvt.s32.f32 %v8383
    %v9408 = vcvt.s32.f32 %v8384
    %v9409 = vcvt.s32.f32 %v8385
    %v9410 = vcvt.s32.f32 %v8386
    %v9411 = vcvt.s32.f32 %v8387
    %v9412 = vcvt.s32.f32 %v8388
    %v9413 = vcvt.s32.f32 %v8389
    %v9414 = vcvt.s32.f32 %v8390
    %v9415 = vcvt.s32.f32 %v8391
    %v9416 = vcvt.s32.f32 %v8392
    %v9417 = vcvt.s32.f32 %v8393
    %v9418 = vcvt.s32.f32 %v8394
    %v9419 = vcvt.s32.f32 %v8395
    %v9420 = vcvt.s32.f32 %v8396
    %v9421 = vcvt.s32.f32 %v8397
    %v9422 = vcvt.s32.f32 %v8398
    %v9423 = vcvt.s32.f32 %v8399
    %v9424 = vcvt.s32.f32 %v8400
    %v9425 = vcvt.s32.f32 %v8401
    %v9426 = vcvt.s32.f32 %v8402
    %v9427 = vcvt.s32.f32 %v8403
    %v9428 = vcvt.s32.f32 %v8404
    %v9429 = vcvt.s32.f32 %v8405
    %v9430 = vcvt.s32.f32 %v8406
    %v9431 = vcvt.s32.f32 %v8407
    %v9432 = vcvt.s32.f32 %v8408
    %v9433 = vcvt.s32.f32 %v8409
    %v9434 = vcvt.s32.f32 %v8410
    %v9435 = vcvt.s32.f32 %v8411
    %v9436 = vcvt.s32.f32 %v8412
    %v9437 = vcvt.s32.f32 %v8413
    %v9438 = vcvt.s32.f32 %v8414
    %v9439 = vcvt.s32.f32 %v8415
    %v9440 = vcvt.s32.f32 %v8416
    %v9441 = vcvt.s32.f32 %v8417
    %v9442 = vcvt.s32.f32 %v8418
    %v9443 = vcvt.s32.f32 %v8419
    %v9444 = vcvt.s32.f32 %v8420
    %v9445 = vcvt.s32.f32 %v8421
    %v9446 = vcvt.s32.f32 %v8422
    %v9447 = vcvt.s32.f32 %v8423
    %v9448 = vcvt.s32.f32 %v8424
    %v9449 = vcvt.s32.f32 %v8425
    %v9450 = vcvt.s32.f32 %v8426
    %v9451 = vcvt.s32.f32 %v8427
    %v9452 = vcvt.s32.f32 %v8428
    %v9453 = vcvt.s32.f32 %v8429
    %v9454 = vcvt.s32.f32 %v8430
    %v9455 = vcvt.s32.f32 %v8431
    %v9456 = vcvt.s32.f32 %v8432
    %v9457 = vcvt.s32.f32 %v8433
    %v9458 = vcvt.s32.f32 %v8434
    %v9459 = vcvt.s32.f32 %v8435
    %v9460 = vcvt.s32.f32 %v8436
    %v9461 = vcvt.s32.f32 %v8437
    %v9462 = vcvt.s32.f32 %v8438
    %v9463 = vcvt.s32.f32 %v8439
    %v9464 = vcvt.s32.f32 %v8440
    %v9465 = vcvt.s32.f32 %v8441
    %v9466 = vcvt.s32.f32 %v8442
    %v9467 = vcvt.s32.f32 %v8443
    %v9468 = vcvt.s32.f32 %v8444
    %v9469 = vcvt.s32.f32 %v8445
    %v9470 = vcvt.s32.f32 %v8446
    %v9471 = vcvt.s32.f32 %v8447
    %v9472 = vcvt.s32.f32 %v8448
    %v9473 = vcvt.s32.f32 %v8449
    %v9474 = vcvt.s32.f32 %v8450
    %v9475 = vcvt.s32.f32 %v8451
    %v9476 = vcvt.s32.f32 %v8452
    %v9477 = vcvt.s32.f32 %v8453
    %v9478 = vcvt.s32.f32 %v8454
    %v9479 = vcvt.s32.f32 %v8455
    %v9480 = vcvt.s32.f32 %v8456
    %v9481 = vcvt.s32.f32 %v8457
    %v9482 = vcvt.s32.f32 %v8458
    %v9483 = vcvt.s32.f32 %v8459
    %v9484 = vcvt.s32.f32 %v8460
    %v9485 = vcvt.s32.f32 %v8461
    %v9486 = vcvt.s32.f32 %v8462
    %v9487 = vcvt.s32.f32 %v8463
    %v9488 = vcvt.s32.f32 %v8464
    %v9489 = vcvt.s32.f32 %v8465
    %v9490 = vcvt.s32.f32 %v8466
    %v9491 = vcvt.s32.f32 %v8467
    %v9492 = vcvt.s32.f32 %v8468
    %v9493 = vcvt.s32.f32 %v8469
    %v9494 = vcvt.s32.f32 %v8470
    %v9495 = vcvt.s32.f32 %v8471
    %v9496 = vcvt.s32.f32 %v8472
    %v9497 = vcvt.s32.f32 %v8473
    %v9498 = vcvt.s32.f32 %v8474
    %v9499 = vcvt.s32.f32 %v8475
    %v9500 = vcvt.s32.f32 %v8476
    %v9501 = vcvt.s32.f32 %v8477
    %v9502 = vcvt.s32.f32 %v8478
    %v9503 = vcvt.s32.f32 %v8479
    %v9504 = vcvt.s32.f32 %v8480
    %v9505 = vcvt.s32.f32 %v8481
    %v9506 = vcvt.s32.f32 %v8482
    %v9507 = vcvt.s32.f32 %v8483
    %v9508 = vcvt.s32.f32 %v8484
    %v9509 = vcvt.s32.f32 %v8485
    %v9510 = vcvt.s32.f32 %v8486
    %v9511 = vcvt.s32.f32 %v8487
    %v9512 = vcvt.s32.f32 %v8488
    %v9513 = vcvt.s32.f32 %v8489
    %v9514 = vcvt.s32.f32 %v8490
    %v9515 = vcvt.s32.f32 %v8491
    %v9516 = vcvt.s32.f32 %v8492
    %v9517 = vcvt.s32.f32 %v8493
    %v9518 = vcvt.s32.f32 %v8494
    %v9519 = vcvt.s32.f32 %v8495
    %v9520 = vcvt.s32.f32 %v8496
    %v9521 = vcvt.s32.f32 %v8497
    %v9522 = vcvt.s32.f32 %v8498
    %v9523 = vcvt.s32.f32 %v8499
    %v9524 = vcvt.s32.f32 %v8500
    %v9525 = vcvt.s32.f32 %v8501
    %v9526 = vcvt.s32.f32 %v8502
    %v9527 = vcvt.s32.f32 %v8503
    %v9528 = vcvt.s32.f32 %v8504
    %v9529 = vcvt.s32.f32 %v8505
    %v9530 = vcvt.s32.f32 %v8506
    %v9531 = vcvt.s32.f32 %v8507
    %v9532 = vcvt.s32.f32 %v8508
    %v9533 = vcvt.s32.f32 %v8509
    %v9534 = vcvt.s32.f32 %v8510
    %v9535 = vcvt.s32.f32 %v8511
    %v9536 = vcvt.s32.f32 %v8512
    %v9537 = vcvt.s32.f32 %v8513
    %v9538 = vcvt.s32.f32 %v8514
    %v9539 = vcvt.s32.f32 %v8515
    %v9540 = vcvt.s32.f32 %v8516
    %v9541 = vcvt.s32.f32 %v8517
    %v9542 = vcvt.s32.f32 %v8518
    %v9543 = vcvt.s32.f32 %v8519
    %v9544 = vcvt.s32.f32 %v8520
    %v9545 = vcvt.s32.f32 %v8521
    %v9546 = vcvt.s32.f32 %v8522
    %v9547 = vcvt.s32.f32 %v8523
    %v9548 = vcvt.s32.f32 %v8524
    %v9549 = vcvt.s32.f32 %v8525
    %v9550 = vcvt.s32.f32 %v8526
    %v9551 = vcvt.s32.f32 %v8527
    %v9552 = vcvt.s32.f32 %v8528
    %v9553 = vcvt.s32.f32 %v8529
    %v9554 = vcvt.s32.f32 %v8530
    %v9555 = vcvt.s32.f32 %v8531
    %v9556 = vcvt.s32.f32 %v8532
    %v9557 = vcvt.s32.f32 %v8533
    %v9558 = vcvt.s32.f32 %v8534
    %v9559 = vcvt.s32.f32 %v8535
    %v9560 = vcvt.s32.f32 %v8536
    %v9561 = vcvt.s32.f32 %v8537
    %v9562 = vcvt.s32.f32 %v8538
    %v9563 = vcvt.s32.f32 %v8539
    %v9564 = vcvt.s32.f32 %v8540
    %v9565 = vcvt.s32.f32 %v8541
    %v9566 = vcvt.s32.f32 %v8542
    %v9567 = vcvt.s32.f32 %v8543
    %v9568 = vcvt.s32.f32 %v8544
    %v9569 = vcvt.s32.f32 %v8545
    %v9570 = vcvt.s32.f32 %v8546
    %v9571 = vcvt.s32.f32 %v8547
    %v9572 = vcvt.s32.f32 %v8548
    %v9573 = vcvt.s32.f32 %v8549
    %v9574 = vcvt.s32.f32 %v8550
    %v9575 = vcvt.s32.f32 %v8551
    %v9576 = vcvt.s32.f32 %v8552
    %v9577 = vcvt.s32.f32 %v8553
    %v9578 = vcvt.s32.f32 %v8554
    %v9579 = vcvt.s32.f32 %v8555
    %v9580 = vcvt.s32.f32 %v8556
    %v9581 = vcvt.s32.f32 %v8557
    %v9582 = vcvt.s32.f32 %v8558
    %v9583 = vcvt.s32.f32 %v8559
    %v9584 = vcvt.s32.f32 %v8560
    %v9585 = vcvt.s32.f32 %v8561
    %v9586 = vcvt.s32.f32 %v8562
    %v9587 = vcvt.s32.f32 %v8563
    %v9588 = vcvt.s32.f32 %v8564
    %v9589 = vcvt.s32.f32 %v8565
    %v9590 = vcvt.s32.f32 %v8566
    %v9591 = vcvt.s32.f32 %v8567
    %v9592 = vcvt.s32.f32 %v8568
    %v9593 = vcvt.s32.f32 %v8569
    %v9594 = vcvt.s32.f32 %v8570
    %v9595 = vcvt.s32.f32 %v8571
    %v9596 = vcvt.s32.f32 %v8572
    %v9597 = vcvt.s32.f32 %v8573
    %v9598 = vcvt.s32.f32 %v8574
    %v9599 = vcvt.s32.f32 %v8575
    %v9600 = vcvt.s32.f32 %v8576
    %v9601 = vcvt.s32.f32 %v8577
    %v9602 = vcvt.s32.f32 %v8578
    %v9603 = vcvt.s32.f32 %v8579
    %v9604 = vcvt.s32.f32 %v8580
    %v9605 = vcvt.s32.f32 %v8581
    %v9606 = vcvt.s32.f32 %v8582
    %v9607 = vcvt.s32.f32 %v8583
    %v9608 = vcvt.s32.f32 %v8584
    %v9609 = vcvt.s32.f32 %v8585
    %v9610 = vcvt.s32.f32 %v8586
    %v9611 = vcvt.s32.f32 %v8587
    %v9612 = vcvt.s32.f32 %v8588
    %v9613 = vcvt.s32.f32 %v8589
    %v9614 = vcvt.s32.f32 %v8590
    %v9615 = vcvt.s32.f32 %v8591
    %v9616 = vcvt.s32.f32 %v8592
    %v9617 = vcvt.s32.f32 %v8593
    %v9618 = vcvt.s32.f32 %v8594
    %v9619 = vcvt.s32.f32 %v8595
    %v9620 = vcvt.s32.f32 %v8596
    %v9621 = vcvt.s32.f32 %v8597
    %v9622 = vcvt.s32.f32 %v8598
    %v9623 = vcvt.s32.f32 %v8599
    %v9624 = vcvt.s32.f32 %v8600
    %v9625 = vcvt.s32.f32 %v8601
    %v9626 = vcvt.s32.f32 %v8602
    %v9627 = vcvt.s32.f32 %v8603
    %v9628 = vcvt.s32.f32 %v8604
    %v9629 = vcvt.s32.f32 %v8605
    %v9630 = vcvt.s32.f32 %v8606
    %v9631 = vcvt.s32.f32 %v8607
    %v9632 = vcvt.s32.f32 %v8608
    %v9633 = vcvt.s32.f32 %v8609
    %v9634 = vcvt.s32.f32 %v8610
    %v9635 = vcvt.s32.f32 %v8611
    %v9636 = vcvt.s32.f32 %v8612
    %v9637 = vcvt.s32.f32 %v8613
    %v9638 = vcvt.s32.f32 %v8614
    %v9639 = vcvt.s32.f32 %v8615
    %v9640 = vcvt.s32.f32 %v8616
    %v9641 = vcvt.s32.f32 %v8617
    %v9642 = vcvt.s32.f32 %v8618
    %v9643 = vcvt.s32.f32 %v8619
    %v9644 = vcvt.s32.f32 %v8620
    %v9645 = vcvt.s32.f32 %v8621
    %v9646 = vcvt.s32.f32 %v8622
    %v9647 = vcvt.s32.f32 %v8623
    %v9648 = vcvt.s32.f32 %v8624
    %v9649 = vcvt.s32.f32 %v8625
    %v9650 = vcvt.s32.f32 %v8626
    %v9651 = vcvt.s32.f32 %v8627
    %v9652 = vcvt.s32.f32 %v8628
    %v9653 = vcvt.s32.f32 %v8629
    %v9654 = vcvt.s32.f32 %v8630
    %v9655 = vcvt.s32.f32 %v8631
    %v9656 = vcvt.s32.f32 %v8632
    %v9657 = vcvt.s32.f32 %v8633
    %v9658 = vcvt.s32.f32 %v8634
    %v9659 = vcvt.s32.f32 %v8635
    %v9660 = vcvt.s32.f32 %v8636
    %v9661 = vcvt.s32.f32 %v8637
    %v9662 = vcvt.s32.f32 %v8638
    %v9663 = vcvt.s32.f32 %v8639
    %v9664 = vcvt.s32.f32 %v8640
    %v9665 = vcvt.s32.f32 %v8641
    %v9666 = vcvt.s32.f32 %v8642
    %v9667 = vcvt.s32.f32 %v8643
    %v9668 = vcvt.s32.f32 %v8644
    %v9669 = vcvt.s32.f32 %v8645
    %v9670 = vcvt.s32.f32 %v8646
    %v9671 = vcvt.s32.f32 %v8647
    %v9672 = vcvt.s32.f32 %v8648
    %v9673 = vcvt.s32.f32 %v8649
    %v9674 = vcvt.s32.f32 %v8650
    %v9675 = vcvt.s32.f32 %v8651
    %v9676 = vcvt.s32.f32 %v8652
    %v9677 = vcvt.s32.f32 %v8653
    %v9678 = vcvt.s32.f32 %v8654
    %v9679 = vcvt.s32.f32 %v8655
    %v9680 = vcvt.s32.f32 %v8656
    %v9681 = vcvt.s32.f32 %v8657
    %v9682 = vcvt.s32.f32 %v8658
    %v9683 = vcvt.s32.f32 %v8659
    %v9684 = vcvt.s32.f32 %v8660
    %v9685 = vcvt.s32.f32 %v8661
    %v9686 = vcvt.s32.f32 %v8662
    %v9687 = vcvt.s32.f32 %v8663
    %v9688 = vcvt.s32.f32 %v8664
    %v9689 = vcvt.s32.f32 %v8665
    %v9690 = vcvt.s32.f32 %v8666
    %v9691 = vcvt.s32.f32 %v8667
    %v9692 = vcvt.s32.f32 %v8668
    %v9693 = vcvt.s32.f32 %v8669
    %v9694 = vcvt.s32.f32 %v8670
    %v9695 = vcvt.s32.f32 %v8671
    %v9696 = vcvt.s32.f32 %v8672
    %v9697 = vcvt.s32.f32 %v8673
    %v9698 = vcvt.s32.f32 %v8674
    %v9699 = vcvt.s32.f32 %v8675
    %v9700 = vcvt.s32.f32 %v8676
    %v9701 = vcvt.s32.f32 %v8677
    %v9702 = vcvt.s32.f32 %v8678
    %v9703 = vcvt.s32.f32 %v8679
    %v9704 = vcvt.s32.f32 %v8680
    %v9705 = vcvt.s32.f32 %v8681
    %v9706 = vcvt.s32.f32 %v8682
    %v9707 = vcvt.s32.f32 %v8683
    %v9708 = vcvt.s32.f32 %v8684
    %v9709 = vcvt.s32.f32 %v8685
    %v9710 = vcvt.s32.f32 %v8686
    %v9711 = vcvt.s32.f32 %v8687
    %v9712 = vcvt.s32.f32 %v8688
    %v9713 = vcvt.s32.f32 %v8689
    %v9714 = vcvt.s32.f32 %v8690
    %v9715 = vcvt.s32.f32 %v8691
    %v9716 = vcvt.s32.f32 %v8692
    %v9717 = vcvt.s32.f32 %v8693
    %v9718 = vcvt.s32.f32 %v8694
    %v9719 = vcvt.s32.f32 %v8695
    %v9720 = vcvt.s32.f32 %v8696
    %v9721 = vcvt.s32.f32 %v8697
    %v9722 = vcvt.s32.f32 %v8698
    %v9723 = vcvt.s32.f32 %v8699
    %v9724 = vcvt.s32.f32 %v8700
    %v9725 = vcvt.s32.f32 %v8701
    %v9726 = vcvt.s32.f32 %v8702
    %v9727 = vcvt.s32.f32 %v8703
    %v9728 = vcvt.s32.f32 %v8704
    %v9729 = vcvt.s32.f32 %v8705
    %v9730 = vcvt.s32.f32 %v8706
    %v9731 = vcvt.s32.f32 %v8707
    %v9732 = vcvt.s32.f32 %v8708
    %v9733 = vcvt.s32.f32 %v8709
    %v9734 = vcvt.s32.f32 %v8710
    %v9735 = vcvt.s32.f32 %v8711
    %v9736 = vcvt.s32.f32 %v8712
    %v9737 = vcvt.s32.f32 %v8713
    %v9738 = vcvt.s32.f32 %v8714
    %v9739 = vcvt.s32.f32 %v8715
    %v9740 = vcvt.s32.f32 %v8716
    %v9741 = vcvt.s32.f32 %v8717
    %v9742 = vcvt.s32.f32 %v8718
    %v9743 = vcvt.s32.f32 %v8719
    %v9744 = vcvt.s32.f32 %v8720
    %v9745 = vcvt.s32.f32 %v8721
    %v9746 = vcvt.s32.f32 %v8722
    %v9747 = vcvt.s32.f32 %v8723
    %v9748 = vcvt.s32.f32 %v8724
    %v9749 = vcvt.s32.f32 %v8725
    %v9750 = vcvt.s32.f32 %v8726
    %v9751 = vcvt.s32.f32 %v8727
    %v9752 = vcvt.s32.f32 %v8728
    %v9753 = vcvt.s32.f32 %v8729
    %v9754 = vcvt.s32.f32 %v8730
    %v9755 = vcvt.s32.f32 %v8731
    %v9756 = vcvt.s32.f32 %v8732
    %v9757 = vcvt.s32.f32 %v8733
    %v9758 = vcvt.s32.f32 %v8734
    %v9759 = vcvt.s32.f32 %v8735
    %v9760 = vcvt.s32.f32 %v8736
    %v9761 = vcvt.s32.f32 %v8737
    %v9762 = vcvt.s32.f32 %v8738
    %v9763 = vcvt.s32.f32 %v8739
    %v9764 = vcvt.s32.f32 %v8740
    %v9765 = vcvt.s32.f32 %v8741
    %v9766 = vcvt.s32.f32 %v8742
    %v9767 = vcvt.s32.f32 %v8743
    %v9768 = vcvt.s32.f32 %v8744
    %v9769 = vcvt.s32.f32 %v8745
    %v9770 = vcvt.s32.f32 %v8746
    %v9771 = vcvt.s32.f32 %v8747
    %v9772 = vcvt.s32.f32 %v8748
    %v9773 = vcvt.s32.f32 %v8749
    %v9774 = vcvt.s32.f32 %v8750
    %v9775 = vcvt.s32.f32 %v8751
    %v9776 = vcvt.s32.f32 %v8752
    %v9777 = vcvt.s32.f32 %v8753
    %v9778 = vcvt.s32.f32 %v8754
    %v9779 = vcvt.s32.f32 %v8755
    %v9780 = vcvt.s32.f32 %v8756
    %v9781 = vcvt.s32.f32 %v8757
    %v9782 = vcvt.s32.f32 %v8758
    %v9783 = vcvt.s32.f32 %v8759
    %v9784 = vcvt.s32.f32 %v8760
    %v9785 = vcvt.s32.f32 %v8761
    %v9786 = vcvt.s32.f32 %v8762
    %v9787 = vcvt.s32.f32 %v8763
    %v9788 = vcvt.s32.f32 %v8764
    %v9789 = vcvt.s32.f32 %v8765
    %v9790 = vcvt.s32.f32 %v8766
    %v9791 = vcvt.s32.f32 %v8767
    %v9792 = vcvt.s32.f32 %v8768
    %v9793 = vcvt.s32.f32 %v8769
    %v9794 = vcvt.s32.f32 %v8770
    %v9795 = vcvt.s32.f32 %v8771
    %v9796 = vcvt.s32.f32 %v8772
    %v9797 = vcvt.s32.f32 %v8773
    %v9798 = vcvt.s32.f32 %v8774
    %v9799 = vcvt.s32.f32 %v8775
    %v9800 = vcvt.s32.f32 %v8776
    %v9801 = vcvt.s32.f32 %v8777
    %v9802 = vcvt.s32.f32 %v8778
    %v9803 = vcvt.s32.f32 %v8779
    %v9804 = vcvt.s32.f32 %v8780
    %v9805 = vcvt.s32.f32 %v8781
    %v9806 = vcvt.s32.f32 %v8782
    %v9807 = vcvt.s32.f32 %v8783
    %v9808 = vcvt.s32.f32 %v8784
    %v9809 = vcvt.s32.f32 %v8785
    %v9810 = vcvt.s32.f32 %v8786
    %v9811 = vcvt.s32.f32 %v8787
    %v9812 = vcvt.s32.f32 %v8788
    %v9813 = vcvt.s32.f32 %v8789
    %v9814 = vcvt.s32.f32 %v8790
    %v9815 = vcvt.s32.f32 %v8791
    %v9816 = vcvt.s32.f32 %v8792
    %v9817 = vcvt.s32.f32 %v8793
    %v9818 = vcvt.s32.f32 %v8794
    %v9819 = vcvt.s32.f32 %v8795
    %v9820 = vcvt.s32.f32 %v8796
    %v9821 = vcvt.s32.f32 %v8797
    %v9822 = vcvt.s32.f32 %v8798
    %v9823 = vcvt.s32.f32 %v8799
    %v9824 = vcvt.s32.f32 %v8800
    %v9825 = vcvt.s32.f32 %v8801
    %v9826 = vcvt.s32.f32 %v8802
    %v9827 = vcvt.s32.f32 %v8803
    %v9828 = vcvt.s32.f32 %v8804
    %v9829 = vcvt.s32.f32 %v8805
    %v9830 = vcvt.s32.f32 %v8806
    %v9831 = vcvt.s32.f32 %v8807
    %v9832 = vcvt.s32.f32 %v8808
    %v9833 = vcvt.s32.f32 %v8809
    %v9834 = vcvt.s32.f32 %v8810
    %v9835 = vcvt.s32.f32 %v8811
    %v9836 = vcvt.s32.f32 %v8812
    %v9837 = vcvt.s32.f32 %v8813
    %v9838 = vcvt.s32.f32 %v8814
    %v9839 = vcvt.s32.f32 %v8815
    %v9840 = vcvt.s32.f32 %v8816
    %v9841 = vcvt.s32.f32 %v8817
    %v9842 = vcvt.s32.f32 %v8818
    %v9843 = vcvt.s32.f32 %v8819
    %v9844 = vcvt.s32.f32 %v8820
    %v9845 = vcvt.s32.f32 %v8821
    %v9846 = vcvt.s32.f32 %v8822
    %v9847 = vcvt.s32.f32 %v8823
    %v9848 = vcvt.s32.f32 %v8824
    %v9849 = vcvt.s32.f32 %v8825
    %v9850 = vcvt.s32.f32 %v8826
    %v9851 = vcvt.s32.f32 %v8827
    %v9852 = vcvt.s32.f32 %v8828
    %v9853 = vcvt.s32.f32 %v8829
    %v9854 = vcvt.s32.f32 %v8830
    %v9855 = vcvt.s32.f32 %v8831
    %v9856 = vcvt.s32.f32 %v8832
    %v9857 = vcvt.s32.f32 %v8833
    %v9858 = vcvt.s32.f32 %v8834
    %v9859 = vcvt.s32.f32 %v8835
    %v9860 = vcvt.s32.f32 %v8836
    %v9861 = vcvt.s32.f32 %v8837
    %v9862 = vcvt.s32.f32 %v8838
    %v9863 = vcvt.s32.f32 %v8839
    %v9864 = vcvt.s32.f32 %v8840
    %v9865 = vcvt.s32.f32 %v8841
    %v9866 = vcvt.s32.f32 %v8842
    %v9867 = vcvt.s32.f32 %v8843
    %v9868 = vcvt.s32.f32 %v8844
    %v9869 = vcvt.s32.f32 %v8845
    %v9870 = vcvt.s32.f32 %v8846
    %v9871 = vcvt.s32.f32 %v8847
    %v9872 = vcvt.s32.f32 %v8848
    %v9873 = vcvt.s32.f32 %v8849
    %v9874 = vcvt.s32.f32 %v8850
    %v9875 = vcvt.s32.f32 %v8851
    %v9876 = vcvt.s32.f32 %v8852
    %v9877 = vcvt.s32.f32 %v8853
    %v9878 = vcvt.s32.f32 %v8854
    %v9879 = vcvt.s32.f32 %v8855
    %v9880 = vcvt.s32.f32 %v8856
    %v9881 = vcvt.s32.f32 %v8857
    %v9882 = vcvt.s32.f32 %v8858
    %v9883 = vcvt.s32.f32 %v8859
    %v9884 = vcvt.s32.f32 %v8860
    %v9885 = vcvt.s32.f32 %v8861
    %v9886 = vcvt.s32.f32 %v8862
    %v9887 = vcvt.s32.f32 %v8863
    %v9888 = vcvt.s32.f32 %v8864
    %v9889 = vcvt.s32.f32 %v8865
    %v9890 = vpack.c.bf16 %v8870, %v8866
    %v9891 = vpack.c.bf16 %v8871, %v8867
    %v9892 = vpack.c.bf16 %v8872, %v8868
    %v9893 = vpack.c.bf16 %v8873, %v8869
    %v9894 = vpack.c.bf16 %v8878, %v8874
    %v9895 = vpack.c.bf16 %v8879, %v8875
    %v9896 = vpack.c.bf16 %v8880, %v8876
    %v9897 = vpack.c.bf16 %v8881, %v8877
    %v9898 = vpack.c.bf16 %v8886, %v8882
    %v9899 = vpack.c.bf16 %v8887, %v8883
    %v9900 = vpack.c.bf16 %v8888, %v8884
    %v9901 = vpack.c.bf16 %v8889, %v8885
    %v9902 = vpack.c.bf16 %v8894, %v8890
    %v9903 = vpack.c.bf16 %v8895, %v8891
    %v9904 = vpack.c.bf16 %v8896, %v8892
    %v9905 = vpack.c.bf16 %v8897, %v8893
    %v9906 = vpack.c.bf16 %v8902, %v8898
    %v9907 = vpack.c.bf16 %v8903, %v8899
    %v9908 = vpack.c.bf16 %v8904, %v8900
    %v9909 = vpack.c.bf16 %v8905, %v8901
    %v9910 = vpack.c.bf16 %v8910, %v8906
    %v9911 = vpack.c.bf16 %v8911, %v8907
    %v9912 = vpack.c.bf16 %v8912, %v8908
    %v9913 = vpack.c.bf16 %v8913, %v8909
    %v9914 = vpack.c.bf16 %v8918, %v8914
    %v9915 = vpack.c.bf16 %v8919, %v8915
    %v9916 = vpack.c.bf16 %v8920, %v8916
    %v9917 = vpack.c.bf16 %v8921, %v8917
    %v9918 = vpack.c.bf16 %v8926, %v8922
    %v9919 = vpack.c.bf16 %v8927, %v8923
    %v9920 = vpack.c.bf16 %v8928, %v8924
    %v9921 = vpack.c.bf16 %v8929, %v8925
    %v9922 = vpack.c.bf16 %v8934, %v8930
    %v9923 = vpack.c.bf16 %v8935, %v8931
    %v9924 = vpack.c.bf16 %v8936, %v8932
    %v9925 = vpack.c.bf16 %v8937, %v8933
    %v9926 = vpack.c.bf16 %v8942, %v8938
    %v9927 = vpack.c.bf16 %v8943, %v8939
    %v9928 = vpack.c.bf16 %v8944, %v8940
    %v9929 = vpack.c.bf16 %v8945, %v8941
    %v9930 = vpack.c.bf16 %v8950, %v8946
    %v9931 = vpack.c.bf16 %v8951, %v8947
    %v9932 = vpack.c.bf16 %v8952, %v8948
    %v9933 = vpack.c.bf16 %v8953, %v8949
    %v9934 = vpack.c.bf16 %v8958, %v8954
    %v9935 = vpack.c.bf16 %v8959, %v8955
    %v9936 = vpack.c.bf16 %v8960, %v8956
    %v9937 = vpack.c.bf16 %v8961, %v8957
    %v9938 = vpack.c.bf16 %v8966, %v8962
    %v9939 = vpack.c.bf16 %v8967, %v8963
    %v9940 = vpack.c.bf16 %v8968, %v8964
    %v9941 = vpack.c.bf16 %v8969, %v8965
    %v9942 = vpack.c.bf16 %v8974, %v8970
    %v9943 = vpack.c.bf16 %v8975, %v8971
    %v9944 = vpack.c.bf16 %v8976, %v8972
    %v9945 = vpack.c.bf16 %v8977, %v8973
    %v9946 = vpack.c.bf16 %v8982, %v8978
    %v9947 = vpack.c.bf16 %v8983, %v8979
    %v9948 = vpack.c.bf16 %v8984, %v8980
    %v9949 = vpack.c.bf16 %v8985, %v8981
    %v9950 = vpack.c.bf16 %v8990, %v8986
    %v9951 = vpack.c.bf16 %v8991, %v8987
    %v9952 = vpack.c.bf16 %v8992, %v8988
    %v9953 = vpack.c.bf16 %v8993, %v8989
    %v9954 = vpack.c.bf16 %v8998, %v8994
    %v9955 = vpack.c.bf16 %v8999, %v8995
    %v9956 = vpack.c.bf16 %v9000, %v8996
    %v9957 = vpack.c.bf16 %v9001, %v8997
    %v9958 = vpack.c.bf16 %v9006, %v9002
    %v9959 = vpack.c.bf16 %v9007, %v9003
    %v9960 = vpack.c.bf16 %v9008, %v9004
    %v9961 = vpack.c.bf16 %v9009, %v9005
    %v9962 = vpack.c.bf16 %v9014, %v9010
    %v9963 = vpack.c.bf16 %v9015, %v9011
    %v9964 = vpack.c.bf16 %v9016, %v9012
    %v9965 = vpack.c.bf16 %v9017, %v9013
    %v9966 = vpack.c.bf16 %v9022, %v9018
    %v9967 = vpack.c.bf16 %v9023, %v9019
    %v9968 = vpack.c.bf16 %v9024, %v9020
    %v9969 = vpack.c.bf16 %v9025, %v9021
    %v9970 = vpack.c.bf16 %v9030, %v9026
    %v9971 = vpack.c.bf16 %v9031, %v9027
    %v9972 = vpack.c.bf16 %v9032, %v9028
    %v9973 = vpack.c.bf16 %v9033, %v9029
    %v9974 = vpack.c.bf16 %v9038, %v9034
    %v9975 = vpack.c.bf16 %v9039, %v9035
    %v9976 = vpack.c.bf16 %v9040, %v9036
    %v9977 = vpack.c.bf16 %v9041, %v9037
    %v9978 = vpack.c.bf16 %v9046, %v9042
    %v9979 = vpack.c.bf16 %v9047, %v9043
    %v9980 = vpack.c.bf16 %v9048, %v9044
    %v9981 = vpack.c.bf16 %v9049, %v9045
    %v9982 = vpack.c.bf16 %v9054, %v9050
    %v9983 = vpack.c.bf16 %v9055, %v9051
    %v9984 = vpack.c.bf16 %v9056, %v9052
    %v9985 = vpack.c.bf16 %v9057, %v9053
    %v9986 = vpack.c.bf16 %v9062, %v9058
    %v9987 = vpack.c.bf16 %v9063, %v9059
    %v9988 = vpack.c.bf16 %v9064, %v9060
    %v9989 = vpack.c.bf16 %v9065, %v9061
    %v9990 = vpack.c.bf16 %v9070, %v9066
    %v9991 = vpack.c.bf16 %v9071, %v9067
    %v9992 = vpack.c.bf16 %v9072, %v9068
    %v9993 = vpack.c.bf16 %v9073, %v9069
    %v9994 = vpack.c.bf16 %v9078, %v9074
    %v9995 = vpack.c.bf16 %v9079, %v9075
    %v9996 = vpack.c.bf16 %v9080, %v9076
    %v9997 = vpack.c.bf16 %v9081, %v9077
    %v9998 = vpack.c.bf16 %v9086, %v9082
    %v9999 = vpack.c.bf16 %v9087, %v9083
    %v10000 = vpack.c.bf16 %v9088, %v9084
    %v10001 = vpack.c.bf16 %v9089, %v9085
    %v10002 = vpack.c.bf16 %v9094, %v9090
    %v10003 = vpack.c.bf16 %v9095, %v9091
    %v10004 = vpack.c.bf16 %v9096, %v9092
    %v10005 = vpack.c.bf16 %v9097, %v9093
    %v10006 = vpack.c.bf16 %v9102, %v9098
    %v10007 = vpack.c.bf16 %v9103, %v9099
    %v10008 = vpack.c.bf16 %v9104, %v9100
    %v10009 = vpack.c.bf16 %v9105, %v9101
    %v10010 = vpack.c.bf16 %v9110, %v9106
    %v10011 = vpack.c.bf16 %v9111, %v9107
    %v10012 = vpack.c.bf16 %v9112, %v9108
    %v10013 = vpack.c.bf16 %v9113, %v9109
    %v10014 = vpack.c.bf16 %v9118, %v9114
    %v10015 = vpack.c.bf16 %v9119, %v9115
    %v10016 = vpack.c.bf16 %v9120, %v9116
    %v10017 = vpack.c.bf16 %v9121, %v9117
    %v10018 = vpack.c.bf16 %v9126, %v9122
    %v10019 = vpack.c.bf16 %v9127, %v9123
    %v10020 = vpack.c.bf16 %v9128, %v9124
    %v10021 = vpack.c.bf16 %v9129, %v9125
    %v10022 = vpack.c.bf16 %v9134, %v9130
    %v10023 = vpack.c.bf16 %v9135, %v9131
    %v10024 = vpack.c.bf16 %v9136, %v9132
    %v10025 = vpack.c.bf16 %v9137, %v9133
    %v10026 = vpack.c.bf16 %v9142, %v9138
    %v10027 = vpack.c.bf16 %v9143, %v9139
    %v10028 = vpack.c.bf16 %v9144, %v9140
    %v10029 = vpack.c.bf16 %v9145, %v9141
    %v10030 = vpack.c.bf16 %v9150, %v9146
    %v10031 = vpack.c.bf16 %v9151, %v9147
    %v10032 = vpack.c.bf16 %v9152, %v9148
    %v10033 = vpack.c.bf16 %v9153, %v9149
    %v10034 = vpack.c.bf16 %v9158, %v9154
    %v10035 = vpack.c.bf16 %v9159, %v9155
    %v10036 = vpack.c.bf16 %v9160, %v9156
    %v10037 = vpack.c.bf16 %v9161, %v9157
    %v10038 = vpack.c.bf16 %v9166, %v9162
    %v10039 = vpack.c.bf16 %v9167, %v9163
    %v10040 = vpack.c.bf16 %v9168, %v9164
    %v10041 = vpack.c.bf16 %v9169, %v9165
    %v10042 = vpack.c.bf16 %v9174, %v9170
    %v10043 = vpack.c.bf16 %v9175, %v9171
    %v10044 = vpack.c.bf16 %v9176, %v9172
    %v10045 = vpack.c.bf16 %v9177, %v9173
    %v10046 = vpack.c.bf16 %v9182, %v9178
    %v10047 = vpack.c.bf16 %v9183, %v9179
    %v10048 = vpack.c.bf16 %v9184, %v9180
    %v10049 = vpack.c.bf16 %v9185, %v9181
    %v10050 = vpack.c.bf16 %v9190, %v9186
    %v10051 = vpack.c.bf16 %v9191, %v9187
    %v10052 = vpack.c.bf16 %v9192, %v9188
    %v10053 = vpack.c.bf16 %v9193, %v9189
    %v10054 = vpack.c.bf16 %v9198, %v9194
    %v10055 = vpack.c.bf16 %v9199, %v9195
    %v10056 = vpack.c.bf16 %v9200, %v9196
    %v10057 = vpack.c.bf16 %v9201, %v9197
    %v10058 = vpack.c.bf16 %v9206, %v9202
    %v10059 = vpack.c.bf16 %v9207, %v9203
    %v10060 = vpack.c.bf16 %v9208, %v9204
    %v10061 = vpack.c.bf16 %v9209, %v9205
    %v10062 = vpack.c.bf16 %v9214, %v9210
    %v10063 = vpack.c.bf16 %v9215, %v9211
    %v10064 = vpack.c.bf16 %v9216, %v9212
    %v10065 = vpack.c.bf16 %v9217, %v9213
    %v10066 = vpack.c.bf16 %v9222, %v9218
    %v10067 = vpack.c.bf16 %v9223, %v9219
    %v10068 = vpack.c.bf16 %v9224, %v9220
    %v10069 = vpack.c.bf16 %v9225, %v9221
    %v10070 = vpack.c.bf16 %v9230, %v9226
    %v10071 = vpack.c.bf16 %v9231, %v9227
    %v10072 = vpack.c.bf16 %v9232, %v9228
    %v10073 = vpack.c.bf16 %v9233, %v9229
    %v10074 = vpack.c.bf16 %v9238, %v9234
    %v10075 = vpack.c.bf16 %v9239, %v9235
    %v10076 = vpack.c.bf16 %v9240, %v9236
    %v10077 = vpack.c.bf16 %v9241, %v9237
    %v10078 = vpack.c.bf16 %v9246, %v9242
    %v10079 = vpack.c.bf16 %v9247, %v9243
    %v10080 = vpack.c.bf16 %v9248, %v9244
    %v10081 = vpack.c.bf16 %v9249, %v9245
    %v10082 = vpack.c.bf16 %v9254, %v9250
    %v10083 = vpack.c.bf16 %v9255, %v9251
    %v10084 = vpack.c.bf16 %v9256, %v9252
    %v10085 = vpack.c.bf16 %v9257, %v9253
    %v10086 = vpack.c.bf16 %v9262, %v9258
    %v10087 = vpack.c.bf16 %v9263, %v9259
    %v10088 = vpack.c.bf16 %v9264, %v9260
    %v10089 = vpack.c.bf16 %v9265, %v9261
    %v10090 = vpack.c.bf16 %v9270, %v9266
    %v10091 = vpack.c.bf16 %v9271, %v9267
    %v10092 = vpack.c.bf16 %v9272, %v9268
    %v10093 = vpack.c.bf16 %v9273, %v9269
    %v10094 = vpack.c.bf16 %v9278, %v9274
    %v10095 = vpack.c.bf16 %v9279, %v9275
    %v10096 = vpack.c.bf16 %v9280, %v9276
    %v10097 = vpack.c.bf16 %v9281, %v9277
    %v10098 = vpack.c.bf16 %v9286, %v9282
    %v10099 = vpack.c.bf16 %v9287, %v9283
    %v10100 = vpack.c.bf16 %v9288, %v9284
    %v10101 = vpack.c.bf16 %v9289, %v9285
    %v10102 = vpack.c.bf16 %v9294, %v9290
    %v10103 = vpack.c.bf16 %v9295, %v9291
    %v10104 = vpack.c.bf16 %v9296, %v9292
    %v10105 = vpack.c.bf16 %v9297, %v9293
    %v10106 = vpack.c.bf16 %v9302, %v9298
    %v10107 = vpack.c.bf16 %v9303, %v9299
    %v10108 = vpack.c.bf16 %v9304, %v9300
    %v10109 = vpack.c.bf16 %v9305, %v9301
    %v10110 = vpack.c.bf16 %v9310, %v9306
    %v10111 = vpack.c.bf16 %v9311, %v9307
    %v10112 = vpack.c.bf16 %v9312, %v9308
    %v10113 = vpack.c.bf16 %v9313, %v9309
    %v10114 = vpack.c.bf16 %v9318, %v9314
    %v10115 = vpack.c.bf16 %v9319, %v9315
    %v10116 = vpack.c.bf16 %v9320, %v9316
    %v10117 = vpack.c.bf16 %v9321, %v9317
    %v10118 = vpack.c.bf16 %v9326, %v9322
    %v10119 = vpack.c.bf16 %v9327, %v9323
    %v10120 = vpack.c.bf16 %v9328, %v9324
    %v10121 = vpack.c.bf16 %v9329, %v9325
    %v10122 = vpack.c.bf16 %v9334, %v9330
    %v10123 = vpack.c.bf16 %v9335, %v9331
    %v10124 = vpack.c.bf16 %v9336, %v9332
    %v10125 = vpack.c.bf16 %v9337, %v9333
    %v10126 = vpack.c.bf16 %v9342, %v9338
    %v10127 = vpack.c.bf16 %v9343, %v9339
    %v10128 = vpack.c.bf16 %v9344, %v9340
    %v10129 = vpack.c.bf16 %v9345, %v9341
    %v10130 = vpack.c.bf16 %v9350, %v9346
    %v10131 = vpack.c.bf16 %v9351, %v9347
    %v10132 = vpack.c.bf16 %v9352, %v9348
    %v10133 = vpack.c.bf16 %v9353, %v9349
    %v10134 = vpack.c.bf16 %v9358, %v9354
    %v10135 = vpack.c.bf16 %v9359, %v9355
    %v10136 = vpack.c.bf16 %v9360, %v9356
    %v10137 = vpack.c.bf16 %v9361, %v9357
    %v10138 = vpack.c.bf16 %v9366, %v9362
    %v10139 = vpack.c.bf16 %v9367, %v9363
    %v10140 = vpack.c.bf16 %v9368, %v9364
    %v10141 = vpack.c.bf16 %v9369, %v9365
    %v10142 = vpack.c.bf16 %v9374, %v9370
    %v10143 = vpack.c.bf16 %v9375, %v9371
    %v10144 = vpack.c.bf16 %v9376, %v9372
    %v10145 = vpack.c.bf16 %v9377, %v9373
    %v10146 = vpack.c.bf16 %v9382, %v9378
    %v10147 = vpack.c.bf16 %v9383, %v9379
    %v10148 = vpack.c.bf16 %v9384, %v9380
    %v10149 = vpack.c.bf16 %v9385, %v9381
    %v10150 = vpack.c.bf16 %v9390, %v9386
    %v10151 = vpack.c.bf16 %v9391, %v9387
    %v10152 = vpack.c.bf16 %v9392, %v9388
    %v10153 = vpack.c.bf16 %v9393, %v9389
    %v10154 = vpack.c.bf16 %v9398, %v9394
    %v10155 = vpack.c.bf16 %v9399, %v9395
    %v10156 = vpack.c.bf16 %v9400, %v9396
    %v10157 = vpack.c.bf16 %v9401, %v9397
    %v10158 = vpack.c.bf16 %v9406, %v9402
    %v10159 = vpack.c.bf16 %v9407, %v9403
    %v10160 = vpack.c.bf16 %v9408, %v9404
    %v10161 = vpack.c.bf16 %v9409, %v9405
    %v10162 = vpack.c.bf16 %v9414, %v9410
    %v10163 = vpack.c.bf16 %v9415, %v9411
    %v10164 = vpack.c.bf16 %v9416, %v9412
    %v10165 = vpack.c.bf16 %v9417, %v9413
    %v10166 = vpack.c.bf16 %v9422, %v9418
    %v10167 = vpack.c.bf16 %v9423, %v9419
    %v10168 = vpack.c.bf16 %v9424, %v9420
    %v10169 = vpack.c.bf16 %v9425, %v9421
    %v10170 = vpack.c.bf16 %v9430, %v9426
    %v10171 = vpack.c.bf16 %v9431, %v9427
    %v10172 = vpack.c.bf16 %v9432, %v9428
    %v10173 = vpack.c.bf16 %v9433, %v9429
    %v10174 = vpack.c.bf16 %v9438, %v9434
    %v10175 = vpack.c.bf16 %v9439, %v9435
    %v10176 = vpack.c.bf16 %v9440, %v9436
    %v10177 = vpack.c.bf16 %v9441, %v9437
    %v10178 = vpack.c.bf16 %v9446, %v9442
    %v10179 = vpack.c.bf16 %v9447, %v9443
    %v10180 = vpack.c.bf16 %v9448, %v9444
    %v10181 = vpack.c.bf16 %v9449, %v9445
    %v10182 = vpack.c.bf16 %v9454, %v9450
    %v10183 = vpack.c.bf16 %v9455, %v9451
    %v10184 = vpack.c.bf16 %v9456, %v9452
    %v10185 = vpack.c.bf16 %v9457, %v9453
    %v10186 = vpack.c.bf16 %v9462, %v9458
    %v10187 = vpack.c.bf16 %v9463, %v9459
    %v10188 = vpack.c.bf16 %v9464, %v9460
    %v10189 = vpack.c.bf16 %v9465, %v9461
    %v10190 = vpack.c.bf16 %v9470, %v9466
    %v10191 = vpack.c.bf16 %v9471, %v9467
    %v10192 = vpack.c.bf16 %v9472, %v9468
    %v10193 = vpack.c.bf16 %v9473, %v9469
    %v10194 = vpack.c.bf16 %v9478, %v9474
    %v10195 = vpack.c.bf16 %v9479, %v9475
    %v10196 = vpack.c.bf16 %v9480, %v9476
    %v10197 = vpack.c.bf16 %v9481, %v9477
    %v10198 = vpack.c.bf16 %v9486, %v9482
    %v10199 = vpack.c.bf16 %v9487, %v9483
    %v10200 = vpack.c.bf16 %v9488, %v9484
    %v10201 = vpack.c.bf16 %v9489, %v9485
    %v10202 = vpack.c.bf16 %v9494, %v9490
    %v10203 = vpack.c.bf16 %v9495, %v9491
    %v10204 = vpack.c.bf16 %v9496, %v9492
    %v10205 = vpack.c.bf16 %v9497, %v9493
    %v10206 = vpack.c.bf16 %v9502, %v9498
    %v10207 = vpack.c.bf16 %v9503, %v9499
    %v10208 = vpack.c.bf16 %v9504, %v9500
    %v10209 = vpack.c.bf16 %v9505, %v9501
    %v10210 = vpack.c.bf16 %v9510, %v9506
    %v10211 = vpack.c.bf16 %v9511, %v9507
    %v10212 = vpack.c.bf16 %v9512, %v9508
    %v10213 = vpack.c.bf16 %v9513, %v9509
    %v10214 = vpack.c.bf16 %v9518, %v9514
    %v10215 = vpack.c.bf16 %v9519, %v9515
    %v10216 = vpack.c.bf16 %v9520, %v9516
    %v10217 = vpack.c.bf16 %v9521, %v9517
    %v10218 = vpack.c.bf16 %v9526, %v9522
    %v10219 = vpack.c.bf16 %v9527, %v9523
    %v10220 = vpack.c.bf16 %v9528, %v9524
    %v10221 = vpack.c.bf16 %v9529, %v9525
    %v10222 = vpack.c.bf16 %v9534, %v9530
    %v10223 = vpack.c.bf16 %v9535, %v9531
    %v10224 = vpack.c.bf16 %v9536, %v9532
    %v10225 = vpack.c.bf16 %v9537, %v9533
    %v10226 = vpack.c.bf16 %v9542, %v9538
    %v10227 = vpack.c.bf16 %v9543, %v9539
    %v10228 = vpack.c.bf16 %v9544, %v9540
    %v10229 = vpack.c.bf16 %v9545, %v9541
    %v10230 = vpack.c.bf16 %v9550, %v9546
    %v10231 = vpack.c.bf16 %v9551, %v9547
    %v10232 = vpack.c.bf16 %v9552, %v9548
    %v10233 = vpack.c.bf16 %v9553, %v9549
    %v10234 = vpack.c.bf16 %v9558, %v9554
    %v10235 = vpack.c.bf16 %v9559, %v9555
    %v10236 = vpack.c.bf16 %v9560, %v9556
    %v10237 = vpack.c.bf16 %v9561, %v9557
    %v10238 = vpack.c.bf16 %v9566, %v9562
    %v10239 = vpack.c.bf16 %v9567, %v9563
    %v10240 = vpack.c.bf16 %v9568, %v9564
    %v10241 = vpack.c.bf16 %v9569, %v9565
    %v10242 = vpack.c.bf16 %v9574, %v9570
    %v10243 = vpack.c.bf16 %v9575, %v9571
    %v10244 = vpack.c.bf16 %v9576, %v9572
    %v10245 = vpack.c.bf16 %v9577, %v9573
    %v10246 = vpack.c.bf16 %v9582, %v9578
    %v10247 = vpack.c.bf16 %v9583, %v9579
    %v10248 = vpack.c.bf16 %v9584, %v9580
    %v10249 = vpack.c.bf16 %v9585, %v9581
    %v10250 = vpack.c.bf16 %v9590, %v9586
    %v10251 = vpack.c.bf16 %v9591, %v9587
    %v10252 = vpack.c.bf16 %v9592, %v9588
    %v10253 = vpack.c.bf16 %v9593, %v9589
    %v10254 = vpack.c.bf16 %v9598, %v9594
    %v10255 = vpack.c.bf16 %v9599, %v9595
    %v10256 = vpack.c.bf16 %v9600, %v9596
    %v10257 = vpack.c.bf16 %v9601, %v9597
    %v10258 = vpack.c.bf16 %v9606, %v9602
    %v10259 = vpack.c.bf16 %v9607, %v9603
    %v10260 = vpack.c.bf16 %v9608, %v9604
    %v10261 = vpack.c.bf16 %v9609, %v9605
    %v10262 = vpack.c.bf16 %v9614, %v9610
    %v10263 = vpack.c.bf16 %v9615, %v9611
    %v10264 = vpack.c.bf16 %v9616, %v9612
    %v10265 = vpack.c.bf16 %v9617, %v9613
    %v10266 = vpack.c.bf16 %v9622, %v9618
    %v10267 = vpack.c.bf16 %v9623, %v9619
    %v10268 = vpack.c.bf16 %v9624, %v9620
    %v10269 = vpack.c.bf16 %v9625, %v9621
    %v10270 = vpack.c.bf16 %v9630, %v9626
    %v10271 = vpack.c.bf16 %v9631, %v9627
    %v10272 = vpack.c.bf16 %v9632, %v9628
    %v10273 = vpack.c.bf16 %v9633, %v9629
    %v10274 = vpack.c.bf16 %v9638, %v9634
    %v10275 = vpack.c.bf16 %v9639, %v9635
    %v10276 = vpack.c.bf16 %v9640, %v9636
    %v10277 = vpack.c.bf16 %v9641, %v9637
    %v10278 = vpack.c.bf16 %v9646, %v9642
    %v10279 = vpack.c.bf16 %v9647, %v9643
    %v10280 = vpack.c.bf16 %v9648, %v9644
    %v10281 = vpack.c.bf16 %v9649, %v9645
    %v10282 = vpack.c.bf16 %v9654, %v9650
    %v10283 = vpack.c.bf16 %v9655, %v9651
    %v10284 = vpack.c.bf16 %v9656, %v9652
    %v10285 = vpack.c.bf16 %v9657, %v9653
    %v10286 = vpack.c.bf16 %v9662, %v9658
    %v10287 = vpack.c.bf16 %v9663, %v9659
    %v10288 = vpack.c.bf16 %v9664, %v9660
    %v10289 = vpack.c.bf16 %v9665, %v9661
    %v10290 = vpack.c.bf16 %v9670, %v9666
    %v10291 = vpack.c.bf16 %v9671, %v9667
    %v10292 = vpack.c.bf16 %v9672, %v9668
    %v10293 = vpack.c.bf16 %v9673, %v9669
    %v10294 = vpack.c.bf16 %v9678, %v9674
    %v10295 = vpack.c.bf16 %v9679, %v9675
    %v10296 = vpack.c.bf16 %v9680, %v9676
    %v10297 = vpack.c.bf16 %v9681, %v9677
    %v10298 = vpack.c.bf16 %v9686, %v9682
    %v10299 = vpack.c.bf16 %v9687, %v9683
    %v10300 = vpack.c.bf16 %v9688, %v9684
    %v10301 = vpack.c.bf16 %v9689, %v9685
    %v10302 = vpack.c.bf16 %v9694, %v9690
    %v10303 = vpack.c.bf16 %v9695, %v9691
    %v10304 = vpack.c.bf16 %v9696, %v9692
    %v10305 = vpack.c.bf16 %v9697, %v9693
    %v10306 = vpack.c.bf16 %v9702, %v9698
    %v10307 = vpack.c.bf16 %v9703, %v9699
    %v10308 = vpack.c.bf16 %v9704, %v9700
    %v10309 = vpack.c.bf16 %v9705, %v9701
    %v10310 = vpack.c.bf16 %v9710, %v9706
    %v10311 = vpack.c.bf16 %v9711, %v9707
    %v10312 = vpack.c.bf16 %v9712, %v9708
    %v10313 = vpack.c.bf16 %v9713, %v9709
    %v10314 = vpack.c.bf16 %v9718, %v9714
    %v10315 = vpack.c.bf16 %v9719, %v9715
    %v10316 = vpack.c.bf16 %v9720, %v9716
    %v10317 = vpack.c.bf16 %v9721, %v9717
    %v10318 = vpack.c.bf16 %v9726, %v9722
    %v10319 = vpack.c.bf16 %v9727, %v9723
    %v10320 = vpack.c.bf16 %v9728, %v9724
    %v10321 = vpack.c.bf16 %v9729, %v9725
    %v10322 = vpack.c.bf16 %v9734, %v9730
    %v10323 = vpack.c.bf16 %v9735, %v9731
    %v10324 = vpack.c.bf16 %v9736, %v9732
    %v10325 = vpack.c.bf16 %v9737, %v9733
    %v10326 = vpack.c.bf16 %v9742, %v9738
    %v10327 = vpack.c.bf16 %v9743, %v9739
    %v10328 = vpack.c.bf16 %v9744, %v9740
    %v10329 = vpack.c.bf16 %v9745, %v9741
    %v10330 = vpack.c.bf16 %v9750, %v9746
    %v10331 = vpack.c.bf16 %v9751, %v9747
    %v10332 = vpack.c.bf16 %v9752, %v9748
    %v10333 = vpack.c.bf16 %v9753, %v9749
    %v10334 = vpack.c.bf16 %v9758, %v9754
    %v10335 = vpack.c.bf16 %v9759, %v9755
    %v10336 = vpack.c.bf16 %v9760, %v9756
    %v10337 = vpack.c.bf16 %v9761, %v9757
    %v10338 = vpack.c.bf16 %v9766, %v9762
    %v10339 = vpack.c.bf16 %v9767, %v9763
    %v10340 = vpack.c.bf16 %v9768, %v9764
    %v10341 = vpack.c.bf16 %v9769, %v9765
    %v10342 = vpack.c.bf16 %v9774, %v9770
    %v10343 = vpack.c.bf16 %v9775, %v9771
    %v10344 = vpack.c.bf16 %v9776, %v9772
    %v10345 = vpack.c.bf16 %v9777, %v9773
    %v10346 = vpack.c.bf16 %v9782, %v9778
    %v10347 = vpack.c.bf16 %v9783, %v9779
    %v10348 = vpack.c.bf16 %v9784, %v9780
    %v10349 = vpack.c.bf16 %v9785, %v9781
    %v10350 = vpack.c.bf16 %v9790, %v9786
    %v10351 = vpack.c.bf16 %v9791, %v9787
    %v10352 = vpack.c.bf16 %v9792, %v9788
    %v10353 = vpack.c.bf16 %v9793, %v9789
    %v10354 = vpack.c.bf16 %v9798, %v9794
    %v10355 = vpack.c.bf16 %v9799, %v9795
    %v10356 = vpack.c.bf16 %v9800, %v9796
    %v10357 = vpack.c.bf16 %v9801, %v9797
    %v10358 = vpack.c.bf16 %v9806, %v9802
    %v10359 = vpack.c.bf16 %v9807, %v9803
    %v10360 = vpack.c.bf16 %v9808, %v9804
    %v10361 = vpack.c.bf16 %v9809, %v9805
    %v10362 = vpack.c.bf16 %v9814, %v9810
    %v10363 = vpack.c.bf16 %v9815, %v9811
    %v10364 = vpack.c.bf16 %v9816, %v9812
    %v10365 = vpack.c.bf16 %v9817, %v9813
    %v10366 = vpack.c.bf16 %v9822, %v9818
    %v10367 = vpack.c.bf16 %v9823, %v9819
    %v10368 = vpack.c.bf16 %v9824, %v9820
    %v10369 = vpack.c.bf16 %v9825, %v9821
    %v10370 = vpack.c.bf16 %v9830, %v9826
    %v10371 = vpack.c.bf16 %v9831, %v9827
    %v10372 = vpack.c.bf16 %v9832, %v9828
    %v10373 = vpack.c.bf16 %v9833, %v9829
    %v10374 = vpack.c.bf16 %v9838, %v9834
    %v10375 = vpack.c.bf16 %v9839, %v9835
    %v10376 = vpack.c.bf16 %v9840, %v9836
    %v10377 = vpack.c.bf16 %v9841, %v9837
    %v10378 = vpack.c.bf16 %v9846, %v9842
    %v10379 = vpack.c.bf16 %v9847, %v9843
    %v10380 = vpack.c.bf16 %v9848, %v9844
    %v10381 = vpack.c.bf16 %v9849, %v9845
    %v10382 = vpack.c.bf16 %v9854, %v9850
    %v10383 = vpack.c.bf16 %v9855, %v9851
    %v10384 = vpack.c.bf16 %v9856, %v9852
    %v10385 = vpack.c.bf16 %v9857, %v9853
    %v10386 = vpack.c.bf16 %v9862, %v9858
    %v10387 = vpack.c.bf16 %v9863, %v9859
    %v10388 = vpack.c.bf16 %v9864, %v9860
    %v10389 = vpack.c.bf16 %v9865, %v9861
    %v10390 = vpack.c.bf16 %v9870, %v9866
    %v10391 = vpack.c.bf16 %v9871, %v9867
    %v10392 = vpack.c.bf16 %v9872, %v9868
    %v10393 = vpack.c.bf16 %v9873, %v9869
    %v10394 = vpack.c.bf16 %v9878, %v9874
    %v10395 = vpack.c.bf16 %v9879, %v9875
    %v10396 = vpack.c.bf16 %v9880, %v9876
    %v10397 = vpack.c.bf16 %v9881, %v9877
    %v10398 = vpack.c.bf16 %v9886, %v9882
    %v10399 = vpack.c.bf16 %v9887, %v9883
    %v10400 = vpack.c.bf16 %v9888, %v9884
    %v10401 = vpack.c.bf16 %v9889, %v9885
    %v10402 = vpack.c.bf16 %v7570, %v7570
    %v10403 = vpack.c.bf16 %v7571, %v7571
    %v10404 = vpack.c.bf16 %v7572, %v7572
    %v10405 = vpack.c.bf16 %v7573, %v7573
    %v10406 = vpack.c.bf16 %v7574, %v7574
    %v10407 = vpack.c.bf16 %v7575, %v7575
    %v10408 = vpack.c.bf16 %v7576, %v7576
    %v10409 = vpack.c.bf16 %v7577, %v7577
    %v10410 = vpack.c.bf16 %v7578, %v7578
    %v10411 = vpack.c.bf16 %v7579, %v7579
    %v10412 = vpack.c.bf16 %v7580, %v7580
    %v10413 = vpack.c.bf16 %v7581, %v7581
    %v10414 = vpack.c.bf16 %v7582, %v7582
    %v10415 = vpack.c.bf16 %v7583, %v7583
    %v10416 = vpack.c.bf16 %v7584, %v7584
    %v10417 = vpack.c.bf16 %v7585, %v7585
    %10418 = vmatpush.bf16.msra.mxu0 %v9918
    %10419 = vmatpush.bf16.msra.mxu0 %v9914
    %10420 = vmatpush.bf16.msra.mxu0 %v9910
    %10421 = vmatpush.bf16.msra.mxu0 %v9906
    %10422 = vmatpush.bf16.msra.mxu0 %v9902
    %10423 = vmatpush.bf16.msra.mxu0 %v9898
    %10424 = vmatpush.bf16.msra.mxu0 %v9894
    %10425 = vmatpush.bf16.msra.mxu0 %v9890
    %10426 = vmatmul.bf16.gmra.mxu0 %v10402
    %v10427 = vpop.f32.mrf.mxu0
    %v10428 = vadd.f32 0.0, %v10427
    %v10429 = vpop.f32.mrf.mxu0
    %10430 = vdwg.mxu0
    %10431 = vmatpush.bf16.msra.mxu0 %v9950
    %10432 = vmatpush.bf16.msra.mxu0 %v9946
    %10433 = vmatpush.bf16.msra.mxu0 %v9942
    %10434 = vmatpush.bf16.msra.mxu0 %v9938
    %10435 = vmatpush.bf16.msra.mxu0 %v9934
    %10436 = vmatpush.bf16.msra.mxu0 %v9930
    %10437 = vmatpush.bf16.msra.mxu0 %v9926
    %10438 = vmatpush.bf16.msra.mxu0 %v9922
    %10439 = vmatmul.bf16.gmra.mxu0 %v10403
    %v10440 = vpop.f32.mrf.mxu0
    %v10441 = vadd.f32 %v10428, %v10440
    %v10442 = vpop.f32.mrf.mxu0
    %10443 = vdwg.mxu0
    %10444 = vmatpush.bf16.msra.mxu0 %v9982
    %10445 = vmatpush.bf16.msra.mxu0 %v9978
    %10446 = vmatpush.bf16.msra.mxu0 %v9974
    %10447 = vmatpush.bf16.msra.mxu0 %v9970
    %10448 = vmatpush.bf16.msra.mxu0 %v9966
    %10449 = vmatpush.bf16.msra.mxu0 %v9962
    %10450 = vmatpush.bf16.msra.mxu0 %v9958
    %10451 = vmatpush.bf16.msra.mxu0 %v9954
    %10452 = vmatmul.bf16.gmra.mxu0 %v10404
    %v10453 = vpop.f32.mrf.mxu0
    %v10454 = vadd.f32 %v10441, %v10453
    %v10455 = vpop.f32.mrf.mxu0
    %10456 = vdwg.mxu0
    %10457 = vmatpush.bf16.msra.mxu0 %v10014
    %10458 = vmatpush.bf16.msra.mxu0 %v10010
    %10459 = vmatpush.bf16.msra.mxu0 %v10006
    %10460 = vmatpush.bf16.msra.mxu0 %v10002
    %10461 = vmatpush.bf16.msra.mxu0 %v9998
    %10462 = vmatpush.bf16.msra.mxu0 %v9994
    %10463 = vmatpush.bf16.msra.mxu0 %v9990
    %10464 = vmatpush.bf16.msra.mxu0 %v9986
    %10465 = vmatmul.bf16.gmra.mxu0 %v10405
    %v10466 = vpop.f32.mrf.mxu0
    %v10467 = vadd.f32 %v10454, %v10466
    %v10468 = vpop.f32.mrf.mxu0
    %10469 = vdwg.mxu0
    %10470 = vmatpush.bf16.msra.mxu0 %v10046
    %10471 = vmatpush.bf16.msra.mxu0 %v10042
    %10472 = vmatpush.bf16.msra.mxu0 %v10038
    %10473 = vmatpush.bf16.msra.mxu0 %v10034
    %10474 = vmatpush.bf16.msra.mxu0 %v10030
    %10475 = vmatpush.bf16.msra.mxu0 %v10026
    %10476 = vmatpush.bf16.msra.mxu0 %v10022
    %10477 = vmatpush.bf16.msra.mxu0 %v10018
    %10478 = vmatmul.bf16.gmra.mxu0 %v10406
    %v10479 = vpop.f32.mrf.mxu0
    %v10480 = vadd.f32 %v10467, %v10479
    %v10481 = vpop.f32.mrf.mxu0
    %10482 = vdwg.mxu0
    %10483 = vmatpush.bf16.msra.mxu0 %v10078
    %10484 = vmatpush.bf16.msra.mxu0 %v10074
    %10485 = vmatpush.bf16.msra.mxu0 %v10070
    %10486 = vmatpush.bf16.msra.mxu0 %v10066
    %10487 = vmatpush.bf16.msra.mxu0 %v10062
    %10488 = vmatpush.bf16.msra.mxu0 %v10058
    %10489 = vmatpush.bf16.msra.mxu0 %v10054
    %10490 = vmatpush.bf16.msra.mxu0 %v10050
    %10491 = vmatmul.bf16.gmra.mxu0 %v10407
    %v10492 = vpop.f32.mrf.mxu0
    %v10493 = vadd.f32 %v10480, %v10492
    %v10494 = vpop.f32.mrf.mxu0
    %10495 = vdwg.mxu0
    %10496 = vmatpush.bf16.msra.mxu0 %v10110
    %10497 = vmatpush.bf16.msra.mxu0 %v10106
    %10498 = vmatpush.bf16.msra.mxu0 %v10102
    %10499 = vmatpush.bf16.msra.mxu0 %v10098
    %10500 = vmatpush.bf16.msra.mxu0 %v10094
    %10501 = vmatpush.bf16.msra.mxu0 %v10090
    %10502 = vmatpush.bf16.msra.mxu0 %v10086
    %10503 = vmatpush.bf16.msra.mxu0 %v10082
    %10504 = vmatmul.bf16.gmra.mxu0 %v10408
    %v10505 = vpop.f32.mrf.mxu0
    %v10506 = vadd.f32 %v10493, %v10505
    %v10507 = vpop.f32.mrf.mxu0
    %10508 = vdwg.mxu0
    %10509 = vmatpush.bf16.msra.mxu0 %v10142
    %10510 = vmatpush.bf16.msra.mxu0 %v10138
    %10511 = vmatpush.bf16.msra.mxu0 %v10134
    %10512 = vmatpush.bf16.msra.mxu0 %v10130
    %10513 = vmatpush.bf16.msra.mxu0 %v10126
    %10514 = vmatpush.bf16.msra.mxu0 %v10122
    %10515 = vmatpush.bf16.msra.mxu0 %v10118
    %10516 = vmatpush.bf16.msra.mxu0 %v10114
    %10517 = vmatmul.bf16.gmra.mxu0 %v10409
    %v10518 = vpop.f32.mrf.mxu0
    %v10519 = vadd.f32 %v10506, %v10518
    %v10520 = vpop.f32.mrf.mxu0
    %10521 = vdwg.mxu0
    %10522 = vmatpush.bf16.msra.mxu0 %v10174
    %10523 = vmatpush.bf16.msra.mxu0 %v10170
    %10524 = vmatpush.bf16.msra.mxu0 %v10166
    %10525 = vmatpush.bf16.msra.mxu0 %v10162
    %10526 = vmatpush.bf16.msra.mxu0 %v10158
    %10527 = vmatpush.bf16.msra.mxu0 %v10154
    %10528 = vmatpush.bf16.msra.mxu0 %v10150
    %10529 = vmatpush.bf16.msra.mxu0 %v10146
    %10530 = vmatmul.bf16.gmra.mxu0 %v10410
    %v10531 = vpop.f32.mrf.mxu0
    %v10532 = vadd.f32 %v10519, %v10531
    %v10533 = vpop.f32.mrf.mxu0
    %10534 = vdwg.mxu0
    %10535 = vmatpush.bf16.msra.mxu0 %v10206
    %10536 = vmatpush.bf16.msra.mxu0 %v10202
    %10537 = vmatpush.bf16.msra.mxu0 %v10198
    %10538 = vmatpush.bf16.msra.mxu0 %v10194
    %10539 = vmatpush.bf16.msra.mxu0 %v10190
    %10540 = vmatpush.bf16.msra.mxu0 %v10186
    %10541 = vmatpush.bf16.msra.mxu0 %v10182
    %10542 = vmatpush.bf16.msra.mxu0 %v10178
    %10543 = vmatmul.bf16.gmra.mxu0 %v10411
    %v10544 = vpop.f32.mrf.mxu0
    %v10545 = vadd.f32 %v10532, %v10544
    %v10546 = vpop.f32.mrf.mxu0
    %10547 = vdwg.mxu0
    %10548 = vmatpush.bf16.msra.mxu0 %v10238
    %10549 = vmatpush.bf16.msra.mxu0 %v10234
    %10550 = vmatpush.bf16.msra.mxu0 %v10230
    %10551 = vmatpush.bf16.msra.mxu0 %v10226
    %10552 = vmatpush.bf16.msra.mxu0 %v10222
    %10553 = vmatpush.bf16.msra.mxu0 %v10218
    %10554 = vmatpush.bf16.msra.mxu0 %v10214
    %10555 = vmatpush.bf16.msra.mxu0 %v10210
    %10556 = vmatmul.bf16.gmra.mxu0 %v10412
    %v10557 = vpop.f32.mrf.mxu0
    %v10558 = vadd.f32 %v10545, %v10557
    %v10559 = vpop.f32.mrf.mxu0
    %10560 = vdwg.mxu0
    %10561 = vmatpush.bf16.msra.mxu0 %v10270
    %10562 = vmatpush.bf16.msra.mxu0 %v10266
    %10563 = vmatpush.bf16.msra.mxu0 %v10262
    %10564 = vmatpush.bf16.msra.mxu0 %v10258
    %10565 = vmatpush.bf16.msra.mxu0 %v10254
    %10566 = vmatpush.bf16.msra.mxu0 %v10250
    %10567 = vmatpush.bf16.msra.mxu0 %v10246
    %10568 = vmatpush.bf16.msra.mxu0 %v10242
    %10569 = vmatmul.bf16.gmra.mxu0 %v10413
    %v10570 = vpop.f32.mrf.mxu0
    %v10571 = vadd.f32 %v10558, %v10570
    %v10572 = vpop.f32.mrf.mxu0
    %10573 = vdwg.mxu0
    %10574 = vmatpush.bf16.msra.mxu0 %v10302
    %10575 = vmatpush.bf16.msra.mxu0 %v10298
    %10576 = vmatpush.bf16.msra.mxu0 %v10294
    %10577 = vmatpush.bf16.msra.mxu0 %v10290
    %10578 = vmatpush.bf16.msra.mxu0 %v10286
    %10579 = vmatpush.bf16.msra.mxu0 %v10282
    %10580 = vmatpush.bf16.msra.mxu0 %v10278
    %10581 = vmatpush.bf16.msra.mxu0 %v10274
    %10582 = vmatmul.bf16.gmra.mxu0 %v10414
    %v10583 = vpop.f32.mrf.mxu0
    %v10584 = vadd.f32 %v10571, %v10583
    %v10585 = vpop.f32.mrf.mxu0
    %10586 = vdwg.mxu0
    %10587 = vmatpush.bf16.msra.mxu0 %v10334
    %10588 = vmatpush.bf16.msra.mxu0 %v10330
    %10589 = vmatpush.bf16.msra.mxu0 %v10326
    %10590 = vmatpush.bf16.msra.mxu0 %v10322
    %10591 = vmatpush.bf16.msra.mxu0 %v10318
    %10592 = vmatpush.bf16.msra.mxu0 %v10314
    %10593 = vmatpush.bf16.msra.mxu0 %v10310
    %10594 = vmatpush.bf16.msra.mxu0 %v10306
    %10595 = vmatmul.bf16.gmra.mxu0 %v10415
    %v10596 = vpop.f32.mrf.mxu0
    %v10597 = vadd.f32 %v10584, %v10596
    %v10598 = vpop.f32.mrf.mxu0
    %10599 = vdwg.mxu0
    %10600 = vmatpush.bf16.msra.mxu0 %v10366
    %10601 = vmatpush.bf16.msra.mxu0 %v10362
    %10602 = vmatpush.bf16.msra.mxu0 %v10358
    %10603 = vmatpush.bf16.msra.mxu0 %v10354
    %10604 = vmatpush.bf16.msra.mxu0 %v10350
    %10605 = vmatpush.bf16.msra.mxu0 %v10346
    %10606 = vmatpush.bf16.msra.mxu0 %v10342
    %10607 = vmatpush.bf16.msra.mxu0 %v10338
    %10608 = vmatmul.bf16.gmra.mxu0 %v10416
    %v10609 = vpop.f32.mrf.mxu0
    %v10610 = vadd.f32 %v10597, %v10609
    %v10611 = vpop.f32.mrf.mxu0
    %10612 = vdwg.mxu0
    %10613 = vmatpush.bf16.msra.mxu0 %v10398
    %10614 = vmatpush.bf16.msra.mxu0 %v10394
    %10615 = vmatpush.bf16.msra.mxu0 %v10390
    %10616 = vmatpush.bf16.msra.mxu0 %v10386
    %10617 = vmatpush.bf16.msra.mxu0 %v10382
    %10618 = vmatpush.bf16.msra.mxu0 %v10378
    %10619 = vmatpush.bf16.msra.mxu0 %v10374
    %10620 = vmatpush.bf16.msra.mxu0 %v10370
    %10621 = vmatmul.bf16.gmra.mxu0 %v10417
    %v10622 = vpop.f32.mrf.mxu0
    %v10623 = vadd.f32 %v10610, %v10622
    %v10624 = vpop.f32.mrf.mxu0
    %10625 = vdwg.mxu0
    %10626 = vmatpush.bf16.msra.mxu0 %v9919
    %10627 = vmatpush.bf16.msra.mxu0 %v9915
    %10628 = vmatpush.bf16.msra.mxu0 %v9911
    %10629 = vmatpush.bf16.msra.mxu0 %v9907
    %10630 = vmatpush.bf16.msra.mxu0 %v9903
    %10631 = vmatpush.bf16.msra.mxu0 %v9899
    %10632 = vmatpush.bf16.msra.mxu0 %v9895
    %10633 = vmatpush.bf16.msra.mxu0 %v9891
    %10634 = vmatmul.bf16.gmra.mxu0 %v10402
    %v10635 = vpop.f32.mrf.mxu0
    %v10636 = vadd.f32 0.0, %v10635
    %v10637 = vpop.f32.mrf.mxu0
    %10638 = vdwg.mxu0
    %10639 = vmatpush.bf16.msra.mxu0 %v9951
    %10640 = vmatpush.bf16.msra.mxu0 %v9947
    %10641 = vmatpush.bf16.msra.mxu0 %v9943
    %10642 = vmatpush.bf16.msra.mxu0 %v9939
    %10643 = vmatpush.bf16.msra.mxu0 %v9935
    %10644 = vmatpush.bf16.msra.mxu0 %v9931
    %10645 = vmatpush.bf16.msra.mxu0 %v9927
    %10646 = vmatpush.bf16.msra.mxu0 %v9923
    %10647 = vmatmul.bf16.gmra.mxu0 %v10403
    %v10648 = vpop.f32.mrf.mxu0
    %v10649 = vadd.f32 %v10636, %v10648
    %v10650 = vpop.f32.mrf.mxu0
    %10651 = vdwg.mxu0
    %10652 = vmatpush.bf16.msra.mxu0 %v9983
    %10653 = vmatpush.bf16.msra.mxu0 %v9979
    %10654 = vmatpush.bf16.msra.mxu0 %v9975
    %10655 = vmatpush.bf16.msra.mxu0 %v9971
    %10656 = vmatpush.bf16.msra.mxu0 %v9967
    %10657 = vmatpush.bf16.msra.mxu0 %v9963
    %10658 = vmatpush.bf16.msra.mxu0 %v9959
    %10659 = vmatpush.bf16.msra.mxu0 %v9955
    %10660 = vmatmul.bf16.gmra.mxu0 %v10404
    %v10661 = vpop.f32.mrf.mxu0
    %v10662 = vadd.f32 %v10649, %v10661
    %v10663 = vpop.f32.mrf.mxu0
    %10664 = vdwg.mxu0
    %10665 = vmatpush.bf16.msra.mxu0 %v10015
    %10666 = vmatpush.bf16.msra.mxu0 %v10011
    %10667 = vmatpush.bf16.msra.mxu0 %v10007
    %10668 = vmatpush.bf16.msra.mxu0 %v10003
    %10669 = vmatpush.bf16.msra.mxu0 %v9999
    %10670 = vmatpush.bf16.msra.mxu0 %v9995
    %10671 = vmatpush.bf16.msra.mxu0 %v9991
    %10672 = vmatpush.bf16.msra.mxu0 %v9987
    %10673 = vmatmul.bf16.gmra.mxu0 %v10405
    %v10674 = vpop.f32.mrf.mxu0
    %v10675 = vadd.f32 %v10662, %v10674
    %v10676 = vpop.f32.mrf.mxu0
    %10677 = vdwg.mxu0
    %10678 = vmatpush.bf16.msra.mxu0 %v10047
    %10679 = vmatpush.bf16.msra.mxu0 %v10043
    %10680 = vmatpush.bf16.msra.mxu0 %v10039
    %10681 = vmatpush.bf16.msra.mxu0 %v10035
    %10682 = vmatpush.bf16.msra.mxu0 %v10031
    %10683 = vmatpush.bf16.msra.mxu0 %v10027
    %10684 = vmatpush.bf16.msra.mxu0 %v10023
    %10685 = vmatpush.bf16.msra.mxu0 %v10019
    %10686 = vmatmul.bf16.gmra.mxu0 %v10406
    %v10687 = vpop.f32.mrf.mxu0
    %v10688 = vadd.f32 %v10675, %v10687
    %v10689 = vpop.f32.mrf.mxu0
    %10690 = vdwg.mxu0
    %10691 = vmatpush.bf16.msra.mxu0 %v10079
    %10692 = vmatpush.bf16.msra.mxu0 %v10075
    %10693 = vmatpush.bf16.msra.mxu0 %v10071
    %10694 = vmatpush.bf16.msra.mxu0 %v10067
    %10695 = vmatpush.bf16.msra.mxu0 %v10063
    %10696 = vmatpush.bf16.msra.mxu0 %v10059
    %10697 = vmatpush.bf16.msra.mxu0 %v10055
    %10698 = vmatpush.bf16.msra.mxu0 %v10051
    %10699 = vmatmul.bf16.gmra.mxu0 %v10407
    %v10700 = vpop.f32.mrf.mxu0
    %v10701 = vadd.f32 %v10688, %v10700
    %v10702 = vpop.f32.mrf.mxu0
    %10703 = vdwg.mxu0
    %10704 = vmatpush.bf16.msra.mxu0 %v10111
    %10705 = vmatpush.bf16.msra.mxu0 %v10107
    %10706 = vmatpush.bf16.msra.mxu0 %v10103
    %10707 = vmatpush.bf16.msra.mxu0 %v10099
    %10708 = vmatpush.bf16.msra.mxu0 %v10095
    %10709 = vmatpush.bf16.msra.mxu0 %v10091
    %10710 = vmatpush.bf16.msra.mxu0 %v10087
    %10711 = vmatpush.bf16.msra.mxu0 %v10083
    %10712 = vmatmul.bf16.gmra.mxu0 %v10408
    %v10713 = vpop.f32.mrf.mxu0
    %v10714 = vadd.f32 %v10701, %v10713
    %v10715 = vpop.f32.mrf.mxu0
    %10716 = vdwg.mxu0
    %10717 = vmatpush.bf16.msra.mxu0 %v10143
    %10718 = vmatpush.bf16.msra.mxu0 %v10139
    %10719 = vmatpush.bf16.msra.mxu0 %v10135
    %10720 = vmatpush.bf16.msra.mxu0 %v10131
    %10721 = vmatpush.bf16.msra.mxu0 %v10127
    %10722 = vmatpush.bf16.msra.mxu0 %v10123
    %10723 = vmatpush.bf16.msra.mxu0 %v10119
    %10724 = vmatpush.bf16.msra.mxu0 %v10115
    %10725 = vmatmul.bf16.gmra.mxu0 %v10409
    %v10726 = vpop.f32.mrf.mxu0
    %v10727 = vadd.f32 %v10714, %v10726
    %v10728 = vpop.f32.mrf.mxu0
    %10729 = vdwg.mxu0
    %10730 = vmatpush.bf16.msra.mxu0 %v10175
    %10731 = vmatpush.bf16.msra.mxu0 %v10171
    %10732 = vmatpush.bf16.msra.mxu0 %v10167
    %10733 = vmatpush.bf16.msra.mxu0 %v10163
    %10734 = vmatpush.bf16.msra.mxu0 %v10159
    %10735 = vmatpush.bf16.msra.mxu0 %v10155
    %10736 = vmatpush.bf16.msra.mxu0 %v10151
    %10737 = vmatpush.bf16.msra.mxu0 %v10147
    %10738 = vmatmul.bf16.gmra.mxu0 %v10410
    %v10739 = vpop.f32.mrf.mxu0
    %v10740 = vadd.f32 %v10727, %v10739
    %v10741 = vpop.f32.mrf.mxu0
    %10742 = vdwg.mxu0
    %10743 = vmatpush.bf16.msra.mxu0 %v10207
    %10744 = vmatpush.bf16.msra.mxu0 %v10203
    %10745 = vmatpush.bf16.msra.mxu0 %v10199
    %10746 = vmatpush.bf16.msra.mxu0 %v10195
    %10747 = vmatpush.bf16.msra.mxu0 %v10191
    %10748 = vmatpush.bf16.msra.mxu0 %v10187
    %10749 = vmatpush.bf16.msra.mxu0 %v10183
    %10750 = vmatpush.bf16.msra.mxu0 %v10179
    %10751 = vmatmul.bf16.gmra.mxu0 %v10411
    %v10752 = vpop.f32.mrf.mxu0
    %v10753 = vadd.f32 %v10740, %v10752
    %v10754 = vpop.f32.mrf.mxu0
    %10755 = vdwg.mxu0
    %10756 = vmatpush.bf16.msra.mxu0 %v10239
    %10757 = vmatpush.bf16.msra.mxu0 %v10235
    %10758 = vmatpush.bf16.msra.mxu0 %v10231
    %10759 = vmatpush.bf16.msra.mxu0 %v10227
    %10760 = vmatpush.bf16.msra.mxu0 %v10223
    %10761 = vmatpush.bf16.msra.mxu0 %v10219
    %10762 = vmatpush.bf16.msra.mxu0 %v10215
    %10763 = vmatpush.bf16.msra.mxu0 %v10211
    %10764 = vmatmul.bf16.gmra.mxu0 %v10412
    %v10765 = vpop.f32.mrf.mxu0
    %v10766 = vadd.f32 %v10753, %v10765
    %v10767 = vpop.f32.mrf.mxu0
    %10768 = vdwg.mxu0
    %10769 = vmatpush.bf16.msra.mxu0 %v10271
    %10770 = vmatpush.bf16.msra.mxu0 %v10267
    %10771 = vmatpush.bf16.msra.mxu0 %v10263
    %10772 = vmatpush.bf16.msra.mxu0 %v10259
    %10773 = vmatpush.bf16.msra.mxu0 %v10255
    %10774 = vmatpush.bf16.msra.mxu0 %v10251
    %10775 = vmatpush.bf16.msra.mxu0 %v10247
    %10776 = vmatpush.bf16.msra.mxu0 %v10243
    %10777 = vmatmul.bf16.gmra.mxu0 %v10413
    %v10778 = vpop.f32.mrf.mxu0
    %v10779 = vadd.f32 %v10766, %v10778
    %v10780 = vpop.f32.mrf.mxu0
    %10781 = vdwg.mxu0
    %10782 = vmatpush.bf16.msra.mxu0 %v10303
    %10783 = vmatpush.bf16.msra.mxu0 %v10299
    %10784 = vmatpush.bf16.msra.mxu0 %v10295
    %10785 = vmatpush.bf16.msra.mxu0 %v10291
    %10786 = vmatpush.bf16.msra.mxu0 %v10287
    %10787 = vmatpush.bf16.msra.mxu0 %v10283
    %10788 = vmatpush.bf16.msra.mxu0 %v10279
    %10789 = vmatpush.bf16.msra.mxu0 %v10275
    %10790 = vmatmul.bf16.gmra.mxu0 %v10414
    %v10791 = vpop.f32.mrf.mxu0
    %v10792 = vadd.f32 %v10779, %v10791
    %v10793 = vpop.f32.mrf.mxu0
    %10794 = vdwg.mxu0
    %10795 = vmatpush.bf16.msra.mxu0 %v10335
    %10796 = vmatpush.bf16.msra.mxu0 %v10331
    %10797 = vmatpush.bf16.msra.mxu0 %v10327
    %10798 = vmatpush.bf16.msra.mxu0 %v10323
    %10799 = vmatpush.bf16.msra.mxu0 %v10319
    %10800 = vmatpush.bf16.msra.mxu0 %v10315
    %10801 = vmatpush.bf16.msra.mxu0 %v10311
    %10802 = vmatpush.bf16.msra.mxu0 %v10307
    %10803 = vmatmul.bf16.gmra.mxu0 %v10415
    %v10804 = vpop.f32.mrf.mxu0
    %v10805 = vadd.f32 %v10792, %v10804
    %v10806 = vpop.f32.mrf.mxu0
    %10807 = vdwg.mxu0
    %10808 = vmatpush.bf16.msra.mxu0 %v10367
    %10809 = vmatpush.bf16.msra.mxu0 %v10363
    %10810 = vmatpush.bf16.msra.mxu0 %v10359
    %10811 = vmatpush.bf16.msra.mxu0 %v10355
    %10812 = vmatpush.bf16.msra.mxu0 %v10351
    %10813 = vmatpush.bf16.msra.mxu0 %v10347
    %10814 = vmatpush.bf16.msra.mxu0 %v10343
    %10815 = vmatpush.bf16.msra.mxu0 %v10339
    %10816 = vmatmul.bf16.gmra.mxu0 %v10416
    %v10817 = vpop.f32.mrf.mxu0
    %v10818 = vadd.f32 %v10805, %v10817
    %v10819 = vpop.f32.mrf.mxu0
    %10820 = vdwg.mxu0
    %10821 = vmatpush.bf16.msra.mxu0 %v10399
    %10822 = vmatpush.bf16.msra.mxu0 %v10395
    %10823 = vmatpush.bf16.msra.mxu0 %v10391
    %10824 = vmatpush.bf16.msra.mxu0 %v10387
    %10825 = vmatpush.bf16.msra.mxu0 %v10383
    %10826 = vmatpush.bf16.msra.mxu0 %v10379
    %10827 = vmatpush.bf16.msra.mxu0 %v10375
    %10828 = vmatpush.bf16.msra.mxu0 %v10371
    %10829 = vmatmul.bf16.gmra.mxu0 %v10417
    %v10830 = vpop.f32.mrf.mxu0
    %v10831 = vadd.f32 %v10818, %v10830
    %v10832 = vpop.f32.mrf.mxu0
    %10833 = vdwg.mxu0
    %10834 = vmatpush.bf16.msra.mxu0 %v9920
    %10835 = vmatpush.bf16.msra.mxu0 %v9916
    %10836 = vmatpush.bf16.msra.mxu0 %v9912
    %10837 = vmatpush.bf16.msra.mxu0 %v9908
    %10838 = vmatpush.bf16.msra.mxu0 %v9904
    %10839 = vmatpush.bf16.msra.mxu0 %v9900
    %10840 = vmatpush.bf16.msra.mxu0 %v9896
    %10841 = vmatpush.bf16.msra.mxu0 %v9892
    %10842 = vmatmul.bf16.gmra.mxu0 %v10402
    %v10843 = vpop.f32.mrf.mxu0
    %v10844 = vadd.f32 0.0, %v10843
    %v10845 = vpop.f32.mrf.mxu0
    %10846 = vdwg.mxu0
    %10847 = vmatpush.bf16.msra.mxu0 %v9952
    %10848 = vmatpush.bf16.msra.mxu0 %v9948
    %10849 = vmatpush.bf16.msra.mxu0 %v9944
    %10850 = vmatpush.bf16.msra.mxu0 %v9940
    %10851 = vmatpush.bf16.msra.mxu0 %v9936
    %10852 = vmatpush.bf16.msra.mxu0 %v9932
    %10853 = vmatpush.bf16.msra.mxu0 %v9928
    %10854 = vmatpush.bf16.msra.mxu0 %v9924
    %10855 = vmatmul.bf16.gmra.mxu0 %v10403
    %v10856 = vpop.f32.mrf.mxu0
    %v10857 = vadd.f32 %v10844, %v10856
    %v10858 = vpop.f32.mrf.mxu0
    %10859 = vdwg.mxu0
    %10860 = vmatpush.bf16.msra.mxu0 %v9984
    %10861 = vmatpush.bf16.msra.mxu0 %v9980
    %10862 = vmatpush.bf16.msra.mxu0 %v9976
    %10863 = vmatpush.bf16.msra.mxu0 %v9972
    %10864 = vmatpush.bf16.msra.mxu0 %v9968
    %10865 = vmatpush.bf16.msra.mxu0 %v9964
    %10866 = vmatpush.bf16.msra.mxu0 %v9960
    %10867 = vmatpush.bf16.msra.mxu0 %v9956
    %10868 = vmatmul.bf16.gmra.mxu0 %v10404
    %v10869 = vpop.f32.mrf.mxu0
    %v10870 = vadd.f32 %v10857, %v10869
    %v10871 = vpop.f32.mrf.mxu0
    %10872 = vdwg.mxu0
    %10873 = vmatpush.bf16.msra.mxu0 %v10016
    %10874 = vmatpush.bf16.msra.mxu0 %v10012
    %10875 = vmatpush.bf16.msra.mxu0 %v10008
    %10876 = vmatpush.bf16.msra.mxu0 %v10004
    %10877 = vmatpush.bf16.msra.mxu0 %v10000
    %10878 = vmatpush.bf16.msra.mxu0 %v9996
    %10879 = vmatpush.bf16.msra.mxu0 %v9992
    %10880 = vmatpush.bf16.msra.mxu0 %v9988
    %10881 = vmatmul.bf16.gmra.mxu0 %v10405
    %v10882 = vpop.f32.mrf.mxu0
    %v10883 = vadd.f32 %v10870, %v10882
    %v10884 = vpop.f32.mrf.mxu0
    %10885 = vdwg.mxu0
    %10886 = vmatpush.bf16.msra.mxu0 %v10048
    %10887 = vmatpush.bf16.msra.mxu0 %v10044
    %10888 = vmatpush.bf16.msra.mxu0 %v10040
    %10889 = vmatpush.bf16.msra.mxu0 %v10036
    %10890 = vmatpush.bf16.msra.mxu0 %v10032
    %10891 = vmatpush.bf16.msra.mxu0 %v10028
    %10892 = vmatpush.bf16.msra.mxu0 %v10024
    %10893 = vmatpush.bf16.msra.mxu0 %v10020
    %10894 = vmatmul.bf16.gmra.mxu0 %v10406
    %v10895 = vpop.f32.mrf.mxu0
    %v10896 = vadd.f32 %v10883, %v10895
    %v10897 = vpop.f32.mrf.mxu0
    %10898 = vdwg.mxu0
    %10899 = vmatpush.bf16.msra.mxu0 %v10080
    %10900 = vmatpush.bf16.msra.mxu0 %v10076
    %10901 = vmatpush.bf16.msra.mxu0 %v10072
    %10902 = vmatpush.bf16.msra.mxu0 %v10068
    %10903 = vmatpush.bf16.msra.mxu0 %v10064
    %10904 = vmatpush.bf16.msra.mxu0 %v10060
    %10905 = vmatpush.bf16.msra.mxu0 %v10056
    %10906 = vmatpush.bf16.msra.mxu0 %v10052
    %10907 = vmatmul.bf16.gmra.mxu0 %v10407
    %v10908 = vpop.f32.mrf.mxu0
    %v10909 = vadd.f32 %v10896, %v10908
    %v10910 = vpop.f32.mrf.mxu0
    %10911 = vdwg.mxu0
    %10912 = vmatpush.bf16.msra.mxu0 %v10112
    %10913 = vmatpush.bf16.msra.mxu0 %v10108
    %10914 = vmatpush.bf16.msra.mxu0 %v10104
    %10915 = vmatpush.bf16.msra.mxu0 %v10100
    %10916 = vmatpush.bf16.msra.mxu0 %v10096
    %10917 = vmatpush.bf16.msra.mxu0 %v10092
    %10918 = vmatpush.bf16.msra.mxu0 %v10088
    %10919 = vmatpush.bf16.msra.mxu0 %v10084
    %10920 = vmatmul.bf16.gmra.mxu0 %v10408
    %v10921 = vpop.f32.mrf.mxu0
    %v10922 = vadd.f32 %v10909, %v10921
    %v10923 = vpop.f32.mrf.mxu0
    %10924 = vdwg.mxu0
    %10925 = vmatpush.bf16.msra.mxu0 %v10144
    %10926 = vmatpush.bf16.msra.mxu0 %v10140
    %10927 = vmatpush.bf16.msra.mxu0 %v10136
    %10928 = vmatpush.bf16.msra.mxu0 %v10132
    %10929 = vmatpush.bf16.msra.mxu0 %v10128
    %10930 = vmatpush.bf16.msra.mxu0 %v10124
    %10931 = vmatpush.bf16.msra.mxu0 %v10120
    %10932 = vmatpush.bf16.msra.mxu0 %v10116
    %10933 = vmatmul.bf16.gmra.mxu0 %v10409
    %v10934 = vpop.f32.mrf.mxu0
    %v10935 = vadd.f32 %v10922, %v10934
    %v10936 = vpop.f32.mrf.mxu0
    %10937 = vdwg.mxu0
    %10938 = vmatpush.bf16.msra.mxu0 %v10176
    %10939 = vmatpush.bf16.msra.mxu0 %v10172
    %10940 = vmatpush.bf16.msra.mxu0 %v10168
    %10941 = vmatpush.bf16.msra.mxu0 %v10164
    %10942 = vmatpush.bf16.msra.mxu0 %v10160
    %10943 = vmatpush.bf16.msra.mxu0 %v10156
    %10944 = vmatpush.bf16.msra.mxu0 %v10152
    %10945 = vmatpush.bf16.msra.mxu0 %v10148
    %10946 = vmatmul.bf16.gmra.mxu0 %v10410
    %v10947 = vpop.f32.mrf.mxu0
    %v10948 = vadd.f32 %v10935, %v10947
    %v10949 = vpop.f32.mrf.mxu0
    %10950 = vdwg.mxu0
    %10951 = vmatpush.bf16.msra.mxu0 %v10208
    %10952 = vmatpush.bf16.msra.mxu0 %v10204
    %10953 = vmatpush.bf16.msra.mxu0 %v10200
    %10954 = vmatpush.bf16.msra.mxu0 %v10196
    %10955 = vmatpush.bf16.msra.mxu0 %v10192
    %10956 = vmatpush.bf16.msra.mxu0 %v10188
    %10957 = vmatpush.bf16.msra.mxu0 %v10184
    %10958 = vmatpush.bf16.msra.mxu0 %v10180
    %10959 = vmatmul.bf16.gmra.mxu0 %v10411
    %v10960 = vpop.f32.mrf.mxu0
    %v10961 = vadd.f32 %v10948, %v10960
    %v10962 = vpop.f32.mrf.mxu0
    %10963 = vdwg.mxu0
    %10964 = vmatpush.bf16.msra.mxu0 %v10240
    %10965 = vmatpush.bf16.msra.mxu0 %v10236
    %10966 = vmatpush.bf16.msra.mxu0 %v10232
    %10967 = vmatpush.bf16.msra.mxu0 %v10228
    %10968 = vmatpush.bf16.msra.mxu0 %v10224
    %10969 = vmatpush.bf16.msra.mxu0 %v10220
    %10970 = vmatpush.bf16.msra.mxu0 %v10216
    %10971 = vmatpush.bf16.msra.mxu0 %v10212
    %10972 = vmatmul.bf16.gmra.mxu0 %v10412
    %v10973 = vpop.f32.mrf.mxu0
    %v10974 = vadd.f32 %v10961, %v10973
    %v10975 = vpop.f32.mrf.mxu0
    %10976 = vdwg.mxu0
    %10977 = vmatpush.bf16.msra.mxu0 %v10272
    %10978 = vmatpush.bf16.msra.mxu0 %v10268
    %10979 = vmatpush.bf16.msra.mxu0 %v10264
    %10980 = vmatpush.bf16.msra.mxu0 %v10260
    %10981 = vmatpush.bf16.msra.mxu0 %v10256
    %10982 = vmatpush.bf16.msra.mxu0 %v10252
    %10983 = vmatpush.bf16.msra.mxu0 %v10248
    %10984 = vmatpush.bf16.msra.mxu0 %v10244
    %10985 = vmatmul.bf16.gmra.mxu0 %v10413
    %v10986 = vpop.f32.mrf.mxu0
    %v10987 = vadd.f32 %v10974, %v10986
    %v10988 = vpop.f32.mrf.mxu0
    %10989 = vdwg.mxu0
    %10990 = vmatpush.bf16.msra.mxu0 %v10304
    %10991 = vmatpush.bf16.msra.mxu0 %v10300
    %10992 = vmatpush.bf16.msra.mxu0 %v10296
    %10993 = vmatpush.bf16.msra.mxu0 %v10292
    %10994 = vmatpush.bf16.msra.mxu0 %v10288
    %10995 = vmatpush.bf16.msra.mxu0 %v10284
    %10996 = vmatpush.bf16.msra.mxu0 %v10280
    %10997 = vmatpush.bf16.msra.mxu0 %v10276
    %10998 = vmatmul.bf16.gmra.mxu0 %v10414
    %v10999 = vpop.f32.mrf.mxu0
    %v11000 = vadd.f32 %v10987, %v10999
    %v11001 = vpop.f32.mrf.mxu0
    %11002 = vdwg.mxu0
    %11003 = vmatpush.bf16.msra.mxu0 %v10336
    %11004 = vmatpush.bf16.msra.mxu0 %v10332
    %11005 = vmatpush.bf16.msra.mxu0 %v10328
    %11006 = vmatpush.bf16.msra.mxu0 %v10324
    %11007 = vmatpush.bf16.msra.mxu0 %v10320
    %11008 = vmatpush.bf16.msra.mxu0 %v10316
    %11009 = vmatpush.bf16.msra.mxu0 %v10312
    %11010 = vmatpush.bf16.msra.mxu0 %v10308
    %11011 = vmatmul.bf16.gmra.mxu0 %v10415
    %v11012 = vpop.f32.mrf.mxu0
    %v11013 = vadd.f32 %v11000, %v11012
    %v11014 = vpop.f32.mrf.mxu0
    %11015 = vdwg.mxu0
    %11016 = vmatpush.bf16.msra.mxu0 %v10368
    %11017 = vmatpush.bf16.msra.mxu0 %v10364
    %11018 = vmatpush.bf16.msra.mxu0 %v10360
    %11019 = vmatpush.bf16.msra.mxu0 %v10356
    %11020 = vmatpush.bf16.msra.mxu0 %v10352
    %11021 = vmatpush.bf16.msra.mxu0 %v10348
    %11022 = vmatpush.bf16.msra.mxu0 %v10344
    %11023 = vmatpush.bf16.msra.mxu0 %v10340
    %11024 = vmatmul.bf16.gmra.mxu0 %v10416
    %v11025 = vpop.f32.mrf.mxu0
    %v11026 = vadd.f32 %v11013, %v11025
    %v11027 = vpop.f32.mrf.mxu0
    %11028 = vdwg.mxu0
    %11029 = vmatpush.bf16.msra.mxu0 %v10400
    %11030 = vmatpush.bf16.msra.mxu0 %v10396
    %11031 = vmatpush.bf16.msra.mxu0 %v10392
    %11032 = vmatpush.bf16.msra.mxu0 %v10388
    %11033 = vmatpush.bf16.msra.mxu0 %v10384
    %11034 = vmatpush.bf16.msra.mxu0 %v10380
    %11035 = vmatpush.bf16.msra.mxu0 %v10376
    %11036 = vmatpush.bf16.msra.mxu0 %v10372
    %11037 = vmatmul.bf16.gmra.mxu0 %v10417
    %v11038 = vpop.f32.mrf.mxu0
    %v11039 = vadd.f32 %v11026, %v11038
    %v11040 = vpop.f32.mrf.mxu0
    %11041 = vdwg.mxu0
    %11042 = vmatpush.bf16.msra.mxu0 %v9921
    %11043 = vmatpush.bf16.msra.mxu0 %v9917
    %11044 = vmatpush.bf16.msra.mxu0 %v9913
    %11045 = vmatpush.bf16.msra.mxu0 %v9909
    %11046 = vmatpush.bf16.msra.mxu0 %v9905
    %11047 = vmatpush.bf16.msra.mxu0 %v9901
    %11048 = vmatpush.bf16.msra.mxu0 %v9897
    %11049 = vmatpush.bf16.msra.mxu0 %v9893
    %11050 = vmatmul.bf16.gmra.mxu0 %v10402
    %v11051 = vpop.f32.mrf.mxu0
    %v11052 = vadd.f32 0.0, %v11051
    %v11053 = vpop.f32.mrf.mxu0
    %11054 = vdwg.mxu0
    %11055 = vmatpush.bf16.msra.mxu0 %v9953
    %11056 = vmatpush.bf16.msra.mxu0 %v9949
    %11057 = vmatpush.bf16.msra.mxu0 %v9945
    %11058 = vmatpush.bf16.msra.mxu0 %v9941
    %11059 = vmatpush.bf16.msra.mxu0 %v9937
    %11060 = vmatpush.bf16.msra.mxu0 %v9933
    %11061 = vmatpush.bf16.msra.mxu0 %v9929
    %11062 = vmatpush.bf16.msra.mxu0 %v9925
    %11063 = vmatmul.bf16.gmra.mxu0 %v10403
    %v11064 = vpop.f32.mrf.mxu0
    %v11065 = vadd.f32 %v11052, %v11064
    %v11066 = vpop.f32.mrf.mxu0
    %11067 = vdwg.mxu0
    %11068 = vmatpush.bf16.msra.mxu0 %v9985
    %11069 = vmatpush.bf16.msra.mxu0 %v9981
    %11070 = vmatpush.bf16.msra.mxu0 %v9977
    %11071 = vmatpush.bf16.msra.mxu0 %v9973
    %11072 = vmatpush.bf16.msra.mxu0 %v9969
    %11073 = vmatpush.bf16.msra.mxu0 %v9965
    %11074 = vmatpush.bf16.msra.mxu0 %v9961
    %11075 = vmatpush.bf16.msra.mxu0 %v9957
    %11076 = vmatmul.bf16.gmra.mxu0 %v10404
    %v11077 = vpop.f32.mrf.mxu0
    %v11078 = vadd.f32 %v11065, %v11077
    %v11079 = vpop.f32.mrf.mxu0
    %11080 = vdwg.mxu0
    %11081 = vmatpush.bf16.msra.mxu0 %v10017
    %11082 = vmatpush.bf16.msra.mxu0 %v10013
    %11083 = vmatpush.bf16.msra.mxu0 %v10009
    %11084 = vmatpush.bf16.msra.mxu0 %v10005
    %11085 = vmatpush.bf16.msra.mxu0 %v10001
    %11086 = vmatpush.bf16.msra.mxu0 %v9997
    %11087 = vmatpush.bf16.msra.mxu0 %v9993
    %11088 = vmatpush.bf16.msra.mxu0 %v9989
    %11089 = vmatmul.bf16.gmra.mxu0 %v10405
    %v11090 = vpop.f32.mrf.mxu0
    %v11091 = vadd.f32 %v11078, %v11090
    %v11092 = vpop.f32.mrf.mxu0
    %11093 = vdwg.mxu0
    %11094 = vmatpush.bf16.msra.mxu0 %v10049
    %11095 = vmatpush.bf16.msra.mxu0 %v10045
    %11096 = vmatpush.bf16.msra.mxu0 %v10041
    %11097 = vmatpush.bf16.msra.mxu0 %v10037
    %11098 = vmatpush.bf16.msra.mxu0 %v10033
    %11099 = vmatpush.bf16.msra.mxu0 %v10029
    %11100 = vmatpush.bf16.msra.mxu0 %v10025
    %11101 = vmatpush.bf16.msra.mxu0 %v10021
    %11102 = vmatmul.bf16.gmra.mxu0 %v10406
    %v11103 = vpop.f32.mrf.mxu0
    %v11104 = vadd.f32 %v11091, %v11103
    %v11105 = vpop.f32.mrf.mxu0
    %11106 = vdwg.mxu0
    %11107 = vmatpush.bf16.msra.mxu0 %v10081
    %11108 = vmatpush.bf16.msra.mxu0 %v10077
    %11109 = vmatpush.bf16.msra.mxu0 %v10073
    %11110 = vmatpush.bf16.msra.mxu0 %v10069
    %11111 = vmatpush.bf16.msra.mxu0 %v10065
    %11112 = vmatpush.bf16.msra.mxu0 %v10061
    %11113 = vmatpush.bf16.msra.mxu0 %v10057
    %11114 = vmatpush.bf16.msra.mxu0 %v10053
    %11115 = vmatmul.bf16.gmra.mxu0 %v10407
    %v11116 = vpop.f32.mrf.mxu0
    %v11117 = vadd.f32 %v11104, %v11116
    %v11118 = vpop.f32.mrf.mxu0
    %11119 = vdwg.mxu0
    %11120 = vmatpush.bf16.msra.mxu0 %v10113
    %11121 = vmatpush.bf16.msra.mxu0 %v10109
    %11122 = vmatpush.bf16.msra.mxu0 %v10105
    %11123 = vmatpush.bf16.msra.mxu0 %v10101
    %11124 = vmatpush.bf16.msra.mxu0 %v10097
    %11125 = vmatpush.bf16.msra.mxu0 %v10093
    %11126 = vmatpush.bf16.msra.mxu0 %v10089
    %11127 = vmatpush.bf16.msra.mxu0 %v10085
    %11128 = vmatmul.bf16.gmra.mxu0 %v10408
    %v11129 = vpop.f32.mrf.mxu0
    %v11130 = vadd.f32 %v11117, %v11129
    %v11131 = vpop.f32.mrf.mxu0
    %11132 = vdwg.mxu0
    %11133 = vmatpush.bf16.msra.mxu0 %v10145
    %11134 = vmatpush.bf16.msra.mxu0 %v10141
    %11135 = vmatpush.bf16.msra.mxu0 %v10137
    %11136 = vmatpush.bf16.msra.mxu0 %v10133
    %11137 = vmatpush.bf16.msra.mxu0 %v10129
    %11138 = vmatpush.bf16.msra.mxu0 %v10125
    %11139 = vmatpush.bf16.msra.mxu0 %v10121
    %11140 = vmatpush.bf16.msra.mxu0 %v10117
    %11141 = vmatmul.bf16.gmra.mxu0 %v10409
    %v11142 = vpop.f32.mrf.mxu0
    %v11143 = vadd.f32 %v11130, %v11142
    %v11144 = vpop.f32.mrf.mxu0
    %11145 = vdwg.mxu0
    %11146 = vmatpush.bf16.msra.mxu0 %v10177
    %11147 = vmatpush.bf16.msra.mxu0 %v10173
    %11148 = vmatpush.bf16.msra.mxu0 %v10169
    %11149 = vmatpush.bf16.msra.mxu0 %v10165
    %11150 = vmatpush.bf16.msra.mxu0 %v10161
    %11151 = vmatpush.bf16.msra.mxu0 %v10157
    %11152 = vmatpush.bf16.msra.mxu0 %v10153
    %11153 = vmatpush.bf16.msra.mxu0 %v10149
    %11154 = vmatmul.bf16.gmra.mxu0 %v10410
    %v11155 = vpop.f32.mrf.mxu0
    %v11156 = vadd.f32 %v11143, %v11155
    %v11157 = vpop.f32.mrf.mxu0
    %11158 = vdwg.mxu0
    %11159 = vmatpush.bf16.msra.mxu0 %v10209
    %11160 = vmatpush.bf16.msra.mxu0 %v10205
    %11161 = vmatpush.bf16.msra.mxu0 %v10201
    %11162 = vmatpush.bf16.msra.mxu0 %v10197
    %11163 = vmatpush.bf16.msra.mxu0 %v10193
    %11164 = vmatpush.bf16.msra.mxu0 %v10189
    %11165 = vmatpush.bf16.msra.mxu0 %v10185
    %11166 = vmatpush.bf16.msra.mxu0 %v10181
    %11167 = vmatmul.bf16.gmra.mxu0 %v10411
    %v11168 = vpop.f32.mrf.mxu0
    %v11169 = vadd.f32 %v11156, %v11168
    %v11170 = vpop.f32.mrf.mxu0
    %11171 = vdwg.mxu0
    %11172 = vmatpush.bf16.msra.mxu0 %v10241
    %11173 = vmatpush.bf16.msra.mxu0 %v10237
    %11174 = vmatpush.bf16.msra.mxu0 %v10233
    %11175 = vmatpush.bf16.msra.mxu0 %v10229
    %11176 = vmatpush.bf16.msra.mxu0 %v10225
    %11177 = vmatpush.bf16.msra.mxu0 %v10221
    %11178 = vmatpush.bf16.msra.mxu0 %v10217
    %11179 = vmatpush.bf16.msra.mxu0 %v10213
    %11180 = vmatmul.bf16.gmra.mxu0 %v10412
    %v11181 = vpop.f32.mrf.mxu0
    %v11182 = vadd.f32 %v11169, %v11181
    %v11183 = vpop.f32.mrf.mxu0
    %11184 = vdwg.mxu0
    %11185 = vmatpush.bf16.msra.mxu0 %v10273
    %11186 = vmatpush.bf16.msra.mxu0 %v10269
    %11187 = vmatpush.bf16.msra.mxu0 %v10265
    %11188 = vmatpush.bf16.msra.mxu0 %v10261
    %11189 = vmatpush.bf16.msra.mxu0 %v10257
    %11190 = vmatpush.bf16.msra.mxu0 %v10253
    %11191 = vmatpush.bf16.msra.mxu0 %v10249
    %11192 = vmatpush.bf16.msra.mxu0 %v10245
    %11193 = vmatmul.bf16.gmra.mxu0 %v10413
    %v11194 = vpop.f32.mrf.mxu0
    %v11195 = vadd.f32 %v11182, %v11194
    %v11196 = vpop.f32.mrf.mxu0
    %11197 = vdwg.mxu0
    %11198 = vmatpush.bf16.msra.mxu0 %v10305
    %11199 = vmatpush.bf16.msra.mxu0 %v10301
    %11200 = vmatpush.bf16.msra.mxu0 %v10297
    %11201 = vmatpush.bf16.msra.mxu0 %v10293
    %11202 = vmatpush.bf16.msra.mxu0 %v10289
    %11203 = vmatpush.bf16.msra.mxu0 %v10285
    %11204 = vmatpush.bf16.msra.mxu0 %v10281
    %11205 = vmatpush.bf16.msra.mxu0 %v10277
    %11206 = vmatmul.bf16.gmra.mxu0 %v10414
    %v11207 = vpop.f32.mrf.mxu0
    %v11208 = vadd.f32 %v11195, %v11207
    %v11209 = vpop.f32.mrf.mxu0
    %11210 = vdwg.mxu0
    %11211 = vmatpush.bf16.msra.mxu0 %v10337
    %11212 = vmatpush.bf16.msra.mxu0 %v10333
    %11213 = vmatpush.bf16.msra.mxu0 %v10329
    %11214 = vmatpush.bf16.msra.mxu0 %v10325
    %11215 = vmatpush.bf16.msra.mxu0 %v10321
    %11216 = vmatpush.bf16.msra.mxu0 %v10317
    %11217 = vmatpush.bf16.msra.mxu0 %v10313
    %11218 = vmatpush.bf16.msra.mxu0 %v10309
    %11219 = vmatmul.bf16.gmra.mxu0 %v10415
    %v11220 = vpop.f32.mrf.mxu0
    %v11221 = vadd.f32 %v11208, %v11220
    %v11222 = vpop.f32.mrf.mxu0
    %11223 = vdwg.mxu0
    %11224 = vmatpush.bf16.msra.mxu0 %v10369
    %11225 = vmatpush.bf16.msra.mxu0 %v10365
    %11226 = vmatpush.bf16.msra.mxu0 %v10361
    %11227 = vmatpush.bf16.msra.mxu0 %v10357
    %11228 = vmatpush.bf16.msra.mxu0 %v10353
    %11229 = vmatpush.bf16.msra.mxu0 %v10349
    %11230 = vmatpush.bf16.msra.mxu0 %v10345
    %11231 = vmatpush.bf16.msra.mxu0 %v10341
    %11232 = vmatmul.bf16.gmra.mxu0 %v10416
    %v11233 = vpop.f32.mrf.mxu0
    %v11234 = vadd.f32 %v11221, %v11233
    %v11235 = vpop.f32.mrf.mxu0
    %11236 = vdwg.mxu0
    %11237 = vmatpush.bf16.msra.mxu0 %v10401
    %11238 = vmatpush.bf16.msra.mxu0 %v10397
    %11239 = vmatpush.bf16.msra.mxu0 %v10393
    %11240 = vmatpush.bf16.msra.mxu0 %v10389
    %11241 = vmatpush.bf16.msra.mxu0 %v10385
    %11242 = vmatpush.bf16.msra.mxu0 %v10381
    %11243 = vmatpush.bf16.msra.mxu0 %v10377
    %11244 = vmatpush.bf16.msra.mxu0 %v10373
    %11245 = vmatmul.bf16.gmra.mxu0 %v10417
    %v11246 = vpop.f32.mrf.mxu0
    %v11247 = vadd.f32 %v11234, %v11246
    %v11248 = vpop.f32.mrf.mxu0
    %11249 = vdwg.mxu0
    %v11250 = vld [vmem:[#allocation13] sm:$0xf]
    %v11252 = vperm.slane %v11250, 0
    %v11253 = vperm.slane %v11250, 1
    %v11254 = vperm.slane %v11250, 2
    %v11255 = vperm.slane %v11250, 3
    %v11260 = vmul.f32 %v10623, %v11252
    %v11261 = vmul.f32 %v10831, %v11253
    %v11262 = vmul.f32 %v11039, %v11254
    %v11263 = vmul.f32 %v11247, %v11255
    %v11264 = vld [vmem:[#allocation14] sm:$0xf]
    %v11266 = vperm.slane %v11264, 0
    %v11267 = vperm.slane %v11264, 1
    %v11268 = vperm.slane %v11264, 2
    %v11269 = vperm.slane %v11264, 3
    %v11274 = vadd.f32 %v11260, %v11266
    %v11275 = vadd.f32 %v11261, %v11267
    %v11276 = vadd.f32 %v11262, %v11268
    %v11277 = vadd.f32 %v11263, %v11269
    %vm11278 = vcmp.gt.f32.partialorder %v11274, 0.0
    %vm11279 = vcmp.gt.f32.partialorder %v11275, 0.0
    %vm11280 = vcmp.gt.f32.partialorder %v11276, 0.0
    %vm11281 = vcmp.gt.f32.partialorder %v11277, 0.0
    %v11282 = vsel %vm11278, 1, 0
    %v11283 = vsel %vm11279, 1, 0
    %v11284 = vsel %vm11280, 1, 0
    %v11285 = vsel %vm11281, 1, 0
    %v11286 = vcvt.s32.f32 %v11282
    %v11287 = vcvt.s32.f32 %v11283
    %v11288 = vcvt.s32.f32 %v11284
    %v11289 = vcvt.s32.f32 %v11285
    %11290 = vst [vmem:[#allocation16] sm:$0xff] %v11286
    %11291 = vst [vmem:[#allocation16 + $0x8] sm:$0xff] %v11287
    %11292 = vst [vmem:[#allocation16 + $0x10] sm:$0xff] %v11288
    %11293 = vst [vmem:[#allocation16 + $0x18] sm:$0xff] %v11289
    %v11294 = vsel %vm11278, %v150, %v146
    %v11295 = vsel %vm11279, %v151, %v147
    %v11296 = vsel %vm11280, %v152, %v148
    %v11297 = vsel %vm11281, %v153, %v149
    %11298 = vst [vmem:[#allocation17] sm:$0xff] %v11294
    %11299 = vst [vmem:[#allocation17 + $0x8] sm:$0xff] %v11295
    %11300 = vst [vmem:[#allocation17 + $0x10] sm:$0xff] %v11296
    %11301 = vst [vmem:[#allocation17 + $0x18] sm:$0xff] %v11297
    // Predicated region
    $region66: #{policy_net_forward.1} parent=1 // pred_check
      _
    $region67: #{policy_net_forward.1} parent=1 // pred_check_branch
      %11303 = sbr.rel (0) target = $region69
    $region68: #{policy_net_forward.1} parent=1 // pred_region
      %11305 = vsyncadd [#allocation4], 0
      %s11307 = sshll.u32 [#allocation16], 4
      %s11308 = int_to_ptr.vmem [resolvable:$true] %s11307
      %s11309 = sshll.u32 %s8, 4
      %s11310 = int_to_ptr.hbm [resolvable:$true] %s11309
      %11312 = dma.vmem_to_hbm [thread:$0]  %s11308, 512, %s11310, [#allocation4]
    $region69: #{policy_net_forward.1} parent=1 // pred_fallthru
      _
    // Predicated region
    $region70: #{policy_net_forward.1} parent=1 // pred_check
      _
    $region71: #{policy_net_forward.1} parent=1 // pred_check_branch
      %11314 = sbr.rel (0) target = $region73
    $region72: #{policy_net_forward.1} parent=1 // pred_region
      %11316 = vsyncadd [#allocation18], 0
      %s11318 = sshll.u32 [#allocation17], 4
      %s11319 = int_to_ptr.vmem [resolvable:$true] %s11318
      %s11320 = sshll.u32 %s9, 4
      %s11321 = int_to_ptr.hbm [resolvable:$true] %s11320
      %11323 = dma.vmem_to_hbm [thread:$0]  %s11319, 512, %s11321, [#allocation18]
    $region73: #{policy_net_forward.1} parent=1 // pred_fallthru
      _
    // Predicated region
    $region74: #{policy_net_forward.1} parent=1 // pred_check
      _
    $region75: #{policy_net_forward.1} parent=1 // pred_check_branch
      %11325 = sbr.rel (0) target = $region77
    $region76: #{policy_net_forward.1} parent=1 // pred_region
      %11327 = dma.done [#allocation4], 512
    $region77: #{policy_net_forward.1} parent=1 // pred_fallthru
      _
    // Predicated region
    $region78: #{policy_net_forward.1} parent=1 // pred_check
      _
    $region79: #{policy_net_forward.1} parent=1 // pred_check_branch
      %11329 = sbr.rel (0) target = $region81
    $region80: #{policy_net_forward.1} parent=1 // pred_region
      %11331 = dma.done [#allocation18], 512
    $region81: #{policy_net_forward.1} parent=1 // pred_fallthru
      _
    %11332 = vsyncpa [#allocation3], 1
    %11333 = vsyncpa [#allocation6], 1
    %11334 = vsyncpa [#allocation9], 1
    %11335 = vsyncpa [#allocation12], 1
    %11336 = vsyncpa [#allocation15], 1
    %11337 = vsyncpa [#allocation4], 1
    %11338 = vsyncpa [#allocation18], 1

</llo_original>
